<compile_context>
chip_gen: v6e
topology: v6e:2x2x1
jax: 0.10.0
libtpu: 0.0.40
codegen_flags: <defaults>
</compile_context>

<pallas_src>
import functools

import jax
import jax.numpy as jnp
from jax import lax
from jax.experimental import pallas as pl
from jax.experimental.pallas import tpu as pltpu

# Target matmul rows per grid step (128 fills the v5e MXU, 256 fills v6e/v7x).
MXU_ROWS = 256


def _round_up(x, m):
    return ((x + m - 1) // m) * m


# ----------------------------------------------------------------------------
# Fused kernel body
# ----------------------------------------------------------------------------
def _build_kernel(dilations, has_down, T, Bb, n_hidden, pad_off, slab_rows):
    """dilations: static dilation per K=2 block (blocks 1..6).
    has_down: whether block 0 has a 1x1 downsample (input_size != n_hidden).
    pad_off: 8-aligned slab row where the interior [pad_off, pad_off+T) lives;
    rows outside it are the zero 'same'-padding halo."""
    M = Bb * T
    f32 = jnp.float32
    bf16 = jnp.bfloat16

    def kernel(slopes_ref, x_ref, w_in_ref, w0c2_ref, w_mid_ref, wf_ref,
               b_ref, bf_ref, o_ref, slab_ref):
        # ---- zero ONLY the halo rows of the per-batch padding slab ----
        left_rows = pad_off
        right_rows = slab_rows - pad_off - T
        if left_rows > 0:
            slab_ref[:, :pad_off, :] = jnp.zeros((Bb, left_rows, n_hidden), f32)
        if right_rows > 0:
            slab_ref[:, pad_off + T:, :] = jnp.zeros(
                (Bb, right_rows, n_hidden), f32)

        def matmul(a_f32, w_bf16):
            # bf16 MXU operands, f32 accumulation.
            return jnp.dot(a_f32.astype(bf16), w_bf16,
                           preferred_element_type=f32)

        def prelu(v, idx):
            a = slopes_ref[idx]                      # scalar from SMEM
            return jnp.where(v >= 0.0, v, a * v)

        def bias(i):
            return b_ref[i:i + 1, :]                 # (1, n_hidden) f32

        def conv_k2(y, widx, dilation, b_row):
            """'same'-padded K=2 dilated conv = 2 shifted MXU matmuls."""
            left = dilation // 2                     # PyTorch 'same' left pad
            slab_ref[:, pad_off:pad_off + T, :] = y.reshape(Bb, T, n_hidden)
            acc = b_row
            for k in range(2):
                start = pad_off - left + k * dilation          # static int
                xk = slab_ref[:, start:start + T, :].reshape(M, n_hidden)
                acc = acc + matmul(xk, w_mid_ref[widx, k])
            return acc

        # ------------------------- block 0 (K = 1) -------------------------
        x2d = x_ref[...].reshape(M, x_ref.shape[-1])            # (M, C_in) f32
        if has_down:
            res = matmul(x2d, w_in_ref[1]) + bias(2)            # 1x1 downsample
        else:
            res = x2d
        h = prelu(matmul(x2d, w_in_ref[0]) + bias(0), 0)        # conv1 + PReLU
        y = prelu(matmul(h, w0c2_ref[...]) + bias(1), 1) + res  # conv2 + res

        # ----------------------- blocks 1..6 (K = 2) -----------------------
        for i, dil in enumerate(dilations):
            h = prelu(conv_k2(y, 2 * i, dil, bias(3 + 2 * i)), 2 + 2 * i)
            y = prelu(conv_k2(h, 2 * i + 1, dil, bias(4 + 2 * i)),
                      3 + 2 * i) + y

        # ---- final 1x1 conv + tanh, lane-dense (c_out, M) output block ----
        out = lax.dot_general(wf_ref[...], y.astype(bf16),
                              (((1,), (1,)), ((), ())),
                              preferred_element_type=f32)        # (c_out, M)
        out = jnp.tanh(out + bf_ref[...])
        o_ref[0] = out.astype(o_ref.dtype)

    return kernel


# ----------------------------------------------------------------------------
# Host wrapper (single fused pallas_call, jitted)
# ----------------------------------------------------------------------------
@functools.partial(jax.jit, static_argnums=(3, 4))
def generator_forward(x, slopes, params, dilations, has_down):
    """Generator forward: (B, T, input_size) -> (B, T, output_size)."""
    w_in, w0c2, w_mid, wf_t, b_all, bf = params
    B, T, C_in = x.shape
    n_hidden = w0c2.shape[0]
    c_out = wf_t.shape[0]

    # Fold batches so the matmul M dim fills the MXU; pad batch to a multiple.
    Bb = max(1, -(-MXU_ROWS // T))
    G = -(-B // Bb)
    B_pad = G * Bb
    if B_pad != B:
        x = jnp.pad(x, ((0, B_pad - B), (0, 0), (0, 0)))
    M = Bb * T

    # 'same'-padding halo geometry (only the K=2 blocks need the slab).
    max_left = max(d // 2 for d in dilations)
    max_right = max(d - d // 2 for d in dilations)
    pad_off = _round_up(max_left, 8)
    slab_rows = _round_up(pad_off + T + max_right, 8)

    kernel = _build_kernel(dilations, has_down, T, Bb, n_hidden,
                           pad_off, slab_rows)

    def const_map(nd):
        return lambda g: (0,) * nd

    in_specs = [
        pl.BlockSpec(memory_space=pltpu.MemorySpace.SMEM),      # PReLU slopes
        pl.BlockSpec((Bb, T, C_in), lambda g: (g, 0, 0)),       # x batch tile
        pl.BlockSpec(w_in.shape, const_map(w_in.ndim)),         # packed weights
        pl.BlockSpec(w0c2.shape, const_map(w0c2.ndim)),
        pl.BlockSpec(w_mid.shape, const_map(w_mid.ndim)),
        pl.BlockSpec(wf_t.shape, const_map(wf_t.ndim)),
        pl.BlockSpec(b_all.shape, const_map(b_all.ndim)),       # packed biases
        pl.BlockSpec(bf.shape, const_map(bf.ndim)),
    ]

    out = pl.pallas_call(
        kernel,
        grid=(G,),
        in_specs=in_specs,
        out_specs=pl.BlockSpec((1, c_out, M), lambda g: (g, 0, 0)),
        out_shape=jax.ShapeDtypeStruct((G, c_out, M), jnp.float32),
        scratch_shapes=[pltpu.VMEM((Bb, slab_rows, n_hidden), jnp.float32)],
        compiler_params=pltpu.CompilerParams(
            dimension_semantics=("parallel",)),
    )(slopes, x, w_in, w0c2, w_mid, wf_t, b_all, bf)

    # Lane-dense (G, c_out, Bb*T) kernel layout -> (B, T, c_out).
    out = out.reshape(G, c_out, Bb, T).transpose(0, 2, 3, 1)
    return out.reshape(B_pad, T, c_out)[:B]


# ----------------------------------------------------------------------------
# Deterministic parameter construction (mirrors TCN.__init__ / init_weights)
# ----------------------------------------------------------------------------
def init_generator_params(key, input_size, output_size, n_hidden=80):
    """Packed parameters for Generator(input_size, output_size):
    7 TemporalBlocks (kernel sizes 1,2,2,2,2,2,2; dilations 1,1,2,4,8,16,32)
    + final 1x1 conv.  Weights are stored pre-packed, bf16, in
    (K, C_in, C_out) layout.  NOTE: porting real PyTorch Conv1d weights
    requires transposing from (C_out, C_in, K)."""
    keys = iter(jax.random.split(key, 16))

    def nrm(shape):
        return 0.01 * jax.random.normal(next(keys), shape, dtype=jnp.float32)

    has_down = (input_size != n_hidden)
    dilations = tuple(2 ** i for i in range(6))          # blocks 1..6

    # block 0 (kernel_size = 1)
    w1_0 = nrm((input_size, n_hidden))
    w2_0 = nrm((n_hidden, n_hidden))
    b1_0, b2_0 = nrm((n_hidden,)), nrm((n_hidden,))
    if has_down:
        wd_0, bd_0 = nrm((input_size, n_hidden)), nrm((n_hidden,))
        w_in = jnp.stack([w1_0, wd_0])                   # (2, C_in, n_hidden)
    else:
        bd_0 = jnp.zeros((n_hidden,), jnp.float32)
        w_in = w1_0[None]

    # blocks 1..6 (kernel_size = 2): 12 stacked (2, n_hidden, n_hidden) weights
    w_mid = nrm((12, 2, n_hidden, n_hidden))
    b_mid = nrm((12, n_hidden))

    # final 1x1 conv, stored transposed -> (c_out, n_hidden) for the
    # lane-dense (c_out, Bb*T) output matmul
    wf_t = nrm((output_size, n_hidden))
    bf = nrm((output_size, 1))

    b_all = jnp.concatenate([jnp.stack([b1_0, b2_0, bd_0]), b_mid], axis=0)
    slopes = jnp.full((14,), 0.25, jnp.float32)          # PReLU default slope

    params = (w_in.astype(jnp.bfloat16), w2_0.astype(jnp.bfloat16),
              w_mid.astype(jnp.bfloat16), wf_t.astype(jnp.bfloat16),
              b_all, bf)
    return params, slopes, dilations, has_down


# ----------------------------------------------------------------------------
# Pure-JAX reference (same bf16-operand / f32-accumulate arithmetic)
# ----------------------------------------------------------------------------
def _ref_conv(x, w, b, dilation):
    K = w.shape[0]
    total = dilation * (K - 1)
    left = total // 2
    out = lax.conv_general_dilated(
        x.astype(jnp.bfloat16), w.astype(jnp.bfloat16),
        window_strides=(1,), padding=[(left, total - left)],
        rhs_dilation=(dilation,), dimension_numbers=("NWC", "WIO", "NWC"),
        preferred_element_type=jnp.float32)
    return out + b.reshape(1, 1, -1).astype(jnp.float32)


def generator_forward_ref(x, slopes, params, dilations, has_down):
    w_in, w0c2, w_mid, wf_t, b_all, bf = params

    def prelu(v, a):
        return jnp.where(v >= 0.0, v, a * v)

    # block 0 (K = 1)
    res = _ref_conv(x, w_in[1][None], b_all[2], 1) if has_down else x
    h = prelu(_ref_conv(x, w_in[0][None], b_all[0], 1), slopes[0])
    y = prelu(_ref_conv(h, w0c2[None], b_all[1], 1), slopes[1]) + res

    # blocks 1..6 (K = 2)
    for i, d in enumerate(dilations):
        h = prelu(_ref_conv(y, w_mid[2 * i], b_all[3 + 2 * i], d),
                  slopes[2 + 2 * i])
        y = prelu(_ref_conv(h, w_mid[2 * i + 1], b_all[4 + 2 * i], d),
                  slopes[3 + 2 * i]) + y

    wf = jnp.transpose(wf_t)[None]                       # (1, n_hidden, c_out)
    return jnp.tanh(_ref_conv(y, wf, bf[:, 0], 1))


# ----------------------------------------------------------------------------
if __name__ == "__main__":
    B, T = 2, 16
    input_size, output_size = 3, 1     # Generator: "3 to 1" TCN
    n_hidden = 80                      # TCN default n_hidden

    key = jax.random.PRNGKey(0)
    k_x, k_p = jax.random.split(key)
    x = jax.random.normal(k_x, (B, T, input_size), dtype=jnp.float32)

    params, slopes, dilations, has_down = init_generator_params(
        k_p, input_size, output_size, n_hidden)

    out = generator_forward(x, slopes, params, dilations, has_down)
    out = jax.block_until_ready(out)
    assert out.shape == (B, T, output_size), out.shape

    ref = jax.block_until_ready(
        generator_forward_ref(x, slopes, params, dilations, has_down))
    max_err = float(jnp.max(jnp.abs(out - ref)))
    assert jnp.allclose(out, ref, rtol=3e-3, atol=3e-5), max_err

    print("KERNEL_OK")
</pallas_src>

<mosaic_0001>
module attributes {stable_mosaic.version = 11 : i64} {
  func.func @kernel(%arg0: i32, %arg1: memref<14xf32, #tpu.memory_space<smem>>, %arg2: memref<16x16x3xf32, #tpu.memory_space<vmem>>, %arg3: memref<2x3x80xbf16, #tpu.memory_space<vmem>>, %arg4: memref<80x80xbf16, #tpu.memory_space<vmem>>, %arg5: memref<12x2x80x80xbf16, #tpu.memory_space<vmem>>, %arg6: memref<1x80xbf16, #tpu.memory_space<vmem>>, %arg7: memref<15x80xf32, #tpu.memory_space<vmem>>, %arg8: memref<1x1xf32, #tpu.memory_space<vmem>>, %arg9: memref<1x1x256xf32, #tpu.memory_space<vmem>>, %arg10: memref<16x48x80xf32, #tpu.memory_space<vmem>>) attributes {dimension_semantics = [#tpu.dimension_semantics<parallel>], iteration_bounds = array<i64: 1>, scalar_prefetch = 0 : i64, scratch_operands = 1 : i64, tpu.core_type = #tpu.core_type<tc>, window_params = [{transform_indices = @transform_0, window_bounds = array<i64: 14>}, {transform_indices = @transform_1, window_bounds = array<i64: 16, 16, 3>}, {pipeline_mode = #tpu.pipeline_mode<synchronous>, transform_indices = @transform_2, window_bounds = array<i64: 2, 3, 80>}, {pipeline_mode = #tpu.pipeline_mode<synchronous>, transform_indices = @transform_3, window_bounds = array<i64: 80, 80>}, {pipeline_mode = #tpu.pipeline_mode<synchronous>, transform_indices = @transform_4, window_bounds = array<i64: 12, 2, 80, 80>}, {pipeline_mode = #tpu.pipeline_mode<synchronous>, transform_indices = @transform_5, window_bounds = array<i64: 1, 80>}, {pipeline_mode = #tpu.pipeline_mode<synchronous>, transform_indices = @transform_6, window_bounds = array<i64: 15, 80>}, {pipeline_mode = #tpu.pipeline_mode<synchronous>, transform_indices = @transform_7, window_bounds = array<i64: 1, 1>}, {transform_indices = @transform_8, window_bounds = array<i64: 1, 1, 256>}]} {
    %cst = arith.constant 0.000000e+00 : f32
    %0 = vector.broadcast %cst : f32 to vector<16x16x80xf32>
    %c0 = arith.constant 0 : index
    %c0_0 = arith.constant 0 : index
    %c0_1 = arith.constant 0 : index
    %1 = vector.load %arg10[%c0, %c0_0, %c0_1] : memref<16x48x80xf32, #tpu.memory_space<vmem>>, vector<16x16x80xf32>
    tpu.vector_store %arg10[%c0, %c0_0, %c0_1], %0 {strides = array<i32>} : memref<16x48x80xf32, #tpu.memory_space<vmem>>, vector<16x16x80xf32>,
    %cst_2 = arith.constant 0.000000e+00 : f32
    %2 = vector.broadcast %cst_2 : f32 to vector<16x16x80xf32>
    %c0_3 = arith.constant 0 : index
    %c32 = arith.constant 32 : index
    %c0_4 = arith.constant 0 : index
    %3 = vector.load %arg10[%c0_3, %c32, %c0_4] : memref<16x48x80xf32, #tpu.memory_space<vmem>>, vector<16x16x80xf32>
    tpu.vector_store %arg10[%c0_3, %c32, %c0_4], %2 {strides = array<i32>} : memref<16x48x80xf32, #tpu.memory_space<vmem>>, vector<16x16x80xf32>,
    %c0_5 = arith.constant 0 : index
    %c0_6 = arith.constant 0 : index
    %c0_7 = arith.constant 0 : index
    %4 = vector.load %arg2[%c0_5, %c0_6, %c0_7] : memref<16x16x3xf32, #tpu.memory_space<vmem>>, vector<16x16x3xf32>
    %5 = vector.shape_cast %4 : vector<16x16x3xf32> to vector<256x3xf32>
    %c1 = arith.constant 1 : index
    %c0_8 = arith.constant 0 : index
    %c0_9 = arith.constant 0 : index
    %6 = vector.load %arg3[%c1, %c0_8, %c0_9] : memref<2x3x80xbf16, #tpu.memory_space<vmem>>, vector<1x3x80xbf16>
    %7 = vector.shape_cast %6 : vector<1x3x80xbf16> to vector<3x80xbf16>
    %8 = arith.truncf %5 : vector<256x3xf32> to vector<256x3xbf16>
    %cst_10 = arith.constant dense<0.000000e+00> : vector<256x80xf32>
    %9 = tpu.matmul %8, %7, %cst_10 {dimension_numbers = #tpu.dot_dimension_numbers<[1], [0], [0], [1], [0, 0, 1, 1], [], []>} : vector<256x3xbf16>, vector<3x80xbf16>, vector<256x80xf32> -> vector<256x80xf32>
    %c2 = arith.constant 2 : index
    %c0_11 = arith.constant 0 : index
    %10 = vector.load %arg7[%c2, %c0_11] : memref<15x80xf32, #tpu.memory_space<vmem>>, vector<1x80xf32>
    %11 = vector.broadcast %10 : vector<1x80xf32> to vector<256x80xf32>
    %12 = arith.addf %9, %11 : vector<256x80xf32>
    %c0_12 = arith.constant 0 : index
    %c0_13 = arith.constant 0 : index
    %c0_14 = arith.constant 0 : index
    %13 = vector.load %arg3[%c0_12, %c0_13, %c0_14] : memref<2x3x80xbf16, #tpu.memory_space<vmem>>, vector<1x3x80xbf16>
    %14 = vector.shape_cast %13 : vector<1x3x80xbf16> to vector<3x80xbf16>
    %15 = arith.truncf %5 : vector<256x3xf32> to vector<256x3xbf16>
    %cst_15 = arith.constant dense<0.000000e+00> : vector<256x80xf32>
    %16 = tpu.matmul %15, %14, %cst_15 {dimension_numbers = #tpu.dot_dimension_numbers<[1], [0], [0], [1], [0, 0, 1, 1], [], []>} : vector<256x3xbf16>, vector<3x80xbf16>, vector<256x80xf32> -> vector<256x80xf32>
    %c0_16 = arith.constant 0 : index
    %c0_17 = arith.constant 0 : index
    %17 = vector.load %arg7[%c0_16, %c0_17] : memref<15x80xf32, #tpu.memory_space<vmem>>, vector<1x80xf32>
    %18 = vector.broadcast %17 : vector<1x80xf32> to vector<256x80xf32>
    %19 = arith.addf %16, %18 : vector<256x80xf32>
    %c0_18 = arith.constant 0 : index
    %20 = memref.load %arg1[%c0_18] : memref<14xf32, #tpu.memory_space<smem>>
    %cst_19 = arith.constant 0.000000e+00 : f32
    %21 = vector.broadcast %cst_19 : f32 to vector<256x80xf32>
    %22 = arith.cmpf oge, %19, %21 : vector<256x80xf32>
    %23 = vector.broadcast %20 : f32 to vector<256x80xf32>
    %24 = arith.mulf %23, %19 : vector<256x80xf32>
    %25 = arith.select %22, %19, %24 : vector<256x80xi1>, vector<256x80xf32>
    %c0_20 = arith.constant 0 : index
    %c0_21 = arith.constant 0 : index
    %26 = vector.load %arg4[%c0_20, %c0_21] : memref<80x80xbf16, #tpu.memory_space<vmem>>, vector<80x80xbf16>
    %27 = arith.truncf %25 : vector<256x80xf32> to vector<256x80xbf16>
    %cst_22 = arith.constant dense<0.000000e+00> : vector<256x80xf32>
    %28 = tpu.matmul %27, %26, %cst_22 {dimension_numbers = #tpu.dot_dimension_numbers<[1], [0], [0], [1], [0, 0, 1, 1], [], []>} : vector<256x80xbf16>, vector<80x80xbf16>, vector<256x80xf32> -> vector<256x80xf32>
    %c1_23 = arith.constant 1 : index
    %c0_24 = arith.constant 0 : index
    %29 = vector.load %arg7[%c1_23, %c0_24] : memref<15x80xf32, #tpu.memory_space<vmem>>, vector<1x80xf32>
    %30 = vector.broadcast %29 : vector<1x80xf32> to vector<256x80xf32>
    %31 = arith.addf %28, %30 : vector<256x80xf32>
    %c1_25 = arith.constant 1 : index
    %32 = memref.load %arg1[%c1_25] : memref<14xf32, #tpu.memory_space<smem>>
    %cst_26 = arith.constant 0.000000e+00 : f32
    %33 = vector.broadcast %cst_26 : f32 to vector<256x80xf32>
    %34 = arith.cmpf oge, %31, %33 : vector<256x80xf32>
    %35 = vector.broadcast %32 : f32 to vector<256x80xf32>
    %36 = arith.mulf %35, %31 : vector<256x80xf32>
    %37 = arith.select %34, %31, %36 : vector<256x80xi1>, vector<256x80xf32>
    %38 = arith.addf %37, %12 : vector<256x80xf32>
    %c3 = arith.constant 3 : index
    %c0_27 = arith.constant 0 : index
    %39 = vector.load %arg7[%c3, %c0_27] : memref<15x80xf32, #tpu.memory_space<vmem>>, vector<1x80xf32>
    %40 = vector.shape_cast %38 : vector<256x80xf32> to vector<16x16x80xf32>
    %c0_28 = arith.constant 0 : index
    %c16 = arith.constant 16 : index
    %c0_29 = arith.constant 0 : index
    %41 = vector.load %arg10[%c0_28, %c16, %c0_29] : memref<16x48x80xf32, #tpu.memory_space<vmem>>, vector<16x16x80xf32>
    tpu.vector_store %arg10[%c0_28, %c16, %c0_29], %40 {strides = array<i32>} : memref<16x48x80xf32, #tpu.memory_space<vmem>>, vector<16x16x80xf32>,
    %c0_30 = arith.constant 0 : index
    %c16_31 = arith.constant 16 : index
    %c0_32 = arith.constant 0 : index
    %42 = vector.load %arg10[%c0_30, %c16_31, %c0_32] : memref<16x48x80xf32, #tpu.memory_space<vmem>>, vector<16x16x80xf32>
    %43 = vector.shape_cast %42 : vector<16x16x80xf32> to vector<256x80xf32>
    %c0_33 = arith.constant 0 : index
    %c0_34 = arith.constant 0 : index
    %c0_35 = arith.constant 0 : index
    %c0_36 = arith.constant 0 : index
    %44 = vector.load %arg5[%c0_33, %c0_34, %c0_35, %c0_36] : memref<12x2x80x80xbf16, #tpu.memory_space<vmem>>, vector<1x1x80x80xbf16>
    %45 = vector.shape_cast %44 : vector<1x1x80x80xbf16> to vector<80x80xbf16>
    %46 = arith.truncf %43 : vector<256x80xf32> to vector<256x80xbf16>
    %cst_37 = arith.constant dense<0.000000e+00> : vector<256x80xf32>
    %47 = tpu.matmul %46, %45, %cst_37 {dimension_numbers = #tpu.dot_dimension_numbers<[1], [0], [0], [1], [0, 0, 1, 1], [], []>} : vector<256x80xbf16>, vector<80x80xbf16>, vector<256x80xf32> -> vector<256x80xf32>
    %48 = vector.broadcast %39 : vector<1x80xf32> to vector<256x80xf32>
    %49 = arith.addf %48, %47 : vector<256x80xf32>
    %c0_38 = arith.constant 0 : index
    %c17 = arith.constant 17 : index
    %c0_39 = arith.constant 0 : index
    %50 = vector.load %arg10[%c0_38, %c17, %c0_39] : memref<16x48x80xf32, #tpu.memory_space<vmem>>, vector<16x16x80xf32>
    %51 = vector.shape_cast %50 : vector<16x16x80xf32> to vector<256x80xf32>
    %c0_40 = arith.constant 0 : index
    %c1_41 = arith.constant 1 : index
    %c0_42 = arith.constant 0 : index
    %c0_43 = arith.constant 0 : index
    %52 = vector.load %arg5[%c0_40, %c1_41, %c0_42, %c0_43] : memref<12x2x80x80xbf16, #tpu.memory_space<vmem>>, vector<1x1x80x80xbf16>
    %53 = vector.shape_cast %52 : vector<1x1x80x80xbf16> to vector<80x80xbf16>
    %54 = arith.truncf %51 : vector<256x80xf32> to vector<256x80xbf16>
    %cst_44 = arith.constant dense<0.000000e+00> : vector<256x80xf32>
    %55 = tpu.matmul %54, %53, %cst_44 {dimension_numbers = #tpu.dot_dimension_numbers<[1], [0], [0], [1], [0, 0, 1, 1], [], []>} : vector<256x80xbf16>, vector<80x80xbf16>, vector<256x80xf32> -> vector<256x80xf32>
    %56 = arith.addf %49, %55 : vector<256x80xf32>
    %c2_45 = arith.constant 2 : index
    %57 = memref.load %arg1[%c2_45] : memref<14xf32, #tpu.memory_space<smem>>
    %cst_46 = arith.constant 0.000000e+00 : f32
    %58 = vector.broadcast %cst_46 : f32 to vector<256x80xf32>
    %59 = arith.cmpf oge, %56, %58 : vector<256x80xf32>
    %60 = vector.broadcast %57 : f32 to vector<256x80xf32>
    %61 = arith.mulf %60, %56 : vector<256x80xf32>
    %62 = arith.select %59, %56, %61 : vector<256x80xi1>, vector<256x80xf32>
    %c4 = arith.constant 4 : index
    %c0_47 = arith.constant 0 : index
    %63 = vector.load %arg7[%c4, %c0_47] : memref<15x80xf32, #tpu.memory_space<vmem>>, vector<1x80xf32>
    %64 = vector.shape_cast %62 : vector<256x80xf32> to vector<16x16x80xf32>
    %c0_48 = arith.constant 0 : index
    %c16_49 = arith.constant 16 : index
    %c0_50 = arith.constant 0 : index
    %65 = vector.load %arg10[%c0_48, %c16_49, %c0_50] : memref<16x48x80xf32, #tpu.memory_space<vmem>>, vector<16x16x80xf32>
    tpu.vector_store %arg10[%c0_48, %c16_49, %c0_50], %64 {strides = array<i32>} : memref<16x48x80xf32, #tpu.memory_space<vmem>>, vector<16x16x80xf32>,
    %c0_51 = arith.constant 0 : index
    %c16_52 = arith.constant 16 : index
    %c0_53 = arith.constant 0 : index
    %66 = vector.load %arg10[%c0_51, %c16_52, %c0_53] : memref<16x48x80xf32, #tpu.memory_space<vmem>>, vector<16x16x80xf32>
    %67 = vector.shape_cast %66 : vector<16x16x80xf32> to vector<256x80xf32>
    %c1_54 = arith.constant 1 : index
    %c0_55 = arith.constant 0 : index
    %c0_56 = arith.constant 0 : index
    %c0_57 = arith.constant 0 : index
    %68 = vector.load %arg5[%c1_54, %c0_55, %c0_56, %c0_57] : memref<12x2x80x80xbf16, #tpu.memory_space<vmem>>, vector<1x1x80x80xbf16>
    %69 = vector.shape_cast %68 : vector<1x1x80x80xbf16> to vector<80x80xbf16>
    %70 = arith.truncf %67 : vector<256x80xf32> to vector<256x80xbf16>
    %cst_58 = arith.constant dense<0.000000e+00> : vector<256x80xf32>
    %71 = tpu.matmul %70, %69, %cst_58 {dimension_numbers = #tpu.dot_dimension_numbers<[1], [0], [0], [1], [0, 0, 1, 1], [], []>} : vector<256x80xbf16>, vector<80x80xbf16>, vector<256x80xf32> -> vector<256x80xf32>
    %72 = vector.broadcast %63 : vector<1x80xf32> to vector<256x80xf32>
    %73 = arith.addf %72, %71 : vector<256x80xf32>
    %c0_59 = arith.constant 0 : index
    %c17_60 = arith.constant 17 : index
    %c0_61 = arith.constant 0 : index
    %74 = vector.load %arg10[%c0_59, %c17_60, %c0_61] : memref<16x48x80xf32, #tpu.memory_space<vmem>>, vector<16x16x80xf32>
    %75 = vector.shape_cast %74 : vector<16x16x80xf32> to vector<256x80xf32>
    %c1_62 = arith.constant 1 : index
    %c1_63 = arith.constant 1 : index
    %c0_64 = arith.constant 0 : index
    %c0_65 = arith.constant 0 : index
    %76 = vector.load %arg5[%c1_62, %c1_63, %c0_64, %c0_65] : memref<12x2x80x80xbf16, #tpu.memory_space<vmem>>, vector<1x1x80x80xbf16>
    %77 = vector.shape_cast %76 : vector<1x1x80x80xbf16> to vector<80x80xbf16>
    %78 = arith.truncf %75 : vector<256x80xf32> to vector<256x80xbf16>
    %cst_66 = arith.constant dense<0.000000e+00> : vector<256x80xf32>
    %79 = tpu.matmul %78, %77, %cst_66 {dimension_numbers = #tpu.dot_dimension_numbers<[1], [0], [0], [1], [0, 0, 1, 1], [], []>} : vector<256x80xbf16>, vector<80x80xbf16>, vector<256x80xf32> -> vector<256x80xf32>
    %80 = arith.addf %73, %79 : vector<256x80xf32>
    %c3_67 = arith.constant 3 : index
    %81 = memref.load %arg1[%c3_67] : memref<14xf32, #tpu.memory_space<smem>>
    %cst_68 = arith.constant 0.000000e+00 : f32
    %82 = vector.broadcast %cst_68 : f32 to vector<256x80xf32>
    %83 = arith.cmpf oge, %80, %82 : vector<256x80xf32>
    %84 = vector.broadcast %81 : f32 to vector<256x80xf32>
    %85 = arith.mulf %84, %80 : vector<256x80xf32>
    %86 = arith.select %83, %80, %85 : vector<256x80xi1>, vector<256x80xf32>
    %87 = arith.addf %86, %38 : vector<256x80xf32>
    %c5 = arith.constant 5 : index
    %c0_69 = arith.constant 0 : index
    %88 = vector.load %arg7[%c5, %c0_69] : memref<15x80xf32, #tpu.memory_space<vmem>>, vector<1x80xf32>
    %89 = vector.shape_cast %87 : vector<256x80xf32> to vector<16x16x80xf32>
    %c0_70 = arith.constant 0 : index
    %c16_71 = arith.constant 16 : index
    %c0_72 = arith.constant 0 : index
    %90 = vector.load %arg10[%c0_70, %c16_71, %c0_72] : memref<16x48x80xf32, #tpu.memory_space<vmem>>, vector<16x16x80xf32>
    tpu.vector_store %arg10[%c0_70, %c16_71, %c0_72], %89 {strides = array<i32>} : memref<16x48x80xf32, #tpu.memory_space<vmem>>, vector<16x16x80xf32>,
    %c0_73 = arith.constant 0 : index
    %c15 = arith.constant 15 : index
    %c0_74 = arith.constant 0 : index
    %91 = vector.load %arg10[%c0_73, %c15, %c0_74] : memref<16x48x80xf32, #tpu.memory_space<vmem>>, vector<16x16x80xf32>
    %92 = vector.shape_cast %91 : vector<16x16x80xf32> to vector<256x80xf32>
    %c2_75 = arith.constant 2 : index
    %c0_76 = arith.constant 0 : index
    %c0_77 = arith.constant 0 : index
    %c0_78 = arith.constant 0 : index
    %93 = vector.load %arg5[%c2_75, %c0_76, %c0_77, %c0_78] : memref<12x2x80x80xbf16, #tpu.memory_space<vmem>>, vector<1x1x80x80xbf16>
    %94 = vector.shape_cast %93 : vector<1x1x80x80xbf16> to vector<80x80xbf16>
    %95 = arith.truncf %92 : vector<256x80xf32> to vector<256x80xbf16>
    %cst_79 = arith.constant dense<0.000000e+00> : vector<256x80xf32>
    %96 = tpu.matmul %95, %94, %cst_79 {dimension_numbers = #tpu.dot_dimension_numbers<[1], [0], [0], [1], [0, 0, 1, 1], [], []>} : vector<256x80xbf16>, vector<80x80xbf16>, vector<256x80xf32> -> vector<256x80xf32>
    %97 = vector.broadcast %88 : vector<1x80xf32> to vector<256x80xf32>
    %98 = arith.addf %97, %96 : vector<256x80xf32>
    %c0_80 = arith.constant 0 : index
    %c17_81 = arith.constant 17 : index
    %c0_82 = arith.constant 0 : index
    %99 = vector.load %arg10[%c0_80, %c17_81, %c0_82] : memref<16x48x80xf32, #tpu.memory_space<vmem>>, vector<16x16x80xf32>
    %100 = vector.shape_cast %99 : vector<16x16x80xf32> to vector<256x80xf32>
    %c2_83 = arith.constant 2 : index
    %c1_84 = arith.constant 1 : index
    %c0_85 = arith.constant 0 : index
    %c0_86 = arith.constant 0 : index
    %101 = vector.load %arg5[%c2_83, %c1_84, %c0_85, %c0_86] : memref<12x2x80x80xbf16, #tpu.memory_space<vmem>>, vector<1x1x80x80xbf16>
    %102 = vector.shape_cast %101 : vector<1x1x80x80xbf16> to vector<80x80xbf16>
    %103 = arith.truncf %100 : vector<256x80xf32> to vector<256x80xbf16>
    %cst_87 = arith.constant dense<0.000000e+00> : vector<256x80xf32>
    %104 = tpu.matmul %103, %102, %cst_87 {dimension_numbers = #tpu.dot_dimension_numbers<[1], [0], [0], [1], [0, 0, 1, 1], [], []>} : vector<256x80xbf16>, vector<80x80xbf16>, vector<256x80xf32> -> vector<256x80xf32>
    %105 = arith.addf %98, %104 : vector<256x80xf32>
    %c4_88 = arith.constant 4 : index
    %106 = memref.load %arg1[%c4_88] : memref<14xf32, #tpu.memory_space<smem>>
    %cst_89 = arith.constant 0.000000e+00 : f32
    %107 = vector.broadcast %cst_89 : f32 to vector<256x80xf32>
    %108 = arith.cmpf oge, %105, %107 : vector<256x80xf32>
    %109 = vector.broadcast %106 : f32 to vector<256x80xf32>
    %110 = arith.mulf %109, %105 : vector<256x80xf32>
    %111 = arith.select %108, %105, %110 : vector<256x80xi1>, vector<256x80xf32>
    %c6 = arith.constant 6 : index
    %c0_90 = arith.constant 0 : index
    %112 = vector.load %arg7[%c6, %c0_90] : memref<15x80xf32, #tpu.memory_space<vmem>>, vector<1x80xf32>
    %113 = vector.shape_cast %111 : vector<256x80xf32> to vector<16x16x80xf32>
    %c0_91 = arith.constant 0 : index
    %c16_92 = arith.constant 16 : index
    %c0_93 = arith.constant 0 : index
    %114 = vector.load %arg10[%c0_91, %c16_92, %c0_93] : memref<16x48x80xf32, #tpu.memory_space<vmem>>, vector<16x16x80xf32>
    tpu.vector_store %arg10[%c0_91, %c16_92, %c0_93], %113 {strides = array<i32>} : memref<16x48x80xf32, #tpu.memory_space<vmem>>, vector<16x16x80xf32>,
    %c0_94 = arith.constant 0 : index
    %c15_95 = arith.constant 15 : index
    %c0_96 = arith.constant 0 : index
    %115 = vector.load %arg10[%c0_94, %c15_95, %c0_96] : memref<16x48x80xf32, #tpu.memory_space<vmem>>, vector<16x16x80xf32>
    %116 = vector.shape_cast %115 : vector<16x16x80xf32> to vector<256x80xf32>
    %c3_97 = arith.constant 3 : index
    %c0_98 = arith.constant 0 : index
    %c0_99 = arith.constant 0 : index
    %c0_100 = arith.constant 0 : index
    %117 = vector.load %arg5[%c3_97, %c0_98, %c0_99, %c0_100] : memref<12x2x80x80xbf16, #tpu.memory_space<vmem>>, vector<1x1x80x80xbf16>
    %118 = vector.shape_cast %117 : vector<1x1x80x80xbf16> to vector<80x80xbf16>
    %119 = arith.truncf %116 : vector<256x80xf32> to vector<256x80xbf16>
    %cst_101 = arith.constant dense<0.000000e+00> : vector<256x80xf32>
    %120 = tpu.matmul %119, %118, %cst_101 {dimension_numbers = #tpu.dot_dimension_numbers<[1], [0], [0], [1], [0, 0, 1, 1], [], []>} : vector<256x80xbf16>, vector<80x80xbf16>, vector<256x80xf32> -> vector<256x80xf32>
    %121 = vector.broadcast %112 : vector<1x80xf32> to vector<256x80xf32>
    %122 = arith.addf %121, %120 : vector<256x80xf32>
    %c0_102 = arith.constant 0 : index
    %c17_103 = arith.constant 17 : index
    %c0_104 = arith.constant 0 : index
    %123 = vector.load %arg10[%c0_102, %c17_103, %c0_104] : memref<16x48x80xf32, #tpu.memory_space<vmem>>, vector<16x16x80xf32>
    %124 = vector.shape_cast %123 : vector<16x16x80xf32> to vector<256x80xf32>
    %c3_105 = arith.constant 3 : index
    %c1_106 = arith.constant 1 : index
    %c0_107 = arith.constant 0 : index
    %c0_108 = arith.constant 0 : index
    %125 = vector.load %arg5[%c3_105, %c1_106, %c0_107, %c0_108] : memref<12x2x80x80xbf16, #tpu.memory_space<vmem>>, vector<1x1x80x80xbf16>
    %126 = vector.shape_cast %125 : vector<1x1x80x80xbf16> to vector<80x80xbf16>
    %127 = arith.truncf %124 : vector<256x80xf32> to vector<256x80xbf16>
    %cst_109 = arith.constant dense<0.000000e+00> : vector<256x80xf32>
    %128 = tpu.matmul %127, %126, %cst_109 {dimension_numbers = #tpu.dot_dimension_numbers<[1], [0], [0], [1], [0, 0, 1, 1], [], []>} : vector<256x80xbf16>, vector<80x80xbf16>, vector<256x80xf32> -> vector<256x80xf32>
    %129 = arith.addf %122, %128 : vector<256x80xf32>
    %c5_110 = arith.constant 5 : index
    %130 = memref.load %arg1[%c5_110] : memref<14xf32, #tpu.memory_space<smem>>
    %cst_111 = arith.constant 0.000000e+00 : f32
    %131 = vector.broadcast %cst_111 : f32 to vector<256x80xf32>
    %132 = arith.cmpf oge, %129, %131 : vector<256x80xf32>
    %133 = vector.broadcast %130 : f32 to vector<256x80xf32>
    %134 = arith.mulf %133, %129 : vector<256x80xf32>
    %135 = arith.select %132, %129, %134 : vector<256x80xi1>, vector<256x80xf32>
    %136 = arith.addf %135, %87 : vector<256x80xf32>
    %c7 = arith.constant 7 : index
    %c0_112 = arith.constant 0 : index
    %137 = vector.load %arg7[%c7, %c0_112] : memref<15x80xf32, #tpu.memory_space<vmem>>, vector<1x80xf32>
    %138 = vector.shape_cast %136 : vector<256x80xf32> to vector<16x16x80xf32>
    %c0_113 = arith.constant 0 : index
    %c16_114 = arith.constant 16 : index
    %c0_115 = arith.constant 0 : index
    %139 = vector.load %arg10[%c0_113, %c16_114, %c0_115] : memref<16x48x80xf32, #tpu.memory_space<vmem>>, vector<16x16x80xf32>
    tpu.vector_store %arg10[%c0_113, %c16_114, %c0_115], %138 {strides = array<i32>} : memref<16x48x80xf32, #tpu.memory_space<vmem>>, vector<16x16x80xf32>,
    %c0_116 = arith.constant 0 : index
    %c14 = arith.constant 14 : index
    %c0_117 = arith.constant 0 : index
    %140 = vector.load %arg10[%c0_116, %c14, %c0_117] : memref<16x48x80xf32, #tpu.memory_space<vmem>>, vector<16x16x80xf32>
    %141 = vector.shape_cast %140 : vector<16x16x80xf32> to vector<256x80xf32>
    %c4_118 = arith.constant 4 : index
    %c0_119 = arith.constant 0 : index
    %c0_120 = arith.constant 0 : index
    %c0_121 = arith.constant 0 : index
    %142 = vector.load %arg5[%c4_118, %c0_119, %c0_120, %c0_121] : memref<12x2x80x80xbf16, #tpu.memory_space<vmem>>, vector<1x1x80x80xbf16>
    %143 = vector.shape_cast %142 : vector<1x1x80x80xbf16> to vector<80x80xbf16>
    %144 = arith.truncf %141 : vector<256x80xf32> to vector<256x80xbf16>
    %cst_122 = arith.constant dense<0.000000e+00> : vector<256x80xf32>
    %145 = tpu.matmul %144, %143, %cst_122 {dimension_numbers = #tpu.dot_dimension_numbers<[1], [0], [0], [1], [0, 0, 1, 1], [], []>} : vector<256x80xbf16>, vector<80x80xbf16>, vector<256x80xf32> -> vector<256x80xf32>
    %146 = vector.broadcast %137 : vector<1x80xf32> to vector<256x80xf32>
    %147 = arith.addf %146, %145 : vector<256x80xf32>
    %c0_123 = arith.constant 0 : index
    %c18 = arith.constant 18 : index
    %c0_124 = arith.constant 0 : index
    %148 = vector.load %arg10[%c0_123, %c18, %c0_124] : memref<16x48x80xf32, #tpu.memory_space<vmem>>, vector<16x16x80xf32>
    %149 = vector.shape_cast %148 : vector<16x16x80xf32> to vector<256x80xf32>
    %c4_125 = arith.constant 4 : index
    %c1_126 = arith.constant 1 : index
    %c0_127 = arith.constant 0 : index
    %c0_128 = arith.constant 0 : index
    %150 = vector.load %arg5[%c4_125, %c1_126, %c0_127, %c0_128] : memref<12x2x80x80xbf16, #tpu.memory_space<vmem>>, vector<1x1x80x80xbf16>
    %151 = vector.shape_cast %150 : vector<1x1x80x80xbf16> to vector<80x80xbf16>
    %152 = arith.truncf %149 : vector<256x80xf32> to vector<256x80xbf16>
    %cst_129 = arith.constant dense<0.000000e+00> : vector<256x80xf32>
    %153 = tpu.matmul %152, %151, %cst_129 {dimension_numbers = #tpu.dot_dimension_numbers<[1], [0], [0], [1], [0, 0, 1, 1], [], []>} : vector<256x80xbf16>, vector<80x80xbf16>, vector<256x80xf32> -> vector<256x80xf32>
    %154 = arith.addf %147, %153 : vector<256x80xf32>
    %c6_130 = arith.constant 6 : index
    %155 = memref.load %arg1[%c6_130] : memref<14xf32, #tpu.memory_space<smem>>
    %cst_131 = arith.constant 0.000000e+00 : f32
    %156 = vector.broadcast %cst_131 : f32 to vector<256x80xf32>
    %157 = arith.cmpf oge, %154, %156 : vector<256x80xf32>
    %158 = vector.broadcast %155 : f32 to vector<256x80xf32>
    %159 = arith.mulf %158, %154 : vector<256x80xf32>
    %160 = arith.select %157, %154, %159 : vector<256x80xi1>, vector<256x80xf32>
    %c8 = arith.constant 8 : index
    %c0_132 = arith.constant 0 : index
    %161 = vector.load %arg7[%c8, %c0_132] : memref<15x80xf32, #tpu.memory_space<vmem>>, vector<1x80xf32>
    %162 = vector.shape_cast %160 : vector<256x80xf32> to vector<16x16x80xf32>
    %c0_133 = arith.constant 0 : index
    %c16_134 = arith.constant 16 : index
    %c0_135 = arith.constant 0 : index
    %163 = vector.load %arg10[%c0_133, %c16_134, %c0_135] : memref<16x48x80xf32, #tpu.memory_space<vmem>>, vector<16x16x80xf32>
    tpu.vector_store %arg10[%c0_133, %c16_134, %c0_135], %162 {strides = array<i32>} : memref<16x48x80xf32, #tpu.memory_space<vmem>>, vector<16x16x80xf32>,
    %c0_136 = arith.constant 0 : index
    %c14_137 = arith.constant 14 : index
    %c0_138 = arith.constant 0 : index
    %164 = vector.load %arg10[%c0_136, %c14_137, %c0_138] : memref<16x48x80xf32, #tpu.memory_space<vmem>>, vector<16x16x80xf32>
    %165 = vector.shape_cast %164 : vector<16x16x80xf32> to vector<256x80xf32>
    %c5_139 = arith.constant 5 : index
    %c0_140 = arith.constant 0 : index
    %c0_141 = arith.constant 0 : index
    %c0_142 = arith.constant 0 : index
    %166 = vector.load %arg5[%c5_139, %c0_140, %c0_141, %c0_142] : memref<12x2x80x80xbf16, #tpu.memory_space<vmem>>, vector<1x1x80x80xbf16>
    %167 = vector.shape_cast %166 : vector<1x1x80x80xbf16> to vector<80x80xbf16>
    %168 = arith.truncf %165 : vector<256x80xf32> to vector<256x80xbf16>
    %cst_143 = arith.constant dense<0.000000e+00> : vector<256x80xf32>
    %169 = tpu.matmul %168, %167, %cst_143 {dimension_numbers = #tpu.dot_dimension_numbers<[1], [0], [0], [1], [0, 0, 1, 1], [], []>} : vector<256x80xbf16>, vector<80x80xbf16>, vector<256x80xf32> -> vector<256x80xf32>
    %170 = vector.broadcast %161 : vector<1x80xf32> to vector<256x80xf32>
    %171 = arith.addf %170, %169 : vector<256x80xf32>
    %c0_144 = arith.constant 0 : index
    %c18_145 = arith.constant 18 : index
    %c0_146 = arith.constant 0 : index
    %172 = vector.load %arg10[%c0_144, %c18_145, %c0_146] : memref<16x48x80xf32, #tpu.memory_space<vmem>>, vector<16x16x80xf32>
    %173 = vector.shape_cast %172 : vector<16x16x80xf32> to vector<256x80xf32>
    %c5_147 = arith.constant 5 : index
    %c1_148 = arith.constant 1 : index
    %c0_149 = arith.constant 0 : index
    %c0_150 = arith.constant 0 : index
    %174 = vector.load %arg5[%c5_147, %c1_148, %c0_149, %c0_150] : memref<12x2x80x80xbf16, #tpu.memory_space<vmem>>, vector<1x1x80x80xbf16>
    %175 = vector.shape_cast %174 : vector<1x1x80x80xbf16> to vector<80x80xbf16>
    %176 = arith.truncf %173 : vector<256x80xf32> to vector<256x80xbf16>
    %cst_151 = arith.constant dense<0.000000e+00> : vector<256x80xf32>
    %177 = tpu.matmul %176, %175, %cst_151 {dimension_numbers = #tpu.dot_dimension_numbers<[1], [0], [0], [1], [0, 0, 1, 1], [], []>} : vector<256x80xbf16>, vector<80x80xbf16>, vector<256x80xf32> -> vector<256x80xf32>
    %178 = arith.addf %171, %177 : vector<256x80xf32>
    %c7_152 = arith.constant 7 : index
    %179 = memref.load %arg1[%c7_152] : memref<14xf32, #tpu.memory_space<smem>>
    %cst_153 = arith.constant 0.000000e+00 : f32
    %180 = vector.broadcast %cst_153 : f32 to vector<256x80xf32>
    %181 = arith.cmpf oge, %178, %180 : vector<256x80xf32>
    %182 = vector.broadcast %179 : f32 to vector<256x80xf32>
    %183 = arith.mulf %182, %178 : vector<256x80xf32>
    %184 = arith.select %181, %178, %183 : vector<256x80xi1>, vector<256x80xf32>
    %185 = arith.addf %184, %136 : vector<256x80xf32>
    %c9 = arith.constant 9 : index
    %c0_154 = arith.constant 0 : index
    %186 = vector.load %arg7[%c9, %c0_154] : memref<15x80xf32, #tpu.memory_space<vmem>>, vector<1x80xf32>
    %187 = vector.shape_cast %185 : vector<256x80xf32> to vector<16x16x80xf32>
    %c0_155 = arith.constant 0 : index
    %c16_156 = arith.constant 16 : index
    %c0_157 = arith.constant 0 : index
    %188 = vector.load %arg10[%c0_155, %c16_156, %c0_157] : memref<16x48x80xf32, #tpu.memory_space<vmem>>, vector<16x16x80xf32>
    tpu.vector_store %arg10[%c0_155, %c16_156, %c0_157], %187 {strides = array<i32>} : memref<16x48x80xf32, #tpu.memory_space<vmem>>, vector<16x16x80xf32>,
    %c0_158 = arith.constant 0 : index
    %c12 = arith.constant 12 : index
    %c0_159 = arith.constant 0 : index
    %189 = vector.load %arg10[%c0_158, %c12, %c0_159] : memref<16x48x80xf32, #tpu.memory_space<vmem>>, vector<16x16x80xf32>
    %190 = vector.shape_cast %189 : vector<16x16x80xf32> to vector<256x80xf32>
    %c6_160 = arith.constant 6 : index
    %c0_161 = arith.constant 0 : index
    %c0_162 = arith.constant 0 : index
    %c0_163 = arith.constant 0 : index
    %191 = vector.load %arg5[%c6_160, %c0_161, %c0_162, %c0_163] : memref<12x2x80x80xbf16, #tpu.memory_space<vmem>>, vector<1x1x80x80xbf16>
    %192 = vector.shape_cast %191 : vector<1x1x80x80xbf16> to vector<80x80xbf16>
    %193 = arith.truncf %190 : vector<256x80xf32> to vector<256x80xbf16>
    %cst_164 = arith.constant dense<0.000000e+00> : vector<256x80xf32>
    %194 = tpu.matmul %193, %192, %cst_164 {dimension_numbers = #tpu.dot_dimension_numbers<[1], [0], [0], [1], [0, 0, 1, 1], [], []>} : vector<256x80xbf16>, vector<80x80xbf16>, vector<256x80xf32> -> vector<256x80xf32>
    %195 = vector.broadcast %186 : vector<1x80xf32> to vector<256x80xf32>
    %196 = arith.addf %195, %194 : vector<256x80xf32>
    %c0_165 = arith.constant 0 : index
    %c20 = arith.constant 20 : index
    %c0_166 = arith.constant 0 : index
    %197 = vector.load %arg10[%c0_165, %c20, %c0_166] : memref<16x48x80xf32, #tpu.memory_space<vmem>>, vector<16x16x80xf32>
    %198 = vector.shape_cast %197 : vector<16x16x80xf32> to vector<256x80xf32>
    %c6_167 = arith.constant 6 : index
    %c1_168 = arith.constant 1 : index
    %c0_169 = arith.constant 0 : index
    %c0_170 = arith.constant 0 : index
    %199 = vector.load %arg5[%c6_167, %c1_168, %c0_169, %c0_170] : memref<12x2x80x80xbf16, #tpu.memory_space<vmem>>, vector<1x1x80x80xbf16>
    %200 = vector.shape_cast %199 : vector<1x1x80x80xbf16> to vector<80x80xbf16>
    %201 = arith.truncf %198 : vector<256x80xf32> to vector<256x80xbf16>
    %cst_171 = arith.constant dense<0.000000e+00> : vector<256x80xf32>
    %202 = tpu.matmul %201, %200, %cst_171 {dimension_numbers = #tpu.dot_dimension_numbers<[1], [0], [0], [1], [0, 0, 1, 1], [], []>} : vector<256x80xbf16>, vector<80x80xbf16>, vector<256x80xf32> -> vector<256x80xf32>
    %203 = arith.addf %196, %202 : vector<256x80xf32>
    %c8_172 = arith.constant 8 : index
    %204 = memref.load %arg1[%c8_172] : memref<14xf32, #tpu.memory_space<smem>>
    %cst_173 = arith.constant 0.000000e+00 : f32
    %205 = vector.broadcast %cst_173 : f32 to vector<256x80xf32>
    %206 = arith.cmpf oge, %203, %205 : vector<256x80xf32>
    %207 = vector.broadcast %204 : f32 to vector<256x80xf32>
    %208 = arith.mulf %207, %203 : vector<256x80xf32>
    %209 = arith.select %206, %203, %208 : vector<256x80xi1>, vector<256x80xf32>
    %c10 = arith.constant 10 : index
    %c0_174 = arith.constant 0 : index
    %210 = vector.load %arg7[%c10, %c0_174] : memref<15x80xf32, #tpu.memory_space<vmem>>, vector<1x80xf32>
    %211 = vector.shape_cast %209 : vector<256x80xf32> to vector<16x16x80xf32>
    %c0_175 = arith.constant 0 : index
    %c16_176 = arith.constant 16 : index
    %c0_177 = arith.constant 0 : index
    %212 = vector.load %arg10[%c0_175, %c16_176, %c0_177] : memref<16x48x80xf32, #tpu.memory_space<vmem>>, vector<16x16x80xf32>
    tpu.vector_store %arg10[%c0_175, %c16_176, %c0_177], %211 {strides = array<i32>} : memref<16x48x80xf32, #tpu.memory_space<vmem>>, vector<16x16x80xf32>,
    %c0_178 = arith.constant 0 : index
    %c12_179 = arith.constant 12 : index
    %c0_180 = arith.constant 0 : index
    %213 = vector.load %arg10[%c0_178, %c12_179, %c0_180] : memref<16x48x80xf32, #tpu.memory_space<vmem>>, vector<16x16x80xf32>
    %214 = vector.shape_cast %213 : vector<16x16x80xf32> to vector<256x80xf32>
    %c7_181 = arith.constant 7 : index
    %c0_182 = arith.constant 0 : index
    %c0_183 = arith.constant 0 : index
    %c0_184 = arith.constant 0 : index
    %215 = vector.load %arg5[%c7_181, %c0_182, %c0_183, %c0_184] : memref<12x2x80x80xbf16, #tpu.memory_space<vmem>>, vector<1x1x80x80xbf16>
    %216 = vector.shape_cast %215 : vector<1x1x80x80xbf16> to vector<80x80xbf16>
    %217 = arith.truncf %214 : vector<256x80xf32> to vector<256x80xbf16>
    %cst_185 = arith.constant dense<0.000000e+00> : vector<256x80xf32>
    %218 = tpu.matmul %217, %216, %cst_185 {dimension_numbers = #tpu.dot_dimension_numbers<[1], [0], [0], [1], [0, 0, 1, 1], [], []>} : vector<256x80xbf16>, vector<80x80xbf16>, vector<256x80xf32> -> vector<256x80xf32>
    %219 = vector.broadcast %210 : vector<1x80xf32> to vector<256x80xf32>
    %220 = arith.addf %219, %218 : vector<256x80xf32>
    %c0_186 = arith.constant 0 : index
    %c20_187 = arith.constant 20 : index
    %c0_188 = arith.constant 0 : index
    %221 = vector.load %arg10[%c0_186, %c20_187, %c0_188] : memref<16x48x80xf32, #tpu.memory_space<vmem>>, vector<16x16x80xf32>
    %222 = vector.shape_cast %221 : vector<16x16x80xf32> to vector<256x80xf32>
    %c7_189 = arith.constant 7 : index
    %c1_190 = arith.constant 1 : index
    %c0_191 = arith.constant 0 : index
    %c0_192 = arith.constant 0 : index
    %223 = vector.load %arg5[%c7_189, %c1_190, %c0_191, %c0_192] : memref<12x2x80x80xbf16, #tpu.memory_space<vmem>>, vector<1x1x80x80xbf16>
    %224 = vector.shape_cast %223 : vector<1x1x80x80xbf16> to vector<80x80xbf16>
    %225 = arith.truncf %222 : vector<256x80xf32> to vector<256x80xbf16>
    %cst_193 = arith.constant dense<0.000000e+00> : vector<256x80xf32>
    %226 = tpu.matmul %225, %224, %cst_193 {dimension_numbers = #tpu.dot_dimension_numbers<[1], [0], [0], [1], [0, 0, 1, 1], [], []>} : vector<256x80xbf16>, vector<80x80xbf16>, vector<256x80xf32> -> vector<256x80xf32>
    %227 = arith.addf %220, %226 : vector<256x80xf32>
    %c9_194 = arith.constant 9 : index
    %228 = memref.load %arg1[%c9_194] : memref<14xf32, #tpu.memory_space<smem>>
    %cst_195 = arith.constant 0.000000e+00 : f32
    %229 = vector.broadcast %cst_195 : f32 to vector<256x80xf32>
    %230 = arith.cmpf oge, %227, %229 : vector<256x80xf32>
    %231 = vector.broadcast %228 : f32 to vector<256x80xf32>
    %232 = arith.mulf %231, %227 : vector<256x80xf32>
    %233 = arith.select %230, %227, %232 : vector<256x80xi1>, vector<256x80xf32>
    %234 = arith.addf %233, %185 : vector<256x80xf32>
    %c11 = arith.constant 11 : index
    %c0_196 = arith.constant 0 : index
    %235 = vector.load %arg7[%c11, %c0_196] : memref<15x80xf32, #tpu.memory_space<vmem>>, vector<1x80xf32>
    %236 = vector.shape_cast %234 : vector<256x80xf32> to vector<16x16x80xf32>
    %c0_197 = arith.constant 0 : index
    %c16_198 = arith.constant 16 : index
    %c0_199 = arith.constant 0 : index
    %237 = vector.load %arg10[%c0_197, %c16_198, %c0_199] : memref<16x48x80xf32, #tpu.memory_space<vmem>>, vector<16x16x80xf32>
    tpu.vector_store %arg10[%c0_197, %c16_198, %c0_199], %236 {strides = array<i32>} : memref<16x48x80xf32, #tpu.memory_space<vmem>>, vector<16x16x80xf32>,
    %c0_200 = arith.constant 0 : index
    %c8_201 = arith.constant 8 : index
    %c0_202 = arith.constant 0 : index
    %238 = vector.load %arg10[%c0_200, %c8_201, %c0_202] : memref<16x48x80xf32, #tpu.memory_space<vmem>>, vector<16x16x80xf32>
    %239 = vector.shape_cast %238 : vector<16x16x80xf32> to vector<256x80xf32>
    %c8_203 = arith.constant 8 : index
    %c0_204 = arith.constant 0 : index
    %c0_205 = arith.constant 0 : index
    %c0_206 = arith.constant 0 : index
    %240 = vector.load %arg5[%c8_203, %c0_204, %c0_205, %c0_206] : memref<12x2x80x80xbf16, #tpu.memory_space<vmem>>, vector<1x1x80x80xbf16>
    %241 = vector.shape_cast %240 : vector<1x1x80x80xbf16> to vector<80x80xbf16>
    %242 = arith.truncf %239 : vector<256x80xf32> to vector<256x80xbf16>
    %cst_207 = arith.constant dense<0.000000e+00> : vector<256x80xf32>
    %243 = tpu.matmul %242, %241, %cst_207 {dimension_numbers = #tpu.dot_dimension_numbers<[1], [0], [0], [1], [0, 0, 1, 1], [], []>} : vector<256x80xbf16>, vector<80x80xbf16>, vector<256x80xf32> -> vector<256x80xf32>
    %244 = vector.broadcast %235 : vector<1x80xf32> to vector<256x80xf32>
    %245 = arith.addf %244, %243 : vector<256x80xf32>
    %c0_208 = arith.constant 0 : index
    %c24 = arith.constant 24 : index
    %c0_209 = arith.constant 0 : index
    %246 = vector.load %arg10[%c0_208, %c24, %c0_209] : memref<16x48x80xf32, #tpu.memory_space<vmem>>, vector<16x16x80xf32>
    %247 = vector.shape_cast %246 : vector<16x16x80xf32> to vector<256x80xf32>
    %c8_210 = arith.constant 8 : index
    %c1_211 = arith.constant 1 : index
    %c0_212 = arith.constant 0 : index
    %c0_213 = arith.constant 0 : index
    %248 = vector.load %arg5[%c8_210, %c1_211, %c0_212, %c0_213] : memref<12x2x80x80xbf16, #tpu.memory_space<vmem>>, vector<1x1x80x80xbf16>
    %249 = vector.shape_cast %248 : vector<1x1x80x80xbf16> to vector<80x80xbf16>
    %250 = arith.truncf %247 : vector<256x80xf32> to vector<256x80xbf16>
    %cst_214 = arith.constant dense<0.000000e+00> : vector<256x80xf32>
    %251 = tpu.matmul %250, %249, %cst_214 {dimension_numbers = #tpu.dot_dimension_numbers<[1], [0], [0], [1], [0, 0, 1, 1], [], []>} : vector<256x80xbf16>, vector<80x80xbf16>, vector<256x80xf32> -> vector<256x80xf32>
    %252 = arith.addf %245, %251 : vector<256x80xf32>
    %c10_215 = arith.constant 10 : index
    %253 = memref.load %arg1[%c10_215] : memref<14xf32, #tpu.memory_space<smem>>
    %cst_216 = arith.constant 0.000000e+00 : f32
    %254 = vector.broadcast %cst_216 : f32 to vector<256x80xf32>
    %255 = arith.cmpf oge, %252, %254 : vector<256x80xf32>
    %256 = vector.broadcast %253 : f32 to vector<256x80xf32>
    %257 = arith.mulf %256, %252 : vector<256x80xf32>
    %258 = arith.select %255, %252, %257 : vector<256x80xi1>, vector<256x80xf32>
    %c12_217 = arith.constant 12 : index
    %c0_218 = arith.constant 0 : index
    %259 = vector.load %arg7[%c12_217, %c0_218] : memref<15x80xf32, #tpu.memory_space<vmem>>, vector<1x80xf32>
    %260 = vector.shape_cast %258 : vector<256x80xf32> to vector<16x16x80xf32>
    %c0_219 = arith.constant 0 : index
    %c16_220 = arith.constant 16 : index
    %c0_221 = arith.constant 0 : index
    %261 = vector.load %arg10[%c0_219, %c16_220, %c0_221] : memref<16x48x80xf32, #tpu.memory_space<vmem>>, vector<16x16x80xf32>
    tpu.vector_store %arg10[%c0_219, %c16_220, %c0_221], %260 {strides = array<i32>} : memref<16x48x80xf32, #tpu.memory_space<vmem>>, vector<16x16x80xf32>,
    %c0_222 = arith.constant 0 : index
    %c8_223 = arith.constant 8 : index
    %c0_224 = arith.constant 0 : index
    %262 = vector.load %arg10[%c0_222, %c8_223, %c0_224] : memref<16x48x80xf32, #tpu.memory_space<vmem>>, vector<16x16x80xf32>
    %263 = vector.shape_cast %262 : vector<16x16x80xf32> to vector<256x80xf32>
    %c9_225 = arith.constant 9 : index
    %c0_226 = arith.constant 0 : index
    %c0_227 = arith.constant 0 : index
    %c0_228 = arith.constant 0 : index
    %264 = vector.load %arg5[%c9_225, %c0_226, %c0_227, %c0_228] : memref<12x2x80x80xbf16, #tpu.memory_space<vmem>>, vector<1x1x80x80xbf16>
    %265 = vector.shape_cast %264 : vector<1x1x80x80xbf16> to vector<80x80xbf16>
    %266 = arith.truncf %263 : vector<256x80xf32> to vector<256x80xbf16>
    %cst_229 = arith.constant dense<0.000000e+00> : vector<256x80xf32>
    %267 = tpu.matmul %266, %265, %cst_229 {dimension_numbers = #tpu.dot_dimension_numbers<[1], [0], [0], [1], [0, 0, 1, 1], [], []>} : vector<256x80xbf16>, vector<80x80xbf16>, vector<256x80xf32> -> vector<256x80xf32>
    %268 = vector.broadcast %259 : vector<1x80xf32> to vector<256x80xf32>
    %269 = arith.addf %268, %267 : vector<256x80xf32>
    %c0_230 = arith.constant 0 : index
    %c24_231 = arith.constant 24 : index
    %c0_232 = arith.constant 0 : index
    %270 = vector.load %arg10[%c0_230, %c24_231, %c0_232] : memref<16x48x80xf32, #tpu.memory_space<vmem>>, vector<16x16x80xf32>
    %271 = vector.shape_cast %270 : vector<16x16x80xf32> to vector<256x80xf32>
    %c9_233 = arith.constant 9 : index
    %c1_234 = arith.constant 1 : index
    %c0_235 = arith.constant 0 : index
    %c0_236 = arith.constant 0 : index
    %272 = vector.load %arg5[%c9_233, %c1_234, %c0_235, %c0_236] : memref<12x2x80x80xbf16, #tpu.memory_space<vmem>>, vector<1x1x80x80xbf16>
    %273 = vector.shape_cast %272 : vector<1x1x80x80xbf16> to vector<80x80xbf16>
    %274 = arith.truncf %271 : vector<256x80xf32> to vector<256x80xbf16>
    %cst_237 = arith.constant dense<0.000000e+00> : vector<256x80xf32>
    %275 = tpu.matmul %274, %273, %cst_237 {dimension_numbers = #tpu.dot_dimension_numbers<[1], [0], [0], [1], [0, 0, 1, 1], [], []>} : vector<256x80xbf16>, vector<80x80xbf16>, vector<256x80xf32> -> vector<256x80xf32>
    %276 = arith.addf %269, %275 : vector<256x80xf32>
    %c11_238 = arith.constant 11 : index
    %277 = memref.load %arg1[%c11_238] : memref<14xf32, #tpu.memory_space<smem>>
    %cst_239 = arith.constant 0.000000e+00 : f32
    %278 = vector.broadcast %cst_239 : f32 to vector<256x80xf32>
    %279 = arith.cmpf oge, %276, %278 : vector<256x80xf32>
    %280 = vector.broadcast %277 : f32 to vector<256x80xf32>
    %281 = arith.mulf %280, %276 : vector<256x80xf32>
    %282 = arith.select %279, %276, %281 : vector<256x80xi1>, vector<256x80xf32>
    %283 = arith.addf %282, %234 : vector<256x80xf32>
    %c13 = arith.constant 13 : index
    %c0_240 = arith.constant 0 : index
    %284 = vector.load %arg7[%c13, %c0_240] : memref<15x80xf32, #tpu.memory_space<vmem>>, vector<1x80xf32>
    %285 = vector.shape_cast %283 : vector<256x80xf32> to vector<16x16x80xf32>
    %c0_241 = arith.constant 0 : index
    %c16_242 = arith.constant 16 : index
    %c0_243 = arith.constant 0 : index
    %286 = vector.load %arg10[%c0_241, %c16_242, %c0_243] : memref<16x48x80xf32, #tpu.memory_space<vmem>>, vector<16x16x80xf32>
    tpu.vector_store %arg10[%c0_241, %c16_242, %c0_243], %285 {strides = array<i32>} : memref<16x48x80xf32, #tpu.memory_space<vmem>>, vector<16x16x80xf32>,
    %c0_244 = arith.constant 0 : index
    %c0_245 = arith.constant 0 : index
    %c0_246 = arith.constant 0 : index
    %287 = vector.load %arg10[%c0_244, %c0_245, %c0_246] : memref<16x48x80xf32, #tpu.memory_space<vmem>>, vector<16x16x80xf32>
    %288 = vector.shape_cast %287 : vector<16x16x80xf32> to vector<256x80xf32>
    %c10_247 = arith.constant 10 : index
    %c0_248 = arith.constant 0 : index
    %c0_249 = arith.constant 0 : index
    %c0_250 = arith.constant 0 : index
    %289 = vector.load %arg5[%c10_247, %c0_248, %c0_249, %c0_250] : memref<12x2x80x80xbf16, #tpu.memory_space<vmem>>, vector<1x1x80x80xbf16>
    %290 = vector.shape_cast %289 : vector<1x1x80x80xbf16> to vector<80x80xbf16>
    %291 = arith.truncf %288 : vector<256x80xf32> to vector<256x80xbf16>
    %cst_251 = arith.constant dense<0.000000e+00> : vector<256x80xf32>
    %292 = tpu.matmul %291, %290, %cst_251 {dimension_numbers = #tpu.dot_dimension_numbers<[1], [0], [0], [1], [0, 0, 1, 1], [], []>} : vector<256x80xbf16>, vector<80x80xbf16>, vector<256x80xf32> -> vector<256x80xf32>
    %293 = vector.broadcast %284 : vector<1x80xf32> to vector<256x80xf32>
    %294 = arith.addf %293, %292 : vector<256x80xf32>
    %c0_252 = arith.constant 0 : index
    %c32_253 = arith.constant 32 : index
    %c0_254 = arith.constant 0 : index
    %295 = vector.load %arg10[%c0_252, %c32_253, %c0_254] : memref<16x48x80xf32, #tpu.memory_space<vmem>>, vector<16x16x80xf32>
    %296 = vector.shape_cast %295 : vector<16x16x80xf32> to vector<256x80xf32>
    %c10_255 = arith.constant 10 : index
    %c1_256 = arith.constant 1 : index
    %c0_257 = arith.constant 0 : index
    %c0_258 = arith.constant 0 : index
    %297 = vector.load %arg5[%c10_255, %c1_256, %c0_257, %c0_258] : memref<12x2x80x80xbf16, #tpu.memory_space<vmem>>, vector<1x1x80x80xbf16>
    %298 = vector.shape_cast %297 : vector<1x1x80x80xbf16> to vector<80x80xbf16>
    %299 = arith.truncf %296 : vector<256x80xf32> to vector<256x80xbf16>
    %cst_259 = arith.constant dense<0.000000e+00> : vector<256x80xf32>
    %300 = tpu.matmul %299, %298, %cst_259 {dimension_numbers = #tpu.dot_dimension_numbers<[1], [0], [0], [1], [0, 0, 1, 1], [], []>} : vector<256x80xbf16>, vector<80x80xbf16>, vector<256x80xf32> -> vector<256x80xf32>
    %301 = arith.addf %294, %300 : vector<256x80xf32>
    %c12_260 = arith.constant 12 : index
    %302 = memref.load %arg1[%c12_260] : memref<14xf32, #tpu.memory_space<smem>>
    %cst_261 = arith.constant 0.000000e+00 : f32
    %303 = vector.broadcast %cst_261 : f32 to vector<256x80xf32>
    %304 = arith.cmpf oge, %301, %303 : vector<256x80xf32>
    %305 = vector.broadcast %302 : f32 to vector<256x80xf32>
    %306 = arith.mulf %305, %301 : vector<256x80xf32>
    %307 = arith.select %304, %301, %306 : vector<256x80xi1>, vector<256x80xf32>
    %c14_262 = arith.constant 14 : index
    %c0_263 = arith.constant 0 : index
    %308 = vector.load %arg7[%c14_262, %c0_263] : memref<15x80xf32, #tpu.memory_space<vmem>>, vector<1x80xf32>
    %309 = vector.shape_cast %307 : vector<256x80xf32> to vector<16x16x80xf32>
    %c0_264 = arith.constant 0 : index
    %c16_265 = arith.constant 16 : index
    %c0_266 = arith.constant 0 : index
    %310 = vector.load %arg10[%c0_264, %c16_265, %c0_266] : memref<16x48x80xf32, #tpu.memory_space<vmem>>, vector<16x16x80xf32>
    tpu.vector_store %arg10[%c0_264, %c16_265, %c0_266], %309 {strides = array<i32>} : memref<16x48x80xf32, #tpu.memory_space<vmem>>, vector<16x16x80xf32>,
    %c0_267 = arith.constant 0 : index
    %c0_268 = arith.constant 0 : index
    %c0_269 = arith.constant 0 : index
    %311 = vector.load %arg10[%c0_267, %c0_268, %c0_269] : memref<16x48x80xf32, #tpu.memory_space<vmem>>, vector<16x16x80xf32>
    %312 = vector.shape_cast %311 : vector<16x16x80xf32> to vector<256x80xf32>
    %c11_270 = arith.constant 11 : index
    %c0_271 = arith.constant 0 : index
    %c0_272 = arith.constant 0 : index
    %c0_273 = arith.constant 0 : index
    %313 = vector.load %arg5[%c11_270, %c0_271, %c0_272, %c0_273] : memref<12x2x80x80xbf16, #tpu.memory_space<vmem>>, vector<1x1x80x80xbf16>
    %314 = vector.shape_cast %313 : vector<1x1x80x80xbf16> to vector<80x80xbf16>
    %315 = arith.truncf %312 : vector<256x80xf32> to vector<256x80xbf16>
    %cst_274 = arith.constant dense<0.000000e+00> : vector<256x80xf32>
    %316 = tpu.matmul %315, %314, %cst_274 {dimension_numbers = #tpu.dot_dimension_numbers<[1], [0], [0], [1], [0, 0, 1, 1], [], []>} : vector<256x80xbf16>, vector<80x80xbf16>, vector<256x80xf32> -> vector<256x80xf32>
    %317 = vector.broadcast %308 : vector<1x80xf32> to vector<256x80xf32>
    %318 = arith.addf %317, %316 : vector<256x80xf32>
    %c0_275 = arith.constant 0 : index
    %c32_276 = arith.constant 32 : index
    %c0_277 = arith.constant 0 : index
    %319 = vector.load %arg10[%c0_275, %c32_276, %c0_277] : memref<16x48x80xf32, #tpu.memory_space<vmem>>, vector<16x16x80xf32>
    %320 = vector.shape_cast %319 : vector<16x16x80xf32> to vector<256x80xf32>
    %c11_278 = arith.constant 11 : index
    %c1_279 = arith.constant 1 : index
    %c0_280 = arith.constant 0 : index
    %c0_281 = arith.constant 0 : index
    %321 = vector.load %arg5[%c11_278, %c1_279, %c0_280, %c0_281] : memref<12x2x80x80xbf16, #tpu.memory_space<vmem>>, vector<1x1x80x80xbf16>
    %322 = vector.shape_cast %321 : vector<1x1x80x80xbf16> to vector<80x80xbf16>
    %323 = arith.truncf %320 : vector<256x80xf32> to vector<256x80xbf16>
    %cst_282 = arith.constant dense<0.000000e+00> : vector<256x80xf32>
    %324 = tpu.matmul %323, %322, %cst_282 {dimension_numbers = #tpu.dot_dimension_numbers<[1], [0], [0], [1], [0, 0, 1, 1], [], []>} : vector<256x80xbf16>, vector<80x80xbf16>, vector<256x80xf32> -> vector<256x80xf32>
    %325 = arith.addf %318, %324 : vector<256x80xf32>
    %c13_283 = arith.constant 13 : index
    %326 = memref.load %arg1[%c13_283] : memref<14xf32, #tpu.memory_space<smem>>
    %cst_284 = arith.constant 0.000000e+00 : f32
    %327 = vector.broadcast %cst_284 : f32 to vector<256x80xf32>
    %328 = arith.cmpf oge, %325, %327 : vector<256x80xf32>
    %329 = vector.broadcast %326 : f32 to vector<256x80xf32>
    %330 = arith.mulf %329, %325 : vector<256x80xf32>
    %331 = arith.select %328, %325, %330 : vector<256x80xi1>, vector<256x80xf32>
    %332 = arith.addf %331, %283 : vector<256x80xf32>
    %c0_285 = arith.constant 0 : index
    %c0_286 = arith.constant 0 : index
    %333 = vector.load %arg6[%c0_285, %c0_286] : memref<1x80xbf16, #tpu.memory_space<vmem>>, vector<1x80xbf16>
    %334 = arith.truncf %332 : vector<256x80xf32> to vector<256x80xbf16>
    %cst_287 = arith.constant dense<0.000000e+00> : vector<1x256xf32>
    %335 = tpu.matmul %333, %334, %cst_287 {dimension_numbers = #tpu.dot_dimension_numbers<[1], [1], [0], [0], [0, 0, 1, 0], [], []>} : vector<1x80xbf16>, vector<256x80xbf16>, vector<1x256xf32> -> vector<1x256xf32>
    %c0_288 = arith.constant 0 : index
    %c0_289 = arith.constant 0 : index
    %336 = vector.load %arg8[%c0_288, %c0_289] : memref<1x1xf32, #tpu.memory_space<vmem>>, vector<1x1xf32>
    %337 = vector.broadcast %336 : vector<1x1xf32> to vector<1x256xf32>
    %338 = arith.addf %335, %337 : vector<1x256xf32>
    %339 = math.tanh %338 : vector<1x256xf32>
    %c0_290 = arith.constant 0 : index
    %c0_291 = arith.constant 0 : index
    %c0_292 = arith.constant 0 : index
    %340 = vector.load %arg9[%c0_290, %c0_291, %c0_292] : memref<1x1x256xf32, #tpu.memory_space<vmem>>, vector<1x1x256xf32>
    %341 = vector.shape_cast %340 : vector<1x1x256xf32> to vector<1x256xf32>
    %342 = vector.shape_cast %339 : vector<1x256xf32> to vector<1x1x256xf32>
    tpu.vector_store %arg9[%c0_290, %c0_291, %c0_292], %342 {strides = array<i32>} : memref<1x1x256xf32, #tpu.memory_space<vmem>>, vector<1x1x256xf32>,
    return
  }
  func.func @transform_0(%arg0: i32) -> i32 {
    %c0_i32 = arith.constant 0 : i32
    %c0_i32_0 = arith.constant 0 : i32
    return %c0_i32 : i32
  }
  func.func @transform_1(%arg0: i32) -> (i32, i32, i32) {
    %c0_i32 = arith.constant 0 : i32
    %c0_i32_0 = arith.constant 0 : i32
    %c0_i32_1 = arith.constant 0 : i32
    return %arg0, %c0_i32, %c0_i32_0 : i32, i32, i32
  }
  func.func @transform_2(%arg0: i32) -> (i32, i32, i32) {
    %c0_i32 = arith.constant 0 : i32
    %c0_i32_0 = arith.constant 0 : i32
    %c0_i32_1 = arith.constant 0 : i32
    %c0_i32_2 = arith.constant 0 : i32
    return %c0_i32, %c0_i32_0, %c0_i32_1 : i32, i32, i32
  }
  func.func @transform_3(%arg0: i32) -> (i32, i32) {
    %c0_i32 = arith.constant 0 : i32
    %c0_i32_0 = arith.constant 0 : i32
    %c0_i32_1 = arith.constant 0 : i32
    return %c0_i32, %c0_i32_0 : i32, i32
  }
  func.func @transform_4(%arg0: i32) -> (i32, i32, i32, i32) {
    %c0_i32 = arith.constant 0 : i32
    %c0_i32_0 = arith.constant 0 : i32
    %c0_i32_1 = arith.constant 0 : i32
    %c0_i32_2 = arith.constant 0 : i32
    %c0_i32_3 = arith.constant 0 : i32
    return %c0_i32, %c0_i32_0, %c0_i32_1, %c0_i32_2 : i32, i32, i32, i32
  }
  func.func @transform_5(%arg0: i32) -> (i32, i32) {
    %c0_i32 = arith.constant 0 : i32
    %c0_i32_0 = arith.constant 0 : i32
    %c0_i32_1 = arith.constant 0 : i32
    return %c0_i32, %c0_i32_0 : i32, i32
  }
  func.func @transform_6(%arg0: i32) -> (i32, i32) {
    %c0_i32 = arith.constant 0 : i32
    %c0_i32_0 = arith.constant 0 : i32
    %c0_i32_1 = arith.constant 0 : i32
    return %c0_i32, %c0_i32_0 : i32, i32
  }
  func.func @transform_7(%arg0: i32) -> (i32, i32) {
    %c0_i32 = arith.constant 0 : i32
    %c0_i32_0 = arith.constant 0 : i32
    %c0_i32_1 = arith.constant 0 : i32
    return %c0_i32, %c0_i32_0 : i32, i32
  }
  func.func @transform_8(%arg0: i32) -> (i32, i32, i32) {
    %c0_i32 = arith.constant 0 : i32
    %c0_i32_0 = arith.constant 0 : i32
    %c0_i32_1 = arith.constant 0 : i32
    return %arg0, %c0_i32, %c0_i32_0 : i32, i32, i32
  }
}

</mosaic_0001>

<llo_original>
// kernel: generator_forward.1
$region0: #{generator_forward.1}
  #allocation0 [shape = 'u32[]', space=smem, size = 0x4, offset = 0x4, fixed_abs, tag = 'smem constant byte address 0x4 - core index']
  #allocation1 [shape = 'u32[144,128]{1,0:T(1,128)}', space=vmem, size = 0x12000, scoped, tag = 'internal scratch']
  #allocation2 [shape = 'f32[16,48,80]{2,1,0:T(8,128)}', space=vmem, size = 0x60000, scoped, tag = 'scratch operand']
  #allocation3 [shape = 'f32[1,1]{1,0:T(1,128)S(1)}', space=vmem, size = 0x200, scoped, tag = 'scoped memory for generator_forward.1']
  %s0 = inlined_call_operand.vmem [shape: f32[14], index: 0, kind: input, shape index: {}]
  %s1 = inlined_call_operand.vmem [shape: f32[16,16,3], index: 1, kind: input, shape index: {}]
  %s2 = inlined_call_operand.vmem [shape: bf16[2,3,80], index: 2, kind: input, shape index: {}]
  %s3 = inlined_call_operand.vmem [shape: bf16[80,80], index: 3, kind: input, shape index: {}]
  %s4 = inlined_call_operand.hbm [shape: bf16[12,2,80,80], index: 4, kind: input, shape index: {}]
  %s5 = inlined_call_operand.vmem [shape: bf16[1,80], index: 5, kind: input, shape index: {}]
  %s6 = inlined_call_operand.vmem [shape: f32[15,80], index: 6, kind: input, shape index: {}]
  %s7 = inlined_call_operand.<no memory space> [shape: f32[1,1], index: 7, kind: input, shape index: {}]
  %s8 = inlined_call_operand.vmem [shape: f32[1,1,256], index: 8, kind: output, shape index: {}]
  %s9 = sld [smem:[#allocation0]]
  $region50: #{generator_forward.1} parent=0
    _
  %s11 = ssub.s32 1, %s9
  %s12 = scalar_select 0, %s11, %s9
  %v13 = vstv %s7
  %14 = vst [vmem:[#allocation3] sm:$0x1] %v13
  $region1: #{generator_forward.1} parent=0
    #allocation4 [shape = 'u8[512]{0}', space=smem, size = 0x200, scoped, tag = 'input window, operand 0, single buffered']
    #allocation5 [shape = 's32[1]{0}', space=sflag, size = 0x4, scoped, tag = 'scoped memory for generator_forward.1']
    #allocation6 [shape = 's32[1]{0}', space=sflag, size = 0x4, scoped, tag = 'scoped memory for generator_forward.1']
    #allocation7 [shape = 'u8[491520]{0}', space=vmem, size = 0x78000, scoped, tag = 'input window, operand 4, single buffered']
    %15 = vsyncpa [#allocation6], 0
    %16 = vsyncpa [#allocation5], 0
    // Predicated region
    $region2: #{generator_forward.1} parent=1 // pred_check
      _
    $region3: #{generator_forward.1} parent=1 // pred_check_branch
      %18 = sbr.rel (0) target = $region5
    $region4: #{generator_forward.1} parent=1 // pred_region
      %s20 = ssub.s32 16, 16
      %21 = vsyncadd [#allocation6], %s20
      %s23 = sshll.u32 %s0, 4
      %s24 = int_to_ptr.vmem [resolvable:$true] %s23
      %26 = dma.vmem_to_smem %s24, 16, [#allocation4], [#allocation6]
    $region5: #{generator_forward.1} parent=1 // pred_fallthru
      _
    // Predicated region
    $region6: #{generator_forward.1} parent=1 // pred_check
      _
    $region7: #{generator_forward.1} parent=1 // pred_check_branch
      %28 = sbr.rel (0) target = $region9
    $region8: #{generator_forward.1} parent=1 // pred_region
      _
    $region9: #{generator_forward.1} parent=1 // pred_fallthru
      _
    // Predicated region
    $region10: #{generator_forward.1} parent=1 // pred_check
      _
    $region11: #{generator_forward.1} parent=1 // pred_check_branch
      %30 = sbr.rel (0) target = $region13
    $region12: #{generator_forward.1} parent=1 // pred_region
      _
    $region13: #{generator_forward.1} parent=1 // pred_fallthru
      _
    // Predicated region
    $region14: #{generator_forward.1} parent=1 // pred_check
      _
    $region15: #{generator_forward.1} parent=1 // pred_check_branch
      %32 = sbr.rel (0) target = $region17
    $region16: #{generator_forward.1} parent=1 // pred_region
      _
    $region17: #{generator_forward.1} parent=1 // pred_fallthru
      _
    // Predicated region
    $region18: #{generator_forward.1} parent=1 // pred_check
      _
    $region19: #{generator_forward.1} parent=1 // pred_check_branch
      %34 = sbr.rel (0) target = $region21
    $region20: #{generator_forward.1} parent=1 // pred_region
      %s36 = ssub.s32 15360, 15360
      %37 = vsyncadd [#allocation5], %s36
      %s38 = sshll.u32 [#allocation7], 4
      %s39 = int_to_ptr.vmem [resolvable:$true] %s38
      %44 = dma.hbm_to_vmem [thread:$0]  %s4, 15360, %s39, [#allocation5], 64, 64, 4
    $region21: #{generator_forward.1} parent=1 // pred_fallthru
      _
    // Predicated region
    $region22: #{generator_forward.1} parent=1 // pred_check
      _
    $region23: #{generator_forward.1} parent=1 // pred_check_branch
      %46 = sbr.rel (0) target = $region25
    $region24: #{generator_forward.1} parent=1 // pred_region
      _
    $region25: #{generator_forward.1} parent=1 // pred_fallthru
      _
    // Predicated region
    $region26: #{generator_forward.1} parent=1 // pred_check
      _
    $region27: #{generator_forward.1} parent=1 // pred_check_branch
      %48 = sbr.rel (0) target = $region29
    $region28: #{generator_forward.1} parent=1 // pred_region
      _
    $region29: #{generator_forward.1} parent=1 // pred_fallthru
      _
    // Predicated region
    $region30: #{generator_forward.1} parent=1 // pred_check
      _
    $region31: #{generator_forward.1} parent=1 // pred_check_branch
      %50 = sbr.rel (0) target = $region33
    $region32: #{generator_forward.1} parent=1 // pred_region
      _
    $region33: #{generator_forward.1} parent=1 // pred_fallthru
      _
    // Predicated region
    $region34: #{generator_forward.1} parent=1 // pred_check
      _
    $region35: #{generator_forward.1} parent=1 // pred_check_branch
      %52 = sbr.rel (0) target = $region37
    $region36: #{generator_forward.1} parent=1 // pred_region
      %53 = dma.done [#allocation6], 16
    $region37: #{generator_forward.1} parent=1 // pred_fallthru
      _
    // Predicated region
    $region38: #{generator_forward.1} parent=1 // pred_check
      _
    $region39: #{generator_forward.1} parent=1 // pred_check_branch
      %55 = sbr.rel (0) target = $region41
    $region40: #{generator_forward.1} parent=1 // pred_region
      %56 = dma.done [#allocation5], 15360
    $region41: #{generator_forward.1} parent=1 // pred_fallthru
      _
    %57 = sfence
    %vm59 = vcmask 654336
    %60 = vst.msk [vmem:[#allocation2] sm:$0xff] %vm59, 0.0
    %61 = vst.msk [vmem:[#allocation2 + $0x8] sm:$0xff] %vm59, 0.0
    %62 = vst.msk [vmem:[#allocation2 + $0x30] sm:$0xff] %vm59, 0.0
    %63 = vst.msk [vmem:[#allocation2 + $0x38] sm:$0xff] %vm59, 0.0
    %64 = vst.msk [vmem:[#allocation2 + $0x60] sm:$0xff] %vm59, 0.0
    %65 = vst.msk [vmem:[#allocation2 + $0x68] sm:$0xff] %vm59, 0.0
    %66 = vst.msk [vmem:[#allocation2 + $0x90] sm:$0xff] %vm59, 0.0
    %67 = vst.msk [vmem:[#allocation2 + $0x98] sm:$0xff] %vm59, 0.0
    %68 = vst.msk [vmem:[#allocation2 + $0xc0] sm:$0xff] %vm59, 0.0
    %69 = vst.msk [vmem:[#allocation2 + $0xc8] sm:$0xff] %vm59, 0.0
    %70 = vst.msk [vmem:[#allocation2 + $0xf0] sm:$0xff] %vm59, 0.0
    %71 = vst.msk [vmem:[#allocation2 + $0xf8] sm:$0xff] %vm59, 0.0
    %72 = vst.msk [vmem:[#allocation2 + $0x120] sm:$0xff] %vm59, 0.0
    %73 = vst.msk [vmem:[#allocation2 + $0x128] sm:$0xff] %vm59, 0.0
    %74 = vst.msk [vmem:[#allocation2 + $0x150] sm:$0xff] %vm59, 0.0
    %75 = vst.msk [vmem:[#allocation2 + $0x158] sm:$0xff] %vm59, 0.0
    %76 = vst.msk [vmem:[#allocation2 + $0x180] sm:$0xff] %vm59, 0.0
    %77 = vst.msk [vmem:[#allocation2 + $0x188] sm:$0xff] %vm59, 0.0
    %78 = vst.msk [vmem:[#allocation2 + $0x1b0] sm:$0xff] %vm59, 0.0
    %79 = vst.msk [vmem:[#allocation2 + $0x1b8] sm:$0xff] %vm59, 0.0
    %80 = vst.msk [vmem:[#allocation2 + $0x1e0] sm:$0xff] %vm59, 0.0
    %81 = vst.msk [vmem:[#allocation2 + $0x1e8] sm:$0xff] %vm59, 0.0
    %82 = vst.msk [vmem:[#allocation2 + $0x210] sm:$0xff] %vm59, 0.0
    %83 = vst.msk [vmem:[#allocation2 + $0x218] sm:$0xff] %vm59, 0.0
    %84 = vst.msk [vmem:[#allocation2 + $0x240] sm:$0xff] %vm59, 0.0
    %85 = vst.msk [vmem:[#allocation2 + $0x248] sm:$0xff] %vm59, 0.0
    %86 = vst.msk [vmem:[#allocation2 + $0x270] sm:$0xff] %vm59, 0.0
    %87 = vst.msk [vmem:[#allocation2 + $0x278] sm:$0xff] %vm59, 0.0
    %88 = vst.msk [vmem:[#allocation2 + $0x2a0] sm:$0xff] %vm59, 0.0
    %89 = vst.msk [vmem:[#allocation2 + $0x2a8] sm:$0xff] %vm59, 0.0
    %90 = vst.msk [vmem:[#allocation2 + $0x2d0] sm:$0xff] %vm59, 0.0
    %91 = vst.msk [vmem:[#allocation2 + $0x2d8] sm:$0xff] %vm59, 0.0
    %92 = vst.msk [vmem:[#allocation2 + $0x20] sm:$0xff] %vm59, 0.0
    %93 = vst.msk [vmem:[#allocation2 + $0x28] sm:$0xff] %vm59, 0.0
    %94 = vst.msk [vmem:[#allocation2 + $0x50] sm:$0xff] %vm59, 0.0
    %95 = vst.msk [vmem:[#allocation2 + $0x58] sm:$0xff] %vm59, 0.0
    %96 = vst.msk [vmem:[#allocation2 + $0x80] sm:$0xff] %vm59, 0.0
    %97 = vst.msk [vmem:[#allocation2 + $0x88] sm:$0xff] %vm59, 0.0
    %98 = vst.msk [vmem:[#allocation2 + $0xb0] sm:$0xff] %vm59, 0.0
    %99 = vst.msk [vmem:[#allocation2 + $0xb8] sm:$0xff] %vm59, 0.0
    %100 = vst.msk [vmem:[#allocation2 + $0xe0] sm:$0xff] %vm59, 0.0
    %101 = vst.msk [vmem:[#allocation2 + $0xe8] sm:$0xff] %vm59, 0.0
    %102 = vst.msk [vmem:[#allocation2 + $0x110] sm:$0xff] %vm59, 0.0
    %103 = vst.msk [vmem:[#allocation2 + $0x118] sm:$0xff] %vm59, 0.0
    %104 = vst.msk [vmem:[#allocation2 + $0x140] sm:$0xff] %vm59, 0.0
    %105 = vst.msk [vmem:[#allocation2 + $0x148] sm:$0xff] %vm59, 0.0
    %106 = vst.msk [vmem:[#allocation2 + $0x170] sm:$0xff] %vm59, 0.0
    %107 = vst.msk [vmem:[#allocation2 + $0x178] sm:$0xff] %vm59, 0.0
    %108 = vst.msk [vmem:[#allocation2 + $0x1a0] sm:$0xff] %vm59, 0.0
    %109 = vst.msk [vmem:[#allocation2 + $0x1a8] sm:$0xff] %vm59, 0.0
    %110 = vst.msk [vmem:[#allocation2 + $0x1d0] sm:$0xff] %vm59, 0.0
    %111 = vst.msk [vmem:[#allocation2 + $0x1d8] sm:$0xff] %vm59, 0.0
    %112 = vst.msk [vmem:[#allocation2 + $0x200] sm:$0xff] %vm59, 0.0
    %113 = vst.msk [vmem:[#allocation2 + $0x208] sm:$0xff] %vm59, 0.0
    %114 = vst.msk [vmem:[#allocation2 + $0x230] sm:$0xff] %vm59, 0.0
    %115 = vst.msk [vmem:[#allocation2 + $0x238] sm:$0xff] %vm59, 0.0
    %116 = vst.msk [vmem:[#allocation2 + $0x260] sm:$0xff] %vm59, 0.0
    %117 = vst.msk [vmem:[#allocation2 + $0x268] sm:$0xff] %vm59, 0.0
    %118 = vst.msk [vmem:[#allocation2 + $0x290] sm:$0xff] %vm59, 0.0
    %119 = vst.msk [vmem:[#allocation2 + $0x298] sm:$0xff] %vm59, 0.0
    %120 = vst.msk [vmem:[#allocation2 + $0x2c0] sm:$0xff] %vm59, 0.0
    %121 = vst.msk [vmem:[#allocation2 + $0x2c8] sm:$0xff] %vm59, 0.0
    %122 = vst.msk [vmem:[#allocation2 + $0x2f0] sm:$0xff] %vm59, 0.0
    %123 = vst.msk [vmem:[#allocation2 + $0x2f8] sm:$0xff] %vm59, 0.0
    %v124 = vld [vmem:[%s1] sm:$0xff]
    %v125 = vld [vmem:[%s1 + $0x8] sm:$0xff]
    %v126 = vld [vmem:[%s1 + $0x10] sm:$0xff]
    %v127 = vld [vmem:[%s1 + $0x18] sm:$0xff]
    %v128 = vld [vmem:[%s1 + $0x20] sm:$0xff]
    %v129 = vld [vmem:[%s1 + $0x28] sm:$0xff]
    %v130 = vld [vmem:[%s1 + $0x30] sm:$0xff]
    %v131 = vld [vmem:[%s1 + $0x38] sm:$0xff]
    %v132 = vld [vmem:[%s1 + $0x40] sm:$0xff]
    %v133 = vld [vmem:[%s1 + $0x48] sm:$0xff]
    %v134 = vld [vmem:[%s1 + $0x50] sm:$0xff]
    %v135 = vld [vmem:[%s1 + $0x58] sm:$0xff]
    %v136 = vld [vmem:[%s1 + $0x60] sm:$0xff]
    %v137 = vld [vmem:[%s1 + $0x68] sm:$0xff]
    %v138 = vld [vmem:[%s1 + $0x70] sm:$0xff]
    %v139 = vld [vmem:[%s1 + $0x78] sm:$0xff]
    %v140 = vld [vmem:[%s1 + $0x80] sm:$0xff]
    %v141 = vld [vmem:[%s1 + $0x88] sm:$0xff]
    %v142 = vld [vmem:[%s1 + $0x90] sm:$0xff]
    %v143 = vld [vmem:[%s1 + $0x98] sm:$0xff]
    %v144 = vld [vmem:[%s1 + $0xa0] sm:$0xff]
    %v145 = vld [vmem:[%s1 + $0xa8] sm:$0xff]
    %v146 = vld [vmem:[%s1 + $0xb0] sm:$0xff]
    %v147 = vld [vmem:[%s1 + $0xb8] sm:$0xff]
    %v148 = vld [vmem:[%s1 + $0xc0] sm:$0xff]
    %v149 = vld [vmem:[%s1 + $0xc8] sm:$0xff]
    %v150 = vld [vmem:[%s1 + $0xd0] sm:$0xff]
    %v151 = vld [vmem:[%s1 + $0xd8] sm:$0xff]
    %v152 = vld [vmem:[%s1 + $0xe0] sm:$0xff]
    %v153 = vld [vmem:[%s1 + $0xe8] sm:$0xff]
    %v154 = vld [vmem:[%s1 + $0xf0] sm:$0xff]
    %v155 = vld [vmem:[%s1 + $0xf8] sm:$0xff]
    %s156 = scalar_lea.vmem %s2, 2
    %v157 = vld [vmem:[%s156] sm:$0x3]
    %v158 = vpack.c.bf16 %v125, %v124
    %v159 = vpack.c.bf16 %v127, %v126
    %v160 = vpack.c.bf16 %v129, %v128
    %v161 = vpack.c.bf16 %v131, %v130
    %v162 = vpack.c.bf16 %v133, %v132
    %v163 = vpack.c.bf16 %v135, %v134
    %v164 = vpack.c.bf16 %v137, %v136
    %v165 = vpack.c.bf16 %v139, %v138
    %v166 = vpack.c.bf16 %v141, %v140
    %v167 = vpack.c.bf16 %v143, %v142
    %v168 = vpack.c.bf16 %v145, %v144
    %v169 = vpack.c.bf16 %v147, %v146
    %v170 = vpack.c.bf16 %v149, %v148
    %v171 = vpack.c.bf16 %v151, %v150
    %v172 = vpack.c.bf16 %v153, %v152
    %v173 = vpack.c.bf16 %v155, %v154
    %v174 = vld [vmem:[%s6 + $0x2] sm:$0x1]
    %v175 = vlaneseq
    %v176 = vshrl.u32 %v175, 7
    %v177 = vsub.s32 0, %v176
    %v178 = vrot.slane %v174, %v177
    %vm179 = vcmask 23552
    %v181 = vsel %vm179, %v158, 0
    %v184 = vsel %vm179, %v159, 0
    %v187 = vsel %vm179, %v160, 0
    %v190 = vsel %vm179, %v161, 0
    %v193 = vsel %vm179, %v162, 0
    %v196 = vsel %vm179, %v163, 0
    %v199 = vsel %vm179, %v164, 0
    %v202 = vsel %vm179, %v165, 0
    %v205 = vsel %vm179, %v166, 0
    %v208 = vsel %vm179, %v167, 0
    %v211 = vsel %vm179, %v168, 0
    %v214 = vsel %vm179, %v169, 0
    %v217 = vsel %vm179, %v170, 0
    %v220 = vsel %vm179, %v171, 0
    %v223 = vsel %vm179, %v172, 0
    %v226 = vsel %vm179, %v173, 0
    %vm228 = vcmask 1040384
    %vm229 = vcmask 1041408
    %v230 = vsel %vm228, 4294967295, 65535
    %v231 = vsel %vm229, %v230, 0
    %v233 = vand.u32 %v157, %v231
    %235 = vmatprep.subr.bf16.mxu0 0
    %236 = vmatpush1.bf16.msra.mxu0 0
    %237 = vmatprep.subr.bf16.mxu0 0
    %238 = vmatpush1.bf16.msra.mxu0 0
    %239 = vmatprep.subr.bf16.mxu0 0
    %240 = vmatpush1.bf16.msra.mxu0 0
    %241 = vmatprep.subr.bf16.mxu0 0
    %242 = vmatpush1.bf16.msra.mxu0 0
    %243 = vmatprep.subr.bf16.mxu0 0
    %244 = vmatpush1.bf16.msra.mxu0 0
    %245 = vmatprep.subr.bf16.mxu0 0
    %246 = vmatpush1.bf16.msra.mxu0 0
    %247 = vmatprep.subr.bf16.mxu0 0
    %248 = vmatpush1.bf16.msra.mxu0 0
    %249 = vmatprep.subr.bf16.mxu0 0
    %250 = vmatpush1.bf16.msra.mxu0 %v233
    %251 = vmatprep.subr.bf16.mxu0 0
    %252 = vmatpush2.bf16.msra.mxu0 0
    %253 = vmatprep.subr.bf16.mxu0 0
    %254 = vmatpush2.bf16.msra.mxu0 0
    %255 = vmatprep.subr.bf16.mxu0 0
    %256 = vmatpush2.bf16.msra.mxu0 0
    %257 = vmatprep.subr.bf16.mxu0 0
    %258 = vmatpush2.bf16.msra.mxu0 0
    %259 = vmatprep.subr.bf16.mxu0 0
    %260 = vmatpush2.bf16.msra.mxu0 0
    %261 = vmatprep.subr.bf16.mxu0 0
    %262 = vmatpush2.bf16.msra.mxu0 0
    %263 = vmatprep.subr.bf16.mxu0 0
    %264 = vmatpush2.bf16.msra.mxu0 0
    %265 = vmatprep.subr.bf16.mxu0 0
    %266 = vmatpush2.bf16.msra.mxu0 0
    %267 = vmatprep.mubr.bf16.mxu0 0
    %268 = vmatmul.mubr.bf16.gmra.mxu0 %v181
    %v269 = vpop.f32.mrf.mxu0
    %v270 = vadd.f32 %v178, %v269
    %v271 = vpop.f32.mrf.mxu0
    %v272 = vpop.f32.mrf.mxu0
    %v273 = vadd.f32 %v178, %v272
    %v274 = vpop.f32.mrf.mxu0
    %275 = vmatprep.mubr.bf16.mxu0 0
    %276 = vmatmul.mubr.bf16.gmra.mxu0 %v184
    %v277 = vpop.f32.mrf.mxu0
    %v278 = vadd.f32 %v178, %v277
    %v279 = vpop.f32.mrf.mxu0
    %v280 = vpop.f32.mrf.mxu0
    %v281 = vadd.f32 %v178, %v280
    %v282 = vpop.f32.mrf.mxu0
    %283 = vmatprep.mubr.bf16.mxu0 0
    %284 = vmatmul.mubr.bf16.gmra.mxu0 %v187
    %v285 = vpop.f32.mrf.mxu0
    %v286 = vadd.f32 %v178, %v285
    %v287 = vpop.f32.mrf.mxu0
    %v288 = vpop.f32.mrf.mxu0
    %v289 = vadd.f32 %v178, %v288
    %v290 = vpop.f32.mrf.mxu0
    %291 = vmatprep.mubr.bf16.mxu0 0
    %292 = vmatmul.mubr.bf16.gmra.mxu0 %v190
    %v293 = vpop.f32.mrf.mxu0
    %v294 = vadd.f32 %v178, %v293
    %v295 = vpop.f32.mrf.mxu0
    %v296 = vpop.f32.mrf.mxu0
    %v297 = vadd.f32 %v178, %v296
    %v298 = vpop.f32.mrf.mxu0
    %299 = vmatprep.mubr.bf16.mxu0 0
    %300 = vmatmul.mubr.bf16.gmra.mxu0 %v193
    %v301 = vpop.f32.mrf.mxu0
    %v302 = vadd.f32 %v178, %v301
    %v303 = vpop.f32.mrf.mxu0
    %v304 = vpop.f32.mrf.mxu0
    %v305 = vadd.f32 %v178, %v304
    %v306 = vpop.f32.mrf.mxu0
    %307 = vmatprep.mubr.bf16.mxu0 0
    %308 = vmatmul.mubr.bf16.gmra.mxu0 %v196
    %v309 = vpop.f32.mrf.mxu0
    %v310 = vadd.f32 %v178, %v309
    %v311 = vpop.f32.mrf.mxu0
    %v312 = vpop.f32.mrf.mxu0
    %v313 = vadd.f32 %v178, %v312
    %v314 = vpop.f32.mrf.mxu0
    %315 = vmatprep.mubr.bf16.mxu0 0
    %316 = vmatmul.mubr.bf16.gmra.mxu0 %v199
    %v317 = vpop.f32.mrf.mxu0
    %v318 = vadd.f32 %v178, %v317
    %v319 = vpop.f32.mrf.mxu0
    %v320 = vpop.f32.mrf.mxu0
    %v321 = vadd.f32 %v178, %v320
    %v322 = vpop.f32.mrf.mxu0
    %323 = vmatprep.mubr.bf16.mxu0 0
    %324 = vmatmul.mubr.bf16.gmra.mxu0 %v202
    %v325 = vpop.f32.mrf.mxu0
    %v326 = vadd.f32 %v178, %v325
    %v327 = vpop.f32.mrf.mxu0
    %v328 = vpop.f32.mrf.mxu0
    %v329 = vadd.f32 %v178, %v328
    %v330 = vpop.f32.mrf.mxu0
    %331 = vmatprep.mubr.bf16.mxu0 0
    %332 = vmatmul.mubr.bf16.gmra.mxu0 %v205
    %v333 = vpop.f32.mrf.mxu0
    %v334 = vadd.f32 %v178, %v333
    %v335 = vpop.f32.mrf.mxu0
    %v336 = vpop.f32.mrf.mxu0
    %v337 = vadd.f32 %v178, %v336
    %v338 = vpop.f32.mrf.mxu0
    %339 = vmatprep.mubr.bf16.mxu0 0
    %340 = vmatmul.mubr.bf16.gmra.mxu0 %v208
    %v341 = vpop.f32.mrf.mxu0
    %v342 = vadd.f32 %v178, %v341
    %v343 = vpop.f32.mrf.mxu0
    %v344 = vpop.f32.mrf.mxu0
    %v345 = vadd.f32 %v178, %v344
    %v346 = vpop.f32.mrf.mxu0
    %347 = vmatprep.mubr.bf16.mxu0 0
    %348 = vmatmul.mubr.bf16.gmra.mxu0 %v211
    %v349 = vpop.f32.mrf.mxu0
    %v350 = vadd.f32 %v178, %v349
    %v351 = vpop.f32.mrf.mxu0
    %v352 = vpop.f32.mrf.mxu0
    %v353 = vadd.f32 %v178, %v352
    %v354 = vpop.f32.mrf.mxu0
    %355 = vmatprep.mubr.bf16.mxu0 0
    %356 = vmatmul.mubr.bf16.gmra.mxu0 %v214
    %v357 = vpop.f32.mrf.mxu0
    %v358 = vadd.f32 %v178, %v357
    %v359 = vpop.f32.mrf.mxu0
    %v360 = vpop.f32.mrf.mxu0
    %v361 = vadd.f32 %v178, %v360
    %v362 = vpop.f32.mrf.mxu0
    %363 = vmatprep.mubr.bf16.mxu0 0
    %364 = vmatmul.mubr.bf16.gmra.mxu0 %v217
    %v365 = vpop.f32.mrf.mxu0
    %v366 = vadd.f32 %v178, %v365
    %v367 = vpop.f32.mrf.mxu0
    %v368 = vpop.f32.mrf.mxu0
    %v369 = vadd.f32 %v178, %v368
    %v370 = vpop.f32.mrf.mxu0
    %371 = vmatprep.mubr.bf16.mxu0 0
    %372 = vmatmul.mubr.bf16.gmra.mxu0 %v220
    %v373 = vpop.f32.mrf.mxu0
    %v374 = vadd.f32 %v178, %v373
    %v375 = vpop.f32.mrf.mxu0
    %v376 = vpop.f32.mrf.mxu0
    %v377 = vadd.f32 %v178, %v376
    %v378 = vpop.f32.mrf.mxu0
    %379 = vmatprep.mubr.bf16.mxu0 0
    %380 = vmatmul.mubr.bf16.gmra.mxu0 %v223
    %v381 = vpop.f32.mrf.mxu0
    %v382 = vadd.f32 %v178, %v381
    %v383 = vpop.f32.mrf.mxu0
    %v384 = vpop.f32.mrf.mxu0
    %v385 = vadd.f32 %v178, %v384
    %v386 = vpop.f32.mrf.mxu0
    %387 = vmatprep.mubr.bf16.mxu0 0
    %388 = vmatmul.mubr.bf16.gmra.mxu0 %v226
    %v389 = vpop.f32.mrf.mxu0
    %v390 = vadd.f32 %v178, %v389
    %v391 = vpop.f32.mrf.mxu0
    %v392 = vpop.f32.mrf.mxu0
    %v393 = vadd.f32 %v178, %v392
    %v394 = vpop.f32.mrf.mxu0
    %395 = vdwg.mxu0
    %v396 = vld [vmem:[%s2] sm:$0x3]
    %v397 = vld [vmem:[%s6] sm:$0x1]
    %v398 = vlaneseq
    %v399 = vshrl.u32 %v398, 7
    %v400 = vsub.s32 0, %v399
    %v401 = vrot.slane %v397, %v400
    %v403 = vand.u32 %v396, %v231
    %405 = vmatprep.subr.bf16.mxu0 0
    %406 = vmatpush1.bf16.msra.mxu0 0
    %407 = vmatprep.subr.bf16.mxu0 0
    %408 = vmatpush1.bf16.msra.mxu0 0
    %409 = vmatprep.subr.bf16.mxu0 0
    %410 = vmatpush1.bf16.msra.mxu0 0
    %411 = vmatprep.subr.bf16.mxu0 0
    %412 = vmatpush1.bf16.msra.mxu0 0
    %413 = vmatprep.subr.bf16.mxu0 0
    %414 = vmatpush1.bf16.msra.mxu0 0
    %415 = vmatprep.subr.bf16.mxu0 0
    %416 = vmatpush1.bf16.msra.mxu0 0
    %417 = vmatprep.subr.bf16.mxu0 0
    %418 = vmatpush1.bf16.msra.mxu0 0
    %419 = vmatprep.subr.bf16.mxu0 0
    %420 = vmatpush1.bf16.msra.mxu0 %v403
    %421 = vmatprep.subr.bf16.mxu0 0
    %422 = vmatpush2.bf16.msra.mxu0 0
    %423 = vmatprep.subr.bf16.mxu0 0
    %424 = vmatpush2.bf16.msra.mxu0 0
    %425 = vmatprep.subr.bf16.mxu0 0
    %426 = vmatpush2.bf16.msra.mxu0 0
    %427 = vmatprep.subr.bf16.mxu0 0
    %428 = vmatpush2.bf16.msra.mxu0 0
    %429 = vmatprep.subr.bf16.mxu0 0
    %430 = vmatpush2.bf16.msra.mxu0 0
    %431 = vmatprep.subr.bf16.mxu0 0
    %432 = vmatpush2.bf16.msra.mxu0 0
    %433 = vmatprep.subr.bf16.mxu0 0
    %434 = vmatpush2.bf16.msra.mxu0 0
    %435 = vmatprep.subr.bf16.mxu0 0
    %436 = vmatpush2.bf16.msra.mxu0 0
    %437 = vmatprep.mubr.bf16.mxu0 0
    %438 = vmatmul.mubr.bf16.gmra.mxu0 %v181
    %v439 = vpop.f32.mrf.mxu0
    %v440 = vadd.f32 %v401, %v439
    %v441 = vpop.f32.mrf.mxu0
    %v442 = vpop.f32.mrf.mxu0
    %v443 = vadd.f32 %v401, %v442
    %v444 = vpop.f32.mrf.mxu0
    %445 = vmatprep.mubr.bf16.mxu0 0
    %446 = vmatmul.mubr.bf16.gmra.mxu0 %v184
    %v447 = vpop.f32.mrf.mxu0
    %v448 = vadd.f32 %v401, %v447
    %v449 = vpop.f32.mrf.mxu0
    %v450 = vpop.f32.mrf.mxu0
    %v451 = vadd.f32 %v401, %v450
    %v452 = vpop.f32.mrf.mxu0
    %453 = vmatprep.mubr.bf16.mxu0 0
    %454 = vmatmul.mubr.bf16.gmra.mxu0 %v187
    %v455 = vpop.f32.mrf.mxu0
    %v456 = vadd.f32 %v401, %v455
    %v457 = vpop.f32.mrf.mxu0
    %v458 = vpop.f32.mrf.mxu0
    %v459 = vadd.f32 %v401, %v458
    %v460 = vpop.f32.mrf.mxu0
    %461 = vmatprep.mubr.bf16.mxu0 0
    %462 = vmatmul.mubr.bf16.gmra.mxu0 %v190
    %v463 = vpop.f32.mrf.mxu0
    %v464 = vadd.f32 %v401, %v463
    %v465 = vpop.f32.mrf.mxu0
    %v466 = vpop.f32.mrf.mxu0
    %v467 = vadd.f32 %v401, %v466
    %v468 = vpop.f32.mrf.mxu0
    %469 = vmatprep.mubr.bf16.mxu0 0
    %470 = vmatmul.mubr.bf16.gmra.mxu0 %v193
    %v471 = vpop.f32.mrf.mxu0
    %v472 = vadd.f32 %v401, %v471
    %v473 = vpop.f32.mrf.mxu0
    %v474 = vpop.f32.mrf.mxu0
    %v475 = vadd.f32 %v401, %v474
    %v476 = vpop.f32.mrf.mxu0
    %477 = vmatprep.mubr.bf16.mxu0 0
    %478 = vmatmul.mubr.bf16.gmra.mxu0 %v196
    %v479 = vpop.f32.mrf.mxu0
    %v480 = vadd.f32 %v401, %v479
    %v481 = vpop.f32.mrf.mxu0
    %v482 = vpop.f32.mrf.mxu0
    %v483 = vadd.f32 %v401, %v482
    %v484 = vpop.f32.mrf.mxu0
    %485 = vmatprep.mubr.bf16.mxu0 0
    %486 = vmatmul.mubr.bf16.gmra.mxu0 %v199
    %v487 = vpop.f32.mrf.mxu0
    %v488 = vadd.f32 %v401, %v487
    %v489 = vpop.f32.mrf.mxu0
    %v490 = vpop.f32.mrf.mxu0
    %v491 = vadd.f32 %v401, %v490
    %v492 = vpop.f32.mrf.mxu0
    %493 = vmatprep.mubr.bf16.mxu0 0
    %494 = vmatmul.mubr.bf16.gmra.mxu0 %v202
    %v495 = vpop.f32.mrf.mxu0
    %v496 = vadd.f32 %v401, %v495
    %v497 = vpop.f32.mrf.mxu0
    %v498 = vpop.f32.mrf.mxu0
    %v499 = vadd.f32 %v401, %v498
    %v500 = vpop.f32.mrf.mxu0
    %501 = vmatprep.mubr.bf16.mxu0 0
    %502 = vmatmul.mubr.bf16.gmra.mxu0 %v205
    %v503 = vpop.f32.mrf.mxu0
    %v504 = vadd.f32 %v401, %v503
    %v505 = vpop.f32.mrf.mxu0
    %v506 = vpop.f32.mrf.mxu0
    %v507 = vadd.f32 %v401, %v506
    %v508 = vpop.f32.mrf.mxu0
    %509 = vmatprep.mubr.bf16.mxu0 0
    %510 = vmatmul.mubr.bf16.gmra.mxu0 %v208
    %v511 = vpop.f32.mrf.mxu0
    %v512 = vadd.f32 %v401, %v511
    %v513 = vpop.f32.mrf.mxu0
    %v514 = vpop.f32.mrf.mxu0
    %v515 = vadd.f32 %v401, %v514
    %v516 = vpop.f32.mrf.mxu0
    %517 = vmatprep.mubr.bf16.mxu0 0
    %518 = vmatmul.mubr.bf16.gmra.mxu0 %v211
    %v519 = vpop.f32.mrf.mxu0
    %v520 = vadd.f32 %v401, %v519
    %v521 = vpop.f32.mrf.mxu0
    %v522 = vpop.f32.mrf.mxu0
    %v523 = vadd.f32 %v401, %v522
    %v524 = vpop.f32.mrf.mxu0
    %525 = vmatprep.mubr.bf16.mxu0 0
    %526 = vmatmul.mubr.bf16.gmra.mxu0 %v214
    %v527 = vpop.f32.mrf.mxu0
    %v528 = vadd.f32 %v401, %v527
    %v529 = vpop.f32.mrf.mxu0
    %v530 = vpop.f32.mrf.mxu0
    %v531 = vadd.f32 %v401, %v530
    %v532 = vpop.f32.mrf.mxu0
    %533 = vmatprep.mubr.bf16.mxu0 0
    %534 = vmatmul.mubr.bf16.gmra.mxu0 %v217
    %v535 = vpop.f32.mrf.mxu0
    %v536 = vadd.f32 %v401, %v535
    %v537 = vpop.f32.mrf.mxu0
    %v538 = vpop.f32.mrf.mxu0
    %v539 = vadd.f32 %v401, %v538
    %v540 = vpop.f32.mrf.mxu0
    %541 = vmatprep.mubr.bf16.mxu0 0
    %542 = vmatmul.mubr.bf16.gmra.mxu0 %v220
    %v543 = vpop.f32.mrf.mxu0
    %v544 = vadd.f32 %v401, %v543
    %v545 = vpop.f32.mrf.mxu0
    %v546 = vpop.f32.mrf.mxu0
    %v547 = vadd.f32 %v401, %v546
    %v548 = vpop.f32.mrf.mxu0
    %549 = vmatprep.mubr.bf16.mxu0 0
    %550 = vmatmul.mubr.bf16.gmra.mxu0 %v223
    %v551 = vpop.f32.mrf.mxu0
    %v552 = vadd.f32 %v401, %v551
    %v553 = vpop.f32.mrf.mxu0
    %v554 = vpop.f32.mrf.mxu0
    %v555 = vadd.f32 %v401, %v554
    %v556 = vpop.f32.mrf.mxu0
    %557 = vmatprep.mubr.bf16.mxu0 0
    %558 = vmatmul.mubr.bf16.gmra.mxu0 %v226
    %v559 = vpop.f32.mrf.mxu0
    %v560 = vadd.f32 %v401, %v559
    %v561 = vpop.f32.mrf.mxu0
    %v562 = vpop.f32.mrf.mxu0
    %v563 = vadd.f32 %v401, %v562
    %v564 = vpop.f32.mrf.mxu0
    %565 = vdwg.mxu0
    %s566 = sld [smem:[#allocation4]]
    %vm567 = vcmp.ge.f32.partialorder %v440, 0.0
    %vm568 = vcmp.ge.f32.partialorder %v443, 0.0
    %vm569 = vcmp.ge.f32.partialorder %v448, 0.0
    %vm570 = vcmp.ge.f32.partialorder %v451, 0.0
    %vm571 = vcmp.ge.f32.partialorder %v456, 0.0
    %vm572 = vcmp.ge.f32.partialorder %v459, 0.0
    %vm573 = vcmp.ge.f32.partialorder %v464, 0.0
    %vm574 = vcmp.ge.f32.partialorder %v467, 0.0
    %vm575 = vcmp.ge.f32.partialorder %v472, 0.0
    %vm576 = vcmp.ge.f32.partialorder %v475, 0.0
    %vm577 = vcmp.ge.f32.partialorder %v480, 0.0
    %vm578 = vcmp.ge.f32.partialorder %v483, 0.0
    %vm579 = vcmp.ge.f32.partialorder %v488, 0.0
    %vm580 = vcmp.ge.f32.partialorder %v491, 0.0
    %vm581 = vcmp.ge.f32.partialorder %v496, 0.0
    %vm582 = vcmp.ge.f32.partialorder %v499, 0.0
    %vm583 = vcmp.ge.f32.partialorder %v504, 0.0
    %vm584 = vcmp.ge.f32.partialorder %v507, 0.0
    %vm585 = vcmp.ge.f32.partialorder %v512, 0.0
    %vm586 = vcmp.ge.f32.partialorder %v515, 0.0
    %vm587 = vcmp.ge.f32.partialorder %v520, 0.0
    %vm588 = vcmp.ge.f32.partialorder %v523, 0.0
    %vm589 = vcmp.ge.f32.partialorder %v528, 0.0
    %vm590 = vcmp.ge.f32.partialorder %v531, 0.0
    %vm591 = vcmp.ge.f32.partialorder %v536, 0.0
    %vm592 = vcmp.ge.f32.partialorder %v539, 0.0
    %vm593 = vcmp.ge.f32.partialorder %v544, 0.0
    %vm594 = vcmp.ge.f32.partialorder %v547, 0.0
    %vm595 = vcmp.ge.f32.partialorder %v552, 0.0
    %vm596 = vcmp.ge.f32.partialorder %v555, 0.0
    %vm597 = vcmp.ge.f32.partialorder %v560, 0.0
    %vm598 = vcmp.ge.f32.partialorder %v563, 0.0
    %v599 = vstv %s566
    %v600 = vmul.f32 %v599, %v440
    %v601 = vmul.f32 %v599, %v443
    %v602 = vmul.f32 %v599, %v448
    %v603 = vmul.f32 %v599, %v451
    %v604 = vmul.f32 %v599, %v456
    %v605 = vmul.f32 %v599, %v459
    %v606 = vmul.f32 %v599, %v464
    %v607 = vmul.f32 %v599, %v467
    %v608 = vmul.f32 %v599, %v472
    %v609 = vmul.f32 %v599, %v475
    %v610 = vmul.f32 %v599, %v480
    %v611 = vmul.f32 %v599, %v483
    %v612 = vmul.f32 %v599, %v488
    %v613 = vmul.f32 %v599, %v491
    %v614 = vmul.f32 %v599, %v496
    %v615 = vmul.f32 %v599, %v499
    %v616 = vmul.f32 %v599, %v504
    %v617 = vmul.f32 %v599, %v507
    %v618 = vmul.f32 %v599, %v512
    %v619 = vmul.f32 %v599, %v515
    %v620 = vmul.f32 %v599, %v520
    %v621 = vmul.f32 %v599, %v523
    %v622 = vmul.f32 %v599, %v528
    %v623 = vmul.f32 %v599, %v531
    %v624 = vmul.f32 %v599, %v536
    %v625 = vmul.f32 %v599, %v539
    %v626 = vmul.f32 %v599, %v544
    %v627 = vmul.f32 %v599, %v547
    %v628 = vmul.f32 %v599, %v552
    %v629 = vmul.f32 %v599, %v555
    %v630 = vmul.f32 %v599, %v560
    %v631 = vmul.f32 %v599, %v563
    %v632 = vsel %vm567, %v440, %v600
    %v633 = vsel %vm568, %v443, %v601
    %v634 = vsel %vm569, %v448, %v602
    %v635 = vsel %vm570, %v451, %v603
    %v636 = vsel %vm571, %v456, %v604
    %v637 = vsel %vm572, %v459, %v605
    %v638 = vsel %vm573, %v464, %v606
    %v639 = vsel %vm574, %v467, %v607
    %v640 = vsel %vm575, %v472, %v608
    %v641 = vsel %vm576, %v475, %v609
    %v642 = vsel %vm577, %v480, %v610
    %v643 = vsel %vm578, %v483, %v611
    %v644 = vsel %vm579, %v488, %v612
    %v645 = vsel %vm580, %v491, %v613
    %v646 = vsel %vm581, %v496, %v614
    %v647 = vsel %vm582, %v499, %v615
    %v648 = vsel %vm583, %v504, %v616
    %v649 = vsel %vm584, %v507, %v617
    %v650 = vsel %vm585, %v512, %v618
    %v651 = vsel %vm586, %v515, %v619
    %v652 = vsel %vm587, %v520, %v620
    %v653 = vsel %vm588, %v523, %v621
    %v654 = vsel %vm589, %v528, %v622
    %v655 = vsel %vm590, %v531, %v623
    %v656 = vsel %vm591, %v536, %v624
    %v657 = vsel %vm592, %v539, %v625
    %v658 = vsel %vm593, %v544, %v626
    %v659 = vsel %vm594, %v547, %v627
    %v660 = vsel %vm595, %v552, %v628
    %v661 = vsel %vm596, %v555, %v629
    %v662 = vsel %vm597, %v560, %v630
    %v663 = vsel %vm598, %v563, %v631
    %v664 = vld [vmem:[%s3] sm:$0xf]
    %v665 = vld [vmem:[%s3 + $0x4] sm:$0xf]
    %v666 = vld [vmem:[%s3 + $0x8] sm:$0xf]
    %v667 = vld [vmem:[%s3 + $0xc] sm:$0xf]
    %v668 = vld [vmem:[%s3 + $0x10] sm:$0xf]
    %v669 = vld [vmem:[%s3 + $0x14] sm:$0xf]
    %v670 = vld [vmem:[%s3 + $0x18] sm:$0xf]
    %v671 = vld [vmem:[%s3 + $0x1c] sm:$0xf]
    %v672 = vld [vmem:[%s3 + $0x20] sm:$0xf]
    %v673 = vld [vmem:[%s3 + $0x24] sm:$0xf]
    %v674 = vpack.c.bf16 %v633, %v632
    %v675 = vpack.c.bf16 %v635, %v634
    %v676 = vpack.c.bf16 %v637, %v636
    %v677 = vpack.c.bf16 %v639, %v638
    %v678 = vpack.c.bf16 %v641, %v640
    %v679 = vpack.c.bf16 %v643, %v642
    %v680 = vpack.c.bf16 %v645, %v644
    %v681 = vpack.c.bf16 %v647, %v646
    %v682 = vpack.c.bf16 %v649, %v648
    %v683 = vpack.c.bf16 %v651, %v650
    %v684 = vpack.c.bf16 %v653, %v652
    %v685 = vpack.c.bf16 %v655, %v654
    %v686 = vpack.c.bf16 %v657, %v656
    %v687 = vpack.c.bf16 %v659, %v658
    %v688 = vpack.c.bf16 %v661, %v660
    %v689 = vpack.c.bf16 %v663, %v662
    %v690 = vld [vmem:[%s6 + $0x1] sm:$0x1]
    %v691 = vlaneseq
    %v692 = vshrl.u32 %v691, 7
    %v693 = vsub.s32 0, %v692
    %v694 = vrot.slane %v690, %v693
    %v705 = vunpack.c.l.b16 %v664
    %v706 = vunpack.c.l.b16 %v665
    %v707 = vunpack.c.l.b16 %v666
    %v708 = vunpack.c.l.b16 %v667
    %v709 = vunpack.c.l.b16 %v668
    %v710 = vunpack.c.l.b16 %v669
    %v711 = vunpack.c.l.b16 %v670
    %v712 = vunpack.c.l.b16 %v671
    %v713 = vunpack.c.l.b16 %v672
    %v714 = vunpack.c.l.b16 %v673
    %v715 = vpack.c.b16 %v706, %v705
    %v716 = vpack.c.b16 %v708, %v707
    %v717 = vpack.c.b16 %v710, %v709
    %v718 = vpack.c.b16 %v712, %v711
    %v719 = vpack.c.b16 %v714, %v713
    %v726 = vsel %vm59, %v674, 0
    %v729 = vsel %vm59, %v675, 0
    %v732 = vsel %vm59, %v676, 0
    %v735 = vsel %vm59, %v677, 0
    %v738 = vsel %vm59, %v678, 0
    %v741 = vsel %vm59, %v679, 0
    %v744 = vsel %vm59, %v680, 0
    %v747 = vsel %vm59, %v681, 0
    %v750 = vsel %vm59, %v682, 0
    %v753 = vsel %vm59, %v683, 0
    %v756 = vsel %vm59, %v684, 0
    %v759 = vsel %vm59, %v685, 0
    %v762 = vsel %vm59, %v686, 0
    %v765 = vsel %vm59, %v687, 0
    %v768 = vsel %vm59, %v688, 0
    %v771 = vsel %vm59, %v689, 0
    %773 = vmatprep.subr.bf16.mxu0 0
    %774 = vmatpush1.bf16.msra.mxu0 0
    %775 = vmatprep.subr.bf16.mxu0 0
    %776 = vmatpush1.bf16.msra.mxu0 0
    %777 = vmatprep.subr.bf16.mxu0 0
    %778 = vmatpush1.bf16.msra.mxu0 0
    %779 = vmatprep.subr.bf16.mxu0 0
    %780 = vmatpush1.bf16.msra.mxu0 %v719
    %781 = vmatprep.subr.bf16.mxu0 0
    %782 = vmatpush1.bf16.msra.mxu0 %v718
    %783 = vmatprep.subr.bf16.mxu0 0
    %784 = vmatpush1.bf16.msra.mxu0 %v717
    %785 = vmatprep.subr.bf16.mxu0 0
    %786 = vmatpush1.bf16.msra.mxu0 %v716
    %787 = vmatprep.subr.bf16.mxu0 0
    %788 = vmatpush1.bf16.msra.mxu0 %v715
    %789 = vmatprep.subr.bf16.mxu0 0
    %790 = vmatpush2.bf16.msra.mxu0 0
    %791 = vmatprep.subr.bf16.mxu0 0
    %792 = vmatpush2.bf16.msra.mxu0 0
    %793 = vmatprep.subr.bf16.mxu0 0
    %794 = vmatpush2.bf16.msra.mxu0 0
    %795 = vmatprep.subr.bf16.mxu0 0
    %796 = vmatpush2.bf16.msra.mxu0 0
    %797 = vmatprep.subr.bf16.mxu0 0
    %798 = vmatpush2.bf16.msra.mxu0 0
    %799 = vmatprep.subr.bf16.mxu0 0
    %800 = vmatpush2.bf16.msra.mxu0 0
    %801 = vmatprep.subr.bf16.mxu0 0
    %802 = vmatpush2.bf16.msra.mxu0 0
    %803 = vmatprep.subr.bf16.mxu0 0
    %804 = vmatpush2.bf16.msra.mxu0 0
    %805 = vmatprep.mubr.bf16.mxu0 0
    %806 = vmatmul.mubr.bf16.gmra.mxu0 %v726
    %v807 = vpop.f32.mrf.mxu0
    %v808 = vadd.f32 %v694, %v807
    %v809 = vpop.f32.mrf.mxu0
    %v810 = vpop.f32.mrf.mxu0
    %v811 = vadd.f32 %v694, %v810
    %v812 = vpop.f32.mrf.mxu0
    %813 = vmatprep.mubr.bf16.mxu0 0
    %814 = vmatmul.mubr.bf16.gmra.mxu0 %v729
    %v815 = vpop.f32.mrf.mxu0
    %v816 = vadd.f32 %v694, %v815
    %v817 = vpop.f32.mrf.mxu0
    %v818 = vpop.f32.mrf.mxu0
    %v819 = vadd.f32 %v694, %v818
    %v820 = vpop.f32.mrf.mxu0
    %821 = vmatprep.mubr.bf16.mxu0 0
    %822 = vmatmul.mubr.bf16.gmra.mxu0 %v732
    %v823 = vpop.f32.mrf.mxu0
    %v824 = vadd.f32 %v694, %v823
    %v825 = vpop.f32.mrf.mxu0
    %v826 = vpop.f32.mrf.mxu0
    %v827 = vadd.f32 %v694, %v826
    %v828 = vpop.f32.mrf.mxu0
    %829 = vmatprep.mubr.bf16.mxu0 0
    %830 = vmatmul.mubr.bf16.gmra.mxu0 %v735
    %v831 = vpop.f32.mrf.mxu0
    %v832 = vadd.f32 %v694, %v831
    %v833 = vpop.f32.mrf.mxu0
    %v834 = vpop.f32.mrf.mxu0
    %v835 = vadd.f32 %v694, %v834
    %v836 = vpop.f32.mrf.mxu0
    %837 = vmatprep.mubr.bf16.mxu0 0
    %838 = vmatmul.mubr.bf16.gmra.mxu0 %v738
    %v839 = vpop.f32.mrf.mxu0
    %v840 = vadd.f32 %v694, %v839
    %v841 = vpop.f32.mrf.mxu0
    %v842 = vpop.f32.mrf.mxu0
    %v843 = vadd.f32 %v694, %v842
    %v844 = vpop.f32.mrf.mxu0
    %845 = vmatprep.mubr.bf16.mxu0 0
    %846 = vmatmul.mubr.bf16.gmra.mxu0 %v741
    %v847 = vpop.f32.mrf.mxu0
    %v848 = vadd.f32 %v694, %v847
    %v849 = vpop.f32.mrf.mxu0
    %v850 = vpop.f32.mrf.mxu0
    %v851 = vadd.f32 %v694, %v850
    %v852 = vpop.f32.mrf.mxu0
    %853 = vmatprep.mubr.bf16.mxu0 0
    %854 = vmatmul.mubr.bf16.gmra.mxu0 %v744
    %v855 = vpop.f32.mrf.mxu0
    %v856 = vadd.f32 %v694, %v855
    %v857 = vpop.f32.mrf.mxu0
    %v858 = vpop.f32.mrf.mxu0
    %v859 = vadd.f32 %v694, %v858
    %v860 = vpop.f32.mrf.mxu0
    %861 = vmatprep.mubr.bf16.mxu0 0
    %862 = vmatmul.mubr.bf16.gmra.mxu0 %v747
    %v863 = vpop.f32.mrf.mxu0
    %v864 = vadd.f32 %v694, %v863
    %v865 = vpop.f32.mrf.mxu0
    %v866 = vpop.f32.mrf.mxu0
    %v867 = vadd.f32 %v694, %v866
    %v868 = vpop.f32.mrf.mxu0
    %869 = vmatprep.mubr.bf16.mxu0 0
    %870 = vmatmul.mubr.bf16.gmra.mxu0 %v750
    %v871 = vpop.f32.mrf.mxu0
    %v872 = vadd.f32 %v694, %v871
    %v873 = vpop.f32.mrf.mxu0
    %v874 = vpop.f32.mrf.mxu0
    %v875 = vadd.f32 %v694, %v874
    %v876 = vpop.f32.mrf.mxu0
    %877 = vmatprep.mubr.bf16.mxu0 0
    %878 = vmatmul.mubr.bf16.gmra.mxu0 %v753
    %v879 = vpop.f32.mrf.mxu0
    %v880 = vadd.f32 %v694, %v879
    %v881 = vpop.f32.mrf.mxu0
    %v882 = vpop.f32.mrf.mxu0
    %v883 = vadd.f32 %v694, %v882
    %v884 = vpop.f32.mrf.mxu0
    %885 = vmatprep.mubr.bf16.mxu0 0
    %886 = vmatmul.mubr.bf16.gmra.mxu0 %v756
    %v887 = vpop.f32.mrf.mxu0
    %v888 = vadd.f32 %v694, %v887
    %v889 = vpop.f32.mrf.mxu0
    %v890 = vpop.f32.mrf.mxu0
    %v891 = vadd.f32 %v694, %v890
    %v892 = vpop.f32.mrf.mxu0
    %893 = vmatprep.mubr.bf16.mxu0 0
    %894 = vmatmul.mubr.bf16.gmra.mxu0 %v759
    %v895 = vpop.f32.mrf.mxu0
    %v896 = vadd.f32 %v694, %v895
    %v897 = vpop.f32.mrf.mxu0
    %v898 = vpop.f32.mrf.mxu0
    %v899 = vadd.f32 %v694, %v898
    %v900 = vpop.f32.mrf.mxu0
    %901 = vmatprep.mubr.bf16.mxu0 0
    %902 = vmatmul.mubr.bf16.gmra.mxu0 %v762
    %v903 = vpop.f32.mrf.mxu0
    %v904 = vadd.f32 %v694, %v903
    %v905 = vpop.f32.mrf.mxu0
    %v906 = vpop.f32.mrf.mxu0
    %v907 = vadd.f32 %v694, %v906
    %v908 = vpop.f32.mrf.mxu0
    %909 = vmatprep.mubr.bf16.mxu0 0
    %910 = vmatmul.mubr.bf16.gmra.mxu0 %v765
    %v911 = vpop.f32.mrf.mxu0
    %v912 = vadd.f32 %v694, %v911
    %v913 = vpop.f32.mrf.mxu0
    %v914 = vpop.f32.mrf.mxu0
    %v915 = vadd.f32 %v694, %v914
    %v916 = vpop.f32.mrf.mxu0
    %917 = vmatprep.mubr.bf16.mxu0 0
    %918 = vmatmul.mubr.bf16.gmra.mxu0 %v768
    %v919 = vpop.f32.mrf.mxu0
    %v920 = vadd.f32 %v694, %v919
    %v921 = vpop.f32.mrf.mxu0
    %v922 = vpop.f32.mrf.mxu0
    %v923 = vadd.f32 %v694, %v922
    %v924 = vpop.f32.mrf.mxu0
    %925 = vmatprep.mubr.bf16.mxu0 0
    %926 = vmatmul.mubr.bf16.gmra.mxu0 %v771
    %v927 = vpop.f32.mrf.mxu0
    %v928 = vadd.f32 %v694, %v927
    %v929 = vpop.f32.mrf.mxu0
    %v930 = vpop.f32.mrf.mxu0
    %v931 = vadd.f32 %v694, %v930
    %v932 = vpop.f32.mrf.mxu0
    %933 = vdwg.mxu0
    %s934 = sld [smem:[#allocation4 + $0x1]]
    %vm935 = vcmp.ge.f32.partialorder %v808, 0.0
    %vm936 = vcmp.ge.f32.partialorder %v811, 0.0
    %vm937 = vcmp.ge.f32.partialorder %v816, 0.0
    %vm938 = vcmp.ge.f32.partialorder %v819, 0.0
    %vm939 = vcmp.ge.f32.partialorder %v824, 0.0
    %vm940 = vcmp.ge.f32.partialorder %v827, 0.0
    %vm941 = vcmp.ge.f32.partialorder %v832, 0.0
    %vm942 = vcmp.ge.f32.partialorder %v835, 0.0
    %vm943 = vcmp.ge.f32.partialorder %v840, 0.0
    %vm944 = vcmp.ge.f32.partialorder %v843, 0.0
    %vm945 = vcmp.ge.f32.partialorder %v848, 0.0
    %vm946 = vcmp.ge.f32.partialorder %v851, 0.0
    %vm947 = vcmp.ge.f32.partialorder %v856, 0.0
    %vm948 = vcmp.ge.f32.partialorder %v859, 0.0
    %vm949 = vcmp.ge.f32.partialorder %v864, 0.0
    %vm950 = vcmp.ge.f32.partialorder %v867, 0.0
    %vm951 = vcmp.ge.f32.partialorder %v872, 0.0
    %vm952 = vcmp.ge.f32.partialorder %v875, 0.0
    %vm953 = vcmp.ge.f32.partialorder %v880, 0.0
    %vm954 = vcmp.ge.f32.partialorder %v883, 0.0
    %vm955 = vcmp.ge.f32.partialorder %v888, 0.0
    %vm956 = vcmp.ge.f32.partialorder %v891, 0.0
    %vm957 = vcmp.ge.f32.partialorder %v896, 0.0
    %vm958 = vcmp.ge.f32.partialorder %v899, 0.0
    %vm959 = vcmp.ge.f32.partialorder %v904, 0.0
    %vm960 = vcmp.ge.f32.partialorder %v907, 0.0
    %vm961 = vcmp.ge.f32.partialorder %v912, 0.0
    %vm962 = vcmp.ge.f32.partialorder %v915, 0.0
    %vm963 = vcmp.ge.f32.partialorder %v920, 0.0
    %vm964 = vcmp.ge.f32.partialorder %v923, 0.0
    %vm965 = vcmp.ge.f32.partialorder %v928, 0.0
    %vm966 = vcmp.ge.f32.partialorder %v931, 0.0
    %v967 = vstv %s934
    %v968 = vmul.f32 %v967, %v808
    %v969 = vmul.f32 %v967, %v811
    %v970 = vmul.f32 %v967, %v816
    %v971 = vmul.f32 %v967, %v819
    %v972 = vmul.f32 %v967, %v824
    %v973 = vmul.f32 %v967, %v827
    %v974 = vmul.f32 %v967, %v832
    %v975 = vmul.f32 %v967, %v835
    %v976 = vmul.f32 %v967, %v840
    %v977 = vmul.f32 %v967, %v843
    %v978 = vmul.f32 %v967, %v848
    %v979 = vmul.f32 %v967, %v851
    %v980 = vmul.f32 %v967, %v856
    %v981 = vmul.f32 %v967, %v859
    %v982 = vmul.f32 %v967, %v864
    %v983 = vmul.f32 %v967, %v867
    %v984 = vmul.f32 %v967, %v872
    %v985 = vmul.f32 %v967, %v875
    %v986 = vmul.f32 %v967, %v880
    %v987 = vmul.f32 %v967, %v883
    %v988 = vmul.f32 %v967, %v888
    %v989 = vmul.f32 %v967, %v891
    %v990 = vmul.f32 %v967, %v896
    %v991 = vmul.f32 %v967, %v899
    %v992 = vmul.f32 %v967, %v904
    %v993 = vmul.f32 %v967, %v907
    %v994 = vmul.f32 %v967, %v912
    %v995 = vmul.f32 %v967, %v915
    %v996 = vmul.f32 %v967, %v920
    %v997 = vmul.f32 %v967, %v923
    %v998 = vmul.f32 %v967, %v928
    %v999 = vmul.f32 %v967, %v931
    %v1000 = vsel %vm935, %v808, %v968
    %v1001 = vsel %vm936, %v811, %v969
    %v1002 = vsel %vm937, %v816, %v970
    %v1003 = vsel %vm938, %v819, %v971
    %v1004 = vsel %vm939, %v824, %v972
    %v1005 = vsel %vm940, %v827, %v973
    %v1006 = vsel %vm941, %v832, %v974
    %v1007 = vsel %vm942, %v835, %v975
    %v1008 = vsel %vm943, %v840, %v976
    %v1009 = vsel %vm944, %v843, %v977
    %v1010 = vsel %vm945, %v848, %v978
    %v1011 = vsel %vm946, %v851, %v979
    %v1012 = vsel %vm947, %v856, %v980
    %v1013 = vsel %vm948, %v859, %v981
    %v1014 = vsel %vm949, %v864, %v982
    %v1015 = vsel %vm950, %v867, %v983
    %v1016 = vsel %vm951, %v872, %v984
    %v1017 = vsel %vm952, %v875, %v985
    %v1018 = vsel %vm953, %v880, %v986
    %v1019 = vsel %vm954, %v883, %v987
    %v1020 = vsel %vm955, %v888, %v988
    %v1021 = vsel %vm956, %v891, %v989
    %v1022 = vsel %vm957, %v896, %v990
    %v1023 = vsel %vm958, %v899, %v991
    %v1024 = vsel %vm959, %v904, %v992
    %v1025 = vsel %vm960, %v907, %v993
    %v1026 = vsel %vm961, %v912, %v994
    %v1027 = vsel %vm962, %v915, %v995
    %v1028 = vsel %vm963, %v920, %v996
    %v1029 = vsel %vm964, %v923, %v997
    %v1030 = vsel %vm965, %v928, %v998
    %v1031 = vsel %vm966, %v931, %v999
    %v1032 = vadd.f32 %v1000, %v270
    %v1033 = vadd.f32 %v1001, %v273
    %v1034 = vadd.f32 %v1002, %v278
    %v1035 = vadd.f32 %v1003, %v281
    %v1036 = vadd.f32 %v1004, %v286
    %v1037 = vadd.f32 %v1005, %v289
    %v1038 = vadd.f32 %v1006, %v294
    %v1039 = vadd.f32 %v1007, %v297
    %v1040 = vadd.f32 %v1008, %v302
    %v1041 = vadd.f32 %v1009, %v305
    %v1042 = vadd.f32 %v1010, %v310
    %v1043 = vadd.f32 %v1011, %v313
    %v1044 = vadd.f32 %v1012, %v318
    %v1045 = vadd.f32 %v1013, %v321
    %v1046 = vadd.f32 %v1014, %v326
    %v1047 = vadd.f32 %v1015, %v329
    %v1048 = vadd.f32 %v1016, %v334
    %v1049 = vadd.f32 %v1017, %v337
    %v1050 = vadd.f32 %v1018, %v342
    %v1051 = vadd.f32 %v1019, %v345
    %v1052 = vadd.f32 %v1020, %v350
    %v1053 = vadd.f32 %v1021, %v353
    %v1054 = vadd.f32 %v1022, %v358
    %v1055 = vadd.f32 %v1023, %v361
    %v1056 = vadd.f32 %v1024, %v366
    %v1057 = vadd.f32 %v1025, %v369
    %v1058 = vadd.f32 %v1026, %v374
    %v1059 = vadd.f32 %v1027, %v377
    %v1060 = vadd.f32 %v1028, %v382
    %v1061 = vadd.f32 %v1029, %v385
    %v1062 = vadd.f32 %v1030, %v390
    %v1063 = vadd.f32 %v1031, %v393
    %v1064 = vld [vmem:[%s6 + $0x3] sm:$0x1]
    %1065 = vst.msk [vmem:[#allocation2 + $0x10] sm:$0xff] %vm59, %v1032
    %1066 = vst.msk [vmem:[#allocation2 + $0x18] sm:$0xff] %vm59, %v1033
    %1067 = vst.msk [vmem:[#allocation2 + $0x40] sm:$0xff] %vm59, %v1034
    %1068 = vst.msk [vmem:[#allocation2 + $0x48] sm:$0xff] %vm59, %v1035
    %1069 = vst.msk [vmem:[#allocation2 + $0x70] sm:$0xff] %vm59, %v1036
    %1070 = vst.msk [vmem:[#allocation2 + $0x78] sm:$0xff] %vm59, %v1037
    %1071 = vst.msk [vmem:[#allocation2 + $0xa0] sm:$0xff] %vm59, %v1038
    %1072 = vst.msk [vmem:[#allocation2 + $0xa8] sm:$0xff] %vm59, %v1039
    %1073 = vst.msk [vmem:[#allocation2 + $0xd0] sm:$0xff] %vm59, %v1040
    %1074 = vst.msk [vmem:[#allocation2 + $0xd8] sm:$0xff] %vm59, %v1041
    %1075 = vst.msk [vmem:[#allocation2 + $0x100] sm:$0xff] %vm59, %v1042
    %1076 = vst.msk [vmem:[#allocation2 + $0x108] sm:$0xff] %vm59, %v1043
    %1077 = vst.msk [vmem:[#allocation2 + $0x130] sm:$0xff] %vm59, %v1044
    %1078 = vst.msk [vmem:[#allocation2 + $0x138] sm:$0xff] %vm59, %v1045
    %1079 = vst.msk [vmem:[#allocation2 + $0x160] sm:$0xff] %vm59, %v1046
    %1080 = vst.msk [vmem:[#allocation2 + $0x168] sm:$0xff] %vm59, %v1047
    %1081 = vst.msk [vmem:[#allocation2 + $0x190] sm:$0xff] %vm59, %v1048
    %1082 = vst.msk [vmem:[#allocation2 + $0x198] sm:$0xff] %vm59, %v1049
    %1083 = vst.msk [vmem:[#allocation2 + $0x1c0] sm:$0xff] %vm59, %v1050
    %1084 = vst.msk [vmem:[#allocation2 + $0x1c8] sm:$0xff] %vm59, %v1051
    %1085 = vst.msk [vmem:[#allocation2 + $0x1f0] sm:$0xff] %vm59, %v1052
    %1086 = vst.msk [vmem:[#allocation2 + $0x1f8] sm:$0xff] %vm59, %v1053
    %1087 = vst.msk [vmem:[#allocation2 + $0x220] sm:$0xff] %vm59, %v1054
    %1088 = vst.msk [vmem:[#allocation2 + $0x228] sm:$0xff] %vm59, %v1055
    %1089 = vst.msk [vmem:[#allocation2 + $0x250] sm:$0xff] %vm59, %v1056
    %1090 = vst.msk [vmem:[#allocation2 + $0x258] sm:$0xff] %vm59, %v1057
    %1091 = vst.msk [vmem:[#allocation2 + $0x280] sm:$0xff] %vm59, %v1058
    %1092 = vst.msk [vmem:[#allocation2 + $0x288] sm:$0xff] %vm59, %v1059
    %1093 = vst.msk [vmem:[#allocation2 + $0x2b0] sm:$0xff] %vm59, %v1060
    %1094 = vst.msk [vmem:[#allocation2 + $0x2b8] sm:$0xff] %vm59, %v1061
    %1095 = vst.msk [vmem:[#allocation2 + $0x2e0] sm:$0xff] %vm59, %v1062
    %1096 = vst.msk [vmem:[#allocation2 + $0x2e8] sm:$0xff] %vm59, %v1063
    %v1097 = vld [vmem:[#allocation2 + $0x10] sm:$0xff]
    %v1098 = vld [vmem:[#allocation2 + $0x18] sm:$0xff]
    %v1099 = vld [vmem:[#allocation2 + $0x40] sm:$0xff]
    %v1100 = vld [vmem:[#allocation2 + $0x48] sm:$0xff]
    %v1101 = vld [vmem:[#allocation2 + $0x70] sm:$0xff]
    %v1102 = vld [vmem:[#allocation2 + $0x78] sm:$0xff]
    %v1103 = vld [vmem:[#allocation2 + $0xa0] sm:$0xff]
    %v1104 = vld [vmem:[#allocation2 + $0xa8] sm:$0xff]
    %v1105 = vld [vmem:[#allocation2 + $0xd0] sm:$0xff]
    %v1106 = vld [vmem:[#allocation2 + $0xd8] sm:$0xff]
    %v1107 = vld [vmem:[#allocation2 + $0x100] sm:$0xff]
    %v1108 = vld [vmem:[#allocation2 + $0x108] sm:$0xff]
    %v1109 = vld [vmem:[#allocation2 + $0x130] sm:$0xff]
    %v1110 = vld [vmem:[#allocation2 + $0x138] sm:$0xff]
    %v1111 = vld [vmem:[#allocation2 + $0x160] sm:$0xff]
    %v1112 = vld [vmem:[#allocation2 + $0x168] sm:$0xff]
    %v1113 = vld [vmem:[#allocation2 + $0x190] sm:$0xff]
    %v1114 = vld [vmem:[#allocation2 + $0x198] sm:$0xff]
    %v1115 = vld [vmem:[#allocation2 + $0x1c0] sm:$0xff]
    %v1116 = vld [vmem:[#allocation2 + $0x1c8] sm:$0xff]
    %v1117 = vld [vmem:[#allocation2 + $0x1f0] sm:$0xff]
    %v1118 = vld [vmem:[#allocation2 + $0x1f8] sm:$0xff]
    %v1119 = vld [vmem:[#allocation2 + $0x220] sm:$0xff]
    %v1120 = vld [vmem:[#allocation2 + $0x228] sm:$0xff]
    %v1121 = vld [vmem:[#allocation2 + $0x250] sm:$0xff]
    %v1122 = vld [vmem:[#allocation2 + $0x258] sm:$0xff]
    %v1123 = vld [vmem:[#allocation2 + $0x280] sm:$0xff]
    %v1124 = vld [vmem:[#allocation2 + $0x288] sm:$0xff]
    %v1125 = vld [vmem:[#allocation2 + $0x2b0] sm:$0xff]
    %v1126 = vld [vmem:[#allocation2 + $0x2b8] sm:$0xff]
    %v1127 = vld [vmem:[#allocation2 + $0x2e0] sm:$0xff]
    %v1128 = vld [vmem:[#allocation2 + $0x2e8] sm:$0xff]
    %v1129 = vld [vmem:[#allocation7] sm:$0xf]
    %v1130 = vld [vmem:[#allocation7 + $0x4] sm:$0xf]
    %v1131 = vld [vmem:[#allocation7 + $0x8] sm:$0xf]
    %v1132 = vld [vmem:[#allocation7 + $0xc] sm:$0xf]
    %v1133 = vld [vmem:[#allocation7 + $0x10] sm:$0xf]
    %v1134 = vld [vmem:[#allocation7 + $0x14] sm:$0xf]
    %v1135 = vld [vmem:[#allocation7 + $0x18] sm:$0xf]
    %v1136 = vld [vmem:[#allocation7 + $0x1c] sm:$0xf]
    %v1137 = vld [vmem:[#allocation7 + $0x20] sm:$0xf]
    %v1138 = vld [vmem:[#allocation7 + $0x24] sm:$0xf]
    %v1139 = vpack.c.bf16 %v1098, %v1097
    %v1140 = vpack.c.bf16 %v1100, %v1099
    %v1141 = vpack.c.bf16 %v1102, %v1101
    %v1142 = vpack.c.bf16 %v1104, %v1103
    %v1143 = vpack.c.bf16 %v1106, %v1105
    %v1144 = vpack.c.bf16 %v1108, %v1107
    %v1145 = vpack.c.bf16 %v1110, %v1109
    %v1146 = vpack.c.bf16 %v1112, %v1111
    %v1147 = vpack.c.bf16 %v1114, %v1113
    %v1148 = vpack.c.bf16 %v1116, %v1115
    %v1149 = vpack.c.bf16 %v1118, %v1117
    %v1150 = vpack.c.bf16 %v1120, %v1119
    %v1151 = vpack.c.bf16 %v1122, %v1121
    %v1152 = vpack.c.bf16 %v1124, %v1123
    %v1153 = vpack.c.bf16 %v1126, %v1125
    %v1154 = vpack.c.bf16 %v1128, %v1127
    %v1165 = vunpack.c.l.b16 %v1129
    %v1166 = vunpack.c.l.b16 %v1130
    %v1167 = vunpack.c.l.b16 %v1131
    %v1168 = vunpack.c.l.b16 %v1132
    %v1169 = vunpack.c.l.b16 %v1133
    %v1170 = vunpack.c.l.b16 %v1134
    %v1171 = vunpack.c.l.b16 %v1135
    %v1172 = vunpack.c.l.b16 %v1136
    %v1173 = vunpack.c.l.b16 %v1137
    %v1174 = vunpack.c.l.b16 %v1138
    %v1175 = vpack.c.b16 %v1166, %v1165
    %v1176 = vpack.c.b16 %v1168, %v1167
    %v1177 = vpack.c.b16 %v1170, %v1169
    %v1178 = vpack.c.b16 %v1172, %v1171
    %v1179 = vpack.c.b16 %v1174, %v1173
    %v1186 = vsel %vm59, %v1139, 0
    %v1189 = vsel %vm59, %v1140, 0
    %v1192 = vsel %vm59, %v1141, 0
    %v1195 = vsel %vm59, %v1142, 0
    %v1198 = vsel %vm59, %v1143, 0
    %v1201 = vsel %vm59, %v1144, 0
    %v1204 = vsel %vm59, %v1145, 0
    %v1207 = vsel %vm59, %v1146, 0
    %v1210 = vsel %vm59, %v1147, 0
    %v1213 = vsel %vm59, %v1148, 0
    %v1216 = vsel %vm59, %v1149, 0
    %v1219 = vsel %vm59, %v1150, 0
    %v1222 = vsel %vm59, %v1151, 0
    %v1225 = vsel %vm59, %v1152, 0
    %v1228 = vsel %vm59, %v1153, 0
    %v1231 = vsel %vm59, %v1154, 0
    %1233 = vmatprep.subr.bf16.mxu0 0
    %1234 = vmatpush1.bf16.msra.mxu0 0
    %1235 = vmatprep.subr.bf16.mxu0 0
    %1236 = vmatpush1.bf16.msra.mxu0 0
    %1237 = vmatprep.subr.bf16.mxu0 0
    %1238 = vmatpush1.bf16.msra.mxu0 0
    %1239 = vmatprep.subr.bf16.mxu0 0
    %1240 = vmatpush1.bf16.msra.mxu0 %v1179
    %1241 = vmatprep.subr.bf16.mxu0 0
    %1242 = vmatpush1.bf16.msra.mxu0 %v1178
    %1243 = vmatprep.subr.bf16.mxu0 0
    %1244 = vmatpush1.bf16.msra.mxu0 %v1177
    %1245 = vmatprep.subr.bf16.mxu0 0
    %1246 = vmatpush1.bf16.msra.mxu0 %v1176
    %1247 = vmatprep.subr.bf16.mxu0 0
    %1248 = vmatpush1.bf16.msra.mxu0 %v1175
    %1249 = vmatprep.subr.bf16.mxu0 0
    %1250 = vmatpush2.bf16.msra.mxu0 0
    %1251 = vmatprep.subr.bf16.mxu0 0
    %1252 = vmatpush2.bf16.msra.mxu0 0
    %1253 = vmatprep.subr.bf16.mxu0 0
    %1254 = vmatpush2.bf16.msra.mxu0 0
    %1255 = vmatprep.subr.bf16.mxu0 0
    %1256 = vmatpush2.bf16.msra.mxu0 0
    %1257 = vmatprep.subr.bf16.mxu0 0
    %1258 = vmatpush2.bf16.msra.mxu0 0
    %1259 = vmatprep.subr.bf16.mxu0 0
    %1260 = vmatpush2.bf16.msra.mxu0 0
    %1261 = vmatprep.subr.bf16.mxu0 0
    %1262 = vmatpush2.bf16.msra.mxu0 0
    %1263 = vmatprep.subr.bf16.mxu0 0
    %1264 = vmatpush2.bf16.msra.mxu0 0
    %1265 = vmatprep.mubr.bf16.mxu0 0
    %1266 = vmatmul.mubr.bf16.gmra.mxu0 %v1186
    %v1267 = vpop.f32.mrf.mxu0
    %v1268 = vadd.f32 0.0, %v1267
    %v1269 = vpop.f32.mrf.mxu0
    %v1270 = vpop.f32.mrf.mxu0
    %v1271 = vadd.f32 0.0, %v1270
    %v1272 = vpop.f32.mrf.mxu0
    %1273 = vmatprep.mubr.bf16.mxu0 0
    %1274 = vmatmul.mubr.bf16.gmra.mxu0 %v1189
    %v1275 = vpop.f32.mrf.mxu0
    %v1276 = vadd.f32 0.0, %v1275
    %v1277 = vpop.f32.mrf.mxu0
    %v1278 = vpop.f32.mrf.mxu0
    %v1279 = vadd.f32 0.0, %v1278
    %v1280 = vpop.f32.mrf.mxu0
    %1281 = vmatprep.mubr.bf16.mxu0 0
    %1282 = vmatmul.mubr.bf16.gmra.mxu0 %v1192
    %v1283 = vpop.f32.mrf.mxu0
    %v1284 = vadd.f32 0.0, %v1283
    %v1285 = vpop.f32.mrf.mxu0
    %v1286 = vpop.f32.mrf.mxu0
    %v1287 = vadd.f32 0.0, %v1286
    %v1288 = vpop.f32.mrf.mxu0
    %1289 = vmatprep.mubr.bf16.mxu0 0
    %1290 = vmatmul.mubr.bf16.gmra.mxu0 %v1195
    %v1291 = vpop.f32.mrf.mxu0
    %v1292 = vadd.f32 0.0, %v1291
    %v1293 = vpop.f32.mrf.mxu0
    %v1294 = vpop.f32.mrf.mxu0
    %v1295 = vadd.f32 0.0, %v1294
    %v1296 = vpop.f32.mrf.mxu0
    %1297 = vmatprep.mubr.bf16.mxu0 0
    %1298 = vmatmul.mubr.bf16.gmra.mxu0 %v1198
    %v1299 = vpop.f32.mrf.mxu0
    %v1300 = vadd.f32 0.0, %v1299
    %v1301 = vpop.f32.mrf.mxu0
    %v1302 = vpop.f32.mrf.mxu0
    %v1303 = vadd.f32 0.0, %v1302
    %v1304 = vpop.f32.mrf.mxu0
    %1305 = vmatprep.mubr.bf16.mxu0 0
    %1306 = vmatmul.mubr.bf16.gmra.mxu0 %v1201
    %v1307 = vpop.f32.mrf.mxu0
    %v1308 = vadd.f32 0.0, %v1307
    %v1309 = vpop.f32.mrf.mxu0
    %v1310 = vpop.f32.mrf.mxu0
    %v1311 = vadd.f32 0.0, %v1310
    %v1312 = vpop.f32.mrf.mxu0
    %1313 = vmatprep.mubr.bf16.mxu0 0
    %1314 = vmatmul.mubr.bf16.gmra.mxu0 %v1204
    %v1315 = vpop.f32.mrf.mxu0
    %v1316 = vadd.f32 0.0, %v1315
    %v1317 = vpop.f32.mrf.mxu0
    %v1318 = vpop.f32.mrf.mxu0
    %v1319 = vadd.f32 0.0, %v1318
    %v1320 = vpop.f32.mrf.mxu0
    %1321 = vmatprep.mubr.bf16.mxu0 0
    %1322 = vmatmul.mubr.bf16.gmra.mxu0 %v1207
    %v1323 = vpop.f32.mrf.mxu0
    %v1324 = vadd.f32 0.0, %v1323
    %v1325 = vpop.f32.mrf.mxu0
    %v1326 = vpop.f32.mrf.mxu0
    %v1327 = vadd.f32 0.0, %v1326
    %v1328 = vpop.f32.mrf.mxu0
    %1329 = vmatprep.mubr.bf16.mxu0 0
    %1330 = vmatmul.mubr.bf16.gmra.mxu0 %v1210
    %v1331 = vpop.f32.mrf.mxu0
    %v1332 = vadd.f32 0.0, %v1331
    %v1333 = vpop.f32.mrf.mxu0
    %v1334 = vpop.f32.mrf.mxu0
    %v1335 = vadd.f32 0.0, %v1334
    %v1336 = vpop.f32.mrf.mxu0
    %1337 = vmatprep.mubr.bf16.mxu0 0
    %1338 = vmatmul.mubr.bf16.gmra.mxu0 %v1213
    %v1339 = vpop.f32.mrf.mxu0
    %v1340 = vadd.f32 0.0, %v1339
    %v1341 = vpop.f32.mrf.mxu0
    %v1342 = vpop.f32.mrf.mxu0
    %v1343 = vadd.f32 0.0, %v1342
    %v1344 = vpop.f32.mrf.mxu0
    %1345 = vmatprep.mubr.bf16.mxu0 0
    %1346 = vmatmul.mubr.bf16.gmra.mxu0 %v1216
    %v1347 = vpop.f32.mrf.mxu0
    %v1348 = vadd.f32 0.0, %v1347
    %v1349 = vpop.f32.mrf.mxu0
    %v1350 = vpop.f32.mrf.mxu0
    %v1351 = vadd.f32 0.0, %v1350
    %v1352 = vpop.f32.mrf.mxu0
    %1353 = vmatprep.mubr.bf16.mxu0 0
    %1354 = vmatmul.mubr.bf16.gmra.mxu0 %v1219
    %v1355 = vpop.f32.mrf.mxu0
    %v1356 = vadd.f32 0.0, %v1355
    %v1357 = vpop.f32.mrf.mxu0
    %v1358 = vpop.f32.mrf.mxu0
    %v1359 = vadd.f32 0.0, %v1358
    %v1360 = vpop.f32.mrf.mxu0
    %1361 = vmatprep.mubr.bf16.mxu0 0
    %1362 = vmatmul.mubr.bf16.gmra.mxu0 %v1222
    %v1363 = vpop.f32.mrf.mxu0
    %v1364 = vadd.f32 0.0, %v1363
    %v1365 = vpop.f32.mrf.mxu0
    %v1366 = vpop.f32.mrf.mxu0
    %v1367 = vadd.f32 0.0, %v1366
    %v1368 = vpop.f32.mrf.mxu0
    %1369 = vmatprep.mubr.bf16.mxu0 0
    %1370 = vmatmul.mubr.bf16.gmra.mxu0 %v1225
    %v1371 = vpop.f32.mrf.mxu0
    %v1372 = vadd.f32 0.0, %v1371
    %v1373 = vpop.f32.mrf.mxu0
    %v1374 = vpop.f32.mrf.mxu0
    %v1375 = vadd.f32 0.0, %v1374
    %v1376 = vpop.f32.mrf.mxu0
    %1377 = vmatprep.mubr.bf16.mxu0 0
    %1378 = vmatmul.mubr.bf16.gmra.mxu0 %v1228
    %v1379 = vpop.f32.mrf.mxu0
    %v1380 = vadd.f32 0.0, %v1379
    %v1381 = vpop.f32.mrf.mxu0
    %v1382 = vpop.f32.mrf.mxu0
    %v1383 = vadd.f32 0.0, %v1382
    %v1384 = vpop.f32.mrf.mxu0
    %1385 = vmatprep.mubr.bf16.mxu0 0
    %1386 = vmatmul.mubr.bf16.gmra.mxu0 %v1231
    %v1387 = vpop.f32.mrf.mxu0
    %v1388 = vadd.f32 0.0, %v1387
    %v1389 = vpop.f32.mrf.mxu0
    %v1390 = vpop.f32.mrf.mxu0
    %v1391 = vadd.f32 0.0, %v1390
    %v1392 = vpop.f32.mrf.mxu0
    %1393 = vdwg.mxu0
    %v1394 = vlaneseq
    %v1395 = vshrl.u32 %v1394, 7
    %v1396 = vsub.s32 0, %v1395
    %v1397 = vrot.slane %v1064, %v1396
    %v1398 = vadd.f32 %v1397, %v1268
    %v1399 = vadd.f32 %v1397, %v1271
    %v1400 = vadd.f32 %v1397, %v1276
    %v1401 = vadd.f32 %v1397, %v1279
    %v1402 = vadd.f32 %v1397, %v1284
    %v1403 = vadd.f32 %v1397, %v1287
    %v1404 = vadd.f32 %v1397, %v1292
    %v1405 = vadd.f32 %v1397, %v1295
    %v1406 = vadd.f32 %v1397, %v1300
    %v1407 = vadd.f32 %v1397, %v1303
    %v1408 = vadd.f32 %v1397, %v1308
    %v1409 = vadd.f32 %v1397, %v1311
    %v1410 = vadd.f32 %v1397, %v1316
    %v1411 = vadd.f32 %v1397, %v1319
    %v1412 = vadd.f32 %v1397, %v1324
    %v1413 = vadd.f32 %v1397, %v1327
    %v1414 = vadd.f32 %v1397, %v1332
    %v1415 = vadd.f32 %v1397, %v1335
    %v1416 = vadd.f32 %v1397, %v1340
    %v1417 = vadd.f32 %v1397, %v1343
    %v1418 = vadd.f32 %v1397, %v1348
    %v1419 = vadd.f32 %v1397, %v1351
    %v1420 = vadd.f32 %v1397, %v1356
    %v1421 = vadd.f32 %v1397, %v1359
    %v1422 = vadd.f32 %v1397, %v1364
    %v1423 = vadd.f32 %v1397, %v1367
    %v1424 = vadd.f32 %v1397, %v1372
    %v1425 = vadd.f32 %v1397, %v1375
    %v1426 = vadd.f32 %v1397, %v1380
    %v1427 = vadd.f32 %v1397, %v1383
    %v1428 = vadd.f32 %v1397, %v1388
    %v1429 = vadd.f32 %v1397, %v1391
    %v1430 = vld [vmem:[#allocation2 + $0x11] sm:$0xff]
    %v1431 = vld [vmem:[#allocation2 + $0x19] sm:$0xff]
    %v1432 = vld [vmem:[#allocation2 + $0x41] sm:$0xff]
    %v1433 = vld [vmem:[#allocation2 + $0x49] sm:$0xff]
    %v1434 = vld [vmem:[#allocation2 + $0x71] sm:$0xff]
    %v1435 = vld [vmem:[#allocation2 + $0x79] sm:$0xff]
    %v1436 = vld [vmem:[#allocation2 + $0xa1] sm:$0xff]
    %v1437 = vld [vmem:[#allocation2 + $0xa9] sm:$0xff]
    %v1438 = vld [vmem:[#allocation2 + $0xd1] sm:$0xff]
    %v1439 = vld [vmem:[#allocation2 + $0xd9] sm:$0xff]
    %v1440 = vld [vmem:[#allocation2 + $0x101] sm:$0xff]
    %v1441 = vld [vmem:[#allocation2 + $0x109] sm:$0xff]
    %v1442 = vld [vmem:[#allocation2 + $0x131] sm:$0xff]
    %v1443 = vld [vmem:[#allocation2 + $0x139] sm:$0xff]
    %v1444 = vld [vmem:[#allocation2 + $0x161] sm:$0xff]
    %v1445 = vld [vmem:[#allocation2 + $0x169] sm:$0xff]
    %v1446 = vld [vmem:[#allocation2 + $0x191] sm:$0xff]
    %v1447 = vld [vmem:[#allocation2 + $0x199] sm:$0xff]
    %v1448 = vld [vmem:[#allocation2 + $0x1c1] sm:$0xff]
    %v1449 = vld [vmem:[#allocation2 + $0x1c9] sm:$0xff]
    %v1450 = vld [vmem:[#allocation2 + $0x1f1] sm:$0xff]
    %v1451 = vld [vmem:[#allocation2 + $0x1f9] sm:$0xff]
    %v1452 = vld [vmem:[#allocation2 + $0x221] sm:$0xff]
    %v1453 = vld [vmem:[#allocation2 + $0x229] sm:$0xff]
    %v1454 = vld [vmem:[#allocation2 + $0x251] sm:$0xff]
    %v1455 = vld [vmem:[#allocation2 + $0x259] sm:$0xff]
    %v1456 = vld [vmem:[#allocation2 + $0x281] sm:$0xff]
    %v1457 = vld [vmem:[#allocation2 + $0x289] sm:$0xff]
    %v1458 = vld [vmem:[#allocation2 + $0x2b1] sm:$0xff]
    %v1459 = vld [vmem:[#allocation2 + $0x2b9] sm:$0xff]
    %v1460 = vld [vmem:[#allocation2 + $0x2e1] sm:$0xff]
    %v1461 = vld [vmem:[#allocation2 + $0x2e9] sm:$0xff]
    %s1462 = scalar_lea.vmem [#allocation7], 40
    %v1463 = vld [vmem:[%s1462] sm:$0xf]
    %v1464 = vld [vmem:[%s1462 + $0x4] sm:$0xf]
    %v1465 = vld [vmem:[%s1462 + $0x8] sm:$0xf]
    %v1466 = vld [vmem:[%s1462 + $0xc] sm:$0xf]
    %v1467 = vld [vmem:[%s1462 + $0x10] sm:$0xf]
    %v1468 = vld [vmem:[%s1462 + $0x14] sm:$0xf]
    %v1469 = vld [vmem:[%s1462 + $0x18] sm:$0xf]
    %v1470 = vld [vmem:[%s1462 + $0x1c] sm:$0xf]
    %v1471 = vld [vmem:[%s1462 + $0x20] sm:$0xf]
    %v1472 = vld [vmem:[%s1462 + $0x24] sm:$0xf]
    %v1473 = vpack.c.bf16 %v1431, %v1430
    %v1474 = vpack.c.bf16 %v1433, %v1432
    %v1475 = vpack.c.bf16 %v1435, %v1434
    %v1476 = vpack.c.bf16 %v1437, %v1436
    %v1477 = vpack.c.bf16 %v1439, %v1438
    %v1478 = vpack.c.bf16 %v1441, %v1440
    %v1479 = vpack.c.bf16 %v1443, %v1442
    %v1480 = vpack.c.bf16 %v1445, %v1444
    %v1481 = vpack.c.bf16 %v1447, %v1446
    %v1482 = vpack.c.bf16 %v1449, %v1448
    %v1483 = vpack.c.bf16 %v1451, %v1450
    %v1484 = vpack.c.bf16 %v1453, %v1452
    %v1485 = vpack.c.bf16 %v1455, %v1454
    %v1486 = vpack.c.bf16 %v1457, %v1456
    %v1487 = vpack.c.bf16 %v1459, %v1458
    %v1488 = vpack.c.bf16 %v1461, %v1460
    %v1499 = vunpack.c.l.b16 %v1463
    %v1500 = vunpack.c.l.b16 %v1464
    %v1501 = vunpack.c.l.b16 %v1465
    %v1502 = vunpack.c.l.b16 %v1466
    %v1503 = vunpack.c.l.b16 %v1467
    %v1504 = vunpack.c.l.b16 %v1468
    %v1505 = vunpack.c.l.b16 %v1469
    %v1506 = vunpack.c.l.b16 %v1470
    %v1507 = vunpack.c.l.b16 %v1471
    %v1508 = vunpack.c.l.b16 %v1472
    %v1509 = vpack.c.b16 %v1500, %v1499
    %v1510 = vpack.c.b16 %v1502, %v1501
    %v1511 = vpack.c.b16 %v1504, %v1503
    %v1512 = vpack.c.b16 %v1506, %v1505
    %v1513 = vpack.c.b16 %v1508, %v1507
    %v1520 = vsel %vm59, %v1473, 0
    %v1523 = vsel %vm59, %v1474, 0
    %v1526 = vsel %vm59, %v1475, 0
    %v1529 = vsel %vm59, %v1476, 0
    %v1532 = vsel %vm59, %v1477, 0
    %v1535 = vsel %vm59, %v1478, 0
    %v1538 = vsel %vm59, %v1479, 0
    %v1541 = vsel %vm59, %v1480, 0
    %v1544 = vsel %vm59, %v1481, 0
    %v1547 = vsel %vm59, %v1482, 0
    %v1550 = vsel %vm59, %v1483, 0
    %v1553 = vsel %vm59, %v1484, 0
    %v1556 = vsel %vm59, %v1485, 0
    %v1559 = vsel %vm59, %v1486, 0
    %v1562 = vsel %vm59, %v1487, 0
    %v1565 = vsel %vm59, %v1488, 0
    %1567 = vmatprep.subr.bf16.mxu0 0
    %1568 = vmatpush1.bf16.msra.mxu0 0
    %1569 = vmatprep.subr.bf16.mxu0 0
    %1570 = vmatpush1.bf16.msra.mxu0 0
    %1571 = vmatprep.subr.bf16.mxu0 0
    %1572 = vmatpush1.bf16.msra.mxu0 0
    %1573 = vmatprep.subr.bf16.mxu0 0
    %1574 = vmatpush1.bf16.msra.mxu0 %v1513
    %1575 = vmatprep.subr.bf16.mxu0 0
    %1576 = vmatpush1.bf16.msra.mxu0 %v1512
    %1577 = vmatprep.subr.bf16.mxu0 0
    %1578 = vmatpush1.bf16.msra.mxu0 %v1511
    %1579 = vmatprep.subr.bf16.mxu0 0
    %1580 = vmatpush1.bf16.msra.mxu0 %v1510
    %1581 = vmatprep.subr.bf16.mxu0 0
    %1582 = vmatpush1.bf16.msra.mxu0 %v1509
    %1583 = vmatprep.subr.bf16.mxu0 0
    %1584 = vmatpush2.bf16.msra.mxu0 0
    %1585 = vmatprep.subr.bf16.mxu0 0
    %1586 = vmatpush2.bf16.msra.mxu0 0
    %1587 = vmatprep.subr.bf16.mxu0 0
    %1588 = vmatpush2.bf16.msra.mxu0 0
    %1589 = vmatprep.subr.bf16.mxu0 0
    %1590 = vmatpush2.bf16.msra.mxu0 0
    %1591 = vmatprep.subr.bf16.mxu0 0
    %1592 = vmatpush2.bf16.msra.mxu0 0
    %1593 = vmatprep.subr.bf16.mxu0 0
    %1594 = vmatpush2.bf16.msra.mxu0 0
    %1595 = vmatprep.subr.bf16.mxu0 0
    %1596 = vmatpush2.bf16.msra.mxu0 0
    %1597 = vmatprep.subr.bf16.mxu0 0
    %1598 = vmatpush2.bf16.msra.mxu0 0
    %1599 = vmatprep.mubr.bf16.mxu0 0
    %1600 = vmatmul.mubr.bf16.gmra.mxu0 %v1520
    %v1601 = vpop.f32.mrf.mxu0
    %v1602 = vadd.f32 0.0, %v1601
    %v1603 = vpop.f32.mrf.mxu0
    %v1604 = vpop.f32.mrf.mxu0
    %v1605 = vadd.f32 0.0, %v1604
    %v1606 = vpop.f32.mrf.mxu0
    %1607 = vmatprep.mubr.bf16.mxu0 0
    %1608 = vmatmul.mubr.bf16.gmra.mxu0 %v1523
    %v1609 = vpop.f32.mrf.mxu0
    %v1610 = vadd.f32 0.0, %v1609
    %v1611 = vpop.f32.mrf.mxu0
    %v1612 = vpop.f32.mrf.mxu0
    %v1613 = vadd.f32 0.0, %v1612
    %v1614 = vpop.f32.mrf.mxu0
    %1615 = vmatprep.mubr.bf16.mxu0 0
    %1616 = vmatmul.mubr.bf16.gmra.mxu0 %v1526
    %v1617 = vpop.f32.mrf.mxu0
    %v1618 = vadd.f32 0.0, %v1617
    %v1619 = vpop.f32.mrf.mxu0
    %v1620 = vpop.f32.mrf.mxu0
    %v1621 = vadd.f32 0.0, %v1620
    %v1622 = vpop.f32.mrf.mxu0
    %1623 = vmatprep.mubr.bf16.mxu0 0
    %1624 = vmatmul.mubr.bf16.gmra.mxu0 %v1529
    %v1625 = vpop.f32.mrf.mxu0
    %v1626 = vadd.f32 0.0, %v1625
    %v1627 = vpop.f32.mrf.mxu0
    %v1628 = vpop.f32.mrf.mxu0
    %v1629 = vadd.f32 0.0, %v1628
    %v1630 = vpop.f32.mrf.mxu0
    %1631 = vmatprep.mubr.bf16.mxu0 0
    %1632 = vmatmul.mubr.bf16.gmra.mxu0 %v1532
    %v1633 = vpop.f32.mrf.mxu0
    %v1634 = vadd.f32 0.0, %v1633
    %v1635 = vpop.f32.mrf.mxu0
    %v1636 = vpop.f32.mrf.mxu0
    %v1637 = vadd.f32 0.0, %v1636
    %v1638 = vpop.f32.mrf.mxu0
    %1639 = vmatprep.mubr.bf16.mxu0 0
    %1640 = vmatmul.mubr.bf16.gmra.mxu0 %v1535
    %v1641 = vpop.f32.mrf.mxu0
    %v1642 = vadd.f32 0.0, %v1641
    %v1643 = vpop.f32.mrf.mxu0
    %v1644 = vpop.f32.mrf.mxu0
    %v1645 = vadd.f32 0.0, %v1644
    %v1646 = vpop.f32.mrf.mxu0
    %1647 = vmatprep.mubr.bf16.mxu0 0
    %1648 = vmatmul.mubr.bf16.gmra.mxu0 %v1538
    %v1649 = vpop.f32.mrf.mxu0
    %v1650 = vadd.f32 0.0, %v1649
    %v1651 = vpop.f32.mrf.mxu0
    %v1652 = vpop.f32.mrf.mxu0
    %v1653 = vadd.f32 0.0, %v1652
    %v1654 = vpop.f32.mrf.mxu0
    %1655 = vmatprep.mubr.bf16.mxu0 0
    %1656 = vmatmul.mubr.bf16.gmra.mxu0 %v1541
    %v1657 = vpop.f32.mrf.mxu0
    %v1658 = vadd.f32 0.0, %v1657
    %v1659 = vpop.f32.mrf.mxu0
    %v1660 = vpop.f32.mrf.mxu0
    %v1661 = vadd.f32 0.0, %v1660
    %v1662 = vpop.f32.mrf.mxu0
    %1663 = vmatprep.mubr.bf16.mxu0 0
    %1664 = vmatmul.mubr.bf16.gmra.mxu0 %v1544
    %v1665 = vpop.f32.mrf.mxu0
    %v1666 = vadd.f32 0.0, %v1665
    %v1667 = vpop.f32.mrf.mxu0
    %v1668 = vpop.f32.mrf.mxu0
    %v1669 = vadd.f32 0.0, %v1668
    %v1670 = vpop.f32.mrf.mxu0
    %1671 = vmatprep.mubr.bf16.mxu0 0
    %1672 = vmatmul.mubr.bf16.gmra.mxu0 %v1547
    %v1673 = vpop.f32.mrf.mxu0
    %v1674 = vadd.f32 0.0, %v1673
    %v1675 = vpop.f32.mrf.mxu0
    %v1676 = vpop.f32.mrf.mxu0
    %v1677 = vadd.f32 0.0, %v1676
    %v1678 = vpop.f32.mrf.mxu0
    %1679 = vmatprep.mubr.bf16.mxu0 0
    %1680 = vmatmul.mubr.bf16.gmra.mxu0 %v1550
    %v1681 = vpop.f32.mrf.mxu0
    %v1682 = vadd.f32 0.0, %v1681
    %v1683 = vpop.f32.mrf.mxu0
    %v1684 = vpop.f32.mrf.mxu0
    %v1685 = vadd.f32 0.0, %v1684
    %v1686 = vpop.f32.mrf.mxu0
    %1687 = vmatprep.mubr.bf16.mxu0 0
    %1688 = vmatmul.mubr.bf16.gmra.mxu0 %v1553
    %v1689 = vpop.f32.mrf.mxu0
    %v1690 = vadd.f32 0.0, %v1689
    %v1691 = vpop.f32.mrf.mxu0
    %v1692 = vpop.f32.mrf.mxu0
    %v1693 = vadd.f32 0.0, %v1692
    %v1694 = vpop.f32.mrf.mxu0
    %1695 = vmatprep.mubr.bf16.mxu0 0
    %1696 = vmatmul.mubr.bf16.gmra.mxu0 %v1556
    %v1697 = vpop.f32.mrf.mxu0
    %v1698 = vadd.f32 0.0, %v1697
    %v1699 = vpop.f32.mrf.mxu0
    %v1700 = vpop.f32.mrf.mxu0
    %v1701 = vadd.f32 0.0, %v1700
    %v1702 = vpop.f32.mrf.mxu0
    %1703 = vmatprep.mubr.bf16.mxu0 0
    %1704 = vmatmul.mubr.bf16.gmra.mxu0 %v1559
    %v1705 = vpop.f32.mrf.mxu0
    %v1706 = vadd.f32 0.0, %v1705
    %v1707 = vpop.f32.mrf.mxu0
    %v1708 = vpop.f32.mrf.mxu0
    %v1709 = vadd.f32 0.0, %v1708
    %v1710 = vpop.f32.mrf.mxu0
    %1711 = vmatprep.mubr.bf16.mxu0 0
    %1712 = vmatmul.mubr.bf16.gmra.mxu0 %v1562
    %v1713 = vpop.f32.mrf.mxu0
    %v1714 = vadd.f32 0.0, %v1713
    %v1715 = vpop.f32.mrf.mxu0
    %v1716 = vpop.f32.mrf.mxu0
    %v1717 = vadd.f32 0.0, %v1716
    %v1718 = vpop.f32.mrf.mxu0
    %1719 = vmatprep.mubr.bf16.mxu0 0
    %1720 = vmatmul.mubr.bf16.gmra.mxu0 %v1565
    %v1721 = vpop.f32.mrf.mxu0
    %v1722 = vadd.f32 0.0, %v1721
    %v1723 = vpop.f32.mrf.mxu0
    %v1724 = vpop.f32.mrf.mxu0
    %v1725 = vadd.f32 0.0, %v1724
    %v1726 = vpop.f32.mrf.mxu0
    %1727 = vdwg.mxu0
    %v1728 = vadd.f32 %v1398, %v1602
    %v1729 = vadd.f32 %v1399, %v1605
    %v1730 = vadd.f32 %v1400, %v1610
    %v1731 = vadd.f32 %v1401, %v1613
    %v1732 = vadd.f32 %v1402, %v1618
    %v1733 = vadd.f32 %v1403, %v1621
    %v1734 = vadd.f32 %v1404, %v1626
    %v1735 = vadd.f32 %v1405, %v1629
    %v1736 = vadd.f32 %v1406, %v1634
    %v1737 = vadd.f32 %v1407, %v1637
    %v1738 = vadd.f32 %v1408, %v1642
    %v1739 = vadd.f32 %v1409, %v1645
    %v1740 = vadd.f32 %v1410, %v1650
    %v1741 = vadd.f32 %v1411, %v1653
    %v1742 = vadd.f32 %v1412, %v1658
    %v1743 = vadd.f32 %v1413, %v1661
    %v1744 = vadd.f32 %v1414, %v1666
    %v1745 = vadd.f32 %v1415, %v1669
    %v1746 = vadd.f32 %v1416, %v1674
    %v1747 = vadd.f32 %v1417, %v1677
    %v1748 = vadd.f32 %v1418, %v1682
    %v1749 = vadd.f32 %v1419, %v1685
    %v1750 = vadd.f32 %v1420, %v1690
    %v1751 = vadd.f32 %v1421, %v1693
    %v1752 = vadd.f32 %v1422, %v1698
    %v1753 = vadd.f32 %v1423, %v1701
    %v1754 = vadd.f32 %v1424, %v1706
    %v1755 = vadd.f32 %v1425, %v1709
    %v1756 = vadd.f32 %v1426, %v1714
    %v1757 = vadd.f32 %v1427, %v1717
    %v1758 = vadd.f32 %v1428, %v1722
    %v1759 = vadd.f32 %v1429, %v1725
    %s1760 = sld [smem:[#allocation4 + $0x2]]
    %vm1761 = vcmp.ge.f32.partialorder %v1728, 0.0
    %vm1762 = vcmp.ge.f32.partialorder %v1729, 0.0
    %vm1763 = vcmp.ge.f32.partialorder %v1730, 0.0
    %vm1764 = vcmp.ge.f32.partialorder %v1731, 0.0
    %vm1765 = vcmp.ge.f32.partialorder %v1732, 0.0
    %vm1766 = vcmp.ge.f32.partialorder %v1733, 0.0
    %vm1767 = vcmp.ge.f32.partialorder %v1734, 0.0
    %vm1768 = vcmp.ge.f32.partialorder %v1735, 0.0
    %vm1769 = vcmp.ge.f32.partialorder %v1736, 0.0
    %vm1770 = vcmp.ge.f32.partialorder %v1737, 0.0
    %vm1771 = vcmp.ge.f32.partialorder %v1738, 0.0
    %vm1772 = vcmp.ge.f32.partialorder %v1739, 0.0
    %vm1773 = vcmp.ge.f32.partialorder %v1740, 0.0
    %vm1774 = vcmp.ge.f32.partialorder %v1741, 0.0
    %vm1775 = vcmp.ge.f32.partialorder %v1742, 0.0
    %vm1776 = vcmp.ge.f32.partialorder %v1743, 0.0
    %vm1777 = vcmp.ge.f32.partialorder %v1744, 0.0
    %vm1778 = vcmp.ge.f32.partialorder %v1745, 0.0
    %vm1779 = vcmp.ge.f32.partialorder %v1746, 0.0
    %vm1780 = vcmp.ge.f32.partialorder %v1747, 0.0
    %vm1781 = vcmp.ge.f32.partialorder %v1748, 0.0
    %vm1782 = vcmp.ge.f32.partialorder %v1749, 0.0
    %vm1783 = vcmp.ge.f32.partialorder %v1750, 0.0
    %vm1784 = vcmp.ge.f32.partialorder %v1751, 0.0
    %vm1785 = vcmp.ge.f32.partialorder %v1752, 0.0
    %vm1786 = vcmp.ge.f32.partialorder %v1753, 0.0
    %vm1787 = vcmp.ge.f32.partialorder %v1754, 0.0
    %vm1788 = vcmp.ge.f32.partialorder %v1755, 0.0
    %vm1789 = vcmp.ge.f32.partialorder %v1756, 0.0
    %vm1790 = vcmp.ge.f32.partialorder %v1757, 0.0
    %vm1791 = vcmp.ge.f32.partialorder %v1758, 0.0
    %vm1792 = vcmp.ge.f32.partialorder %v1759, 0.0
    %v1793 = vstv %s1760
    %v1794 = vmul.f32 %v1793, %v1728
    %v1795 = vmul.f32 %v1793, %v1729
    %v1796 = vmul.f32 %v1793, %v1730
    %v1797 = vmul.f32 %v1793, %v1731
    %v1798 = vmul.f32 %v1793, %v1732
    %v1799 = vmul.f32 %v1793, %v1733
    %v1800 = vmul.f32 %v1793, %v1734
    %v1801 = vmul.f32 %v1793, %v1735
    %v1802 = vmul.f32 %v1793, %v1736
    %v1803 = vmul.f32 %v1793, %v1737
    %v1804 = vmul.f32 %v1793, %v1738
    %v1805 = vmul.f32 %v1793, %v1739
    %v1806 = vmul.f32 %v1793, %v1740
    %v1807 = vmul.f32 %v1793, %v1741
    %v1808 = vmul.f32 %v1793, %v1742
    %v1809 = vmul.f32 %v1793, %v1743
    %v1810 = vmul.f32 %v1793, %v1744
    %v1811 = vmul.f32 %v1793, %v1745
    %v1812 = vmul.f32 %v1793, %v1746
    %v1813 = vmul.f32 %v1793, %v1747
    %v1814 = vmul.f32 %v1793, %v1748
    %v1815 = vmul.f32 %v1793, %v1749
    %v1816 = vmul.f32 %v1793, %v1750
    %v1817 = vmul.f32 %v1793, %v1751
    %v1818 = vmul.f32 %v1793, %v1752
    %v1819 = vmul.f32 %v1793, %v1753
    %v1820 = vmul.f32 %v1793, %v1754
    %v1821 = vmul.f32 %v1793, %v1755
    %v1822 = vmul.f32 %v1793, %v1756
    %v1823 = vmul.f32 %v1793, %v1757
    %v1824 = vmul.f32 %v1793, %v1758
    %v1825 = vmul.f32 %v1793, %v1759
    %v1826 = vsel %vm1761, %v1728, %v1794
    %v1827 = vsel %vm1762, %v1729, %v1795
    %v1828 = vsel %vm1763, %v1730, %v1796
    %v1829 = vsel %vm1764, %v1731, %v1797
    %v1830 = vsel %vm1765, %v1732, %v1798
    %v1831 = vsel %vm1766, %v1733, %v1799
    %v1832 = vsel %vm1767, %v1734, %v1800
    %v1833 = vsel %vm1768, %v1735, %v1801
    %v1834 = vsel %vm1769, %v1736, %v1802
    %v1835 = vsel %vm1770, %v1737, %v1803
    %v1836 = vsel %vm1771, %v1738, %v1804
    %v1837 = vsel %vm1772, %v1739, %v1805
    %v1838 = vsel %vm1773, %v1740, %v1806
    %v1839 = vsel %vm1774, %v1741, %v1807
    %v1840 = vsel %vm1775, %v1742, %v1808
    %v1841 = vsel %vm1776, %v1743, %v1809
    %v1842 = vsel %vm1777, %v1744, %v1810
    %v1843 = vsel %vm1778, %v1745, %v1811
    %v1844 = vsel %vm1779, %v1746, %v1812
    %v1845 = vsel %vm1780, %v1747, %v1813
    %v1846 = vsel %vm1781, %v1748, %v1814
    %v1847 = vsel %vm1782, %v1749, %v1815
    %v1848 = vsel %vm1783, %v1750, %v1816
    %v1849 = vsel %vm1784, %v1751, %v1817
    %v1850 = vsel %vm1785, %v1752, %v1818
    %v1851 = vsel %vm1786, %v1753, %v1819
    %v1852 = vsel %vm1787, %v1754, %v1820
    %v1853 = vsel %vm1788, %v1755, %v1821
    %v1854 = vsel %vm1789, %v1756, %v1822
    %v1855 = vsel %vm1790, %v1757, %v1823
    %v1856 = vsel %vm1791, %v1758, %v1824
    %v1857 = vsel %vm1792, %v1759, %v1825
    %v1858 = vld [vmem:[%s6 + $0x4] sm:$0x1]
    %1859 = vst.msk [vmem:[#allocation2 + $0x10] sm:$0xff] %vm59, %v1826
    %1860 = vst.msk [vmem:[#allocation2 + $0x18] sm:$0xff] %vm59, %v1827
    %1861 = vst.msk [vmem:[#allocation2 + $0x40] sm:$0xff] %vm59, %v1828
    %1862 = vst.msk [vmem:[#allocation2 + $0x48] sm:$0xff] %vm59, %v1829
    %1863 = vst.msk [vmem:[#allocation2 + $0x70] sm:$0xff] %vm59, %v1830
    %1864 = vst.msk [vmem:[#allocation2 + $0x78] sm:$0xff] %vm59, %v1831
    %1865 = vst.msk [vmem:[#allocation2 + $0xa0] sm:$0xff] %vm59, %v1832
    %1866 = vst.msk [vmem:[#allocation2 + $0xa8] sm:$0xff] %vm59, %v1833
    %1867 = vst.msk [vmem:[#allocation2 + $0xd0] sm:$0xff] %vm59, %v1834
    %1868 = vst.msk [vmem:[#allocation2 + $0xd8] sm:$0xff] %vm59, %v1835
    %1869 = vst.msk [vmem:[#allocation2 + $0x100] sm:$0xff] %vm59, %v1836
    %1870 = vst.msk [vmem:[#allocation2 + $0x108] sm:$0xff] %vm59, %v1837
    %1871 = vst.msk [vmem:[#allocation2 + $0x130] sm:$0xff] %vm59, %v1838
    %1872 = vst.msk [vmem:[#allocation2 + $0x138] sm:$0xff] %vm59, %v1839
    %1873 = vst.msk [vmem:[#allocation2 + $0x160] sm:$0xff] %vm59, %v1840
    %1874 = vst.msk [vmem:[#allocation2 + $0x168] sm:$0xff] %vm59, %v1841
    %1875 = vst.msk [vmem:[#allocation2 + $0x190] sm:$0xff] %vm59, %v1842
    %1876 = vst.msk [vmem:[#allocation2 + $0x198] sm:$0xff] %vm59, %v1843
    %1877 = vst.msk [vmem:[#allocation2 + $0x1c0] sm:$0xff] %vm59, %v1844
    %1878 = vst.msk [vmem:[#allocation2 + $0x1c8] sm:$0xff] %vm59, %v1845
    %1879 = vst.msk [vmem:[#allocation2 + $0x1f0] sm:$0xff] %vm59, %v1846
    %1880 = vst.msk [vmem:[#allocation2 + $0x1f8] sm:$0xff] %vm59, %v1847
    %1881 = vst.msk [vmem:[#allocation2 + $0x220] sm:$0xff] %vm59, %v1848
    %1882 = vst.msk [vmem:[#allocation2 + $0x228] sm:$0xff] %vm59, %v1849
    %1883 = vst.msk [vmem:[#allocation2 + $0x250] sm:$0xff] %vm59, %v1850
    %1884 = vst.msk [vmem:[#allocation2 + $0x258] sm:$0xff] %vm59, %v1851
    %1885 = vst.msk [vmem:[#allocation2 + $0x280] sm:$0xff] %vm59, %v1852
    %1886 = vst.msk [vmem:[#allocation2 + $0x288] sm:$0xff] %vm59, %v1853
    %1887 = vst.msk [vmem:[#allocation2 + $0x2b0] sm:$0xff] %vm59, %v1854
    %1888 = vst.msk [vmem:[#allocation2 + $0x2b8] sm:$0xff] %vm59, %v1855
    %1889 = vst.msk [vmem:[#allocation2 + $0x2e0] sm:$0xff] %vm59, %v1856
    %1890 = vst.msk [vmem:[#allocation2 + $0x2e8] sm:$0xff] %vm59, %v1857
    %v1891 = vld [vmem:[#allocation2 + $0x10] sm:$0xff]
    %v1892 = vld [vmem:[#allocation2 + $0x18] sm:$0xff]
    %v1893 = vld [vmem:[#allocation2 + $0x40] sm:$0xff]
    %v1894 = vld [vmem:[#allocation2 + $0x48] sm:$0xff]
    %v1895 = vld [vmem:[#allocation2 + $0x70] sm:$0xff]
    %v1896 = vld [vmem:[#allocation2 + $0x78] sm:$0xff]
    %v1897 = vld [vmem:[#allocation2 + $0xa0] sm:$0xff]
    %v1898 = vld [vmem:[#allocation2 + $0xa8] sm:$0xff]
    %v1899 = vld [vmem:[#allocation2 + $0xd0] sm:$0xff]
    %v1900 = vld [vmem:[#allocation2 + $0xd8] sm:$0xff]
    %v1901 = vld [vmem:[#allocation2 + $0x100] sm:$0xff]
    %v1902 = vld [vmem:[#allocation2 + $0x108] sm:$0xff]
    %v1903 = vld [vmem:[#allocation2 + $0x130] sm:$0xff]
    %v1904 = vld [vmem:[#allocation2 + $0x138] sm:$0xff]
    %v1905 = vld [vmem:[#allocation2 + $0x160] sm:$0xff]
    %v1906 = vld [vmem:[#allocation2 + $0x168] sm:$0xff]
    %v1907 = vld [vmem:[#allocation2 + $0x190] sm:$0xff]
    %v1908 = vld [vmem:[#allocation2 + $0x198] sm:$0xff]
    %v1909 = vld [vmem:[#allocation2 + $0x1c0] sm:$0xff]
    %v1910 = vld [vmem:[#allocation2 + $0x1c8] sm:$0xff]
    %v1911 = vld [vmem:[#allocation2 + $0x1f0] sm:$0xff]
    %v1912 = vld [vmem:[#allocation2 + $0x1f8] sm:$0xff]
    %v1913 = vld [vmem:[#allocation2 + $0x220] sm:$0xff]
    %v1914 = vld [vmem:[#allocation2 + $0x228] sm:$0xff]
    %v1915 = vld [vmem:[#allocation2 + $0x250] sm:$0xff]
    %v1916 = vld [vmem:[#allocation2 + $0x258] sm:$0xff]
    %v1917 = vld [vmem:[#allocation2 + $0x280] sm:$0xff]
    %v1918 = vld [vmem:[#allocation2 + $0x288] sm:$0xff]
    %v1919 = vld [vmem:[#allocation2 + $0x2b0] sm:$0xff]
    %v1920 = vld [vmem:[#allocation2 + $0x2b8] sm:$0xff]
    %v1921 = vld [vmem:[#allocation2 + $0x2e0] sm:$0xff]
    %v1922 = vld [vmem:[#allocation2 + $0x2e8] sm:$0xff]
    %s1923 = scalar_lea.vmem [#allocation7], 80
    %v1924 = vld [vmem:[%s1923] sm:$0xf]
    %v1925 = vld [vmem:[%s1923 + $0x4] sm:$0xf]
    %v1926 = vld [vmem:[%s1923 + $0x8] sm:$0xf]
    %v1927 = vld [vmem:[%s1923 + $0xc] sm:$0xf]
    %v1928 = vld [vmem:[%s1923 + $0x10] sm:$0xf]
    %v1929 = vld [vmem:[%s1923 + $0x14] sm:$0xf]
    %v1930 = vld [vmem:[%s1923 + $0x18] sm:$0xf]
    %v1931 = vld [vmem:[%s1923 + $0x1c] sm:$0xf]
    %v1932 = vld [vmem:[%s1923 + $0x20] sm:$0xf]
    %v1933 = vld [vmem:[%s1923 + $0x24] sm:$0xf]
    %v1934 = vpack.c.bf16 %v1892, %v1891
    %v1935 = vpack.c.bf16 %v1894, %v1893
    %v1936 = vpack.c.bf16 %v1896, %v1895
    %v1937 = vpack.c.bf16 %v1898, %v1897
    %v1938 = vpack.c.bf16 %v1900, %v1899
    %v1939 = vpack.c.bf16 %v1902, %v1901
    %v1940 = vpack.c.bf16 %v1904, %v1903
    %v1941 = vpack.c.bf16 %v1906, %v1905
    %v1942 = vpack.c.bf16 %v1908, %v1907
    %v1943 = vpack.c.bf16 %v1910, %v1909
    %v1944 = vpack.c.bf16 %v1912, %v1911
    %v1945 = vpack.c.bf16 %v1914, %v1913
    %v1946 = vpack.c.bf16 %v1916, %v1915
    %v1947 = vpack.c.bf16 %v1918, %v1917
    %v1948 = vpack.c.bf16 %v1920, %v1919
    %v1949 = vpack.c.bf16 %v1922, %v1921
    %v1960 = vunpack.c.l.b16 %v1924
    %v1961 = vunpack.c.l.b16 %v1925
    %v1962 = vunpack.c.l.b16 %v1926
    %v1963 = vunpack.c.l.b16 %v1927
    %v1964 = vunpack.c.l.b16 %v1928
    %v1965 = vunpack.c.l.b16 %v1929
    %v1966 = vunpack.c.l.b16 %v1930
    %v1967 = vunpack.c.l.b16 %v1931
    %v1968 = vunpack.c.l.b16 %v1932
    %v1969 = vunpack.c.l.b16 %v1933
    %v1970 = vpack.c.b16 %v1961, %v1960
    %v1971 = vpack.c.b16 %v1963, %v1962
    %v1972 = vpack.c.b16 %v1965, %v1964
    %v1973 = vpack.c.b16 %v1967, %v1966
    %v1974 = vpack.c.b16 %v1969, %v1968
    %v1981 = vsel %vm59, %v1934, 0
    %v1984 = vsel %vm59, %v1935, 0
    %v1987 = vsel %vm59, %v1936, 0
    %v1990 = vsel %vm59, %v1937, 0
    %v1993 = vsel %vm59, %v1938, 0
    %v1996 = vsel %vm59, %v1939, 0
    %v1999 = vsel %vm59, %v1940, 0
    %v2002 = vsel %vm59, %v1941, 0
    %v2005 = vsel %vm59, %v1942, 0
    %v2008 = vsel %vm59, %v1943, 0
    %v2011 = vsel %vm59, %v1944, 0
    %v2014 = vsel %vm59, %v1945, 0
    %v2017 = vsel %vm59, %v1946, 0
    %v2020 = vsel %vm59, %v1947, 0
    %v2023 = vsel %vm59, %v1948, 0
    %v2026 = vsel %vm59, %v1949, 0
    %2028 = vmatprep.subr.bf16.mxu0 0
    %2029 = vmatpush1.bf16.msra.mxu0 0
    %2030 = vmatprep.subr.bf16.mxu0 0
    %2031 = vmatpush1.bf16.msra.mxu0 0
    %2032 = vmatprep.subr.bf16.mxu0 0
    %2033 = vmatpush1.bf16.msra.mxu0 0
    %2034 = vmatprep.subr.bf16.mxu0 0
    %2035 = vmatpush1.bf16.msra.mxu0 %v1974
    %2036 = vmatprep.subr.bf16.mxu0 0
    %2037 = vmatpush1.bf16.msra.mxu0 %v1973
    %2038 = vmatprep.subr.bf16.mxu0 0
    %2039 = vmatpush1.bf16.msra.mxu0 %v1972
    %2040 = vmatprep.subr.bf16.mxu0 0
    %2041 = vmatpush1.bf16.msra.mxu0 %v1971
    %2042 = vmatprep.subr.bf16.mxu0 0
    %2043 = vmatpush1.bf16.msra.mxu0 %v1970
    %2044 = vmatprep.subr.bf16.mxu0 0
    %2045 = vmatpush2.bf16.msra.mxu0 0
    %2046 = vmatprep.subr.bf16.mxu0 0
    %2047 = vmatpush2.bf16.msra.mxu0 0
    %2048 = vmatprep.subr.bf16.mxu0 0
    %2049 = vmatpush2.bf16.msra.mxu0 0
    %2050 = vmatprep.subr.bf16.mxu0 0
    %2051 = vmatpush2.bf16.msra.mxu0 0
    %2052 = vmatprep.subr.bf16.mxu0 0
    %2053 = vmatpush2.bf16.msra.mxu0 0
    %2054 = vmatprep.subr.bf16.mxu0 0
    %2055 = vmatpush2.bf16.msra.mxu0 0
    %2056 = vmatprep.subr.bf16.mxu0 0
    %2057 = vmatpush2.bf16.msra.mxu0 0
    %2058 = vmatprep.subr.bf16.mxu0 0
    %2059 = vmatpush2.bf16.msra.mxu0 0
    %2060 = vmatprep.mubr.bf16.mxu0 0
    %2061 = vmatmul.mubr.bf16.gmra.mxu0 %v1981
    %v2062 = vpop.f32.mrf.mxu0
    %v2063 = vadd.f32 0.0, %v2062
    %v2064 = vpop.f32.mrf.mxu0
    %v2065 = vpop.f32.mrf.mxu0
    %v2066 = vadd.f32 0.0, %v2065
    %v2067 = vpop.f32.mrf.mxu0
    %2068 = vmatprep.mubr.bf16.mxu0 0
    %2069 = vmatmul.mubr.bf16.gmra.mxu0 %v1984
    %v2070 = vpop.f32.mrf.mxu0
    %v2071 = vadd.f32 0.0, %v2070
    %v2072 = vpop.f32.mrf.mxu0
    %v2073 = vpop.f32.mrf.mxu0
    %v2074 = vadd.f32 0.0, %v2073
    %v2075 = vpop.f32.mrf.mxu0
    %2076 = vmatprep.mubr.bf16.mxu0 0
    %2077 = vmatmul.mubr.bf16.gmra.mxu0 %v1987
    %v2078 = vpop.f32.mrf.mxu0
    %v2079 = vadd.f32 0.0, %v2078
    %v2080 = vpop.f32.mrf.mxu0
    %v2081 = vpop.f32.mrf.mxu0
    %v2082 = vadd.f32 0.0, %v2081
    %v2083 = vpop.f32.mrf.mxu0
    %2084 = vmatprep.mubr.bf16.mxu0 0
    %2085 = vmatmul.mubr.bf16.gmra.mxu0 %v1990
    %v2086 = vpop.f32.mrf.mxu0
    %v2087 = vadd.f32 0.0, %v2086
    %v2088 = vpop.f32.mrf.mxu0
    %v2089 = vpop.f32.mrf.mxu0
    %v2090 = vadd.f32 0.0, %v2089
    %v2091 = vpop.f32.mrf.mxu0
    %2092 = vmatprep.mubr.bf16.mxu0 0
    %2093 = vmatmul.mubr.bf16.gmra.mxu0 %v1993
    %v2094 = vpop.f32.mrf.mxu0
    %v2095 = vadd.f32 0.0, %v2094
    %v2096 = vpop.f32.mrf.mxu0
    %v2097 = vpop.f32.mrf.mxu0
    %v2098 = vadd.f32 0.0, %v2097
    %v2099 = vpop.f32.mrf.mxu0
    %2100 = vmatprep.mubr.bf16.mxu0 0
    %2101 = vmatmul.mubr.bf16.gmra.mxu0 %v1996
    %v2102 = vpop.f32.mrf.mxu0
    %v2103 = vadd.f32 0.0, %v2102
    %v2104 = vpop.f32.mrf.mxu0
    %v2105 = vpop.f32.mrf.mxu0
    %v2106 = vadd.f32 0.0, %v2105
    %v2107 = vpop.f32.mrf.mxu0
    %2108 = vmatprep.mubr.bf16.mxu0 0
    %2109 = vmatmul.mubr.bf16.gmra.mxu0 %v1999
    %v2110 = vpop.f32.mrf.mxu0
    %v2111 = vadd.f32 0.0, %v2110
    %v2112 = vpop.f32.mrf.mxu0
    %v2113 = vpop.f32.mrf.mxu0
    %v2114 = vadd.f32 0.0, %v2113
    %v2115 = vpop.f32.mrf.mxu0
    %2116 = vmatprep.mubr.bf16.mxu0 0
    %2117 = vmatmul.mubr.bf16.gmra.mxu0 %v2002
    %v2118 = vpop.f32.mrf.mxu0
    %v2119 = vadd.f32 0.0, %v2118
    %v2120 = vpop.f32.mrf.mxu0
    %v2121 = vpop.f32.mrf.mxu0
    %v2122 = vadd.f32 0.0, %v2121
    %v2123 = vpop.f32.mrf.mxu0
    %2124 = vmatprep.mubr.bf16.mxu0 0
    %2125 = vmatmul.mubr.bf16.gmra.mxu0 %v2005
    %v2126 = vpop.f32.mrf.mxu0
    %v2127 = vadd.f32 0.0, %v2126
    %v2128 = vpop.f32.mrf.mxu0
    %v2129 = vpop.f32.mrf.mxu0
    %v2130 = vadd.f32 0.0, %v2129
    %v2131 = vpop.f32.mrf.mxu0
    %2132 = vmatprep.mubr.bf16.mxu0 0
    %2133 = vmatmul.mubr.bf16.gmra.mxu0 %v2008
    %v2134 = vpop.f32.mrf.mxu0
    %v2135 = vadd.f32 0.0, %v2134
    %v2136 = vpop.f32.mrf.mxu0
    %v2137 = vpop.f32.mrf.mxu0
    %v2138 = vadd.f32 0.0, %v2137
    %v2139 = vpop.f32.mrf.mxu0
    %2140 = vmatprep.mubr.bf16.mxu0 0
    %2141 = vmatmul.mubr.bf16.gmra.mxu0 %v2011
    %v2142 = vpop.f32.mrf.mxu0
    %v2143 = vadd.f32 0.0, %v2142
    %v2144 = vpop.f32.mrf.mxu0
    %v2145 = vpop.f32.mrf.mxu0
    %v2146 = vadd.f32 0.0, %v2145
    %v2147 = vpop.f32.mrf.mxu0
    %2148 = vmatprep.mubr.bf16.mxu0 0
    %2149 = vmatmul.mubr.bf16.gmra.mxu0 %v2014
    %v2150 = vpop.f32.mrf.mxu0
    %v2151 = vadd.f32 0.0, %v2150
    %v2152 = vpop.f32.mrf.mxu0
    %v2153 = vpop.f32.mrf.mxu0
    %v2154 = vadd.f32 0.0, %v2153
    %v2155 = vpop.f32.mrf.mxu0
    %2156 = vmatprep.mubr.bf16.mxu0 0
    %2157 = vmatmul.mubr.bf16.gmra.mxu0 %v2017
    %v2158 = vpop.f32.mrf.mxu0
    %v2159 = vadd.f32 0.0, %v2158
    %v2160 = vpop.f32.mrf.mxu0
    %v2161 = vpop.f32.mrf.mxu0
    %v2162 = vadd.f32 0.0, %v2161
    %v2163 = vpop.f32.mrf.mxu0
    %2164 = vmatprep.mubr.bf16.mxu0 0
    %2165 = vmatmul.mubr.bf16.gmra.mxu0 %v2020
    %v2166 = vpop.f32.mrf.mxu0
    %v2167 = vadd.f32 0.0, %v2166
    %v2168 = vpop.f32.mrf.mxu0
    %v2169 = vpop.f32.mrf.mxu0
    %v2170 = vadd.f32 0.0, %v2169
    %v2171 = vpop.f32.mrf.mxu0
    %2172 = vmatprep.mubr.bf16.mxu0 0
    %2173 = vmatmul.mubr.bf16.gmra.mxu0 %v2023
    %v2174 = vpop.f32.mrf.mxu0
    %v2175 = vadd.f32 0.0, %v2174
    %v2176 = vpop.f32.mrf.mxu0
    %v2177 = vpop.f32.mrf.mxu0
    %v2178 = vadd.f32 0.0, %v2177
    %v2179 = vpop.f32.mrf.mxu0
    %2180 = vmatprep.mubr.bf16.mxu0 0
    %2181 = vmatmul.mubr.bf16.gmra.mxu0 %v2026
    %v2182 = vpop.f32.mrf.mxu0
    %v2183 = vadd.f32 0.0, %v2182
    %v2184 = vpop.f32.mrf.mxu0
    %v2185 = vpop.f32.mrf.mxu0
    %v2186 = vadd.f32 0.0, %v2185
    %v2187 = vpop.f32.mrf.mxu0
    %2188 = vdwg.mxu0
    %v2189 = vlaneseq
    %v2190 = vshrl.u32 %v2189, 7
    %v2191 = vsub.s32 0, %v2190
    %v2192 = vrot.slane %v1858, %v2191
    %v2193 = vadd.f32 %v2192, %v2063
    %v2194 = vadd.f32 %v2192, %v2066
    %v2195 = vadd.f32 %v2192, %v2071
    %v2196 = vadd.f32 %v2192, %v2074
    %v2197 = vadd.f32 %v2192, %v2079
    %v2198 = vadd.f32 %v2192, %v2082
    %v2199 = vadd.f32 %v2192, %v2087
    %v2200 = vadd.f32 %v2192, %v2090
    %v2201 = vadd.f32 %v2192, %v2095
    %v2202 = vadd.f32 %v2192, %v2098
    %v2203 = vadd.f32 %v2192, %v2103
    %v2204 = vadd.f32 %v2192, %v2106
    %v2205 = vadd.f32 %v2192, %v2111
    %v2206 = vadd.f32 %v2192, %v2114
    %v2207 = vadd.f32 %v2192, %v2119
    %v2208 = vadd.f32 %v2192, %v2122
    %v2209 = vadd.f32 %v2192, %v2127
    %v2210 = vadd.f32 %v2192, %v2130
    %v2211 = vadd.f32 %v2192, %v2135
    %v2212 = vadd.f32 %v2192, %v2138
    %v2213 = vadd.f32 %v2192, %v2143
    %v2214 = vadd.f32 %v2192, %v2146
    %v2215 = vadd.f32 %v2192, %v2151
    %v2216 = vadd.f32 %v2192, %v2154
    %v2217 = vadd.f32 %v2192, %v2159
    %v2218 = vadd.f32 %v2192, %v2162
    %v2219 = vadd.f32 %v2192, %v2167
    %v2220 = vadd.f32 %v2192, %v2170
    %v2221 = vadd.f32 %v2192, %v2175
    %v2222 = vadd.f32 %v2192, %v2178
    %v2223 = vadd.f32 %v2192, %v2183
    %v2224 = vadd.f32 %v2192, %v2186
    %v2225 = vld [vmem:[#allocation2 + $0x11] sm:$0xff]
    %v2226 = vld [vmem:[#allocation2 + $0x19] sm:$0xff]
    %v2227 = vld [vmem:[#allocation2 + $0x41] sm:$0xff]
    %v2228 = vld [vmem:[#allocation2 + $0x49] sm:$0xff]
    %v2229 = vld [vmem:[#allocation2 + $0x71] sm:$0xff]
    %v2230 = vld [vmem:[#allocation2 + $0x79] sm:$0xff]
    %v2231 = vld [vmem:[#allocation2 + $0xa1] sm:$0xff]
    %v2232 = vld [vmem:[#allocation2 + $0xa9] sm:$0xff]
    %v2233 = vld [vmem:[#allocation2 + $0xd1] sm:$0xff]
    %v2234 = vld [vmem:[#allocation2 + $0xd9] sm:$0xff]
    %v2235 = vld [vmem:[#allocation2 + $0x101] sm:$0xff]
    %v2236 = vld [vmem:[#allocation2 + $0x109] sm:$0xff]
    %v2237 = vld [vmem:[#allocation2 + $0x131] sm:$0xff]
    %v2238 = vld [vmem:[#allocation2 + $0x139] sm:$0xff]
    %v2239 = vld [vmem:[#allocation2 + $0x161] sm:$0xff]
    %v2240 = vld [vmem:[#allocation2 + $0x169] sm:$0xff]
    %v2241 = vld [vmem:[#allocation2 + $0x191] sm:$0xff]
    %v2242 = vld [vmem:[#allocation2 + $0x199] sm:$0xff]
    %v2243 = vld [vmem:[#allocation2 + $0x1c1] sm:$0xff]
    %v2244 = vld [vmem:[#allocation2 + $0x1c9] sm:$0xff]
    %v2245 = vld [vmem:[#allocation2 + $0x1f1] sm:$0xff]
    %v2246 = vld [vmem:[#allocation2 + $0x1f9] sm:$0xff]
    %v2247 = vld [vmem:[#allocation2 + $0x221] sm:$0xff]
    %v2248 = vld [vmem:[#allocation2 + $0x229] sm:$0xff]
    %v2249 = vld [vmem:[#allocation2 + $0x251] sm:$0xff]
    %v2250 = vld [vmem:[#allocation2 + $0x259] sm:$0xff]
    %v2251 = vld [vmem:[#allocation2 + $0x281] sm:$0xff]
    %v2252 = vld [vmem:[#allocation2 + $0x289] sm:$0xff]
    %v2253 = vld [vmem:[#allocation2 + $0x2b1] sm:$0xff]
    %v2254 = vld [vmem:[#allocation2 + $0x2b9] sm:$0xff]
    %v2255 = vld [vmem:[#allocation2 + $0x2e1] sm:$0xff]
    %v2256 = vld [vmem:[#allocation2 + $0x2e9] sm:$0xff]
    %s2257 = scalar_lea.vmem [#allocation7], 120
    %v2258 = vld [vmem:[%s2257] sm:$0xf]
    %v2259 = vld [vmem:[%s2257 + $0x4] sm:$0xf]
    %v2260 = vld [vmem:[%s2257 + $0x8] sm:$0xf]
    %v2261 = vld [vmem:[%s2257 + $0xc] sm:$0xf]
    %v2262 = vld [vmem:[%s2257 + $0x10] sm:$0xf]
    %v2263 = vld [vmem:[%s2257 + $0x14] sm:$0xf]
    %v2264 = vld [vmem:[%s2257 + $0x18] sm:$0xf]
    %v2265 = vld [vmem:[%s2257 + $0x1c] sm:$0xf]
    %v2266 = vld [vmem:[%s2257 + $0x20] sm:$0xf]
    %v2267 = vld [vmem:[%s2257 + $0x24] sm:$0xf]
    %v2268 = vpack.c.bf16 %v2226, %v2225
    %v2269 = vpack.c.bf16 %v2228, %v2227
    %v2270 = vpack.c.bf16 %v2230, %v2229
    %v2271 = vpack.c.bf16 %v2232, %v2231
    %v2272 = vpack.c.bf16 %v2234, %v2233
    %v2273 = vpack.c.bf16 %v2236, %v2235
    %v2274 = vpack.c.bf16 %v2238, %v2237
    %v2275 = vpack.c.bf16 %v2240, %v2239
    %v2276 = vpack.c.bf16 %v2242, %v2241
    %v2277 = vpack.c.bf16 %v2244, %v2243
    %v2278 = vpack.c.bf16 %v2246, %v2245
    %v2279 = vpack.c.bf16 %v2248, %v2247
    %v2280 = vpack.c.bf16 %v2250, %v2249
    %v2281 = vpack.c.bf16 %v2252, %v2251
    %v2282 = vpack.c.bf16 %v2254, %v2253
    %v2283 = vpack.c.bf16 %v2256, %v2255
    %v2294 = vunpack.c.l.b16 %v2258
    %v2295 = vunpack.c.l.b16 %v2259
    %v2296 = vunpack.c.l.b16 %v2260
    %v2297 = vunpack.c.l.b16 %v2261
    %v2298 = vunpack.c.l.b16 %v2262
    %v2299 = vunpack.c.l.b16 %v2263
    %v2300 = vunpack.c.l.b16 %v2264
    %v2301 = vunpack.c.l.b16 %v2265
    %v2302 = vunpack.c.l.b16 %v2266
    %v2303 = vunpack.c.l.b16 %v2267
    %v2304 = vpack.c.b16 %v2295, %v2294
    %v2305 = vpack.c.b16 %v2297, %v2296
    %v2306 = vpack.c.b16 %v2299, %v2298
    %v2307 = vpack.c.b16 %v2301, %v2300
    %v2308 = vpack.c.b16 %v2303, %v2302
    %v2315 = vsel %vm59, %v2268, 0
    %v2318 = vsel %vm59, %v2269, 0
    %v2321 = vsel %vm59, %v2270, 0
    %v2324 = vsel %vm59, %v2271, 0
    %v2327 = vsel %vm59, %v2272, 0
    %v2330 = vsel %vm59, %v2273, 0
    %v2333 = vsel %vm59, %v2274, 0
    %v2336 = vsel %vm59, %v2275, 0
    %v2339 = vsel %vm59, %v2276, 0
    %v2342 = vsel %vm59, %v2277, 0
    %v2345 = vsel %vm59, %v2278, 0
    %v2348 = vsel %vm59, %v2279, 0
    %v2351 = vsel %vm59, %v2280, 0
    %v2354 = vsel %vm59, %v2281, 0
    %v2357 = vsel %vm59, %v2282, 0
    %v2360 = vsel %vm59, %v2283, 0
    %2362 = vmatprep.subr.bf16.mxu0 0
    %2363 = vmatpush1.bf16.msra.mxu0 0
    %2364 = vmatprep.subr.bf16.mxu0 0
    %2365 = vmatpush1.bf16.msra.mxu0 0
    %2366 = vmatprep.subr.bf16.mxu0 0
    %2367 = vmatpush1.bf16.msra.mxu0 0
    %2368 = vmatprep.subr.bf16.mxu0 0
    %2369 = vmatpush1.bf16.msra.mxu0 %v2308
    %2370 = vmatprep.subr.bf16.mxu0 0
    %2371 = vmatpush1.bf16.msra.mxu0 %v2307
    %2372 = vmatprep.subr.bf16.mxu0 0
    %2373 = vmatpush1.bf16.msra.mxu0 %v2306
    %2374 = vmatprep.subr.bf16.mxu0 0
    %2375 = vmatpush1.bf16.msra.mxu0 %v2305
    %2376 = vmatprep.subr.bf16.mxu0 0
    %2377 = vmatpush1.bf16.msra.mxu0 %v2304
    %2378 = vmatprep.subr.bf16.mxu0 0
    %2379 = vmatpush2.bf16.msra.mxu0 0
    %2380 = vmatprep.subr.bf16.mxu0 0
    %2381 = vmatpush2.bf16.msra.mxu0 0
    %2382 = vmatprep.subr.bf16.mxu0 0
    %2383 = vmatpush2.bf16.msra.mxu0 0
    %2384 = vmatprep.subr.bf16.mxu0 0
    %2385 = vmatpush2.bf16.msra.mxu0 0
    %2386 = vmatprep.subr.bf16.mxu0 0
    %2387 = vmatpush2.bf16.msra.mxu0 0
    %2388 = vmatprep.subr.bf16.mxu0 0
    %2389 = vmatpush2.bf16.msra.mxu0 0
    %2390 = vmatprep.subr.bf16.mxu0 0
    %2391 = vmatpush2.bf16.msra.mxu0 0
    %2392 = vmatprep.subr.bf16.mxu0 0
    %2393 = vmatpush2.bf16.msra.mxu0 0
    %2394 = vmatprep.mubr.bf16.mxu0 0
    %2395 = vmatmul.mubr.bf16.gmra.mxu0 %v2315
    %v2396 = vpop.f32.mrf.mxu0
    %v2397 = vadd.f32 0.0, %v2396
    %v2398 = vpop.f32.mrf.mxu0
    %v2399 = vpop.f32.mrf.mxu0
    %v2400 = vadd.f32 0.0, %v2399
    %v2401 = vpop.f32.mrf.mxu0
    %2402 = vmatprep.mubr.bf16.mxu0 0
    %2403 = vmatmul.mubr.bf16.gmra.mxu0 %v2318
    %v2404 = vpop.f32.mrf.mxu0
    %v2405 = vadd.f32 0.0, %v2404
    %v2406 = vpop.f32.mrf.mxu0
    %v2407 = vpop.f32.mrf.mxu0
    %v2408 = vadd.f32 0.0, %v2407
    %v2409 = vpop.f32.mrf.mxu0
    %2410 = vmatprep.mubr.bf16.mxu0 0
    %2411 = vmatmul.mubr.bf16.gmra.mxu0 %v2321
    %v2412 = vpop.f32.mrf.mxu0
    %v2413 = vadd.f32 0.0, %v2412
    %v2414 = vpop.f32.mrf.mxu0
    %v2415 = vpop.f32.mrf.mxu0
    %v2416 = vadd.f32 0.0, %v2415
    %v2417 = vpop.f32.mrf.mxu0
    %2418 = vmatprep.mubr.bf16.mxu0 0
    %2419 = vmatmul.mubr.bf16.gmra.mxu0 %v2324
    %v2420 = vpop.f32.mrf.mxu0
    %v2421 = vadd.f32 0.0, %v2420
    %v2422 = vpop.f32.mrf.mxu0
    %v2423 = vpop.f32.mrf.mxu0
    %v2424 = vadd.f32 0.0, %v2423
    %v2425 = vpop.f32.mrf.mxu0
    %2426 = vmatprep.mubr.bf16.mxu0 0
    %2427 = vmatmul.mubr.bf16.gmra.mxu0 %v2327
    %v2428 = vpop.f32.mrf.mxu0
    %v2429 = vadd.f32 0.0, %v2428
    %v2430 = vpop.f32.mrf.mxu0
    %v2431 = vpop.f32.mrf.mxu0
    %v2432 = vadd.f32 0.0, %v2431
    %v2433 = vpop.f32.mrf.mxu0
    %2434 = vmatprep.mubr.bf16.mxu0 0
    %2435 = vmatmul.mubr.bf16.gmra.mxu0 %v2330
    %v2436 = vpop.f32.mrf.mxu0
    %v2437 = vadd.f32 0.0, %v2436
    %v2438 = vpop.f32.mrf.mxu0
    %v2439 = vpop.f32.mrf.mxu0
    %v2440 = vadd.f32 0.0, %v2439
    %v2441 = vpop.f32.mrf.mxu0
    %2442 = vmatprep.mubr.bf16.mxu0 0
    %2443 = vmatmul.mubr.bf16.gmra.mxu0 %v2333
    %v2444 = vpop.f32.mrf.mxu0
    %v2445 = vadd.f32 0.0, %v2444
    %v2446 = vpop.f32.mrf.mxu0
    %v2447 = vpop.f32.mrf.mxu0
    %v2448 = vadd.f32 0.0, %v2447
    %v2449 = vpop.f32.mrf.mxu0
    %2450 = vmatprep.mubr.bf16.mxu0 0
    %2451 = vmatmul.mubr.bf16.gmra.mxu0 %v2336
    %v2452 = vpop.f32.mrf.mxu0
    %v2453 = vadd.f32 0.0, %v2452
    %v2454 = vpop.f32.mrf.mxu0
    %v2455 = vpop.f32.mrf.mxu0
    %v2456 = vadd.f32 0.0, %v2455
    %v2457 = vpop.f32.mrf.mxu0
    %2458 = vmatprep.mubr.bf16.mxu0 0
    %2459 = vmatmul.mubr.bf16.gmra.mxu0 %v2339
    %v2460 = vpop.f32.mrf.mxu0
    %v2461 = vadd.f32 0.0, %v2460
    %v2462 = vpop.f32.mrf.mxu0
    %v2463 = vpop.f32.mrf.mxu0
    %v2464 = vadd.f32 0.0, %v2463
    %v2465 = vpop.f32.mrf.mxu0
    %2466 = vmatprep.mubr.bf16.mxu0 0
    %2467 = vmatmul.mubr.bf16.gmra.mxu0 %v2342
    %v2468 = vpop.f32.mrf.mxu0
    %v2469 = vadd.f32 0.0, %v2468
    %v2470 = vpop.f32.mrf.mxu0
    %v2471 = vpop.f32.mrf.mxu0
    %v2472 = vadd.f32 0.0, %v2471
    %v2473 = vpop.f32.mrf.mxu0
    %2474 = vmatprep.mubr.bf16.mxu0 0
    %2475 = vmatmul.mubr.bf16.gmra.mxu0 %v2345
    %v2476 = vpop.f32.mrf.mxu0
    %v2477 = vadd.f32 0.0, %v2476
    %v2478 = vpop.f32.mrf.mxu0
    %v2479 = vpop.f32.mrf.mxu0
    %v2480 = vadd.f32 0.0, %v2479
    %v2481 = vpop.f32.mrf.mxu0
    %2482 = vmatprep.mubr.bf16.mxu0 0
    %2483 = vmatmul.mubr.bf16.gmra.mxu0 %v2348
    %v2484 = vpop.f32.mrf.mxu0
    %v2485 = vadd.f32 0.0, %v2484
    %v2486 = vpop.f32.mrf.mxu0
    %v2487 = vpop.f32.mrf.mxu0
    %v2488 = vadd.f32 0.0, %v2487
    %v2489 = vpop.f32.mrf.mxu0
    %2490 = vmatprep.mubr.bf16.mxu0 0
    %2491 = vmatmul.mubr.bf16.gmra.mxu0 %v2351
    %v2492 = vpop.f32.mrf.mxu0
    %v2493 = vadd.f32 0.0, %v2492
    %v2494 = vpop.f32.mrf.mxu0
    %v2495 = vpop.f32.mrf.mxu0
    %v2496 = vadd.f32 0.0, %v2495
    %v2497 = vpop.f32.mrf.mxu0
    %2498 = vmatprep.mubr.bf16.mxu0 0
    %2499 = vmatmul.mubr.bf16.gmra.mxu0 %v2354
    %v2500 = vpop.f32.mrf.mxu0
    %v2501 = vadd.f32 0.0, %v2500
    %v2502 = vpop.f32.mrf.mxu0
    %v2503 = vpop.f32.mrf.mxu0
    %v2504 = vadd.f32 0.0, %v2503
    %v2505 = vpop.f32.mrf.mxu0
    %2506 = vmatprep.mubr.bf16.mxu0 0
    %2507 = vmatmul.mubr.bf16.gmra.mxu0 %v2357
    %v2508 = vpop.f32.mrf.mxu0
    %v2509 = vadd.f32 0.0, %v2508
    %v2510 = vpop.f32.mrf.mxu0
    %v2511 = vpop.f32.mrf.mxu0
    %v2512 = vadd.f32 0.0, %v2511
    %v2513 = vpop.f32.mrf.mxu0
    %2514 = vmatprep.mubr.bf16.mxu0 0
    %2515 = vmatmul.mubr.bf16.gmra.mxu0 %v2360
    %v2516 = vpop.f32.mrf.mxu0
    %v2517 = vadd.f32 0.0, %v2516
    %v2518 = vpop.f32.mrf.mxu0
    %v2519 = vpop.f32.mrf.mxu0
    %v2520 = vadd.f32 0.0, %v2519
    %v2521 = vpop.f32.mrf.mxu0
    %2522 = vdwg.mxu0
    %v2523 = vadd.f32 %v2193, %v2397
    %v2524 = vadd.f32 %v2194, %v2400
    %v2525 = vadd.f32 %v2195, %v2405
    %v2526 = vadd.f32 %v2196, %v2408
    %v2527 = vadd.f32 %v2197, %v2413
    %v2528 = vadd.f32 %v2198, %v2416
    %v2529 = vadd.f32 %v2199, %v2421
    %v2530 = vadd.f32 %v2200, %v2424
    %v2531 = vadd.f32 %v2201, %v2429
    %v2532 = vadd.f32 %v2202, %v2432
    %v2533 = vadd.f32 %v2203, %v2437
    %v2534 = vadd.f32 %v2204, %v2440
    %v2535 = vadd.f32 %v2205, %v2445
    %v2536 = vadd.f32 %v2206, %v2448
    %v2537 = vadd.f32 %v2207, %v2453
    %v2538 = vadd.f32 %v2208, %v2456
    %v2539 = vadd.f32 %v2209, %v2461
    %v2540 = vadd.f32 %v2210, %v2464
    %v2541 = vadd.f32 %v2211, %v2469
    %v2542 = vadd.f32 %v2212, %v2472
    %v2543 = vadd.f32 %v2213, %v2477
    %v2544 = vadd.f32 %v2214, %v2480
    %v2545 = vadd.f32 %v2215, %v2485
    %v2546 = vadd.f32 %v2216, %v2488
    %v2547 = vadd.f32 %v2217, %v2493
    %v2548 = vadd.f32 %v2218, %v2496
    %v2549 = vadd.f32 %v2219, %v2501
    %v2550 = vadd.f32 %v2220, %v2504
    %v2551 = vadd.f32 %v2221, %v2509
    %v2552 = vadd.f32 %v2222, %v2512
    %v2553 = vadd.f32 %v2223, %v2517
    %v2554 = vadd.f32 %v2224, %v2520
    %s2555 = sld [smem:[#allocation4 + $0x3]]
    %vm2556 = vcmp.ge.f32.partialorder %v2523, 0.0
    %vm2557 = vcmp.ge.f32.partialorder %v2524, 0.0
    %vm2558 = vcmp.ge.f32.partialorder %v2525, 0.0
    %vm2559 = vcmp.ge.f32.partialorder %v2526, 0.0
    %vm2560 = vcmp.ge.f32.partialorder %v2527, 0.0
    %vm2561 = vcmp.ge.f32.partialorder %v2528, 0.0
    %vm2562 = vcmp.ge.f32.partialorder %v2529, 0.0
    %vm2563 = vcmp.ge.f32.partialorder %v2530, 0.0
    %vm2564 = vcmp.ge.f32.partialorder %v2531, 0.0
    %vm2565 = vcmp.ge.f32.partialorder %v2532, 0.0
    %vm2566 = vcmp.ge.f32.partialorder %v2533, 0.0
    %vm2567 = vcmp.ge.f32.partialorder %v2534, 0.0
    %vm2568 = vcmp.ge.f32.partialorder %v2535, 0.0
    %vm2569 = vcmp.ge.f32.partialorder %v2536, 0.0
    %vm2570 = vcmp.ge.f32.partialorder %v2537, 0.0
    %vm2571 = vcmp.ge.f32.partialorder %v2538, 0.0
    %vm2572 = vcmp.ge.f32.partialorder %v2539, 0.0
    %vm2573 = vcmp.ge.f32.partialorder %v2540, 0.0
    %vm2574 = vcmp.ge.f32.partialorder %v2541, 0.0
    %vm2575 = vcmp.ge.f32.partialorder %v2542, 0.0
    %vm2576 = vcmp.ge.f32.partialorder %v2543, 0.0
    %vm2577 = vcmp.ge.f32.partialorder %v2544, 0.0
    %vm2578 = vcmp.ge.f32.partialorder %v2545, 0.0
    %vm2579 = vcmp.ge.f32.partialorder %v2546, 0.0
    %vm2580 = vcmp.ge.f32.partialorder %v2547, 0.0
    %vm2581 = vcmp.ge.f32.partialorder %v2548, 0.0
    %vm2582 = vcmp.ge.f32.partialorder %v2549, 0.0
    %vm2583 = vcmp.ge.f32.partialorder %v2550, 0.0
    %vm2584 = vcmp.ge.f32.partialorder %v2551, 0.0
    %vm2585 = vcmp.ge.f32.partialorder %v2552, 0.0
    %vm2586 = vcmp.ge.f32.partialorder %v2553, 0.0
    %vm2587 = vcmp.ge.f32.partialorder %v2554, 0.0
    %v2588 = vstv %s2555
    %v2589 = vmul.f32 %v2588, %v2523
    %v2590 = vmul.f32 %v2588, %v2524
    %v2591 = vmul.f32 %v2588, %v2525
    %v2592 = vmul.f32 %v2588, %v2526
    %v2593 = vmul.f32 %v2588, %v2527
    %v2594 = vmul.f32 %v2588, %v2528
    %v2595 = vmul.f32 %v2588, %v2529
    %v2596 = vmul.f32 %v2588, %v2530
    %v2597 = vmul.f32 %v2588, %v2531
    %v2598 = vmul.f32 %v2588, %v2532
    %v2599 = vmul.f32 %v2588, %v2533
    %v2600 = vmul.f32 %v2588, %v2534
    %v2601 = vmul.f32 %v2588, %v2535
    %v2602 = vmul.f32 %v2588, %v2536
    %v2603 = vmul.f32 %v2588, %v2537
    %v2604 = vmul.f32 %v2588, %v2538
    %v2605 = vmul.f32 %v2588, %v2539
    %v2606 = vmul.f32 %v2588, %v2540
    %v2607 = vmul.f32 %v2588, %v2541
    %v2608 = vmul.f32 %v2588, %v2542
    %v2609 = vmul.f32 %v2588, %v2543
    %v2610 = vmul.f32 %v2588, %v2544
    %v2611 = vmul.f32 %v2588, %v2545
    %v2612 = vmul.f32 %v2588, %v2546
    %v2613 = vmul.f32 %v2588, %v2547
    %v2614 = vmul.f32 %v2588, %v2548
    %v2615 = vmul.f32 %v2588, %v2549
    %v2616 = vmul.f32 %v2588, %v2550
    %v2617 = vmul.f32 %v2588, %v2551
    %v2618 = vmul.f32 %v2588, %v2552
    %v2619 = vmul.f32 %v2588, %v2553
    %v2620 = vmul.f32 %v2588, %v2554
    %v2621 = vsel %vm2556, %v2523, %v2589
    %v2622 = vsel %vm2557, %v2524, %v2590
    %v2623 = vsel %vm2558, %v2525, %v2591
    %v2624 = vsel %vm2559, %v2526, %v2592
    %v2625 = vsel %vm2560, %v2527, %v2593
    %v2626 = vsel %vm2561, %v2528, %v2594
    %v2627 = vsel %vm2562, %v2529, %v2595
    %v2628 = vsel %vm2563, %v2530, %v2596
    %v2629 = vsel %vm2564, %v2531, %v2597
    %v2630 = vsel %vm2565, %v2532, %v2598
    %v2631 = vsel %vm2566, %v2533, %v2599
    %v2632 = vsel %vm2567, %v2534, %v2600
    %v2633 = vsel %vm2568, %v2535, %v2601
    %v2634 = vsel %vm2569, %v2536, %v2602
    %v2635 = vsel %vm2570, %v2537, %v2603
    %v2636 = vsel %vm2571, %v2538, %v2604
    %v2637 = vsel %vm2572, %v2539, %v2605
    %v2638 = vsel %vm2573, %v2540, %v2606
    %v2639 = vsel %vm2574, %v2541, %v2607
    %v2640 = vsel %vm2575, %v2542, %v2608
    %v2641 = vsel %vm2576, %v2543, %v2609
    %v2642 = vsel %vm2577, %v2544, %v2610
    %v2643 = vsel %vm2578, %v2545, %v2611
    %v2644 = vsel %vm2579, %v2546, %v2612
    %v2645 = vsel %vm2580, %v2547, %v2613
    %v2646 = vsel %vm2581, %v2548, %v2614
    %v2647 = vsel %vm2582, %v2549, %v2615
    %v2648 = vsel %vm2583, %v2550, %v2616
    %v2649 = vsel %vm2584, %v2551, %v2617
    %v2650 = vsel %vm2585, %v2552, %v2618
    %v2651 = vsel %vm2586, %v2553, %v2619
    %v2652 = vsel %vm2587, %v2554, %v2620
    %v2653 = vadd.f32 %v2621, %v1032
    %v2654 = vadd.f32 %v2622, %v1033
    %v2655 = vadd.f32 %v2623, %v1034
    %v2656 = vadd.f32 %v2624, %v1035
    %v2657 = vadd.f32 %v2625, %v1036
    %v2658 = vadd.f32 %v2626, %v1037
    %v2659 = vadd.f32 %v2627, %v1038
    %v2660 = vadd.f32 %v2628, %v1039
    %v2661 = vadd.f32 %v2629, %v1040
    %v2662 = vadd.f32 %v2630, %v1041
    %v2663 = vadd.f32 %v2631, %v1042
    %v2664 = vadd.f32 %v2632, %v1043
    %v2665 = vadd.f32 %v2633, %v1044
    %v2666 = vadd.f32 %v2634, %v1045
    %v2667 = vadd.f32 %v2635, %v1046
    %v2668 = vadd.f32 %v2636, %v1047
    %v2669 = vadd.f32 %v2637, %v1048
    %v2670 = vadd.f32 %v2638, %v1049
    %v2671 = vadd.f32 %v2639, %v1050
    %v2672 = vadd.f32 %v2640, %v1051
    %v2673 = vadd.f32 %v2641, %v1052
    %v2674 = vadd.f32 %v2642, %v1053
    %v2675 = vadd.f32 %v2643, %v1054
    %v2676 = vadd.f32 %v2644, %v1055
    %v2677 = vadd.f32 %v2645, %v1056
    %v2678 = vadd.f32 %v2646, %v1057
    %v2679 = vadd.f32 %v2647, %v1058
    %v2680 = vadd.f32 %v2648, %v1059
    %v2681 = vadd.f32 %v2649, %v1060
    %v2682 = vadd.f32 %v2650, %v1061
    %v2683 = vadd.f32 %v2651, %v1062
    %v2684 = vadd.f32 %v2652, %v1063
    %v2685 = vld [vmem:[%s6 + $0x5] sm:$0x1]
    %2686 = vst.msk [vmem:[#allocation2 + $0x10] sm:$0xff] %vm59, %v2653
    %2687 = vst.msk [vmem:[#allocation2 + $0x18] sm:$0xff] %vm59, %v2654
    %2688 = vst.msk [vmem:[#allocation2 + $0x40] sm:$0xff] %vm59, %v2655
    %2689 = vst.msk [vmem:[#allocation2 + $0x48] sm:$0xff] %vm59, %v2656
    %2690 = vst.msk [vmem:[#allocation2 + $0x70] sm:$0xff] %vm59, %v2657
    %2691 = vst.msk [vmem:[#allocation2 + $0x78] sm:$0xff] %vm59, %v2658
    %2692 = vst.msk [vmem:[#allocation2 + $0xa0] sm:$0xff] %vm59, %v2659
    %2693 = vst.msk [vmem:[#allocation2 + $0xa8] sm:$0xff] %vm59, %v2660
    %2694 = vst.msk [vmem:[#allocation2 + $0xd0] sm:$0xff] %vm59, %v2661
    %2695 = vst.msk [vmem:[#allocation2 + $0xd8] sm:$0xff] %vm59, %v2662
    %2696 = vst.msk [vmem:[#allocation2 + $0x100] sm:$0xff] %vm59, %v2663
    %2697 = vst.msk [vmem:[#allocation2 + $0x108] sm:$0xff] %vm59, %v2664
    %2698 = vst.msk [vmem:[#allocation2 + $0x130] sm:$0xff] %vm59, %v2665
    %2699 = vst.msk [vmem:[#allocation2 + $0x138] sm:$0xff] %vm59, %v2666
    %2700 = vst.msk [vmem:[#allocation2 + $0x160] sm:$0xff] %vm59, %v2667
    %2701 = vst.msk [vmem:[#allocation2 + $0x168] sm:$0xff] %vm59, %v2668
    %2702 = vst.msk [vmem:[#allocation2 + $0x190] sm:$0xff] %vm59, %v2669
    %2703 = vst.msk [vmem:[#allocation2 + $0x198] sm:$0xff] %vm59, %v2670
    %2704 = vst.msk [vmem:[#allocation2 + $0x1c0] sm:$0xff] %vm59, %v2671
    %2705 = vst.msk [vmem:[#allocation2 + $0x1c8] sm:$0xff] %vm59, %v2672
    %2706 = vst.msk [vmem:[#allocation2 + $0x1f0] sm:$0xff] %vm59, %v2673
    %2707 = vst.msk [vmem:[#allocation2 + $0x1f8] sm:$0xff] %vm59, %v2674
    %2708 = vst.msk [vmem:[#allocation2 + $0x220] sm:$0xff] %vm59, %v2675
    %2709 = vst.msk [vmem:[#allocation2 + $0x228] sm:$0xff] %vm59, %v2676
    %2710 = vst.msk [vmem:[#allocation2 + $0x250] sm:$0xff] %vm59, %v2677
    %2711 = vst.msk [vmem:[#allocation2 + $0x258] sm:$0xff] %vm59, %v2678
    %2712 = vst.msk [vmem:[#allocation2 + $0x280] sm:$0xff] %vm59, %v2679
    %2713 = vst.msk [vmem:[#allocation2 + $0x288] sm:$0xff] %vm59, %v2680
    %2714 = vst.msk [vmem:[#allocation2 + $0x2b0] sm:$0xff] %vm59, %v2681
    %2715 = vst.msk [vmem:[#allocation2 + $0x2b8] sm:$0xff] %vm59, %v2682
    %2716 = vst.msk [vmem:[#allocation2 + $0x2e0] sm:$0xff] %vm59, %v2683
    %2717 = vst.msk [vmem:[#allocation2 + $0x2e8] sm:$0xff] %vm59, %v2684
    %v2718 = vld [vmem:[#allocation2 + $0xf] sm:$0xff]
    %v2719 = vld [vmem:[#allocation2 + $0x17] sm:$0xff]
    %v2720 = vld [vmem:[#allocation2 + $0x3f] sm:$0xff]
    %v2721 = vld [vmem:[#allocation2 + $0x47] sm:$0xff]
    %v2722 = vld [vmem:[#allocation2 + $0x6f] sm:$0xff]
    %v2723 = vld [vmem:[#allocation2 + $0x77] sm:$0xff]
    %v2724 = vld [vmem:[#allocation2 + $0x9f] sm:$0xff]
    %v2725 = vld [vmem:[#allocation2 + $0xa7] sm:$0xff]
    %v2726 = vld [vmem:[#allocation2 + $0xcf] sm:$0xff]
    %v2727 = vld [vmem:[#allocation2 + $0xd7] sm:$0xff]
    %v2728 = vld [vmem:[#allocation2 + $0xff] sm:$0xff]
    %v2729 = vld [vmem:[#allocation2 + $0x107] sm:$0xff]
    %v2730 = vld [vmem:[#allocation2 + $0x12f] sm:$0xff]
    %v2731 = vld [vmem:[#allocation2 + $0x137] sm:$0xff]
    %v2732 = vld [vmem:[#allocation2 + $0x15f] sm:$0xff]
    %v2733 = vld [vmem:[#allocation2 + $0x167] sm:$0xff]
    %v2734 = vld [vmem:[#allocation2 + $0x18f] sm:$0xff]
    %v2735 = vld [vmem:[#allocation2 + $0x197] sm:$0xff]
    %v2736 = vld [vmem:[#allocation2 + $0x1bf] sm:$0xff]
    %v2737 = vld [vmem:[#allocation2 + $0x1c7] sm:$0xff]
    %v2738 = vld [vmem:[#allocation2 + $0x1ef] sm:$0xff]
    %v2739 = vld [vmem:[#allocation2 + $0x1f7] sm:$0xff]
    %v2740 = vld [vmem:[#allocation2 + $0x21f] sm:$0xff]
    %v2741 = vld [vmem:[#allocation2 + $0x227] sm:$0xff]
    %v2742 = vld [vmem:[#allocation2 + $0x24f] sm:$0xff]
    %v2743 = vld [vmem:[#allocation2 + $0x257] sm:$0xff]
    %v2744 = vld [vmem:[#allocation2 + $0x27f] sm:$0xff]
    %v2745 = vld [vmem:[#allocation2 + $0x287] sm:$0xff]
    %v2746 = vld [vmem:[#allocation2 + $0x2af] sm:$0xff]
    %v2747 = vld [vmem:[#allocation2 + $0x2b7] sm:$0xff]
    %v2748 = vld [vmem:[#allocation2 + $0x2df] sm:$0xff]
    %v2749 = vld [vmem:[#allocation2 + $0x2e7] sm:$0xff]
    %s2750 = scalar_lea.vmem [#allocation7], 160
    %v2751 = vld [vmem:[%s2750] sm:$0xf]
    %v2752 = vld [vmem:[%s2750 + $0x4] sm:$0xf]
    %v2753 = vld [vmem:[%s2750 + $0x8] sm:$0xf]
    %v2754 = vld [vmem:[%s2750 + $0xc] sm:$0xf]
    %v2755 = vld [vmem:[%s2750 + $0x10] sm:$0xf]
    %v2756 = vld [vmem:[%s2750 + $0x14] sm:$0xf]
    %v2757 = vld [vmem:[%s2750 + $0x18] sm:$0xf]
    %v2758 = vld [vmem:[%s2750 + $0x1c] sm:$0xf]
    %v2759 = vld [vmem:[%s2750 + $0x20] sm:$0xf]
    %v2760 = vld [vmem:[%s2750 + $0x24] sm:$0xf]
    %v2761 = vpack.c.bf16 %v2719, %v2718
    %v2762 = vpack.c.bf16 %v2721, %v2720
    %v2763 = vpack.c.bf16 %v2723, %v2722
    %v2764 = vpack.c.bf16 %v2725, %v2724
    %v2765 = vpack.c.bf16 %v2727, %v2726
    %v2766 = vpack.c.bf16 %v2729, %v2728
    %v2767 = vpack.c.bf16 %v2731, %v2730
    %v2768 = vpack.c.bf16 %v2733, %v2732
    %v2769 = vpack.c.bf16 %v2735, %v2734
    %v2770 = vpack.c.bf16 %v2737, %v2736
    %v2771 = vpack.c.bf16 %v2739, %v2738
    %v2772 = vpack.c.bf16 %v2741, %v2740
    %v2773 = vpack.c.bf16 %v2743, %v2742
    %v2774 = vpack.c.bf16 %v2745, %v2744
    %v2775 = vpack.c.bf16 %v2747, %v2746
    %v2776 = vpack.c.bf16 %v2749, %v2748
    %v2787 = vunpack.c.l.b16 %v2751
    %v2788 = vunpack.c.l.b16 %v2752
    %v2789 = vunpack.c.l.b16 %v2753
    %v2790 = vunpack.c.l.b16 %v2754
    %v2791 = vunpack.c.l.b16 %v2755
    %v2792 = vunpack.c.l.b16 %v2756
    %v2793 = vunpack.c.l.b16 %v2757
    %v2794 = vunpack.c.l.b16 %v2758
    %v2795 = vunpack.c.l.b16 %v2759
    %v2796 = vunpack.c.l.b16 %v2760
    %v2797 = vpack.c.b16 %v2788, %v2787
    %v2798 = vpack.c.b16 %v2790, %v2789
    %v2799 = vpack.c.b16 %v2792, %v2791
    %v2800 = vpack.c.b16 %v2794, %v2793
    %v2801 = vpack.c.b16 %v2796, %v2795
    %v2808 = vsel %vm59, %v2761, 0
    %v2811 = vsel %vm59, %v2762, 0
    %v2814 = vsel %vm59, %v2763, 0
    %v2817 = vsel %vm59, %v2764, 0
    %v2820 = vsel %vm59, %v2765, 0
    %v2823 = vsel %vm59, %v2766, 0
    %v2826 = vsel %vm59, %v2767, 0
    %v2829 = vsel %vm59, %v2768, 0
    %v2832 = vsel %vm59, %v2769, 0
    %v2835 = vsel %vm59, %v2770, 0
    %v2838 = vsel %vm59, %v2771, 0
    %v2841 = vsel %vm59, %v2772, 0
    %v2844 = vsel %vm59, %v2773, 0
    %v2847 = vsel %vm59, %v2774, 0
    %v2850 = vsel %vm59, %v2775, 0
    %v2853 = vsel %vm59, %v2776, 0
    %2855 = vmatprep.subr.bf16.mxu0 0
    %2856 = vmatpush1.bf16.msra.mxu0 0
    %2857 = vmatprep.subr.bf16.mxu0 0
    %2858 = vmatpush1.bf16.msra.mxu0 0
    %2859 = vmatprep.subr.bf16.mxu0 0
    %2860 = vmatpush1.bf16.msra.mxu0 0
    %2861 = vmatprep.subr.bf16.mxu0 0
    %2862 = vmatpush1.bf16.msra.mxu0 %v2801
    %2863 = vmatprep.subr.bf16.mxu0 0
    %2864 = vmatpush1.bf16.msra.mxu0 %v2800
    %2865 = vmatprep.subr.bf16.mxu0 0
    %2866 = vmatpush1.bf16.msra.mxu0 %v2799
    %2867 = vmatprep.subr.bf16.mxu0 0
    %2868 = vmatpush1.bf16.msra.mxu0 %v2798
    %2869 = vmatprep.subr.bf16.mxu0 0
    %2870 = vmatpush1.bf16.msra.mxu0 %v2797
    %2871 = vmatprep.subr.bf16.mxu0 0
    %2872 = vmatpush2.bf16.msra.mxu0 0
    %2873 = vmatprep.subr.bf16.mxu0 0
    %2874 = vmatpush2.bf16.msra.mxu0 0
    %2875 = vmatprep.subr.bf16.mxu0 0
    %2876 = vmatpush2.bf16.msra.mxu0 0
    %2877 = vmatprep.subr.bf16.mxu0 0
    %2878 = vmatpush2.bf16.msra.mxu0 0
    %2879 = vmatprep.subr.bf16.mxu0 0
    %2880 = vmatpush2.bf16.msra.mxu0 0
    %2881 = vmatprep.subr.bf16.mxu0 0
    %2882 = vmatpush2.bf16.msra.mxu0 0
    %2883 = vmatprep.subr.bf16.mxu0 0
    %2884 = vmatpush2.bf16.msra.mxu0 0
    %2885 = vmatprep.subr.bf16.mxu0 0
    %2886 = vmatpush2.bf16.msra.mxu0 0
    %2887 = vmatprep.mubr.bf16.mxu0 0
    %2888 = vmatmul.mubr.bf16.gmra.mxu0 %v2808
    %v2889 = vpop.f32.mrf.mxu0
    %v2890 = vadd.f32 0.0, %v2889
    %v2891 = vpop.f32.mrf.mxu0
    %v2892 = vpop.f32.mrf.mxu0
    %v2893 = vadd.f32 0.0, %v2892
    %v2894 = vpop.f32.mrf.mxu0
    %2895 = vmatprep.mubr.bf16.mxu0 0
    %2896 = vmatmul.mubr.bf16.gmra.mxu0 %v2811
    %v2897 = vpop.f32.mrf.mxu0
    %v2898 = vadd.f32 0.0, %v2897
    %v2899 = vpop.f32.mrf.mxu0
    %v2900 = vpop.f32.mrf.mxu0
    %v2901 = vadd.f32 0.0, %v2900
    %v2902 = vpop.f32.mrf.mxu0
    %2903 = vmatprep.mubr.bf16.mxu0 0
    %2904 = vmatmul.mubr.bf16.gmra.mxu0 %v2814
    %v2905 = vpop.f32.mrf.mxu0
    %v2906 = vadd.f32 0.0, %v2905
    %v2907 = vpop.f32.mrf.mxu0
    %v2908 = vpop.f32.mrf.mxu0
    %v2909 = vadd.f32 0.0, %v2908
    %v2910 = vpop.f32.mrf.mxu0
    %2911 = vmatprep.mubr.bf16.mxu0 0
    %2912 = vmatmul.mubr.bf16.gmra.mxu0 %v2817
    %v2913 = vpop.f32.mrf.mxu0
    %v2914 = vadd.f32 0.0, %v2913
    %v2915 = vpop.f32.mrf.mxu0
    %v2916 = vpop.f32.mrf.mxu0
    %v2917 = vadd.f32 0.0, %v2916
    %v2918 = vpop.f32.mrf.mxu0
    %2919 = vmatprep.mubr.bf16.mxu0 0
    %2920 = vmatmul.mubr.bf16.gmra.mxu0 %v2820
    %v2921 = vpop.f32.mrf.mxu0
    %v2922 = vadd.f32 0.0, %v2921
    %v2923 = vpop.f32.mrf.mxu0
    %v2924 = vpop.f32.mrf.mxu0
    %v2925 = vadd.f32 0.0, %v2924
    %v2926 = vpop.f32.mrf.mxu0
    %2927 = vmatprep.mubr.bf16.mxu0 0
    %2928 = vmatmul.mubr.bf16.gmra.mxu0 %v2823
    %v2929 = vpop.f32.mrf.mxu0
    %v2930 = vadd.f32 0.0, %v2929
    %v2931 = vpop.f32.mrf.mxu0
    %v2932 = vpop.f32.mrf.mxu0
    %v2933 = vadd.f32 0.0, %v2932
    %v2934 = vpop.f32.mrf.mxu0
    %2935 = vmatprep.mubr.bf16.mxu0 0
    %2936 = vmatmul.mubr.bf16.gmra.mxu0 %v2826
    %v2937 = vpop.f32.mrf.mxu0
    %v2938 = vadd.f32 0.0, %v2937
    %v2939 = vpop.f32.mrf.mxu0
    %v2940 = vpop.f32.mrf.mxu0
    %v2941 = vadd.f32 0.0, %v2940
    %v2942 = vpop.f32.mrf.mxu0
    %2943 = vmatprep.mubr.bf16.mxu0 0
    %2944 = vmatmul.mubr.bf16.gmra.mxu0 %v2829
    %v2945 = vpop.f32.mrf.mxu0
    %v2946 = vadd.f32 0.0, %v2945
    %v2947 = vpop.f32.mrf.mxu0
    %v2948 = vpop.f32.mrf.mxu0
    %v2949 = vadd.f32 0.0, %v2948
    %v2950 = vpop.f32.mrf.mxu0
    %2951 = vmatprep.mubr.bf16.mxu0 0
    %2952 = vmatmul.mubr.bf16.gmra.mxu0 %v2832
    %v2953 = vpop.f32.mrf.mxu0
    %v2954 = vadd.f32 0.0, %v2953
    %v2955 = vpop.f32.mrf.mxu0
    %v2956 = vpop.f32.mrf.mxu0
    %v2957 = vadd.f32 0.0, %v2956
    %v2958 = vpop.f32.mrf.mxu0
    %2959 = vmatprep.mubr.bf16.mxu0 0
    %2960 = vmatmul.mubr.bf16.gmra.mxu0 %v2835
    %v2961 = vpop.f32.mrf.mxu0
    %v2962 = vadd.f32 0.0, %v2961
    %v2963 = vpop.f32.mrf.mxu0
    %v2964 = vpop.f32.mrf.mxu0
    %v2965 = vadd.f32 0.0, %v2964
    %v2966 = vpop.f32.mrf.mxu0
    %2967 = vmatprep.mubr.bf16.mxu0 0
    %2968 = vmatmul.mubr.bf16.gmra.mxu0 %v2838
    %v2969 = vpop.f32.mrf.mxu0
    %v2970 = vadd.f32 0.0, %v2969
    %v2971 = vpop.f32.mrf.mxu0
    %v2972 = vpop.f32.mrf.mxu0
    %v2973 = vadd.f32 0.0, %v2972
    %v2974 = vpop.f32.mrf.mxu0
    %2975 = vmatprep.mubr.bf16.mxu0 0
    %2976 = vmatmul.mubr.bf16.gmra.mxu0 %v2841
    %v2977 = vpop.f32.mrf.mxu0
    %v2978 = vadd.f32 0.0, %v2977
    %v2979 = vpop.f32.mrf.mxu0
    %v2980 = vpop.f32.mrf.mxu0
    %v2981 = vadd.f32 0.0, %v2980
    %v2982 = vpop.f32.mrf.mxu0
    %2983 = vmatprep.mubr.bf16.mxu0 0
    %2984 = vmatmul.mubr.bf16.gmra.mxu0 %v2844
    %v2985 = vpop.f32.mrf.mxu0
    %v2986 = vadd.f32 0.0, %v2985
    %v2987 = vpop.f32.mrf.mxu0
    %v2988 = vpop.f32.mrf.mxu0
    %v2989 = vadd.f32 0.0, %v2988
    %v2990 = vpop.f32.mrf.mxu0
    %2991 = vmatprep.mubr.bf16.mxu0 0
    %2992 = vmatmul.mubr.bf16.gmra.mxu0 %v2847
    %v2993 = vpop.f32.mrf.mxu0
    %v2994 = vadd.f32 0.0, %v2993
    %v2995 = vpop.f32.mrf.mxu0
    %v2996 = vpop.f32.mrf.mxu0
    %v2997 = vadd.f32 0.0, %v2996
    %v2998 = vpop.f32.mrf.mxu0
    %2999 = vmatprep.mubr.bf16.mxu0 0
    %3000 = vmatmul.mubr.bf16.gmra.mxu0 %v2850
    %v3001 = vpop.f32.mrf.mxu0
    %v3002 = vadd.f32 0.0, %v3001
    %v3003 = vpop.f32.mrf.mxu0
    %v3004 = vpop.f32.mrf.mxu0
    %v3005 = vadd.f32 0.0, %v3004
    %v3006 = vpop.f32.mrf.mxu0
    %3007 = vmatprep.mubr.bf16.mxu0 0
    %3008 = vmatmul.mubr.bf16.gmra.mxu0 %v2853
    %v3009 = vpop.f32.mrf.mxu0
    %v3010 = vadd.f32 0.0, %v3009
    %v3011 = vpop.f32.mrf.mxu0
    %v3012 = vpop.f32.mrf.mxu0
    %v3013 = vadd.f32 0.0, %v3012
    %v3014 = vpop.f32.mrf.mxu0
    %3015 = vdwg.mxu0
    %v3016 = vlaneseq
    %v3017 = vshrl.u32 %v3016, 7
    %v3018 = vsub.s32 0, %v3017
    %v3019 = vrot.slane %v2685, %v3018
    %v3020 = vadd.f32 %v3019, %v2890
    %v3021 = vadd.f32 %v3019, %v2893
    %v3022 = vadd.f32 %v3019, %v2898
    %v3023 = vadd.f32 %v3019, %v2901
    %v3024 = vadd.f32 %v3019, %v2906
    %v3025 = vadd.f32 %v3019, %v2909
    %v3026 = vadd.f32 %v3019, %v2914
    %v3027 = vadd.f32 %v3019, %v2917
    %v3028 = vadd.f32 %v3019, %v2922
    %v3029 = vadd.f32 %v3019, %v2925
    %v3030 = vadd.f32 %v3019, %v2930
    %v3031 = vadd.f32 %v3019, %v2933
    %v3032 = vadd.f32 %v3019, %v2938
    %v3033 = vadd.f32 %v3019, %v2941
    %v3034 = vadd.f32 %v3019, %v2946
    %v3035 = vadd.f32 %v3019, %v2949
    %v3036 = vadd.f32 %v3019, %v2954
    %v3037 = vadd.f32 %v3019, %v2957
    %v3038 = vadd.f32 %v3019, %v2962
    %v3039 = vadd.f32 %v3019, %v2965
    %v3040 = vadd.f32 %v3019, %v2970
    %v3041 = vadd.f32 %v3019, %v2973
    %v3042 = vadd.f32 %v3019, %v2978
    %v3043 = vadd.f32 %v3019, %v2981
    %v3044 = vadd.f32 %v3019, %v2986
    %v3045 = vadd.f32 %v3019, %v2989
    %v3046 = vadd.f32 %v3019, %v2994
    %v3047 = vadd.f32 %v3019, %v2997
    %v3048 = vadd.f32 %v3019, %v3002
    %v3049 = vadd.f32 %v3019, %v3005
    %v3050 = vadd.f32 %v3019, %v3010
    %v3051 = vadd.f32 %v3019, %v3013
    %v3052 = vld [vmem:[#allocation2 + $0x11] sm:$0xff]
    %v3053 = vld [vmem:[#allocation2 + $0x19] sm:$0xff]
    %v3054 = vld [vmem:[#allocation2 + $0x41] sm:$0xff]
    %v3055 = vld [vmem:[#allocation2 + $0x49] sm:$0xff]
    %v3056 = vld [vmem:[#allocation2 + $0x71] sm:$0xff]
    %v3057 = vld [vmem:[#allocation2 + $0x79] sm:$0xff]
    %v3058 = vld [vmem:[#allocation2 + $0xa1] sm:$0xff]
    %v3059 = vld [vmem:[#allocation2 + $0xa9] sm:$0xff]
    %v3060 = vld [vmem:[#allocation2 + $0xd1] sm:$0xff]
    %v3061 = vld [vmem:[#allocation2 + $0xd9] sm:$0xff]
    %v3062 = vld [vmem:[#allocation2 + $0x101] sm:$0xff]
    %v3063 = vld [vmem:[#allocation2 + $0x109] sm:$0xff]
    %v3064 = vld [vmem:[#allocation2 + $0x131] sm:$0xff]
    %v3065 = vld [vmem:[#allocation2 + $0x139] sm:$0xff]
    %v3066 = vld [vmem:[#allocation2 + $0x161] sm:$0xff]
    %v3067 = vld [vmem:[#allocation2 + $0x169] sm:$0xff]
    %v3068 = vld [vmem:[#allocation2 + $0x191] sm:$0xff]
    %v3069 = vld [vmem:[#allocation2 + $0x199] sm:$0xff]
    %v3070 = vld [vmem:[#allocation2 + $0x1c1] sm:$0xff]
    %v3071 = vld [vmem:[#allocation2 + $0x1c9] sm:$0xff]
    %v3072 = vld [vmem:[#allocation2 + $0x1f1] sm:$0xff]
    %v3073 = vld [vmem:[#allocation2 + $0x1f9] sm:$0xff]
    %v3074 = vld [vmem:[#allocation2 + $0x221] sm:$0xff]
    %v3075 = vld [vmem:[#allocation2 + $0x229] sm:$0xff]
    %v3076 = vld [vmem:[#allocation2 + $0x251] sm:$0xff]
    %v3077 = vld [vmem:[#allocation2 + $0x259] sm:$0xff]
    %v3078 = vld [vmem:[#allocation2 + $0x281] sm:$0xff]
    %v3079 = vld [vmem:[#allocation2 + $0x289] sm:$0xff]
    %v3080 = vld [vmem:[#allocation2 + $0x2b1] sm:$0xff]
    %v3081 = vld [vmem:[#allocation2 + $0x2b9] sm:$0xff]
    %v3082 = vld [vmem:[#allocation2 + $0x2e1] sm:$0xff]
    %v3083 = vld [vmem:[#allocation2 + $0x2e9] sm:$0xff]
    %s3084 = scalar_lea.vmem [#allocation7], 200
    %v3085 = vld [vmem:[%s3084] sm:$0xf]
    %v3086 = vld [vmem:[%s3084 + $0x4] sm:$0xf]
    %v3087 = vld [vmem:[%s3084 + $0x8] sm:$0xf]
    %v3088 = vld [vmem:[%s3084 + $0xc] sm:$0xf]
    %v3089 = vld [vmem:[%s3084 + $0x10] sm:$0xf]
    %v3090 = vld [vmem:[%s3084 + $0x14] sm:$0xf]
    %v3091 = vld [vmem:[%s3084 + $0x18] sm:$0xf]
    %v3092 = vld [vmem:[%s3084 + $0x1c] sm:$0xf]
    %v3093 = vld [vmem:[%s3084 + $0x20] sm:$0xf]
    %v3094 = vld [vmem:[%s3084 + $0x24] sm:$0xf]
    %v3095 = vpack.c.bf16 %v3053, %v3052
    %v3096 = vpack.c.bf16 %v3055, %v3054
    %v3097 = vpack.c.bf16 %v3057, %v3056
    %v3098 = vpack.c.bf16 %v3059, %v3058
    %v3099 = vpack.c.bf16 %v3061, %v3060
    %v3100 = vpack.c.bf16 %v3063, %v3062
    %v3101 = vpack.c.bf16 %v3065, %v3064
    %v3102 = vpack.c.bf16 %v3067, %v3066
    %v3103 = vpack.c.bf16 %v3069, %v3068
    %v3104 = vpack.c.bf16 %v3071, %v3070
    %v3105 = vpack.c.bf16 %v3073, %v3072
    %v3106 = vpack.c.bf16 %v3075, %v3074
    %v3107 = vpack.c.bf16 %v3077, %v3076
    %v3108 = vpack.c.bf16 %v3079, %v3078
    %v3109 = vpack.c.bf16 %v3081, %v3080
    %v3110 = vpack.c.bf16 %v3083, %v3082
    %v3121 = vunpack.c.l.b16 %v3085
    %v3122 = vunpack.c.l.b16 %v3086
    %v3123 = vunpack.c.l.b16 %v3087
    %v3124 = vunpack.c.l.b16 %v3088
    %v3125 = vunpack.c.l.b16 %v3089
    %v3126 = vunpack.c.l.b16 %v3090
    %v3127 = vunpack.c.l.b16 %v3091
    %v3128 = vunpack.c.l.b16 %v3092
    %v3129 = vunpack.c.l.b16 %v3093
    %v3130 = vunpack.c.l.b16 %v3094
    %v3131 = vpack.c.b16 %v3122, %v3121
    %v3132 = vpack.c.b16 %v3124, %v3123
    %v3133 = vpack.c.b16 %v3126, %v3125
    %v3134 = vpack.c.b16 %v3128, %v3127
    %v3135 = vpack.c.b16 %v3130, %v3129
    %v3142 = vsel %vm59, %v3095, 0
    %v3145 = vsel %vm59, %v3096, 0
    %v3148 = vsel %vm59, %v3097, 0
    %v3151 = vsel %vm59, %v3098, 0
    %v3154 = vsel %vm59, %v3099, 0
    %v3157 = vsel %vm59, %v3100, 0
    %v3160 = vsel %vm59, %v3101, 0
    %v3163 = vsel %vm59, %v3102, 0
    %v3166 = vsel %vm59, %v3103, 0
    %v3169 = vsel %vm59, %v3104, 0
    %v3172 = vsel %vm59, %v3105, 0
    %v3175 = vsel %vm59, %v3106, 0
    %v3178 = vsel %vm59, %v3107, 0
    %v3181 = vsel %vm59, %v3108, 0
    %v3184 = vsel %vm59, %v3109, 0
    %v3187 = vsel %vm59, %v3110, 0
    %3189 = vmatprep.subr.bf16.mxu0 0
    %3190 = vmatpush1.bf16.msra.mxu0 0
    %3191 = vmatprep.subr.bf16.mxu0 0
    %3192 = vmatpush1.bf16.msra.mxu0 0
    %3193 = vmatprep.subr.bf16.mxu0 0
    %3194 = vmatpush1.bf16.msra.mxu0 0
    %3195 = vmatprep.subr.bf16.mxu0 0
    %3196 = vmatpush1.bf16.msra.mxu0 %v3135
    %3197 = vmatprep.subr.bf16.mxu0 0
    %3198 = vmatpush1.bf16.msra.mxu0 %v3134
    %3199 = vmatprep.subr.bf16.mxu0 0
    %3200 = vmatpush1.bf16.msra.mxu0 %v3133
    %3201 = vmatprep.subr.bf16.mxu0 0
    %3202 = vmatpush1.bf16.msra.mxu0 %v3132
    %3203 = vmatprep.subr.bf16.mxu0 0
    %3204 = vmatpush1.bf16.msra.mxu0 %v3131
    %3205 = vmatprep.subr.bf16.mxu0 0
    %3206 = vmatpush2.bf16.msra.mxu0 0
    %3207 = vmatprep.subr.bf16.mxu0 0
    %3208 = vmatpush2.bf16.msra.mxu0 0
    %3209 = vmatprep.subr.bf16.mxu0 0
    %3210 = vmatpush2.bf16.msra.mxu0 0
    %3211 = vmatprep.subr.bf16.mxu0 0
    %3212 = vmatpush2.bf16.msra.mxu0 0
    %3213 = vmatprep.subr.bf16.mxu0 0
    %3214 = vmatpush2.bf16.msra.mxu0 0
    %3215 = vmatprep.subr.bf16.mxu0 0
    %3216 = vmatpush2.bf16.msra.mxu0 0
    %3217 = vmatprep.subr.bf16.mxu0 0
    %3218 = vmatpush2.bf16.msra.mxu0 0
    %3219 = vmatprep.subr.bf16.mxu0 0
    %3220 = vmatpush2.bf16.msra.mxu0 0
    %3221 = vmatprep.mubr.bf16.mxu0 0
    %3222 = vmatmul.mubr.bf16.gmra.mxu0 %v3142
    %v3223 = vpop.f32.mrf.mxu0
    %v3224 = vadd.f32 0.0, %v3223
    %v3225 = vpop.f32.mrf.mxu0
    %v3226 = vpop.f32.mrf.mxu0
    %v3227 = vadd.f32 0.0, %v3226
    %v3228 = vpop.f32.mrf.mxu0
    %3229 = vmatprep.mubr.bf16.mxu0 0
    %3230 = vmatmul.mubr.bf16.gmra.mxu0 %v3145
    %v3231 = vpop.f32.mrf.mxu0
    %v3232 = vadd.f32 0.0, %v3231
    %v3233 = vpop.f32.mrf.mxu0
    %v3234 = vpop.f32.mrf.mxu0
    %v3235 = vadd.f32 0.0, %v3234
    %v3236 = vpop.f32.mrf.mxu0
    %3237 = vmatprep.mubr.bf16.mxu0 0
    %3238 = vmatmul.mubr.bf16.gmra.mxu0 %v3148
    %v3239 = vpop.f32.mrf.mxu0
    %v3240 = vadd.f32 0.0, %v3239
    %v3241 = vpop.f32.mrf.mxu0
    %v3242 = vpop.f32.mrf.mxu0
    %v3243 = vadd.f32 0.0, %v3242
    %v3244 = vpop.f32.mrf.mxu0
    %3245 = vmatprep.mubr.bf16.mxu0 0
    %3246 = vmatmul.mubr.bf16.gmra.mxu0 %v3151
    %v3247 = vpop.f32.mrf.mxu0
    %v3248 = vadd.f32 0.0, %v3247
    %v3249 = vpop.f32.mrf.mxu0
    %v3250 = vpop.f32.mrf.mxu0
    %v3251 = vadd.f32 0.0, %v3250
    %v3252 = vpop.f32.mrf.mxu0
    %3253 = vmatprep.mubr.bf16.mxu0 0
    %3254 = vmatmul.mubr.bf16.gmra.mxu0 %v3154
    %v3255 = vpop.f32.mrf.mxu0
    %v3256 = vadd.f32 0.0, %v3255
    %v3257 = vpop.f32.mrf.mxu0
    %v3258 = vpop.f32.mrf.mxu0
    %v3259 = vadd.f32 0.0, %v3258
    %v3260 = vpop.f32.mrf.mxu0
    %3261 = vmatprep.mubr.bf16.mxu0 0
    %3262 = vmatmul.mubr.bf16.gmra.mxu0 %v3157
    %v3263 = vpop.f32.mrf.mxu0
    %v3264 = vadd.f32 0.0, %v3263
    %v3265 = vpop.f32.mrf.mxu0
    %v3266 = vpop.f32.mrf.mxu0
    %v3267 = vadd.f32 0.0, %v3266
    %v3268 = vpop.f32.mrf.mxu0
    %3269 = vmatprep.mubr.bf16.mxu0 0
    %3270 = vmatmul.mubr.bf16.gmra.mxu0 %v3160
    %v3271 = vpop.f32.mrf.mxu0
    %v3272 = vadd.f32 0.0, %v3271
    %v3273 = vpop.f32.mrf.mxu0
    %v3274 = vpop.f32.mrf.mxu0
    %v3275 = vadd.f32 0.0, %v3274
    %v3276 = vpop.f32.mrf.mxu0
    %3277 = vmatprep.mubr.bf16.mxu0 0
    %3278 = vmatmul.mubr.bf16.gmra.mxu0 %v3163
    %v3279 = vpop.f32.mrf.mxu0
    %v3280 = vadd.f32 0.0, %v3279
    %v3281 = vpop.f32.mrf.mxu0
    %v3282 = vpop.f32.mrf.mxu0
    %v3283 = vadd.f32 0.0, %v3282
    %v3284 = vpop.f32.mrf.mxu0
    %3285 = vmatprep.mubr.bf16.mxu0 0
    %3286 = vmatmul.mubr.bf16.gmra.mxu0 %v3166
    %v3287 = vpop.f32.mrf.mxu0
    %v3288 = vadd.f32 0.0, %v3287
    %v3289 = vpop.f32.mrf.mxu0
    %v3290 = vpop.f32.mrf.mxu0
    %v3291 = vadd.f32 0.0, %v3290
    %v3292 = vpop.f32.mrf.mxu0
    %3293 = vmatprep.mubr.bf16.mxu0 0
    %3294 = vmatmul.mubr.bf16.gmra.mxu0 %v3169
    %v3295 = vpop.f32.mrf.mxu0
    %v3296 = vadd.f32 0.0, %v3295
    %v3297 = vpop.f32.mrf.mxu0
    %v3298 = vpop.f32.mrf.mxu0
    %v3299 = vadd.f32 0.0, %v3298
    %v3300 = vpop.f32.mrf.mxu0
    %3301 = vmatprep.mubr.bf16.mxu0 0
    %3302 = vmatmul.mubr.bf16.gmra.mxu0 %v3172
    %v3303 = vpop.f32.mrf.mxu0
    %v3304 = vadd.f32 0.0, %v3303
    %v3305 = vpop.f32.mrf.mxu0
    %v3306 = vpop.f32.mrf.mxu0
    %v3307 = vadd.f32 0.0, %v3306
    %v3308 = vpop.f32.mrf.mxu0
    %3309 = vmatprep.mubr.bf16.mxu0 0
    %3310 = vmatmul.mubr.bf16.gmra.mxu0 %v3175
    %v3311 = vpop.f32.mrf.mxu0
    %v3312 = vadd.f32 0.0, %v3311
    %v3313 = vpop.f32.mrf.mxu0
    %v3314 = vpop.f32.mrf.mxu0
    %v3315 = vadd.f32 0.0, %v3314
    %v3316 = vpop.f32.mrf.mxu0
    %3317 = vmatprep.mubr.bf16.mxu0 0
    %3318 = vmatmul.mubr.bf16.gmra.mxu0 %v3178
    %v3319 = vpop.f32.mrf.mxu0
    %v3320 = vadd.f32 0.0, %v3319
    %v3321 = vpop.f32.mrf.mxu0
    %v3322 = vpop.f32.mrf.mxu0
    %v3323 = vadd.f32 0.0, %v3322
    %v3324 = vpop.f32.mrf.mxu0
    %3325 = vmatprep.mubr.bf16.mxu0 0
    %3326 = vmatmul.mubr.bf16.gmra.mxu0 %v3181
    %v3327 = vpop.f32.mrf.mxu0
    %v3328 = vadd.f32 0.0, %v3327
    %v3329 = vpop.f32.mrf.mxu0
    %v3330 = vpop.f32.mrf.mxu0
    %v3331 = vadd.f32 0.0, %v3330
    %v3332 = vpop.f32.mrf.mxu0
    %3333 = vmatprep.mubr.bf16.mxu0 0
    %3334 = vmatmul.mubr.bf16.gmra.mxu0 %v3184
    %v3335 = vpop.f32.mrf.mxu0
    %v3336 = vadd.f32 0.0, %v3335
    %v3337 = vpop.f32.mrf.mxu0
    %v3338 = vpop.f32.mrf.mxu0
    %v3339 = vadd.f32 0.0, %v3338
    %v3340 = vpop.f32.mrf.mxu0
    %3341 = vmatprep.mubr.bf16.mxu0 0
    %3342 = vmatmul.mubr.bf16.gmra.mxu0 %v3187
    %v3343 = vpop.f32.mrf.mxu0
    %v3344 = vadd.f32 0.0, %v3343
    %v3345 = vpop.f32.mrf.mxu0
    %v3346 = vpop.f32.mrf.mxu0
    %v3347 = vadd.f32 0.0, %v3346
    %v3348 = vpop.f32.mrf.mxu0
    %3349 = vdwg.mxu0
    %v3350 = vadd.f32 %v3020, %v3224
    %v3351 = vadd.f32 %v3021, %v3227
    %v3352 = vadd.f32 %v3022, %v3232
    %v3353 = vadd.f32 %v3023, %v3235
    %v3354 = vadd.f32 %v3024, %v3240
    %v3355 = vadd.f32 %v3025, %v3243
    %v3356 = vadd.f32 %v3026, %v3248
    %v3357 = vadd.f32 %v3027, %v3251
    %v3358 = vadd.f32 %v3028, %v3256
    %v3359 = vadd.f32 %v3029, %v3259
    %v3360 = vadd.f32 %v3030, %v3264
    %v3361 = vadd.f32 %v3031, %v3267
    %v3362 = vadd.f32 %v3032, %v3272
    %v3363 = vadd.f32 %v3033, %v3275
    %v3364 = vadd.f32 %v3034, %v3280
    %v3365 = vadd.f32 %v3035, %v3283
    %v3366 = vadd.f32 %v3036, %v3288
    %v3367 = vadd.f32 %v3037, %v3291
    %v3368 = vadd.f32 %v3038, %v3296
    %v3369 = vadd.f32 %v3039, %v3299
    %v3370 = vadd.f32 %v3040, %v3304
    %v3371 = vadd.f32 %v3041, %v3307
    %v3372 = vadd.f32 %v3042, %v3312
    %v3373 = vadd.f32 %v3043, %v3315
    %v3374 = vadd.f32 %v3044, %v3320
    %v3375 = vadd.f32 %v3045, %v3323
    %v3376 = vadd.f32 %v3046, %v3328
    %v3377 = vadd.f32 %v3047, %v3331
    %v3378 = vadd.f32 %v3048, %v3336
    %v3379 = vadd.f32 %v3049, %v3339
    %v3380 = vadd.f32 %v3050, %v3344
    %v3381 = vadd.f32 %v3051, %v3347
    %s3382 = sld [smem:[#allocation4 + $0x4]]
    %vm3383 = vcmp.ge.f32.partialorder %v3350, 0.0
    %vm3384 = vcmp.ge.f32.partialorder %v3351, 0.0
    %vm3385 = vcmp.ge.f32.partialorder %v3352, 0.0
    %vm3386 = vcmp.ge.f32.partialorder %v3353, 0.0
    %vm3387 = vcmp.ge.f32.partialorder %v3354, 0.0
    %vm3388 = vcmp.ge.f32.partialorder %v3355, 0.0
    %vm3389 = vcmp.ge.f32.partialorder %v3356, 0.0
    %vm3390 = vcmp.ge.f32.partialorder %v3357, 0.0
    %vm3391 = vcmp.ge.f32.partialorder %v3358, 0.0
    %vm3392 = vcmp.ge.f32.partialorder %v3359, 0.0
    %vm3393 = vcmp.ge.f32.partialorder %v3360, 0.0
    %vm3394 = vcmp.ge.f32.partialorder %v3361, 0.0
    %vm3395 = vcmp.ge.f32.partialorder %v3362, 0.0
    %vm3396 = vcmp.ge.f32.partialorder %v3363, 0.0
    %vm3397 = vcmp.ge.f32.partialorder %v3364, 0.0
    %vm3398 = vcmp.ge.f32.partialorder %v3365, 0.0
    %vm3399 = vcmp.ge.f32.partialorder %v3366, 0.0
    %vm3400 = vcmp.ge.f32.partialorder %v3367, 0.0
    %vm3401 = vcmp.ge.f32.partialorder %v3368, 0.0
    %vm3402 = vcmp.ge.f32.partialorder %v3369, 0.0
    %vm3403 = vcmp.ge.f32.partialorder %v3370, 0.0
    %vm3404 = vcmp.ge.f32.partialorder %v3371, 0.0
    %vm3405 = vcmp.ge.f32.partialorder %v3372, 0.0
    %vm3406 = vcmp.ge.f32.partialorder %v3373, 0.0
    %vm3407 = vcmp.ge.f32.partialorder %v3374, 0.0
    %vm3408 = vcmp.ge.f32.partialorder %v3375, 0.0
    %vm3409 = vcmp.ge.f32.partialorder %v3376, 0.0
    %vm3410 = vcmp.ge.f32.partialorder %v3377, 0.0
    %vm3411 = vcmp.ge.f32.partialorder %v3378, 0.0
    %vm3412 = vcmp.ge.f32.partialorder %v3379, 0.0
    %vm3413 = vcmp.ge.f32.partialorder %v3380, 0.0
    %vm3414 = vcmp.ge.f32.partialorder %v3381, 0.0
    %v3415 = vstv %s3382
    %v3416 = vmul.f32 %v3415, %v3350
    %v3417 = vmul.f32 %v3415, %v3351
    %v3418 = vmul.f32 %v3415, %v3352
    %v3419 = vmul.f32 %v3415, %v3353
    %v3420 = vmul.f32 %v3415, %v3354
    %v3421 = vmul.f32 %v3415, %v3355
    %v3422 = vmul.f32 %v3415, %v3356
    %v3423 = vmul.f32 %v3415, %v3357
    %v3424 = vmul.f32 %v3415, %v3358
    %v3425 = vmul.f32 %v3415, %v3359
    %v3426 = vmul.f32 %v3415, %v3360
    %v3427 = vmul.f32 %v3415, %v3361
    %v3428 = vmul.f32 %v3415, %v3362
    %v3429 = vmul.f32 %v3415, %v3363
    %v3430 = vmul.f32 %v3415, %v3364
    %v3431 = vmul.f32 %v3415, %v3365
    %v3432 = vmul.f32 %v3415, %v3366
    %v3433 = vmul.f32 %v3415, %v3367
    %v3434 = vmul.f32 %v3415, %v3368
    %v3435 = vmul.f32 %v3415, %v3369
    %v3436 = vmul.f32 %v3415, %v3370
    %v3437 = vmul.f32 %v3415, %v3371
    %v3438 = vmul.f32 %v3415, %v3372
    %v3439 = vmul.f32 %v3415, %v3373
    %v3440 = vmul.f32 %v3415, %v3374
    %v3441 = vmul.f32 %v3415, %v3375
    %v3442 = vmul.f32 %v3415, %v3376
    %v3443 = vmul.f32 %v3415, %v3377
    %v3444 = vmul.f32 %v3415, %v3378
    %v3445 = vmul.f32 %v3415, %v3379
    %v3446 = vmul.f32 %v3415, %v3380
    %v3447 = vmul.f32 %v3415, %v3381
    %v3448 = vsel %vm3383, %v3350, %v3416
    %v3449 = vsel %vm3384, %v3351, %v3417
    %v3450 = vsel %vm3385, %v3352, %v3418
    %v3451 = vsel %vm3386, %v3353, %v3419
    %v3452 = vsel %vm3387, %v3354, %v3420
    %v3453 = vsel %vm3388, %v3355, %v3421
    %v3454 = vsel %vm3389, %v3356, %v3422
    %v3455 = vsel %vm3390, %v3357, %v3423
    %v3456 = vsel %vm3391, %v3358, %v3424
    %v3457 = vsel %vm3392, %v3359, %v3425
    %v3458 = vsel %vm3393, %v3360, %v3426
    %v3459 = vsel %vm3394, %v3361, %v3427
    %v3460 = vsel %vm3395, %v3362, %v3428
    %v3461 = vsel %vm3396, %v3363, %v3429
    %v3462 = vsel %vm3397, %v3364, %v3430
    %v3463 = vsel %vm3398, %v3365, %v3431
    %v3464 = vsel %vm3399, %v3366, %v3432
    %v3465 = vsel %vm3400, %v3367, %v3433
    %v3466 = vsel %vm3401, %v3368, %v3434
    %v3467 = vsel %vm3402, %v3369, %v3435
    %v3468 = vsel %vm3403, %v3370, %v3436
    %v3469 = vsel %vm3404, %v3371, %v3437
    %v3470 = vsel %vm3405, %v3372, %v3438
    %v3471 = vsel %vm3406, %v3373, %v3439
    %v3472 = vsel %vm3407, %v3374, %v3440
    %v3473 = vsel %vm3408, %v3375, %v3441
    %v3474 = vsel %vm3409, %v3376, %v3442
    %v3475 = vsel %vm3410, %v3377, %v3443
    %v3476 = vsel %vm3411, %v3378, %v3444
    %v3477 = vsel %vm3412, %v3379, %v3445
    %v3478 = vsel %vm3413, %v3380, %v3446
    %v3479 = vsel %vm3414, %v3381, %v3447
    %v3480 = vld [vmem:[%s6 + $0x6] sm:$0x1]
    %3481 = vst.msk [vmem:[#allocation2 + $0x10] sm:$0xff] %vm59, %v3448
    %3482 = vst.msk [vmem:[#allocation2 + $0x18] sm:$0xff] %vm59, %v3449
    %3483 = vst.msk [vmem:[#allocation2 + $0x40] sm:$0xff] %vm59, %v3450
    %3484 = vst.msk [vmem:[#allocation2 + $0x48] sm:$0xff] %vm59, %v3451
    %3485 = vst.msk [vmem:[#allocation2 + $0x70] sm:$0xff] %vm59, %v3452
    %3486 = vst.msk [vmem:[#allocation2 + $0x78] sm:$0xff] %vm59, %v3453
    %3487 = vst.msk [vmem:[#allocation2 + $0xa0] sm:$0xff] %vm59, %v3454
    %3488 = vst.msk [vmem:[#allocation2 + $0xa8] sm:$0xff] %vm59, %v3455
    %3489 = vst.msk [vmem:[#allocation2 + $0xd0] sm:$0xff] %vm59, %v3456
    %3490 = vst.msk [vmem:[#allocation2 + $0xd8] sm:$0xff] %vm59, %v3457
    %3491 = vst.msk [vmem:[#allocation2 + $0x100] sm:$0xff] %vm59, %v3458
    %3492 = vst.msk [vmem:[#allocation2 + $0x108] sm:$0xff] %vm59, %v3459
    %3493 = vst.msk [vmem:[#allocation2 + $0x130] sm:$0xff] %vm59, %v3460
    %3494 = vst.msk [vmem:[#allocation2 + $0x138] sm:$0xff] %vm59, %v3461
    %3495 = vst.msk [vmem:[#allocation2 + $0x160] sm:$0xff] %vm59, %v3462
    %3496 = vst.msk [vmem:[#allocation2 + $0x168] sm:$0xff] %vm59, %v3463
    %3497 = vst.msk [vmem:[#allocation2 + $0x190] sm:$0xff] %vm59, %v3464
    %3498 = vst.msk [vmem:[#allocation2 + $0x198] sm:$0xff] %vm59, %v3465
    %3499 = vst.msk [vmem:[#allocation2 + $0x1c0] sm:$0xff] %vm59, %v3466
    %3500 = vst.msk [vmem:[#allocation2 + $0x1c8] sm:$0xff] %vm59, %v3467
    %3501 = vst.msk [vmem:[#allocation2 + $0x1f0] sm:$0xff] %vm59, %v3468
    %3502 = vst.msk [vmem:[#allocation2 + $0x1f8] sm:$0xff] %vm59, %v3469
    %3503 = vst.msk [vmem:[#allocation2 + $0x220] sm:$0xff] %vm59, %v3470
    %3504 = vst.msk [vmem:[#allocation2 + $0x228] sm:$0xff] %vm59, %v3471
    %3505 = vst.msk [vmem:[#allocation2 + $0x250] sm:$0xff] %vm59, %v3472
    %3506 = vst.msk [vmem:[#allocation2 + $0x258] sm:$0xff] %vm59, %v3473
    %3507 = vst.msk [vmem:[#allocation2 + $0x280] sm:$0xff] %vm59, %v3474
    %3508 = vst.msk [vmem:[#allocation2 + $0x288] sm:$0xff] %vm59, %v3475
    %3509 = vst.msk [vmem:[#allocation2 + $0x2b0] sm:$0xff] %vm59, %v3476
    %3510 = vst.msk [vmem:[#allocation2 + $0x2b8] sm:$0xff] %vm59, %v3477
    %3511 = vst.msk [vmem:[#allocation2 + $0x2e0] sm:$0xff] %vm59, %v3478
    %3512 = vst.msk [vmem:[#allocation2 + $0x2e8] sm:$0xff] %vm59, %v3479
    %v3513 = vld [vmem:[#allocation2 + $0xf] sm:$0xff]
    %v3514 = vld [vmem:[#allocation2 + $0x17] sm:$0xff]
    %v3515 = vld [vmem:[#allocation2 + $0x3f] sm:$0xff]
    %v3516 = vld [vmem:[#allocation2 + $0x47] sm:$0xff]
    %v3517 = vld [vmem:[#allocation2 + $0x6f] sm:$0xff]
    %v3518 = vld [vmem:[#allocation2 + $0x77] sm:$0xff]
    %v3519 = vld [vmem:[#allocation2 + $0x9f] sm:$0xff]
    %v3520 = vld [vmem:[#allocation2 + $0xa7] sm:$0xff]
    %v3521 = vld [vmem:[#allocation2 + $0xcf] sm:$0xff]
    %v3522 = vld [vmem:[#allocation2 + $0xd7] sm:$0xff]
    %v3523 = vld [vmem:[#allocation2 + $0xff] sm:$0xff]
    %v3524 = vld [vmem:[#allocation2 + $0x107] sm:$0xff]
    %v3525 = vld [vmem:[#allocation2 + $0x12f] sm:$0xff]
    %v3526 = vld [vmem:[#allocation2 + $0x137] sm:$0xff]
    %v3527 = vld [vmem:[#allocation2 + $0x15f] sm:$0xff]
    %v3528 = vld [vmem:[#allocation2 + $0x167] sm:$0xff]
    %v3529 = vld [vmem:[#allocation2 + $0x18f] sm:$0xff]
    %v3530 = vld [vmem:[#allocation2 + $0x197] sm:$0xff]
    %v3531 = vld [vmem:[#allocation2 + $0x1bf] sm:$0xff]
    %v3532 = vld [vmem:[#allocation2 + $0x1c7] sm:$0xff]
    %v3533 = vld [vmem:[#allocation2 + $0x1ef] sm:$0xff]
    %v3534 = vld [vmem:[#allocation2 + $0x1f7] sm:$0xff]
    %v3535 = vld [vmem:[#allocation2 + $0x21f] sm:$0xff]
    %v3536 = vld [vmem:[#allocation2 + $0x227] sm:$0xff]
    %v3537 = vld [vmem:[#allocation2 + $0x24f] sm:$0xff]
    %v3538 = vld [vmem:[#allocation2 + $0x257] sm:$0xff]
    %v3539 = vld [vmem:[#allocation2 + $0x27f] sm:$0xff]
    %v3540 = vld [vmem:[#allocation2 + $0x287] sm:$0xff]
    %v3541 = vld [vmem:[#allocation2 + $0x2af] sm:$0xff]
    %v3542 = vld [vmem:[#allocation2 + $0x2b7] sm:$0xff]
    %v3543 = vld [vmem:[#allocation2 + $0x2df] sm:$0xff]
    %v3544 = vld [vmem:[#allocation2 + $0x2e7] sm:$0xff]
    %s3545 = scalar_lea.vmem [#allocation7], 240
    %v3546 = vld [vmem:[%s3545] sm:$0xf]
    %v3547 = vld [vmem:[%s3545 + $0x4] sm:$0xf]
    %v3548 = vld [vmem:[%s3545 + $0x8] sm:$0xf]
    %v3549 = vld [vmem:[%s3545 + $0xc] sm:$0xf]
    %v3550 = vld [vmem:[%s3545 + $0x10] sm:$0xf]
    %v3551 = vld [vmem:[%s3545 + $0x14] sm:$0xf]
    %v3552 = vld [vmem:[%s3545 + $0x18] sm:$0xf]
    %v3553 = vld [vmem:[%s3545 + $0x1c] sm:$0xf]
    %v3554 = vld [vmem:[%s3545 + $0x20] sm:$0xf]
    %v3555 = vld [vmem:[%s3545 + $0x24] sm:$0xf]
    %v3556 = vpack.c.bf16 %v3514, %v3513
    %v3557 = vpack.c.bf16 %v3516, %v3515
    %v3558 = vpack.c.bf16 %v3518, %v3517
    %v3559 = vpack.c.bf16 %v3520, %v3519
    %v3560 = vpack.c.bf16 %v3522, %v3521
    %v3561 = vpack.c.bf16 %v3524, %v3523
    %v3562 = vpack.c.bf16 %v3526, %v3525
    %v3563 = vpack.c.bf16 %v3528, %v3527
    %v3564 = vpack.c.bf16 %v3530, %v3529
    %v3565 = vpack.c.bf16 %v3532, %v3531
    %v3566 = vpack.c.bf16 %v3534, %v3533
    %v3567 = vpack.c.bf16 %v3536, %v3535
    %v3568 = vpack.c.bf16 %v3538, %v3537
    %v3569 = vpack.c.bf16 %v3540, %v3539
    %v3570 = vpack.c.bf16 %v3542, %v3541
    %v3571 = vpack.c.bf16 %v3544, %v3543
    %v3582 = vunpack.c.l.b16 %v3546
    %v3583 = vunpack.c.l.b16 %v3547
    %v3584 = vunpack.c.l.b16 %v3548
    %v3585 = vunpack.c.l.b16 %v3549
    %v3586 = vunpack.c.l.b16 %v3550
    %v3587 = vunpack.c.l.b16 %v3551
    %v3588 = vunpack.c.l.b16 %v3552
    %v3589 = vunpack.c.l.b16 %v3553
    %v3590 = vunpack.c.l.b16 %v3554
    %v3591 = vunpack.c.l.b16 %v3555
    %v3592 = vpack.c.b16 %v3583, %v3582
    %v3593 = vpack.c.b16 %v3585, %v3584
    %v3594 = vpack.c.b16 %v3587, %v3586
    %v3595 = vpack.c.b16 %v3589, %v3588
    %v3596 = vpack.c.b16 %v3591, %v3590
    %v3603 = vsel %vm59, %v3556, 0
    %v3606 = vsel %vm59, %v3557, 0
    %v3609 = vsel %vm59, %v3558, 0
    %v3612 = vsel %vm59, %v3559, 0
    %v3615 = vsel %vm59, %v3560, 0
    %v3618 = vsel %vm59, %v3561, 0
    %v3621 = vsel %vm59, %v3562, 0
    %v3624 = vsel %vm59, %v3563, 0
    %v3627 = vsel %vm59, %v3564, 0
    %v3630 = vsel %vm59, %v3565, 0
    %v3633 = vsel %vm59, %v3566, 0
    %v3636 = vsel %vm59, %v3567, 0
    %v3639 = vsel %vm59, %v3568, 0
    %v3642 = vsel %vm59, %v3569, 0
    %v3645 = vsel %vm59, %v3570, 0
    %v3648 = vsel %vm59, %v3571, 0
    %3650 = vmatprep.subr.bf16.mxu0 0
    %3651 = vmatpush1.bf16.msra.mxu0 0
    %3652 = vmatprep.subr.bf16.mxu0 0
    %3653 = vmatpush1.bf16.msra.mxu0 0
    %3654 = vmatprep.subr.bf16.mxu0 0
    %3655 = vmatpush1.bf16.msra.mxu0 0
    %3656 = vmatprep.subr.bf16.mxu0 0
    %3657 = vmatpush1.bf16.msra.mxu0 %v3596
    %3658 = vmatprep.subr.bf16.mxu0 0
    %3659 = vmatpush1.bf16.msra.mxu0 %v3595
    %3660 = vmatprep.subr.bf16.mxu0 0
    %3661 = vmatpush1.bf16.msra.mxu0 %v3594
    %3662 = vmatprep.subr.bf16.mxu0 0
    %3663 = vmatpush1.bf16.msra.mxu0 %v3593
    %3664 = vmatprep.subr.bf16.mxu0 0
    %3665 = vmatpush1.bf16.msra.mxu0 %v3592
    %3666 = vmatprep.subr.bf16.mxu0 0
    %3667 = vmatpush2.bf16.msra.mxu0 0
    %3668 = vmatprep.subr.bf16.mxu0 0
    %3669 = vmatpush2.bf16.msra.mxu0 0
    %3670 = vmatprep.subr.bf16.mxu0 0
    %3671 = vmatpush2.bf16.msra.mxu0 0
    %3672 = vmatprep.subr.bf16.mxu0 0
    %3673 = vmatpush2.bf16.msra.mxu0 0
    %3674 = vmatprep.subr.bf16.mxu0 0
    %3675 = vmatpush2.bf16.msra.mxu0 0
    %3676 = vmatprep.subr.bf16.mxu0 0
    %3677 = vmatpush2.bf16.msra.mxu0 0
    %3678 = vmatprep.subr.bf16.mxu0 0
    %3679 = vmatpush2.bf16.msra.mxu0 0
    %3680 = vmatprep.subr.bf16.mxu0 0
    %3681 = vmatpush2.bf16.msra.mxu0 0
    %3682 = vmatprep.mubr.bf16.mxu0 0
    %3683 = vmatmul.mubr.bf16.gmra.mxu0 %v3603
    %v3684 = vpop.f32.mrf.mxu0
    %v3685 = vadd.f32 0.0, %v3684
    %v3686 = vpop.f32.mrf.mxu0
    %v3687 = vpop.f32.mrf.mxu0
    %v3688 = vadd.f32 0.0, %v3687
    %v3689 = vpop.f32.mrf.mxu0
    %3690 = vmatprep.mubr.bf16.mxu0 0
    %3691 = vmatmul.mubr.bf16.gmra.mxu0 %v3606
    %v3692 = vpop.f32.mrf.mxu0
    %v3693 = vadd.f32 0.0, %v3692
    %v3694 = vpop.f32.mrf.mxu0
    %v3695 = vpop.f32.mrf.mxu0
    %v3696 = vadd.f32 0.0, %v3695
    %v3697 = vpop.f32.mrf.mxu0
    %3698 = vmatprep.mubr.bf16.mxu0 0
    %3699 = vmatmul.mubr.bf16.gmra.mxu0 %v3609
    %v3700 = vpop.f32.mrf.mxu0
    %v3701 = vadd.f32 0.0, %v3700
    %v3702 = vpop.f32.mrf.mxu0
    %v3703 = vpop.f32.mrf.mxu0
    %v3704 = vadd.f32 0.0, %v3703
    %v3705 = vpop.f32.mrf.mxu0
    %3706 = vmatprep.mubr.bf16.mxu0 0
    %3707 = vmatmul.mubr.bf16.gmra.mxu0 %v3612
    %v3708 = vpop.f32.mrf.mxu0
    %v3709 = vadd.f32 0.0, %v3708
    %v3710 = vpop.f32.mrf.mxu0
    %v3711 = vpop.f32.mrf.mxu0
    %v3712 = vadd.f32 0.0, %v3711
    %v3713 = vpop.f32.mrf.mxu0
    %3714 = vmatprep.mubr.bf16.mxu0 0
    %3715 = vmatmul.mubr.bf16.gmra.mxu0 %v3615
    %v3716 = vpop.f32.mrf.mxu0
    %v3717 = vadd.f32 0.0, %v3716
    %v3718 = vpop.f32.mrf.mxu0
    %v3719 = vpop.f32.mrf.mxu0
    %v3720 = vadd.f32 0.0, %v3719
    %v3721 = vpop.f32.mrf.mxu0
    %3722 = vmatprep.mubr.bf16.mxu0 0
    %3723 = vmatmul.mubr.bf16.gmra.mxu0 %v3618
    %v3724 = vpop.f32.mrf.mxu0
    %v3725 = vadd.f32 0.0, %v3724
    %v3726 = vpop.f32.mrf.mxu0
    %v3727 = vpop.f32.mrf.mxu0
    %v3728 = vadd.f32 0.0, %v3727
    %v3729 = vpop.f32.mrf.mxu0
    %3730 = vmatprep.mubr.bf16.mxu0 0
    %3731 = vmatmul.mubr.bf16.gmra.mxu0 %v3621
    %v3732 = vpop.f32.mrf.mxu0
    %v3733 = vadd.f32 0.0, %v3732
    %v3734 = vpop.f32.mrf.mxu0
    %v3735 = vpop.f32.mrf.mxu0
    %v3736 = vadd.f32 0.0, %v3735
    %v3737 = vpop.f32.mrf.mxu0
    %3738 = vmatprep.mubr.bf16.mxu0 0
    %3739 = vmatmul.mubr.bf16.gmra.mxu0 %v3624
    %v3740 = vpop.f32.mrf.mxu0
    %v3741 = vadd.f32 0.0, %v3740
    %v3742 = vpop.f32.mrf.mxu0
    %v3743 = vpop.f32.mrf.mxu0
    %v3744 = vadd.f32 0.0, %v3743
    %v3745 = vpop.f32.mrf.mxu0
    %3746 = vmatprep.mubr.bf16.mxu0 0
    %3747 = vmatmul.mubr.bf16.gmra.mxu0 %v3627
    %v3748 = vpop.f32.mrf.mxu0
    %v3749 = vadd.f32 0.0, %v3748
    %v3750 = vpop.f32.mrf.mxu0
    %v3751 = vpop.f32.mrf.mxu0
    %v3752 = vadd.f32 0.0, %v3751
    %v3753 = vpop.f32.mrf.mxu0
    %3754 = vmatprep.mubr.bf16.mxu0 0
    %3755 = vmatmul.mubr.bf16.gmra.mxu0 %v3630
    %v3756 = vpop.f32.mrf.mxu0
    %v3757 = vadd.f32 0.0, %v3756
    %v3758 = vpop.f32.mrf.mxu0
    %v3759 = vpop.f32.mrf.mxu0
    %v3760 = vadd.f32 0.0, %v3759
    %v3761 = vpop.f32.mrf.mxu0
    %3762 = vmatprep.mubr.bf16.mxu0 0
    %3763 = vmatmul.mubr.bf16.gmra.mxu0 %v3633
    %v3764 = vpop.f32.mrf.mxu0
    %v3765 = vadd.f32 0.0, %v3764
    %v3766 = vpop.f32.mrf.mxu0
    %v3767 = vpop.f32.mrf.mxu0
    %v3768 = vadd.f32 0.0, %v3767
    %v3769 = vpop.f32.mrf.mxu0
    %3770 = vmatprep.mubr.bf16.mxu0 0
    %3771 = vmatmul.mubr.bf16.gmra.mxu0 %v3636
    %v3772 = vpop.f32.mrf.mxu0
    %v3773 = vadd.f32 0.0, %v3772
    %v3774 = vpop.f32.mrf.mxu0
    %v3775 = vpop.f32.mrf.mxu0
    %v3776 = vadd.f32 0.0, %v3775
    %v3777 = vpop.f32.mrf.mxu0
    %3778 = vmatprep.mubr.bf16.mxu0 0
    %3779 = vmatmul.mubr.bf16.gmra.mxu0 %v3639
    %v3780 = vpop.f32.mrf.mxu0
    %v3781 = vadd.f32 0.0, %v3780
    %v3782 = vpop.f32.mrf.mxu0
    %v3783 = vpop.f32.mrf.mxu0
    %v3784 = vadd.f32 0.0, %v3783
    %v3785 = vpop.f32.mrf.mxu0
    %3786 = vmatprep.mubr.bf16.mxu0 0
    %3787 = vmatmul.mubr.bf16.gmra.mxu0 %v3642
    %v3788 = vpop.f32.mrf.mxu0
    %v3789 = vadd.f32 0.0, %v3788
    %v3790 = vpop.f32.mrf.mxu0
    %v3791 = vpop.f32.mrf.mxu0
    %v3792 = vadd.f32 0.0, %v3791
    %v3793 = vpop.f32.mrf.mxu0
    %3794 = vmatprep.mubr.bf16.mxu0 0
    %3795 = vmatmul.mubr.bf16.gmra.mxu0 %v3645
    %v3796 = vpop.f32.mrf.mxu0
    %v3797 = vadd.f32 0.0, %v3796
    %v3798 = vpop.f32.mrf.mxu0
    %v3799 = vpop.f32.mrf.mxu0
    %v3800 = vadd.f32 0.0, %v3799
    %v3801 = vpop.f32.mrf.mxu0
    %3802 = vmatprep.mubr.bf16.mxu0 0
    %3803 = vmatmul.mubr.bf16.gmra.mxu0 %v3648
    %v3804 = vpop.f32.mrf.mxu0
    %v3805 = vadd.f32 0.0, %v3804
    %v3806 = vpop.f32.mrf.mxu0
    %v3807 = vpop.f32.mrf.mxu0
    %v3808 = vadd.f32 0.0, %v3807
    %v3809 = vpop.f32.mrf.mxu0
    %3810 = vdwg.mxu0
    %v3811 = vlaneseq
    %v3812 = vshrl.u32 %v3811, 7
    %v3813 = vsub.s32 0, %v3812
    %v3814 = vrot.slane %v3480, %v3813
    %v3815 = vadd.f32 %v3814, %v3685
    %v3816 = vadd.f32 %v3814, %v3688
    %v3817 = vadd.f32 %v3814, %v3693
    %v3818 = vadd.f32 %v3814, %v3696
    %v3819 = vadd.f32 %v3814, %v3701
    %v3820 = vadd.f32 %v3814, %v3704
    %v3821 = vadd.f32 %v3814, %v3709
    %v3822 = vadd.f32 %v3814, %v3712
    %v3823 = vadd.f32 %v3814, %v3717
    %v3824 = vadd.f32 %v3814, %v3720
    %v3825 = vadd.f32 %v3814, %v3725
    %v3826 = vadd.f32 %v3814, %v3728
    %v3827 = vadd.f32 %v3814, %v3733
    %v3828 = vadd.f32 %v3814, %v3736
    %v3829 = vadd.f32 %v3814, %v3741
    %v3830 = vadd.f32 %v3814, %v3744
    %v3831 = vadd.f32 %v3814, %v3749
    %v3832 = vadd.f32 %v3814, %v3752
    %v3833 = vadd.f32 %v3814, %v3757
    %v3834 = vadd.f32 %v3814, %v3760
    %v3835 = vadd.f32 %v3814, %v3765
    %v3836 = vadd.f32 %v3814, %v3768
    %v3837 = vadd.f32 %v3814, %v3773
    %v3838 = vadd.f32 %v3814, %v3776
    %v3839 = vadd.f32 %v3814, %v3781
    %v3840 = vadd.f32 %v3814, %v3784
    %v3841 = vadd.f32 %v3814, %v3789
    %v3842 = vadd.f32 %v3814, %v3792
    %v3843 = vadd.f32 %v3814, %v3797
    %v3844 = vadd.f32 %v3814, %v3800
    %v3845 = vadd.f32 %v3814, %v3805
    %v3846 = vadd.f32 %v3814, %v3808
    %v3847 = vld [vmem:[#allocation2 + $0x11] sm:$0xff]
    %v3848 = vld [vmem:[#allocation2 + $0x19] sm:$0xff]
    %v3849 = vld [vmem:[#allocation2 + $0x41] sm:$0xff]
    %v3850 = vld [vmem:[#allocation2 + $0x49] sm:$0xff]
    %v3851 = vld [vmem:[#allocation2 + $0x71] sm:$0xff]
    %v3852 = vld [vmem:[#allocation2 + $0x79] sm:$0xff]
    %v3853 = vld [vmem:[#allocation2 + $0xa1] sm:$0xff]
    %v3854 = vld [vmem:[#allocation2 + $0xa9] sm:$0xff]
    %v3855 = vld [vmem:[#allocation2 + $0xd1] sm:$0xff]
    %v3856 = vld [vmem:[#allocation2 + $0xd9] sm:$0xff]
    %v3857 = vld [vmem:[#allocation2 + $0x101] sm:$0xff]
    %v3858 = vld [vmem:[#allocation2 + $0x109] sm:$0xff]
    %v3859 = vld [vmem:[#allocation2 + $0x131] sm:$0xff]
    %v3860 = vld [vmem:[#allocation2 + $0x139] sm:$0xff]
    %v3861 = vld [vmem:[#allocation2 + $0x161] sm:$0xff]
    %v3862 = vld [vmem:[#allocation2 + $0x169] sm:$0xff]
    %v3863 = vld [vmem:[#allocation2 + $0x191] sm:$0xff]
    %v3864 = vld [vmem:[#allocation2 + $0x199] sm:$0xff]
    %v3865 = vld [vmem:[#allocation2 + $0x1c1] sm:$0xff]
    %v3866 = vld [vmem:[#allocation2 + $0x1c9] sm:$0xff]
    %v3867 = vld [vmem:[#allocation2 + $0x1f1] sm:$0xff]
    %v3868 = vld [vmem:[#allocation2 + $0x1f9] sm:$0xff]
    %v3869 = vld [vmem:[#allocation2 + $0x221] sm:$0xff]
    %v3870 = vld [vmem:[#allocation2 + $0x229] sm:$0xff]
    %v3871 = vld [vmem:[#allocation2 + $0x251] sm:$0xff]
    %v3872 = vld [vmem:[#allocation2 + $0x259] sm:$0xff]
    %v3873 = vld [vmem:[#allocation2 + $0x281] sm:$0xff]
    %v3874 = vld [vmem:[#allocation2 + $0x289] sm:$0xff]
    %v3875 = vld [vmem:[#allocation2 + $0x2b1] sm:$0xff]
    %v3876 = vld [vmem:[#allocation2 + $0x2b9] sm:$0xff]
    %v3877 = vld [vmem:[#allocation2 + $0x2e1] sm:$0xff]
    %v3878 = vld [vmem:[#allocation2 + $0x2e9] sm:$0xff]
    %s3879 = scalar_lea.vmem [#allocation7], 280
    %v3880 = vld [vmem:[%s3879] sm:$0xf]
    %v3881 = vld [vmem:[%s3879 + $0x4] sm:$0xf]
    %v3882 = vld [vmem:[%s3879 + $0x8] sm:$0xf]
    %v3883 = vld [vmem:[%s3879 + $0xc] sm:$0xf]
    %v3884 = vld [vmem:[%s3879 + $0x10] sm:$0xf]
    %v3885 = vld [vmem:[%s3879 + $0x14] sm:$0xf]
    %v3886 = vld [vmem:[%s3879 + $0x18] sm:$0xf]
    %v3887 = vld [vmem:[%s3879 + $0x1c] sm:$0xf]
    %v3888 = vld [vmem:[%s3879 + $0x20] sm:$0xf]
    %v3889 = vld [vmem:[%s3879 + $0x24] sm:$0xf]
    %v3890 = vpack.c.bf16 %v3848, %v3847
    %v3891 = vpack.c.bf16 %v3850, %v3849
    %v3892 = vpack.c.bf16 %v3852, %v3851
    %v3893 = vpack.c.bf16 %v3854, %v3853
    %v3894 = vpack.c.bf16 %v3856, %v3855
    %v3895 = vpack.c.bf16 %v3858, %v3857
    %v3896 = vpack.c.bf16 %v3860, %v3859
    %v3897 = vpack.c.bf16 %v3862, %v3861
    %v3898 = vpack.c.bf16 %v3864, %v3863
    %v3899 = vpack.c.bf16 %v3866, %v3865
    %v3900 = vpack.c.bf16 %v3868, %v3867
    %v3901 = vpack.c.bf16 %v3870, %v3869
    %v3902 = vpack.c.bf16 %v3872, %v3871
    %v3903 = vpack.c.bf16 %v3874, %v3873
    %v3904 = vpack.c.bf16 %v3876, %v3875
    %v3905 = vpack.c.bf16 %v3878, %v3877
    %v3916 = vunpack.c.l.b16 %v3880
    %v3917 = vunpack.c.l.b16 %v3881
    %v3918 = vunpack.c.l.b16 %v3882
    %v3919 = vunpack.c.l.b16 %v3883
    %v3920 = vunpack.c.l.b16 %v3884
    %v3921 = vunpack.c.l.b16 %v3885
    %v3922 = vunpack.c.l.b16 %v3886
    %v3923 = vunpack.c.l.b16 %v3887
    %v3924 = vunpack.c.l.b16 %v3888
    %v3925 = vunpack.c.l.b16 %v3889
    %v3926 = vpack.c.b16 %v3917, %v3916
    %v3927 = vpack.c.b16 %v3919, %v3918
    %v3928 = vpack.c.b16 %v3921, %v3920
    %v3929 = vpack.c.b16 %v3923, %v3922
    %v3930 = vpack.c.b16 %v3925, %v3924
    %v3937 = vsel %vm59, %v3890, 0
    %v3940 = vsel %vm59, %v3891, 0
    %v3943 = vsel %vm59, %v3892, 0
    %v3946 = vsel %vm59, %v3893, 0
    %v3949 = vsel %vm59, %v3894, 0
    %v3952 = vsel %vm59, %v3895, 0
    %v3955 = vsel %vm59, %v3896, 0
    %v3958 = vsel %vm59, %v3897, 0
    %v3961 = vsel %vm59, %v3898, 0
    %v3964 = vsel %vm59, %v3899, 0
    %v3967 = vsel %vm59, %v3900, 0
    %v3970 = vsel %vm59, %v3901, 0
    %v3973 = vsel %vm59, %v3902, 0
    %v3976 = vsel %vm59, %v3903, 0
    %v3979 = vsel %vm59, %v3904, 0
    %v3982 = vsel %vm59, %v3905, 0
    %3984 = vmatprep.subr.bf16.mxu0 0
    %3985 = vmatpush1.bf16.msra.mxu0 0
    %3986 = vmatprep.subr.bf16.mxu0 0
    %3987 = vmatpush1.bf16.msra.mxu0 0
    %3988 = vmatprep.subr.bf16.mxu0 0
    %3989 = vmatpush1.bf16.msra.mxu0 0
    %3990 = vmatprep.subr.bf16.mxu0 0
    %3991 = vmatpush1.bf16.msra.mxu0 %v3930
    %3992 = vmatprep.subr.bf16.mxu0 0
    %3993 = vmatpush1.bf16.msra.mxu0 %v3929
    %3994 = vmatprep.subr.bf16.mxu0 0
    %3995 = vmatpush1.bf16.msra.mxu0 %v3928
    %3996 = vmatprep.subr.bf16.mxu0 0
    %3997 = vmatpush1.bf16.msra.mxu0 %v3927
    %3998 = vmatprep.subr.bf16.mxu0 0
    %3999 = vmatpush1.bf16.msra.mxu0 %v3926
    %4000 = vmatprep.subr.bf16.mxu0 0
    %4001 = vmatpush2.bf16.msra.mxu0 0
    %4002 = vmatprep.subr.bf16.mxu0 0
    %4003 = vmatpush2.bf16.msra.mxu0 0
    %4004 = vmatprep.subr.bf16.mxu0 0
    %4005 = vmatpush2.bf16.msra.mxu0 0
    %4006 = vmatprep.subr.bf16.mxu0 0
    %4007 = vmatpush2.bf16.msra.mxu0 0
    %4008 = vmatprep.subr.bf16.mxu0 0
    %4009 = vmatpush2.bf16.msra.mxu0 0
    %4010 = vmatprep.subr.bf16.mxu0 0
    %4011 = vmatpush2.bf16.msra.mxu0 0
    %4012 = vmatprep.subr.bf16.mxu0 0
    %4013 = vmatpush2.bf16.msra.mxu0 0
    %4014 = vmatprep.subr.bf16.mxu0 0
    %4015 = vmatpush2.bf16.msra.mxu0 0
    %4016 = vmatprep.mubr.bf16.mxu0 0
    %4017 = vmatmul.mubr.bf16.gmra.mxu0 %v3937
    %v4018 = vpop.f32.mrf.mxu0
    %v4019 = vadd.f32 0.0, %v4018
    %v4020 = vpop.f32.mrf.mxu0
    %v4021 = vpop.f32.mrf.mxu0
    %v4022 = vadd.f32 0.0, %v4021
    %v4023 = vpop.f32.mrf.mxu0
    %4024 = vmatprep.mubr.bf16.mxu0 0
    %4025 = vmatmul.mubr.bf16.gmra.mxu0 %v3940
    %v4026 = vpop.f32.mrf.mxu0
    %v4027 = vadd.f32 0.0, %v4026
    %v4028 = vpop.f32.mrf.mxu0
    %v4029 = vpop.f32.mrf.mxu0
    %v4030 = vadd.f32 0.0, %v4029
    %v4031 = vpop.f32.mrf.mxu0
    %4032 = vmatprep.mubr.bf16.mxu0 0
    %4033 = vmatmul.mubr.bf16.gmra.mxu0 %v3943
    %v4034 = vpop.f32.mrf.mxu0
    %v4035 = vadd.f32 0.0, %v4034
    %v4036 = vpop.f32.mrf.mxu0
    %v4037 = vpop.f32.mrf.mxu0
    %v4038 = vadd.f32 0.0, %v4037
    %v4039 = vpop.f32.mrf.mxu0
    %4040 = vmatprep.mubr.bf16.mxu0 0
    %4041 = vmatmul.mubr.bf16.gmra.mxu0 %v3946
    %v4042 = vpop.f32.mrf.mxu0
    %v4043 = vadd.f32 0.0, %v4042
    %v4044 = vpop.f32.mrf.mxu0
    %v4045 = vpop.f32.mrf.mxu0
    %v4046 = vadd.f32 0.0, %v4045
    %v4047 = vpop.f32.mrf.mxu0
    %4048 = vmatprep.mubr.bf16.mxu0 0
    %4049 = vmatmul.mubr.bf16.gmra.mxu0 %v3949
    %v4050 = vpop.f32.mrf.mxu0
    %v4051 = vadd.f32 0.0, %v4050
    %v4052 = vpop.f32.mrf.mxu0
    %v4053 = vpop.f32.mrf.mxu0
    %v4054 = vadd.f32 0.0, %v4053
    %v4055 = vpop.f32.mrf.mxu0
    %4056 = vmatprep.mubr.bf16.mxu0 0
    %4057 = vmatmul.mubr.bf16.gmra.mxu0 %v3952
    %v4058 = vpop.f32.mrf.mxu0
    %v4059 = vadd.f32 0.0, %v4058
    %v4060 = vpop.f32.mrf.mxu0
    %v4061 = vpop.f32.mrf.mxu0
    %v4062 = vadd.f32 0.0, %v4061
    %v4063 = vpop.f32.mrf.mxu0
    %4064 = vmatprep.mubr.bf16.mxu0 0
    %4065 = vmatmul.mubr.bf16.gmra.mxu0 %v3955
    %v4066 = vpop.f32.mrf.mxu0
    %v4067 = vadd.f32 0.0, %v4066
    %v4068 = vpop.f32.mrf.mxu0
    %v4069 = vpop.f32.mrf.mxu0
    %v4070 = vadd.f32 0.0, %v4069
    %v4071 = vpop.f32.mrf.mxu0
    %4072 = vmatprep.mubr.bf16.mxu0 0
    %4073 = vmatmul.mubr.bf16.gmra.mxu0 %v3958
    %v4074 = vpop.f32.mrf.mxu0
    %v4075 = vadd.f32 0.0, %v4074
    %v4076 = vpop.f32.mrf.mxu0
    %v4077 = vpop.f32.mrf.mxu0
    %v4078 = vadd.f32 0.0, %v4077
    %v4079 = vpop.f32.mrf.mxu0
    %4080 = vmatprep.mubr.bf16.mxu0 0
    %4081 = vmatmul.mubr.bf16.gmra.mxu0 %v3961
    %v4082 = vpop.f32.mrf.mxu0
    %v4083 = vadd.f32 0.0, %v4082
    %v4084 = vpop.f32.mrf.mxu0
    %v4085 = vpop.f32.mrf.mxu0
    %v4086 = vadd.f32 0.0, %v4085
    %v4087 = vpop.f32.mrf.mxu0
    %4088 = vmatprep.mubr.bf16.mxu0 0
    %4089 = vmatmul.mubr.bf16.gmra.mxu0 %v3964
    %v4090 = vpop.f32.mrf.mxu0
    %v4091 = vadd.f32 0.0, %v4090
    %v4092 = vpop.f32.mrf.mxu0
    %v4093 = vpop.f32.mrf.mxu0
    %v4094 = vadd.f32 0.0, %v4093
    %v4095 = vpop.f32.mrf.mxu0
    %4096 = vmatprep.mubr.bf16.mxu0 0
    %4097 = vmatmul.mubr.bf16.gmra.mxu0 %v3967
    %v4098 = vpop.f32.mrf.mxu0
    %v4099 = vadd.f32 0.0, %v4098
    %v4100 = vpop.f32.mrf.mxu0
    %v4101 = vpop.f32.mrf.mxu0
    %v4102 = vadd.f32 0.0, %v4101
    %v4103 = vpop.f32.mrf.mxu0
    %4104 = vmatprep.mubr.bf16.mxu0 0
    %4105 = vmatmul.mubr.bf16.gmra.mxu0 %v3970
    %v4106 = vpop.f32.mrf.mxu0
    %v4107 = vadd.f32 0.0, %v4106
    %v4108 = vpop.f32.mrf.mxu0
    %v4109 = vpop.f32.mrf.mxu0
    %v4110 = vadd.f32 0.0, %v4109
    %v4111 = vpop.f32.mrf.mxu0
    %4112 = vmatprep.mubr.bf16.mxu0 0
    %4113 = vmatmul.mubr.bf16.gmra.mxu0 %v3973
    %v4114 = vpop.f32.mrf.mxu0
    %v4115 = vadd.f32 0.0, %v4114
    %v4116 = vpop.f32.mrf.mxu0
    %v4117 = vpop.f32.mrf.mxu0
    %v4118 = vadd.f32 0.0, %v4117
    %v4119 = vpop.f32.mrf.mxu0
    %4120 = vmatprep.mubr.bf16.mxu0 0
    %4121 = vmatmul.mubr.bf16.gmra.mxu0 %v3976
    %v4122 = vpop.f32.mrf.mxu0
    %v4123 = vadd.f32 0.0, %v4122
    %v4124 = vpop.f32.mrf.mxu0
    %v4125 = vpop.f32.mrf.mxu0
    %v4126 = vadd.f32 0.0, %v4125
    %v4127 = vpop.f32.mrf.mxu0
    %4128 = vmatprep.mubr.bf16.mxu0 0
    %4129 = vmatmul.mubr.bf16.gmra.mxu0 %v3979
    %v4130 = vpop.f32.mrf.mxu0
    %v4131 = vadd.f32 0.0, %v4130
    %v4132 = vpop.f32.mrf.mxu0
    %v4133 = vpop.f32.mrf.mxu0
    %v4134 = vadd.f32 0.0, %v4133
    %v4135 = vpop.f32.mrf.mxu0
    %4136 = vmatprep.mubr.bf16.mxu0 0
    %4137 = vmatmul.mubr.bf16.gmra.mxu0 %v3982
    %v4138 = vpop.f32.mrf.mxu0
    %v4139 = vadd.f32 0.0, %v4138
    %v4140 = vpop.f32.mrf.mxu0
    %v4141 = vpop.f32.mrf.mxu0
    %v4142 = vadd.f32 0.0, %v4141
    %v4143 = vpop.f32.mrf.mxu0
    %4144 = vdwg.mxu0
    %v4145 = vadd.f32 %v3815, %v4019
    %v4146 = vadd.f32 %v3816, %v4022
    %v4147 = vadd.f32 %v3817, %v4027
    %v4148 = vadd.f32 %v3818, %v4030
    %v4149 = vadd.f32 %v3819, %v4035
    %v4150 = vadd.f32 %v3820, %v4038
    %v4151 = vadd.f32 %v3821, %v4043
    %v4152 = vadd.f32 %v3822, %v4046
    %v4153 = vadd.f32 %v3823, %v4051
    %v4154 = vadd.f32 %v3824, %v4054
    %v4155 = vadd.f32 %v3825, %v4059
    %v4156 = vadd.f32 %v3826, %v4062
    %v4157 = vadd.f32 %v3827, %v4067
    %v4158 = vadd.f32 %v3828, %v4070
    %v4159 = vadd.f32 %v3829, %v4075
    %v4160 = vadd.f32 %v3830, %v4078
    %v4161 = vadd.f32 %v3831, %v4083
    %v4162 = vadd.f32 %v3832, %v4086
    %v4163 = vadd.f32 %v3833, %v4091
    %v4164 = vadd.f32 %v3834, %v4094
    %v4165 = vadd.f32 %v3835, %v4099
    %v4166 = vadd.f32 %v3836, %v4102
    %v4167 = vadd.f32 %v3837, %v4107
    %v4168 = vadd.f32 %v3838, %v4110
    %v4169 = vadd.f32 %v3839, %v4115
    %v4170 = vadd.f32 %v3840, %v4118
    %v4171 = vadd.f32 %v3841, %v4123
    %v4172 = vadd.f32 %v3842, %v4126
    %v4173 = vadd.f32 %v3843, %v4131
    %v4174 = vadd.f32 %v3844, %v4134
    %v4175 = vadd.f32 %v3845, %v4139
    %v4176 = vadd.f32 %v3846, %v4142
    %s4177 = sld [smem:[#allocation4 + $0x5]]
    %vm4178 = vcmp.ge.f32.partialorder %v4145, 0.0
    %vm4179 = vcmp.ge.f32.partialorder %v4146, 0.0
    %vm4180 = vcmp.ge.f32.partialorder %v4147, 0.0
    %vm4181 = vcmp.ge.f32.partialorder %v4148, 0.0
    %vm4182 = vcmp.ge.f32.partialorder %v4149, 0.0
    %vm4183 = vcmp.ge.f32.partialorder %v4150, 0.0
    %vm4184 = vcmp.ge.f32.partialorder %v4151, 0.0
    %vm4185 = vcmp.ge.f32.partialorder %v4152, 0.0
    %vm4186 = vcmp.ge.f32.partialorder %v4153, 0.0
    %vm4187 = vcmp.ge.f32.partialorder %v4154, 0.0
    %vm4188 = vcmp.ge.f32.partialorder %v4155, 0.0
    %vm4189 = vcmp.ge.f32.partialorder %v4156, 0.0
    %vm4190 = vcmp.ge.f32.partialorder %v4157, 0.0
    %vm4191 = vcmp.ge.f32.partialorder %v4158, 0.0
    %vm4192 = vcmp.ge.f32.partialorder %v4159, 0.0
    %vm4193 = vcmp.ge.f32.partialorder %v4160, 0.0
    %vm4194 = vcmp.ge.f32.partialorder %v4161, 0.0
    %vm4195 = vcmp.ge.f32.partialorder %v4162, 0.0
    %vm4196 = vcmp.ge.f32.partialorder %v4163, 0.0
    %vm4197 = vcmp.ge.f32.partialorder %v4164, 0.0
    %vm4198 = vcmp.ge.f32.partialorder %v4165, 0.0
    %vm4199 = vcmp.ge.f32.partialorder %v4166, 0.0
    %vm4200 = vcmp.ge.f32.partialorder %v4167, 0.0
    %vm4201 = vcmp.ge.f32.partialorder %v4168, 0.0
    %vm4202 = vcmp.ge.f32.partialorder %v4169, 0.0
    %vm4203 = vcmp.ge.f32.partialorder %v4170, 0.0
    %vm4204 = vcmp.ge.f32.partialorder %v4171, 0.0
    %vm4205 = vcmp.ge.f32.partialorder %v4172, 0.0
    %vm4206 = vcmp.ge.f32.partialorder %v4173, 0.0
    %vm4207 = vcmp.ge.f32.partialorder %v4174, 0.0
    %vm4208 = vcmp.ge.f32.partialorder %v4175, 0.0
    %vm4209 = vcmp.ge.f32.partialorder %v4176, 0.0
    %v4210 = vstv %s4177
    %v4211 = vmul.f32 %v4210, %v4145
    %v4212 = vmul.f32 %v4210, %v4146
    %v4213 = vmul.f32 %v4210, %v4147
    %v4214 = vmul.f32 %v4210, %v4148
    %v4215 = vmul.f32 %v4210, %v4149
    %v4216 = vmul.f32 %v4210, %v4150
    %v4217 = vmul.f32 %v4210, %v4151
    %v4218 = vmul.f32 %v4210, %v4152
    %v4219 = vmul.f32 %v4210, %v4153
    %v4220 = vmul.f32 %v4210, %v4154
    %v4221 = vmul.f32 %v4210, %v4155
    %v4222 = vmul.f32 %v4210, %v4156
    %v4223 = vmul.f32 %v4210, %v4157
    %v4224 = vmul.f32 %v4210, %v4158
    %v4225 = vmul.f32 %v4210, %v4159
    %v4226 = vmul.f32 %v4210, %v4160
    %v4227 = vmul.f32 %v4210, %v4161
    %v4228 = vmul.f32 %v4210, %v4162
    %v4229 = vmul.f32 %v4210, %v4163
    %v4230 = vmul.f32 %v4210, %v4164
    %v4231 = vmul.f32 %v4210, %v4165
    %v4232 = vmul.f32 %v4210, %v4166
    %v4233 = vmul.f32 %v4210, %v4167
    %v4234 = vmul.f32 %v4210, %v4168
    %v4235 = vmul.f32 %v4210, %v4169
    %v4236 = vmul.f32 %v4210, %v4170
    %v4237 = vmul.f32 %v4210, %v4171
    %v4238 = vmul.f32 %v4210, %v4172
    %v4239 = vmul.f32 %v4210, %v4173
    %v4240 = vmul.f32 %v4210, %v4174
    %v4241 = vmul.f32 %v4210, %v4175
    %v4242 = vmul.f32 %v4210, %v4176
    %v4243 = vsel %vm4178, %v4145, %v4211
    %v4244 = vsel %vm4179, %v4146, %v4212
    %v4245 = vsel %vm4180, %v4147, %v4213
    %v4246 = vsel %vm4181, %v4148, %v4214
    %v4247 = vsel %vm4182, %v4149, %v4215
    %v4248 = vsel %vm4183, %v4150, %v4216
    %v4249 = vsel %vm4184, %v4151, %v4217
    %v4250 = vsel %vm4185, %v4152, %v4218
    %v4251 = vsel %vm4186, %v4153, %v4219
    %v4252 = vsel %vm4187, %v4154, %v4220
    %v4253 = vsel %vm4188, %v4155, %v4221
    %v4254 = vsel %vm4189, %v4156, %v4222
    %v4255 = vsel %vm4190, %v4157, %v4223
    %v4256 = vsel %vm4191, %v4158, %v4224
    %v4257 = vsel %vm4192, %v4159, %v4225
    %v4258 = vsel %vm4193, %v4160, %v4226
    %v4259 = vsel %vm4194, %v4161, %v4227
    %v4260 = vsel %vm4195, %v4162, %v4228
    %v4261 = vsel %vm4196, %v4163, %v4229
    %v4262 = vsel %vm4197, %v4164, %v4230
    %v4263 = vsel %vm4198, %v4165, %v4231
    %v4264 = vsel %vm4199, %v4166, %v4232
    %v4265 = vsel %vm4200, %v4167, %v4233
    %v4266 = vsel %vm4201, %v4168, %v4234
    %v4267 = vsel %vm4202, %v4169, %v4235
    %v4268 = vsel %vm4203, %v4170, %v4236
    %v4269 = vsel %vm4204, %v4171, %v4237
    %v4270 = vsel %vm4205, %v4172, %v4238
    %v4271 = vsel %vm4206, %v4173, %v4239
    %v4272 = vsel %vm4207, %v4174, %v4240
    %v4273 = vsel %vm4208, %v4175, %v4241
    %v4274 = vsel %vm4209, %v4176, %v4242
    %v4275 = vadd.f32 %v4243, %v2653
    %v4276 = vadd.f32 %v4244, %v2654
    %v4277 = vadd.f32 %v4245, %v2655
    %v4278 = vadd.f32 %v4246, %v2656
    %v4279 = vadd.f32 %v4247, %v2657
    %v4280 = vadd.f32 %v4248, %v2658
    %v4281 = vadd.f32 %v4249, %v2659
    %v4282 = vadd.f32 %v4250, %v2660
    %v4283 = vadd.f32 %v4251, %v2661
    %v4284 = vadd.f32 %v4252, %v2662
    %v4285 = vadd.f32 %v4253, %v2663
    %v4286 = vadd.f32 %v4254, %v2664
    %v4287 = vadd.f32 %v4255, %v2665
    %v4288 = vadd.f32 %v4256, %v2666
    %v4289 = vadd.f32 %v4257, %v2667
    %v4290 = vadd.f32 %v4258, %v2668
    %v4291 = vadd.f32 %v4259, %v2669
    %v4292 = vadd.f32 %v4260, %v2670
    %v4293 = vadd.f32 %v4261, %v2671
    %v4294 = vadd.f32 %v4262, %v2672
    %v4295 = vadd.f32 %v4263, %v2673
    %v4296 = vadd.f32 %v4264, %v2674
    %v4297 = vadd.f32 %v4265, %v2675
    %v4298 = vadd.f32 %v4266, %v2676
    %v4299 = vadd.f32 %v4267, %v2677
    %v4300 = vadd.f32 %v4268, %v2678
    %v4301 = vadd.f32 %v4269, %v2679
    %v4302 = vadd.f32 %v4270, %v2680
    %v4303 = vadd.f32 %v4271, %v2681
    %v4304 = vadd.f32 %v4272, %v2682
    %v4305 = vadd.f32 %v4273, %v2683
    %v4306 = vadd.f32 %v4274, %v2684
    %v4307 = vld [vmem:[%s6 + $0x7] sm:$0x1]
    %4308 = vst.msk [vmem:[#allocation2 + $0x10] sm:$0xff] %vm59, %v4275
    %4309 = vst.msk [vmem:[#allocation2 + $0x18] sm:$0xff] %vm59, %v4276
    %4310 = vst.msk [vmem:[#allocation2 + $0x40] sm:$0xff] %vm59, %v4277
    %4311 = vst.msk [vmem:[#allocation2 + $0x48] sm:$0xff] %vm59, %v4278
    %4312 = vst.msk [vmem:[#allocation2 + $0x70] sm:$0xff] %vm59, %v4279
    %4313 = vst.msk [vmem:[#allocation2 + $0x78] sm:$0xff] %vm59, %v4280
    %4314 = vst.msk [vmem:[#allocation2 + $0xa0] sm:$0xff] %vm59, %v4281
    %4315 = vst.msk [vmem:[#allocation2 + $0xa8] sm:$0xff] %vm59, %v4282
    %4316 = vst.msk [vmem:[#allocation2 + $0xd0] sm:$0xff] %vm59, %v4283
    %4317 = vst.msk [vmem:[#allocation2 + $0xd8] sm:$0xff] %vm59, %v4284
    %4318 = vst.msk [vmem:[#allocation2 + $0x100] sm:$0xff] %vm59, %v4285
    %4319 = vst.msk [vmem:[#allocation2 + $0x108] sm:$0xff] %vm59, %v4286
    %4320 = vst.msk [vmem:[#allocation2 + $0x130] sm:$0xff] %vm59, %v4287
    %4321 = vst.msk [vmem:[#allocation2 + $0x138] sm:$0xff] %vm59, %v4288
    %4322 = vst.msk [vmem:[#allocation2 + $0x160] sm:$0xff] %vm59, %v4289
    %4323 = vst.msk [vmem:[#allocation2 + $0x168] sm:$0xff] %vm59, %v4290
    %4324 = vst.msk [vmem:[#allocation2 + $0x190] sm:$0xff] %vm59, %v4291
    %4325 = vst.msk [vmem:[#allocation2 + $0x198] sm:$0xff] %vm59, %v4292
    %4326 = vst.msk [vmem:[#allocation2 + $0x1c0] sm:$0xff] %vm59, %v4293
    %4327 = vst.msk [vmem:[#allocation2 + $0x1c8] sm:$0xff] %vm59, %v4294
    %4328 = vst.msk [vmem:[#allocation2 + $0x1f0] sm:$0xff] %vm59, %v4295
    %4329 = vst.msk [vmem:[#allocation2 + $0x1f8] sm:$0xff] %vm59, %v4296
    %4330 = vst.msk [vmem:[#allocation2 + $0x220] sm:$0xff] %vm59, %v4297
    %4331 = vst.msk [vmem:[#allocation2 + $0x228] sm:$0xff] %vm59, %v4298
    %4332 = vst.msk [vmem:[#allocation2 + $0x250] sm:$0xff] %vm59, %v4299
    %4333 = vst.msk [vmem:[#allocation2 + $0x258] sm:$0xff] %vm59, %v4300
    %4334 = vst.msk [vmem:[#allocation2 + $0x280] sm:$0xff] %vm59, %v4301
    %4335 = vst.msk [vmem:[#allocation2 + $0x288] sm:$0xff] %vm59, %v4302
    %4336 = vst.msk [vmem:[#allocation2 + $0x2b0] sm:$0xff] %vm59, %v4303
    %4337 = vst.msk [vmem:[#allocation2 + $0x2b8] sm:$0xff] %vm59, %v4304
    %4338 = vst.msk [vmem:[#allocation2 + $0x2e0] sm:$0xff] %vm59, %v4305
    %4339 = vst.msk [vmem:[#allocation2 + $0x2e8] sm:$0xff] %vm59, %v4306
    %v4340 = vld [vmem:[#allocation2 + $0xe] sm:$0xff]
    %v4341 = vld [vmem:[#allocation2 + $0x16] sm:$0xff]
    %v4342 = vld [vmem:[#allocation2 + $0x3e] sm:$0xff]
    %v4343 = vld [vmem:[#allocation2 + $0x46] sm:$0xff]
    %v4344 = vld [vmem:[#allocation2 + $0x6e] sm:$0xff]
    %v4345 = vld [vmem:[#allocation2 + $0x76] sm:$0xff]
    %v4346 = vld [vmem:[#allocation2 + $0x9e] sm:$0xff]
    %v4347 = vld [vmem:[#allocation2 + $0xa6] sm:$0xff]
    %v4348 = vld [vmem:[#allocation2 + $0xce] sm:$0xff]
    %v4349 = vld [vmem:[#allocation2 + $0xd6] sm:$0xff]
    %v4350 = vld [vmem:[#allocation2 + $0xfe] sm:$0xff]
    %v4351 = vld [vmem:[#allocation2 + $0x106] sm:$0xff]
    %v4352 = vld [vmem:[#allocation2 + $0x12e] sm:$0xff]
    %v4353 = vld [vmem:[#allocation2 + $0x136] sm:$0xff]
    %v4354 = vld [vmem:[#allocation2 + $0x15e] sm:$0xff]
    %v4355 = vld [vmem:[#allocation2 + $0x166] sm:$0xff]
    %v4356 = vld [vmem:[#allocation2 + $0x18e] sm:$0xff]
    %v4357 = vld [vmem:[#allocation2 + $0x196] sm:$0xff]
    %v4358 = vld [vmem:[#allocation2 + $0x1be] sm:$0xff]
    %v4359 = vld [vmem:[#allocation2 + $0x1c6] sm:$0xff]
    %v4360 = vld [vmem:[#allocation2 + $0x1ee] sm:$0xff]
    %v4361 = vld [vmem:[#allocation2 + $0x1f6] sm:$0xff]
    %v4362 = vld [vmem:[#allocation2 + $0x21e] sm:$0xff]
    %v4363 = vld [vmem:[#allocation2 + $0x226] sm:$0xff]
    %v4364 = vld [vmem:[#allocation2 + $0x24e] sm:$0xff]
    %v4365 = vld [vmem:[#allocation2 + $0x256] sm:$0xff]
    %v4366 = vld [vmem:[#allocation2 + $0x27e] sm:$0xff]
    %v4367 = vld [vmem:[#allocation2 + $0x286] sm:$0xff]
    %v4368 = vld [vmem:[#allocation2 + $0x2ae] sm:$0xff]
    %v4369 = vld [vmem:[#allocation2 + $0x2b6] sm:$0xff]
    %v4370 = vld [vmem:[#allocation2 + $0x2de] sm:$0xff]
    %v4371 = vld [vmem:[#allocation2 + $0x2e6] sm:$0xff]
    %s4372 = scalar_lea.vmem [#allocation7], 320
    %v4373 = vld [vmem:[%s4372] sm:$0xf]
    %v4374 = vld [vmem:[%s4372 + $0x4] sm:$0xf]
    %v4375 = vld [vmem:[%s4372 + $0x8] sm:$0xf]
    %v4376 = vld [vmem:[%s4372 + $0xc] sm:$0xf]
    %v4377 = vld [vmem:[%s4372 + $0x10] sm:$0xf]
    %v4378 = vld [vmem:[%s4372 + $0x14] sm:$0xf]
    %v4379 = vld [vmem:[%s4372 + $0x18] sm:$0xf]
    %v4380 = vld [vmem:[%s4372 + $0x1c] sm:$0xf]
    %v4381 = vld [vmem:[%s4372 + $0x20] sm:$0xf]
    %v4382 = vld [vmem:[%s4372 + $0x24] sm:$0xf]
    %v4383 = vpack.c.bf16 %v4341, %v4340
    %v4384 = vpack.c.bf16 %v4343, %v4342
    %v4385 = vpack.c.bf16 %v4345, %v4344
    %v4386 = vpack.c.bf16 %v4347, %v4346
    %v4387 = vpack.c.bf16 %v4349, %v4348
    %v4388 = vpack.c.bf16 %v4351, %v4350
    %v4389 = vpack.c.bf16 %v4353, %v4352
    %v4390 = vpack.c.bf16 %v4355, %v4354
    %v4391 = vpack.c.bf16 %v4357, %v4356
    %v4392 = vpack.c.bf16 %v4359, %v4358
    %v4393 = vpack.c.bf16 %v4361, %v4360
    %v4394 = vpack.c.bf16 %v4363, %v4362
    %v4395 = vpack.c.bf16 %v4365, %v4364
    %v4396 = vpack.c.bf16 %v4367, %v4366
    %v4397 = vpack.c.bf16 %v4369, %v4368
    %v4398 = vpack.c.bf16 %v4371, %v4370
    %v4409 = vunpack.c.l.b16 %v4373
    %v4410 = vunpack.c.l.b16 %v4374
    %v4411 = vunpack.c.l.b16 %v4375
    %v4412 = vunpack.c.l.b16 %v4376
    %v4413 = vunpack.c.l.b16 %v4377
    %v4414 = vunpack.c.l.b16 %v4378
    %v4415 = vunpack.c.l.b16 %v4379
    %v4416 = vunpack.c.l.b16 %v4380
    %v4417 = vunpack.c.l.b16 %v4381
    %v4418 = vunpack.c.l.b16 %v4382
    %v4419 = vpack.c.b16 %v4410, %v4409
    %v4420 = vpack.c.b16 %v4412, %v4411
    %v4421 = vpack.c.b16 %v4414, %v4413
    %v4422 = vpack.c.b16 %v4416, %v4415
    %v4423 = vpack.c.b16 %v4418, %v4417
    %v4430 = vsel %vm59, %v4383, 0
    %v4433 = vsel %vm59, %v4384, 0
    %v4436 = vsel %vm59, %v4385, 0
    %v4439 = vsel %vm59, %v4386, 0
    %v4442 = vsel %vm59, %v4387, 0
    %v4445 = vsel %vm59, %v4388, 0
    %v4448 = vsel %vm59, %v4389, 0
    %v4451 = vsel %vm59, %v4390, 0
    %v4454 = vsel %vm59, %v4391, 0
    %v4457 = vsel %vm59, %v4392, 0
    %v4460 = vsel %vm59, %v4393, 0
    %v4463 = vsel %vm59, %v4394, 0
    %v4466 = vsel %vm59, %v4395, 0
    %v4469 = vsel %vm59, %v4396, 0
    %v4472 = vsel %vm59, %v4397, 0
    %v4475 = vsel %vm59, %v4398, 0
    %4477 = vmatprep.subr.bf16.mxu0 0
    %4478 = vmatpush1.bf16.msra.mxu0 0
    %4479 = vmatprep.subr.bf16.mxu0 0
    %4480 = vmatpush1.bf16.msra.mxu0 0
    %4481 = vmatprep.subr.bf16.mxu0 0
    %4482 = vmatpush1.bf16.msra.mxu0 0
    %4483 = vmatprep.subr.bf16.mxu0 0
    %4484 = vmatpush1.bf16.msra.mxu0 %v4423
    %4485 = vmatprep.subr.bf16.mxu0 0
    %4486 = vmatpush1.bf16.msra.mxu0 %v4422
    %4487 = vmatprep.subr.bf16.mxu0 0
    %4488 = vmatpush1.bf16.msra.mxu0 %v4421
    %4489 = vmatprep.subr.bf16.mxu0 0
    %4490 = vmatpush1.bf16.msra.mxu0 %v4420
    %4491 = vmatprep.subr.bf16.mxu0 0
    %4492 = vmatpush1.bf16.msra.mxu0 %v4419
    %4493 = vmatprep.subr.bf16.mxu0 0
    %4494 = vmatpush2.bf16.msra.mxu0 0
    %4495 = vmatprep.subr.bf16.mxu0 0
    %4496 = vmatpush2.bf16.msra.mxu0 0
    %4497 = vmatprep.subr.bf16.mxu0 0
    %4498 = vmatpush2.bf16.msra.mxu0 0
    %4499 = vmatprep.subr.bf16.mxu0 0
    %4500 = vmatpush2.bf16.msra.mxu0 0
    %4501 = vmatprep.subr.bf16.mxu0 0
    %4502 = vmatpush2.bf16.msra.mxu0 0
    %4503 = vmatprep.subr.bf16.mxu0 0
    %4504 = vmatpush2.bf16.msra.mxu0 0
    %4505 = vmatprep.subr.bf16.mxu0 0
    %4506 = vmatpush2.bf16.msra.mxu0 0
    %4507 = vmatprep.subr.bf16.mxu0 0
    %4508 = vmatpush2.bf16.msra.mxu0 0
    %4509 = vmatprep.mubr.bf16.mxu0 0
    %4510 = vmatmul.mubr.bf16.gmra.mxu0 %v4430
    %v4511 = vpop.f32.mrf.mxu0
    %v4512 = vadd.f32 0.0, %v4511
    %v4513 = vpop.f32.mrf.mxu0
    %v4514 = vpop.f32.mrf.mxu0
    %v4515 = vadd.f32 0.0, %v4514
    %v4516 = vpop.f32.mrf.mxu0
    %4517 = vmatprep.mubr.bf16.mxu0 0
    %4518 = vmatmul.mubr.bf16.gmra.mxu0 %v4433
    %v4519 = vpop.f32.mrf.mxu0
    %v4520 = vadd.f32 0.0, %v4519
    %v4521 = vpop.f32.mrf.mxu0
    %v4522 = vpop.f32.mrf.mxu0
    %v4523 = vadd.f32 0.0, %v4522
    %v4524 = vpop.f32.mrf.mxu0
    %4525 = vmatprep.mubr.bf16.mxu0 0
    %4526 = vmatmul.mubr.bf16.gmra.mxu0 %v4436
    %v4527 = vpop.f32.mrf.mxu0
    %v4528 = vadd.f32 0.0, %v4527
    %v4529 = vpop.f32.mrf.mxu0
    %v4530 = vpop.f32.mrf.mxu0
    %v4531 = vadd.f32 0.0, %v4530
    %v4532 = vpop.f32.mrf.mxu0
    %4533 = vmatprep.mubr.bf16.mxu0 0
    %4534 = vmatmul.mubr.bf16.gmra.mxu0 %v4439
    %v4535 = vpop.f32.mrf.mxu0
    %v4536 = vadd.f32 0.0, %v4535
    %v4537 = vpop.f32.mrf.mxu0
    %v4538 = vpop.f32.mrf.mxu0
    %v4539 = vadd.f32 0.0, %v4538
    %v4540 = vpop.f32.mrf.mxu0
    %4541 = vmatprep.mubr.bf16.mxu0 0
    %4542 = vmatmul.mubr.bf16.gmra.mxu0 %v4442
    %v4543 = vpop.f32.mrf.mxu0
    %v4544 = vadd.f32 0.0, %v4543
    %v4545 = vpop.f32.mrf.mxu0
    %v4546 = vpop.f32.mrf.mxu0
    %v4547 = vadd.f32 0.0, %v4546
    %v4548 = vpop.f32.mrf.mxu0
    %4549 = vmatprep.mubr.bf16.mxu0 0
    %4550 = vmatmul.mubr.bf16.gmra.mxu0 %v4445
    %v4551 = vpop.f32.mrf.mxu0
    %v4552 = vadd.f32 0.0, %v4551
    %v4553 = vpop.f32.mrf.mxu0
    %v4554 = vpop.f32.mrf.mxu0
    %v4555 = vadd.f32 0.0, %v4554
    %v4556 = vpop.f32.mrf.mxu0
    %4557 = vmatprep.mubr.bf16.mxu0 0
    %4558 = vmatmul.mubr.bf16.gmra.mxu0 %v4448
    %v4559 = vpop.f32.mrf.mxu0
    %v4560 = vadd.f32 0.0, %v4559
    %v4561 = vpop.f32.mrf.mxu0
    %v4562 = vpop.f32.mrf.mxu0
    %v4563 = vadd.f32 0.0, %v4562
    %v4564 = vpop.f32.mrf.mxu0
    %4565 = vmatprep.mubr.bf16.mxu0 0
    %4566 = vmatmul.mubr.bf16.gmra.mxu0 %v4451
    %v4567 = vpop.f32.mrf.mxu0
    %v4568 = vadd.f32 0.0, %v4567
    %v4569 = vpop.f32.mrf.mxu0
    %v4570 = vpop.f32.mrf.mxu0
    %v4571 = vadd.f32 0.0, %v4570
    %v4572 = vpop.f32.mrf.mxu0
    %4573 = vmatprep.mubr.bf16.mxu0 0
    %4574 = vmatmul.mubr.bf16.gmra.mxu0 %v4454
    %v4575 = vpop.f32.mrf.mxu0
    %v4576 = vadd.f32 0.0, %v4575
    %v4577 = vpop.f32.mrf.mxu0
    %v4578 = vpop.f32.mrf.mxu0
    %v4579 = vadd.f32 0.0, %v4578
    %v4580 = vpop.f32.mrf.mxu0
    %4581 = vmatprep.mubr.bf16.mxu0 0
    %4582 = vmatmul.mubr.bf16.gmra.mxu0 %v4457
    %v4583 = vpop.f32.mrf.mxu0
    %v4584 = vadd.f32 0.0, %v4583
    %v4585 = vpop.f32.mrf.mxu0
    %v4586 = vpop.f32.mrf.mxu0
    %v4587 = vadd.f32 0.0, %v4586
    %v4588 = vpop.f32.mrf.mxu0
    %4589 = vmatprep.mubr.bf16.mxu0 0
    %4590 = vmatmul.mubr.bf16.gmra.mxu0 %v4460
    %v4591 = vpop.f32.mrf.mxu0
    %v4592 = vadd.f32 0.0, %v4591
    %v4593 = vpop.f32.mrf.mxu0
    %v4594 = vpop.f32.mrf.mxu0
    %v4595 = vadd.f32 0.0, %v4594
    %v4596 = vpop.f32.mrf.mxu0
    %4597 = vmatprep.mubr.bf16.mxu0 0
    %4598 = vmatmul.mubr.bf16.gmra.mxu0 %v4463
    %v4599 = vpop.f32.mrf.mxu0
    %v4600 = vadd.f32 0.0, %v4599
    %v4601 = vpop.f32.mrf.mxu0
    %v4602 = vpop.f32.mrf.mxu0
    %v4603 = vadd.f32 0.0, %v4602
    %v4604 = vpop.f32.mrf.mxu0
    %4605 = vmatprep.mubr.bf16.mxu0 0
    %4606 = vmatmul.mubr.bf16.gmra.mxu0 %v4466
    %v4607 = vpop.f32.mrf.mxu0
    %v4608 = vadd.f32 0.0, %v4607
    %v4609 = vpop.f32.mrf.mxu0
    %v4610 = vpop.f32.mrf.mxu0
    %v4611 = vadd.f32 0.0, %v4610
    %v4612 = vpop.f32.mrf.mxu0
    %4613 = vmatprep.mubr.bf16.mxu0 0
    %4614 = vmatmul.mubr.bf16.gmra.mxu0 %v4469
    %v4615 = vpop.f32.mrf.mxu0
    %v4616 = vadd.f32 0.0, %v4615
    %v4617 = vpop.f32.mrf.mxu0
    %v4618 = vpop.f32.mrf.mxu0
    %v4619 = vadd.f32 0.0, %v4618
    %v4620 = vpop.f32.mrf.mxu0
    %4621 = vmatprep.mubr.bf16.mxu0 0
    %4622 = vmatmul.mubr.bf16.gmra.mxu0 %v4472
    %v4623 = vpop.f32.mrf.mxu0
    %v4624 = vadd.f32 0.0, %v4623
    %v4625 = vpop.f32.mrf.mxu0
    %v4626 = vpop.f32.mrf.mxu0
    %v4627 = vadd.f32 0.0, %v4626
    %v4628 = vpop.f32.mrf.mxu0
    %4629 = vmatprep.mubr.bf16.mxu0 0
    %4630 = vmatmul.mubr.bf16.gmra.mxu0 %v4475
    %v4631 = vpop.f32.mrf.mxu0
    %v4632 = vadd.f32 0.0, %v4631
    %v4633 = vpop.f32.mrf.mxu0
    %v4634 = vpop.f32.mrf.mxu0
    %v4635 = vadd.f32 0.0, %v4634
    %v4636 = vpop.f32.mrf.mxu0
    %4637 = vdwg.mxu0
    %v4638 = vlaneseq
    %v4639 = vshrl.u32 %v4638, 7
    %v4640 = vsub.s32 0, %v4639
    %v4641 = vrot.slane %v4307, %v4640
    %v4642 = vadd.f32 %v4641, %v4512
    %v4643 = vadd.f32 %v4641, %v4515
    %v4644 = vadd.f32 %v4641, %v4520
    %v4645 = vadd.f32 %v4641, %v4523
    %v4646 = vadd.f32 %v4641, %v4528
    %v4647 = vadd.f32 %v4641, %v4531
    %v4648 = vadd.f32 %v4641, %v4536
    %v4649 = vadd.f32 %v4641, %v4539
    %v4650 = vadd.f32 %v4641, %v4544
    %v4651 = vadd.f32 %v4641, %v4547
    %v4652 = vadd.f32 %v4641, %v4552
    %v4653 = vadd.f32 %v4641, %v4555
    %v4654 = vadd.f32 %v4641, %v4560
    %v4655 = vadd.f32 %v4641, %v4563
    %v4656 = vadd.f32 %v4641, %v4568
    %v4657 = vadd.f32 %v4641, %v4571
    %v4658 = vadd.f32 %v4641, %v4576
    %v4659 = vadd.f32 %v4641, %v4579
    %v4660 = vadd.f32 %v4641, %v4584
    %v4661 = vadd.f32 %v4641, %v4587
    %v4662 = vadd.f32 %v4641, %v4592
    %v4663 = vadd.f32 %v4641, %v4595
    %v4664 = vadd.f32 %v4641, %v4600
    %v4665 = vadd.f32 %v4641, %v4603
    %v4666 = vadd.f32 %v4641, %v4608
    %v4667 = vadd.f32 %v4641, %v4611
    %v4668 = vadd.f32 %v4641, %v4616
    %v4669 = vadd.f32 %v4641, %v4619
    %v4670 = vadd.f32 %v4641, %v4624
    %v4671 = vadd.f32 %v4641, %v4627
    %v4672 = vadd.f32 %v4641, %v4632
    %v4673 = vadd.f32 %v4641, %v4635
    %v4674 = vld [vmem:[#allocation2 + $0x12] sm:$0xff]
    %v4675 = vld [vmem:[#allocation2 + $0x1a] sm:$0xff]
    %v4676 = vld [vmem:[#allocation2 + $0x42] sm:$0xff]
    %v4677 = vld [vmem:[#allocation2 + $0x4a] sm:$0xff]
    %v4678 = vld [vmem:[#allocation2 + $0x72] sm:$0xff]
    %v4679 = vld [vmem:[#allocation2 + $0x7a] sm:$0xff]
    %v4680 = vld [vmem:[#allocation2 + $0xa2] sm:$0xff]
    %v4681 = vld [vmem:[#allocation2 + $0xaa] sm:$0xff]
    %v4682 = vld [vmem:[#allocation2 + $0xd2] sm:$0xff]
    %v4683 = vld [vmem:[#allocation2 + $0xda] sm:$0xff]
    %v4684 = vld [vmem:[#allocation2 + $0x102] sm:$0xff]
    %v4685 = vld [vmem:[#allocation2 + $0x10a] sm:$0xff]
    %v4686 = vld [vmem:[#allocation2 + $0x132] sm:$0xff]
    %v4687 = vld [vmem:[#allocation2 + $0x13a] sm:$0xff]
    %v4688 = vld [vmem:[#allocation2 + $0x162] sm:$0xff]
    %v4689 = vld [vmem:[#allocation2 + $0x16a] sm:$0xff]
    %v4690 = vld [vmem:[#allocation2 + $0x192] sm:$0xff]
    %v4691 = vld [vmem:[#allocation2 + $0x19a] sm:$0xff]
    %v4692 = vld [vmem:[#allocation2 + $0x1c2] sm:$0xff]
    %v4693 = vld [vmem:[#allocation2 + $0x1ca] sm:$0xff]
    %v4694 = vld [vmem:[#allocation2 + $0x1f2] sm:$0xff]
    %v4695 = vld [vmem:[#allocation2 + $0x1fa] sm:$0xff]
    %v4696 = vld [vmem:[#allocation2 + $0x222] sm:$0xff]
    %v4697 = vld [vmem:[#allocation2 + $0x22a] sm:$0xff]
    %v4698 = vld [vmem:[#allocation2 + $0x252] sm:$0xff]
    %v4699 = vld [vmem:[#allocation2 + $0x25a] sm:$0xff]
    %v4700 = vld [vmem:[#allocation2 + $0x282] sm:$0xff]
    %v4701 = vld [vmem:[#allocation2 + $0x28a] sm:$0xff]
    %v4702 = vld [vmem:[#allocation2 + $0x2b2] sm:$0xff]
    %v4703 = vld [vmem:[#allocation2 + $0x2ba] sm:$0xff]
    %v4704 = vld [vmem:[#allocation2 + $0x2e2] sm:$0xff]
    %v4705 = vld [vmem:[#allocation2 + $0x2ea] sm:$0xff]
    %s4706 = scalar_lea.vmem [#allocation7], 360
    %v4707 = vld [vmem:[%s4706] sm:$0xf]
    %v4708 = vld [vmem:[%s4706 + $0x4] sm:$0xf]
    %v4709 = vld [vmem:[%s4706 + $0x8] sm:$0xf]
    %v4710 = vld [vmem:[%s4706 + $0xc] sm:$0xf]
    %v4711 = vld [vmem:[%s4706 + $0x10] sm:$0xf]
    %v4712 = vld [vmem:[%s4706 + $0x14] sm:$0xf]
    %v4713 = vld [vmem:[%s4706 + $0x18] sm:$0xf]
    %v4714 = vld [vmem:[%s4706 + $0x1c] sm:$0xf]
    %v4715 = vld [vmem:[%s4706 + $0x20] sm:$0xf]
    %v4716 = vld [vmem:[%s4706 + $0x24] sm:$0xf]
    %v4717 = vpack.c.bf16 %v4675, %v4674
    %v4718 = vpack.c.bf16 %v4677, %v4676
    %v4719 = vpack.c.bf16 %v4679, %v4678
    %v4720 = vpack.c.bf16 %v4681, %v4680
    %v4721 = vpack.c.bf16 %v4683, %v4682
    %v4722 = vpack.c.bf16 %v4685, %v4684
    %v4723 = vpack.c.bf16 %v4687, %v4686
    %v4724 = vpack.c.bf16 %v4689, %v4688
    %v4725 = vpack.c.bf16 %v4691, %v4690
    %v4726 = vpack.c.bf16 %v4693, %v4692
    %v4727 = vpack.c.bf16 %v4695, %v4694
    %v4728 = vpack.c.bf16 %v4697, %v4696
    %v4729 = vpack.c.bf16 %v4699, %v4698
    %v4730 = vpack.c.bf16 %v4701, %v4700
    %v4731 = vpack.c.bf16 %v4703, %v4702
    %v4732 = vpack.c.bf16 %v4705, %v4704
    %v4743 = vunpack.c.l.b16 %v4707
    %v4744 = vunpack.c.l.b16 %v4708
    %v4745 = vunpack.c.l.b16 %v4709
    %v4746 = vunpack.c.l.b16 %v4710
    %v4747 = vunpack.c.l.b16 %v4711
    %v4748 = vunpack.c.l.b16 %v4712
    %v4749 = vunpack.c.l.b16 %v4713
    %v4750 = vunpack.c.l.b16 %v4714
    %v4751 = vunpack.c.l.b16 %v4715
    %v4752 = vunpack.c.l.b16 %v4716
    %v4753 = vpack.c.b16 %v4744, %v4743
    %v4754 = vpack.c.b16 %v4746, %v4745
    %v4755 = vpack.c.b16 %v4748, %v4747
    %v4756 = vpack.c.b16 %v4750, %v4749
    %v4757 = vpack.c.b16 %v4752, %v4751
    %v4764 = vsel %vm59, %v4717, 0
    %v4767 = vsel %vm59, %v4718, 0
    %v4770 = vsel %vm59, %v4719, 0
    %v4773 = vsel %vm59, %v4720, 0
    %v4776 = vsel %vm59, %v4721, 0
    %v4779 = vsel %vm59, %v4722, 0
    %v4782 = vsel %vm59, %v4723, 0
    %v4785 = vsel %vm59, %v4724, 0
    %v4788 = vsel %vm59, %v4725, 0
    %v4791 = vsel %vm59, %v4726, 0
    %v4794 = vsel %vm59, %v4727, 0
    %v4797 = vsel %vm59, %v4728, 0
    %v4800 = vsel %vm59, %v4729, 0
    %v4803 = vsel %vm59, %v4730, 0
    %v4806 = vsel %vm59, %v4731, 0
    %v4809 = vsel %vm59, %v4732, 0
    %4811 = vmatprep.subr.bf16.mxu0 0
    %4812 = vmatpush1.bf16.msra.mxu0 0
    %4813 = vmatprep.subr.bf16.mxu0 0
    %4814 = vmatpush1.bf16.msra.mxu0 0
    %4815 = vmatprep.subr.bf16.mxu0 0
    %4816 = vmatpush1.bf16.msra.mxu0 0
    %4817 = vmatprep.subr.bf16.mxu0 0
    %4818 = vmatpush1.bf16.msra.mxu0 %v4757
    %4819 = vmatprep.subr.bf16.mxu0 0
    %4820 = vmatpush1.bf16.msra.mxu0 %v4756
    %4821 = vmatprep.subr.bf16.mxu0 0
    %4822 = vmatpush1.bf16.msra.mxu0 %v4755
    %4823 = vmatprep.subr.bf16.mxu0 0
    %4824 = vmatpush1.bf16.msra.mxu0 %v4754
    %4825 = vmatprep.subr.bf16.mxu0 0
    %4826 = vmatpush1.bf16.msra.mxu0 %v4753
    %4827 = vmatprep.subr.bf16.mxu0 0
    %4828 = vmatpush2.bf16.msra.mxu0 0
    %4829 = vmatprep.subr.bf16.mxu0 0
    %4830 = vmatpush2.bf16.msra.mxu0 0
    %4831 = vmatprep.subr.bf16.mxu0 0
    %4832 = vmatpush2.bf16.msra.mxu0 0
    %4833 = vmatprep.subr.bf16.mxu0 0
    %4834 = vmatpush2.bf16.msra.mxu0 0
    %4835 = vmatprep.subr.bf16.mxu0 0
    %4836 = vmatpush2.bf16.msra.mxu0 0
    %4837 = vmatprep.subr.bf16.mxu0 0
    %4838 = vmatpush2.bf16.msra.mxu0 0
    %4839 = vmatprep.subr.bf16.mxu0 0
    %4840 = vmatpush2.bf16.msra.mxu0 0
    %4841 = vmatprep.subr.bf16.mxu0 0
    %4842 = vmatpush2.bf16.msra.mxu0 0
    %4843 = vmatprep.mubr.bf16.mxu0 0
    %4844 = vmatmul.mubr.bf16.gmra.mxu0 %v4764
    %v4845 = vpop.f32.mrf.mxu0
    %v4846 = vadd.f32 0.0, %v4845
    %v4847 = vpop.f32.mrf.mxu0
    %v4848 = vpop.f32.mrf.mxu0
    %v4849 = vadd.f32 0.0, %v4848
    %v4850 = vpop.f32.mrf.mxu0
    %4851 = vmatprep.mubr.bf16.mxu0 0
    %4852 = vmatmul.mubr.bf16.gmra.mxu0 %v4767
    %v4853 = vpop.f32.mrf.mxu0
    %v4854 = vadd.f32 0.0, %v4853
    %v4855 = vpop.f32.mrf.mxu0
    %v4856 = vpop.f32.mrf.mxu0
    %v4857 = vadd.f32 0.0, %v4856
    %v4858 = vpop.f32.mrf.mxu0
    %4859 = vmatprep.mubr.bf16.mxu0 0
    %4860 = vmatmul.mubr.bf16.gmra.mxu0 %v4770
    %v4861 = vpop.f32.mrf.mxu0
    %v4862 = vadd.f32 0.0, %v4861
    %v4863 = vpop.f32.mrf.mxu0
    %v4864 = vpop.f32.mrf.mxu0
    %v4865 = vadd.f32 0.0, %v4864
    %v4866 = vpop.f32.mrf.mxu0
    %4867 = vmatprep.mubr.bf16.mxu0 0
    %4868 = vmatmul.mubr.bf16.gmra.mxu0 %v4773
    %v4869 = vpop.f32.mrf.mxu0
    %v4870 = vadd.f32 0.0, %v4869
    %v4871 = vpop.f32.mrf.mxu0
    %v4872 = vpop.f32.mrf.mxu0
    %v4873 = vadd.f32 0.0, %v4872
    %v4874 = vpop.f32.mrf.mxu0
    %4875 = vmatprep.mubr.bf16.mxu0 0
    %4876 = vmatmul.mubr.bf16.gmra.mxu0 %v4776
    %v4877 = vpop.f32.mrf.mxu0
    %v4878 = vadd.f32 0.0, %v4877
    %v4879 = vpop.f32.mrf.mxu0
    %v4880 = vpop.f32.mrf.mxu0
    %v4881 = vadd.f32 0.0, %v4880
    %v4882 = vpop.f32.mrf.mxu0
    %4883 = vmatprep.mubr.bf16.mxu0 0
    %4884 = vmatmul.mubr.bf16.gmra.mxu0 %v4779
    %v4885 = vpop.f32.mrf.mxu0
    %v4886 = vadd.f32 0.0, %v4885
    %v4887 = vpop.f32.mrf.mxu0
    %v4888 = vpop.f32.mrf.mxu0
    %v4889 = vadd.f32 0.0, %v4888
    %v4890 = vpop.f32.mrf.mxu0
    %4891 = vmatprep.mubr.bf16.mxu0 0
    %4892 = vmatmul.mubr.bf16.gmra.mxu0 %v4782
    %v4893 = vpop.f32.mrf.mxu0
    %v4894 = vadd.f32 0.0, %v4893
    %v4895 = vpop.f32.mrf.mxu0
    %v4896 = vpop.f32.mrf.mxu0
    %v4897 = vadd.f32 0.0, %v4896
    %v4898 = vpop.f32.mrf.mxu0
    %4899 = vmatprep.mubr.bf16.mxu0 0
    %4900 = vmatmul.mubr.bf16.gmra.mxu0 %v4785
    %v4901 = vpop.f32.mrf.mxu0
    %v4902 = vadd.f32 0.0, %v4901
    %v4903 = vpop.f32.mrf.mxu0
    %v4904 = vpop.f32.mrf.mxu0
    %v4905 = vadd.f32 0.0, %v4904
    %v4906 = vpop.f32.mrf.mxu0
    %4907 = vmatprep.mubr.bf16.mxu0 0
    %4908 = vmatmul.mubr.bf16.gmra.mxu0 %v4788
    %v4909 = vpop.f32.mrf.mxu0
    %v4910 = vadd.f32 0.0, %v4909
    %v4911 = vpop.f32.mrf.mxu0
    %v4912 = vpop.f32.mrf.mxu0
    %v4913 = vadd.f32 0.0, %v4912
    %v4914 = vpop.f32.mrf.mxu0
    %4915 = vmatprep.mubr.bf16.mxu0 0
    %4916 = vmatmul.mubr.bf16.gmra.mxu0 %v4791
    %v4917 = vpop.f32.mrf.mxu0
    %v4918 = vadd.f32 0.0, %v4917
    %v4919 = vpop.f32.mrf.mxu0
    %v4920 = vpop.f32.mrf.mxu0
    %v4921 = vadd.f32 0.0, %v4920
    %v4922 = vpop.f32.mrf.mxu0
    %4923 = vmatprep.mubr.bf16.mxu0 0
    %4924 = vmatmul.mubr.bf16.gmra.mxu0 %v4794
    %v4925 = vpop.f32.mrf.mxu0
    %v4926 = vadd.f32 0.0, %v4925
    %v4927 = vpop.f32.mrf.mxu0
    %v4928 = vpop.f32.mrf.mxu0
    %v4929 = vadd.f32 0.0, %v4928
    %v4930 = vpop.f32.mrf.mxu0
    %4931 = vmatprep.mubr.bf16.mxu0 0
    %4932 = vmatmul.mubr.bf16.gmra.mxu0 %v4797
    %v4933 = vpop.f32.mrf.mxu0
    %v4934 = vadd.f32 0.0, %v4933
    %v4935 = vpop.f32.mrf.mxu0
    %v4936 = vpop.f32.mrf.mxu0
    %v4937 = vadd.f32 0.0, %v4936
    %v4938 = vpop.f32.mrf.mxu0
    %4939 = vmatprep.mubr.bf16.mxu0 0
    %4940 = vmatmul.mubr.bf16.gmra.mxu0 %v4800
    %v4941 = vpop.f32.mrf.mxu0
    %v4942 = vadd.f32 0.0, %v4941
    %v4943 = vpop.f32.mrf.mxu0
    %v4944 = vpop.f32.mrf.mxu0
    %v4945 = vadd.f32 0.0, %v4944
    %v4946 = vpop.f32.mrf.mxu0
    %4947 = vmatprep.mubr.bf16.mxu0 0
    %4948 = vmatmul.mubr.bf16.gmra.mxu0 %v4803
    %v4949 = vpop.f32.mrf.mxu0
    %v4950 = vadd.f32 0.0, %v4949
    %v4951 = vpop.f32.mrf.mxu0
    %v4952 = vpop.f32.mrf.mxu0
    %v4953 = vadd.f32 0.0, %v4952
    %v4954 = vpop.f32.mrf.mxu0
    %4955 = vmatprep.mubr.bf16.mxu0 0
    %4956 = vmatmul.mubr.bf16.gmra.mxu0 %v4806
    %v4957 = vpop.f32.mrf.mxu0
    %v4958 = vadd.f32 0.0, %v4957
    %v4959 = vpop.f32.mrf.mxu0
    %v4960 = vpop.f32.mrf.mxu0
    %v4961 = vadd.f32 0.0, %v4960
    %v4962 = vpop.f32.mrf.mxu0
    %4963 = vmatprep.mubr.bf16.mxu0 0
    %4964 = vmatmul.mubr.bf16.gmra.mxu0 %v4809
    %v4965 = vpop.f32.mrf.mxu0
    %v4966 = vadd.f32 0.0, %v4965
    %v4967 = vpop.f32.mrf.mxu0
    %v4968 = vpop.f32.mrf.mxu0
    %v4969 = vadd.f32 0.0, %v4968
    %v4970 = vpop.f32.mrf.mxu0
    %4971 = vdwg.mxu0
    %v4972 = vadd.f32 %v4642, %v4846
    %v4973 = vadd.f32 %v4643, %v4849
    %v4974 = vadd.f32 %v4644, %v4854
    %v4975 = vadd.f32 %v4645, %v4857
    %v4976 = vadd.f32 %v4646, %v4862
    %v4977 = vadd.f32 %v4647, %v4865
    %v4978 = vadd.f32 %v4648, %v4870
    %v4979 = vadd.f32 %v4649, %v4873
    %v4980 = vadd.f32 %v4650, %v4878
    %v4981 = vadd.f32 %v4651, %v4881
    %v4982 = vadd.f32 %v4652, %v4886
    %v4983 = vadd.f32 %v4653, %v4889
    %v4984 = vadd.f32 %v4654, %v4894
    %v4985 = vadd.f32 %v4655, %v4897
    %v4986 = vadd.f32 %v4656, %v4902
    %v4987 = vadd.f32 %v4657, %v4905
    %v4988 = vadd.f32 %v4658, %v4910
    %v4989 = vadd.f32 %v4659, %v4913
    %v4990 = vadd.f32 %v4660, %v4918
    %v4991 = vadd.f32 %v4661, %v4921
    %v4992 = vadd.f32 %v4662, %v4926
    %v4993 = vadd.f32 %v4663, %v4929
    %v4994 = vadd.f32 %v4664, %v4934
    %v4995 = vadd.f32 %v4665, %v4937
    %v4996 = vadd.f32 %v4666, %v4942
    %v4997 = vadd.f32 %v4667, %v4945
    %v4998 = vadd.f32 %v4668, %v4950
    %v4999 = vadd.f32 %v4669, %v4953
    %v5000 = vadd.f32 %v4670, %v4958
    %v5001 = vadd.f32 %v4671, %v4961
    %v5002 = vadd.f32 %v4672, %v4966
    %v5003 = vadd.f32 %v4673, %v4969
    %s5004 = sld [smem:[#allocation4 + $0x6]]
    %vm5005 = vcmp.ge.f32.partialorder %v4972, 0.0
    %vm5006 = vcmp.ge.f32.partialorder %v4973, 0.0
    %vm5007 = vcmp.ge.f32.partialorder %v4974, 0.0
    %vm5008 = vcmp.ge.f32.partialorder %v4975, 0.0
    %vm5009 = vcmp.ge.f32.partialorder %v4976, 0.0
    %vm5010 = vcmp.ge.f32.partialorder %v4977, 0.0
    %vm5011 = vcmp.ge.f32.partialorder %v4978, 0.0
    %vm5012 = vcmp.ge.f32.partialorder %v4979, 0.0
    %vm5013 = vcmp.ge.f32.partialorder %v4980, 0.0
    %vm5014 = vcmp.ge.f32.partialorder %v4981, 0.0
    %vm5015 = vcmp.ge.f32.partialorder %v4982, 0.0
    %vm5016 = vcmp.ge.f32.partialorder %v4983, 0.0
    %vm5017 = vcmp.ge.f32.partialorder %v4984, 0.0
    %vm5018 = vcmp.ge.f32.partialorder %v4985, 0.0
    %vm5019 = vcmp.ge.f32.partialorder %v4986, 0.0
    %vm5020 = vcmp.ge.f32.partialorder %v4987, 0.0
    %vm5021 = vcmp.ge.f32.partialorder %v4988, 0.0
    %vm5022 = vcmp.ge.f32.partialorder %v4989, 0.0
    %vm5023 = vcmp.ge.f32.partialorder %v4990, 0.0
    %vm5024 = vcmp.ge.f32.partialorder %v4991, 0.0
    %vm5025 = vcmp.ge.f32.partialorder %v4992, 0.0
    %vm5026 = vcmp.ge.f32.partialorder %v4993, 0.0
    %vm5027 = vcmp.ge.f32.partialorder %v4994, 0.0
    %vm5028 = vcmp.ge.f32.partialorder %v4995, 0.0
    %vm5029 = vcmp.ge.f32.partialorder %v4996, 0.0
    %vm5030 = vcmp.ge.f32.partialorder %v4997, 0.0
    %vm5031 = vcmp.ge.f32.partialorder %v4998, 0.0
    %vm5032 = vcmp.ge.f32.partialorder %v4999, 0.0
    %vm5033 = vcmp.ge.f32.partialorder %v5000, 0.0
    %vm5034 = vcmp.ge.f32.partialorder %v5001, 0.0
    %vm5035 = vcmp.ge.f32.partialorder %v5002, 0.0
    %vm5036 = vcmp.ge.f32.partialorder %v5003, 0.0
    %v5037 = vstv %s5004
    %v5038 = vmul.f32 %v5037, %v4972
    %v5039 = vmul.f32 %v5037, %v4973
    %v5040 = vmul.f32 %v5037, %v4974
    %v5041 = vmul.f32 %v5037, %v4975
    %v5042 = vmul.f32 %v5037, %v4976
    %v5043 = vmul.f32 %v5037, %v4977
    %v5044 = vmul.f32 %v5037, %v4978
    %v5045 = vmul.f32 %v5037, %v4979
    %v5046 = vmul.f32 %v5037, %v4980
    %v5047 = vmul.f32 %v5037, %v4981
    %v5048 = vmul.f32 %v5037, %v4982
    %v5049 = vmul.f32 %v5037, %v4983
    %v5050 = vmul.f32 %v5037, %v4984
    %v5051 = vmul.f32 %v5037, %v4985
    %v5052 = vmul.f32 %v5037, %v4986
    %v5053 = vmul.f32 %v5037, %v4987
    %v5054 = vmul.f32 %v5037, %v4988
    %v5055 = vmul.f32 %v5037, %v4989
    %v5056 = vmul.f32 %v5037, %v4990
    %v5057 = vmul.f32 %v5037, %v4991
    %v5058 = vmul.f32 %v5037, %v4992
    %v5059 = vmul.f32 %v5037, %v4993
    %v5060 = vmul.f32 %v5037, %v4994
    %v5061 = vmul.f32 %v5037, %v4995
    %v5062 = vmul.f32 %v5037, %v4996
    %v5063 = vmul.f32 %v5037, %v4997
    %v5064 = vmul.f32 %v5037, %v4998
    %v5065 = vmul.f32 %v5037, %v4999
    %v5066 = vmul.f32 %v5037, %v5000
    %v5067 = vmul.f32 %v5037, %v5001
    %v5068 = vmul.f32 %v5037, %v5002
    %v5069 = vmul.f32 %v5037, %v5003
    %v5070 = vsel %vm5005, %v4972, %v5038
    %v5071 = vsel %vm5006, %v4973, %v5039
    %v5072 = vsel %vm5007, %v4974, %v5040
    %v5073 = vsel %vm5008, %v4975, %v5041
    %v5074 = vsel %vm5009, %v4976, %v5042
    %v5075 = vsel %vm5010, %v4977, %v5043
    %v5076 = vsel %vm5011, %v4978, %v5044
    %v5077 = vsel %vm5012, %v4979, %v5045
    %v5078 = vsel %vm5013, %v4980, %v5046
    %v5079 = vsel %vm5014, %v4981, %v5047
    %v5080 = vsel %vm5015, %v4982, %v5048
    %v5081 = vsel %vm5016, %v4983, %v5049
    %v5082 = vsel %vm5017, %v4984, %v5050
    %v5083 = vsel %vm5018, %v4985, %v5051
    %v5084 = vsel %vm5019, %v4986, %v5052
    %v5085 = vsel %vm5020, %v4987, %v5053
    %v5086 = vsel %vm5021, %v4988, %v5054
    %v5087 = vsel %vm5022, %v4989, %v5055
    %v5088 = vsel %vm5023, %v4990, %v5056
    %v5089 = vsel %vm5024, %v4991, %v5057
    %v5090 = vsel %vm5025, %v4992, %v5058
    %v5091 = vsel %vm5026, %v4993, %v5059
    %v5092 = vsel %vm5027, %v4994, %v5060
    %v5093 = vsel %vm5028, %v4995, %v5061
    %v5094 = vsel %vm5029, %v4996, %v5062
    %v5095 = vsel %vm5030, %v4997, %v5063
    %v5096 = vsel %vm5031, %v4998, %v5064
    %v5097 = vsel %vm5032, %v4999, %v5065
    %v5098 = vsel %vm5033, %v5000, %v5066
    %v5099 = vsel %vm5034, %v5001, %v5067
    %v5100 = vsel %vm5035, %v5002, %v5068
    %v5101 = vsel %vm5036, %v5003, %v5069
    %v5102 = vld [vmem:[%s6 + $0x8] sm:$0x1]
    %5103 = vst.msk [vmem:[#allocation2 + $0x10] sm:$0xff] %vm59, %v5070
    %5104 = vst.msk [vmem:[#allocation2 + $0x18] sm:$0xff] %vm59, %v5071
    %5105 = vst.msk [vmem:[#allocation2 + $0x40] sm:$0xff] %vm59, %v5072
    %5106 = vst.msk [vmem:[#allocation2 + $0x48] sm:$0xff] %vm59, %v5073
    %5107 = vst.msk [vmem:[#allocation2 + $0x70] sm:$0xff] %vm59, %v5074
    %5108 = vst.msk [vmem:[#allocation2 + $0x78] sm:$0xff] %vm59, %v5075
    %5109 = vst.msk [vmem:[#allocation2 + $0xa0] sm:$0xff] %vm59, %v5076
    %5110 = vst.msk [vmem:[#allocation2 + $0xa8] sm:$0xff] %vm59, %v5077
    %5111 = vst.msk [vmem:[#allocation2 + $0xd0] sm:$0xff] %vm59, %v5078
    %5112 = vst.msk [vmem:[#allocation2 + $0xd8] sm:$0xff] %vm59, %v5079
    %5113 = vst.msk [vmem:[#allocation2 + $0x100] sm:$0xff] %vm59, %v5080
    %5114 = vst.msk [vmem:[#allocation2 + $0x108] sm:$0xff] %vm59, %v5081
    %5115 = vst.msk [vmem:[#allocation2 + $0x130] sm:$0xff] %vm59, %v5082
    %5116 = vst.msk [vmem:[#allocation2 + $0x138] sm:$0xff] %vm59, %v5083
    %5117 = vst.msk [vmem:[#allocation2 + $0x160] sm:$0xff] %vm59, %v5084
    %5118 = vst.msk [vmem:[#allocation2 + $0x168] sm:$0xff] %vm59, %v5085
    %5119 = vst.msk [vmem:[#allocation2 + $0x190] sm:$0xff] %vm59, %v5086
    %5120 = vst.msk [vmem:[#allocation2 + $0x198] sm:$0xff] %vm59, %v5087
    %5121 = vst.msk [vmem:[#allocation2 + $0x1c0] sm:$0xff] %vm59, %v5088
    %5122 = vst.msk [vmem:[#allocation2 + $0x1c8] sm:$0xff] %vm59, %v5089
    %5123 = vst.msk [vmem:[#allocation2 + $0x1f0] sm:$0xff] %vm59, %v5090
    %5124 = vst.msk [vmem:[#allocation2 + $0x1f8] sm:$0xff] %vm59, %v5091
    %5125 = vst.msk [vmem:[#allocation2 + $0x220] sm:$0xff] %vm59, %v5092
    %5126 = vst.msk [vmem:[#allocation2 + $0x228] sm:$0xff] %vm59, %v5093
    %5127 = vst.msk [vmem:[#allocation2 + $0x250] sm:$0xff] %vm59, %v5094
    %5128 = vst.msk [vmem:[#allocation2 + $0x258] sm:$0xff] %vm59, %v5095
    %5129 = vst.msk [vmem:[#allocation2 + $0x280] sm:$0xff] %vm59, %v5096
    %5130 = vst.msk [vmem:[#allocation2 + $0x288] sm:$0xff] %vm59, %v5097
    %5131 = vst.msk [vmem:[#allocation2 + $0x2b0] sm:$0xff] %vm59, %v5098
    %5132 = vst.msk [vmem:[#allocation2 + $0x2b8] sm:$0xff] %vm59, %v5099
    %5133 = vst.msk [vmem:[#allocation2 + $0x2e0] sm:$0xff] %vm59, %v5100
    %5134 = vst.msk [vmem:[#allocation2 + $0x2e8] sm:$0xff] %vm59, %v5101
    %v5135 = vld [vmem:[#allocation2 + $0xe] sm:$0xff]
    %v5136 = vld [vmem:[#allocation2 + $0x16] sm:$0xff]
    %v5137 = vld [vmem:[#allocation2 + $0x3e] sm:$0xff]
    %v5138 = vld [vmem:[#allocation2 + $0x46] sm:$0xff]
    %v5139 = vld [vmem:[#allocation2 + $0x6e] sm:$0xff]
    %v5140 = vld [vmem:[#allocation2 + $0x76] sm:$0xff]
    %v5141 = vld [vmem:[#allocation2 + $0x9e] sm:$0xff]
    %v5142 = vld [vmem:[#allocation2 + $0xa6] sm:$0xff]
    %v5143 = vld [vmem:[#allocation2 + $0xce] sm:$0xff]
    %v5144 = vld [vmem:[#allocation2 + $0xd6] sm:$0xff]
    %v5145 = vld [vmem:[#allocation2 + $0xfe] sm:$0xff]
    %v5146 = vld [vmem:[#allocation2 + $0x106] sm:$0xff]
    %v5147 = vld [vmem:[#allocation2 + $0x12e] sm:$0xff]
    %v5148 = vld [vmem:[#allocation2 + $0x136] sm:$0xff]
    %v5149 = vld [vmem:[#allocation2 + $0x15e] sm:$0xff]
    %v5150 = vld [vmem:[#allocation2 + $0x166] sm:$0xff]
    %v5151 = vld [vmem:[#allocation2 + $0x18e] sm:$0xff]
    %v5152 = vld [vmem:[#allocation2 + $0x196] sm:$0xff]
    %v5153 = vld [vmem:[#allocation2 + $0x1be] sm:$0xff]
    %v5154 = vld [vmem:[#allocation2 + $0x1c6] sm:$0xff]
    %v5155 = vld [vmem:[#allocation2 + $0x1ee] sm:$0xff]
    %v5156 = vld [vmem:[#allocation2 + $0x1f6] sm:$0xff]
    %v5157 = vld [vmem:[#allocation2 + $0x21e] sm:$0xff]
    %v5158 = vld [vmem:[#allocation2 + $0x226] sm:$0xff]
    %v5159 = vld [vmem:[#allocation2 + $0x24e] sm:$0xff]
    %v5160 = vld [vmem:[#allocation2 + $0x256] sm:$0xff]
    %v5161 = vld [vmem:[#allocation2 + $0x27e] sm:$0xff]
    %v5162 = vld [vmem:[#allocation2 + $0x286] sm:$0xff]
    %v5163 = vld [vmem:[#allocation2 + $0x2ae] sm:$0xff]
    %v5164 = vld [vmem:[#allocation2 + $0x2b6] sm:$0xff]
    %v5165 = vld [vmem:[#allocation2 + $0x2de] sm:$0xff]
    %v5166 = vld [vmem:[#allocation2 + $0x2e6] sm:$0xff]
    %s5167 = scalar_lea.vmem [#allocation7], 400
    %v5168 = vld [vmem:[%s5167] sm:$0xf]
    %v5169 = vld [vmem:[%s5167 + $0x4] sm:$0xf]
    %v5170 = vld [vmem:[%s5167 + $0x8] sm:$0xf]
    %v5171 = vld [vmem:[%s5167 + $0xc] sm:$0xf]
    %v5172 = vld [vmem:[%s5167 + $0x10] sm:$0xf]
    %v5173 = vld [vmem:[%s5167 + $0x14] sm:$0xf]
    %v5174 = vld [vmem:[%s5167 + $0x18] sm:$0xf]
    %v5175 = vld [vmem:[%s5167 + $0x1c] sm:$0xf]
    %v5176 = vld [vmem:[%s5167 + $0x20] sm:$0xf]
    %v5177 = vld [vmem:[%s5167 + $0x24] sm:$0xf]
    %v5178 = vpack.c.bf16 %v5136, %v5135
    %v5179 = vpack.c.bf16 %v5138, %v5137
    %v5180 = vpack.c.bf16 %v5140, %v5139
    %v5181 = vpack.c.bf16 %v5142, %v5141
    %v5182 = vpack.c.bf16 %v5144, %v5143
    %v5183 = vpack.c.bf16 %v5146, %v5145
    %v5184 = vpack.c.bf16 %v5148, %v5147
    %v5185 = vpack.c.bf16 %v5150, %v5149
    %v5186 = vpack.c.bf16 %v5152, %v5151
    %v5187 = vpack.c.bf16 %v5154, %v5153
    %v5188 = vpack.c.bf16 %v5156, %v5155
    %v5189 = vpack.c.bf16 %v5158, %v5157
    %v5190 = vpack.c.bf16 %v5160, %v5159
    %v5191 = vpack.c.bf16 %v5162, %v5161
    %v5192 = vpack.c.bf16 %v5164, %v5163
    %v5193 = vpack.c.bf16 %v5166, %v5165
    %v5204 = vunpack.c.l.b16 %v5168
    %v5205 = vunpack.c.l.b16 %v5169
    %v5206 = vunpack.c.l.b16 %v5170
    %v5207 = vunpack.c.l.b16 %v5171
    %v5208 = vunpack.c.l.b16 %v5172
    %v5209 = vunpack.c.l.b16 %v5173
    %v5210 = vunpack.c.l.b16 %v5174
    %v5211 = vunpack.c.l.b16 %v5175
    %v5212 = vunpack.c.l.b16 %v5176
    %v5213 = vunpack.c.l.b16 %v5177
    %v5214 = vpack.c.b16 %v5205, %v5204
    %v5215 = vpack.c.b16 %v5207, %v5206
    %v5216 = vpack.c.b16 %v5209, %v5208
    %v5217 = vpack.c.b16 %v5211, %v5210
    %v5218 = vpack.c.b16 %v5213, %v5212
    %v5225 = vsel %vm59, %v5178, 0
    %v5228 = vsel %vm59, %v5179, 0
    %v5231 = vsel %vm59, %v5180, 0
    %v5234 = vsel %vm59, %v5181, 0
    %v5237 = vsel %vm59, %v5182, 0
    %v5240 = vsel %vm59, %v5183, 0
    %v5243 = vsel %vm59, %v5184, 0
    %v5246 = vsel %vm59, %v5185, 0
    %v5249 = vsel %vm59, %v5186, 0
    %v5252 = vsel %vm59, %v5187, 0
    %v5255 = vsel %vm59, %v5188, 0
    %v5258 = vsel %vm59, %v5189, 0
    %v5261 = vsel %vm59, %v5190, 0
    %v5264 = vsel %vm59, %v5191, 0
    %v5267 = vsel %vm59, %v5192, 0
    %v5270 = vsel %vm59, %v5193, 0
    %5272 = vmatprep.subr.bf16.mxu0 0
    %5273 = vmatpush1.bf16.msra.mxu0 0
    %5274 = vmatprep.subr.bf16.mxu0 0
    %5275 = vmatpush1.bf16.msra.mxu0 0
    %5276 = vmatprep.subr.bf16.mxu0 0
    %5277 = vmatpush1.bf16.msra.mxu0 0
    %5278 = vmatprep.subr.bf16.mxu0 0
    %5279 = vmatpush1.bf16.msra.mxu0 %v5218
    %5280 = vmatprep.subr.bf16.mxu0 0
    %5281 = vmatpush1.bf16.msra.mxu0 %v5217
    %5282 = vmatprep.subr.bf16.mxu0 0
    %5283 = vmatpush1.bf16.msra.mxu0 %v5216
    %5284 = vmatprep.subr.bf16.mxu0 0
    %5285 = vmatpush1.bf16.msra.mxu0 %v5215
    %5286 = vmatprep.subr.bf16.mxu0 0
    %5287 = vmatpush1.bf16.msra.mxu0 %v5214
    %5288 = vmatprep.subr.bf16.mxu0 0
    %5289 = vmatpush2.bf16.msra.mxu0 0
    %5290 = vmatprep.subr.bf16.mxu0 0
    %5291 = vmatpush2.bf16.msra.mxu0 0
    %5292 = vmatprep.subr.bf16.mxu0 0
    %5293 = vmatpush2.bf16.msra.mxu0 0
    %5294 = vmatprep.subr.bf16.mxu0 0
    %5295 = vmatpush2.bf16.msra.mxu0 0
    %5296 = vmatprep.subr.bf16.mxu0 0
    %5297 = vmatpush2.bf16.msra.mxu0 0
    %5298 = vmatprep.subr.bf16.mxu0 0
    %5299 = vmatpush2.bf16.msra.mxu0 0
    %5300 = vmatprep.subr.bf16.mxu0 0
    %5301 = vmatpush2.bf16.msra.mxu0 0
    %5302 = vmatprep.subr.bf16.mxu0 0
    %5303 = vmatpush2.bf16.msra.mxu0 0
    %5304 = vmatprep.mubr.bf16.mxu0 0
    %5305 = vmatmul.mubr.bf16.gmra.mxu0 %v5225
    %v5306 = vpop.f32.mrf.mxu0
    %v5307 = vadd.f32 0.0, %v5306
    %v5308 = vpop.f32.mrf.mxu0
    %v5309 = vpop.f32.mrf.mxu0
    %v5310 = vadd.f32 0.0, %v5309
    %v5311 = vpop.f32.mrf.mxu0
    %5312 = vmatprep.mubr.bf16.mxu0 0
    %5313 = vmatmul.mubr.bf16.gmra.mxu0 %v5228
    %v5314 = vpop.f32.mrf.mxu0
    %v5315 = vadd.f32 0.0, %v5314
    %v5316 = vpop.f32.mrf.mxu0
    %v5317 = vpop.f32.mrf.mxu0
    %v5318 = vadd.f32 0.0, %v5317
    %v5319 = vpop.f32.mrf.mxu0
    %5320 = vmatprep.mubr.bf16.mxu0 0
    %5321 = vmatmul.mubr.bf16.gmra.mxu0 %v5231
    %v5322 = vpop.f32.mrf.mxu0
    %v5323 = vadd.f32 0.0, %v5322
    %v5324 = vpop.f32.mrf.mxu0
    %v5325 = vpop.f32.mrf.mxu0
    %v5326 = vadd.f32 0.0, %v5325
    %v5327 = vpop.f32.mrf.mxu0
    %5328 = vmatprep.mubr.bf16.mxu0 0
    %5329 = vmatmul.mubr.bf16.gmra.mxu0 %v5234
    %v5330 = vpop.f32.mrf.mxu0
    %v5331 = vadd.f32 0.0, %v5330
    %v5332 = vpop.f32.mrf.mxu0
    %v5333 = vpop.f32.mrf.mxu0
    %v5334 = vadd.f32 0.0, %v5333
    %v5335 = vpop.f32.mrf.mxu0
    %5336 = vmatprep.mubr.bf16.mxu0 0
    %5337 = vmatmul.mubr.bf16.gmra.mxu0 %v5237
    %v5338 = vpop.f32.mrf.mxu0
    %v5339 = vadd.f32 0.0, %v5338
    %v5340 = vpop.f32.mrf.mxu0
    %v5341 = vpop.f32.mrf.mxu0
    %v5342 = vadd.f32 0.0, %v5341
    %v5343 = vpop.f32.mrf.mxu0
    %5344 = vmatprep.mubr.bf16.mxu0 0
    %5345 = vmatmul.mubr.bf16.gmra.mxu0 %v5240
    %v5346 = vpop.f32.mrf.mxu0
    %v5347 = vadd.f32 0.0, %v5346
    %v5348 = vpop.f32.mrf.mxu0
    %v5349 = vpop.f32.mrf.mxu0
    %v5350 = vadd.f32 0.0, %v5349
    %v5351 = vpop.f32.mrf.mxu0
    %5352 = vmatprep.mubr.bf16.mxu0 0
    %5353 = vmatmul.mubr.bf16.gmra.mxu0 %v5243
    %v5354 = vpop.f32.mrf.mxu0
    %v5355 = vadd.f32 0.0, %v5354
    %v5356 = vpop.f32.mrf.mxu0
    %v5357 = vpop.f32.mrf.mxu0
    %v5358 = vadd.f32 0.0, %v5357
    %v5359 = vpop.f32.mrf.mxu0
    %5360 = vmatprep.mubr.bf16.mxu0 0
    %5361 = vmatmul.mubr.bf16.gmra.mxu0 %v5246
    %v5362 = vpop.f32.mrf.mxu0
    %v5363 = vadd.f32 0.0, %v5362
    %v5364 = vpop.f32.mrf.mxu0
    %v5365 = vpop.f32.mrf.mxu0
    %v5366 = vadd.f32 0.0, %v5365
    %v5367 = vpop.f32.mrf.mxu0
    %5368 = vmatprep.mubr.bf16.mxu0 0
    %5369 = vmatmul.mubr.bf16.gmra.mxu0 %v5249
    %v5370 = vpop.f32.mrf.mxu0
    %v5371 = vadd.f32 0.0, %v5370
    %v5372 = vpop.f32.mrf.mxu0
    %v5373 = vpop.f32.mrf.mxu0
    %v5374 = vadd.f32 0.0, %v5373
    %v5375 = vpop.f32.mrf.mxu0
    %5376 = vmatprep.mubr.bf16.mxu0 0
    %5377 = vmatmul.mubr.bf16.gmra.mxu0 %v5252
    %v5378 = vpop.f32.mrf.mxu0
    %v5379 = vadd.f32 0.0, %v5378
    %v5380 = vpop.f32.mrf.mxu0
    %v5381 = vpop.f32.mrf.mxu0
    %v5382 = vadd.f32 0.0, %v5381
    %v5383 = vpop.f32.mrf.mxu0
    %5384 = vmatprep.mubr.bf16.mxu0 0
    %5385 = vmatmul.mubr.bf16.gmra.mxu0 %v5255
    %v5386 = vpop.f32.mrf.mxu0
    %v5387 = vadd.f32 0.0, %v5386
    %v5388 = vpop.f32.mrf.mxu0
    %v5389 = vpop.f32.mrf.mxu0
    %v5390 = vadd.f32 0.0, %v5389
    %v5391 = vpop.f32.mrf.mxu0
    %5392 = vmatprep.mubr.bf16.mxu0 0
    %5393 = vmatmul.mubr.bf16.gmra.mxu0 %v5258
    %v5394 = vpop.f32.mrf.mxu0
    %v5395 = vadd.f32 0.0, %v5394
    %v5396 = vpop.f32.mrf.mxu0
    %v5397 = vpop.f32.mrf.mxu0
    %v5398 = vadd.f32 0.0, %v5397
    %v5399 = vpop.f32.mrf.mxu0
    %5400 = vmatprep.mubr.bf16.mxu0 0
    %5401 = vmatmul.mubr.bf16.gmra.mxu0 %v5261
    %v5402 = vpop.f32.mrf.mxu0
    %v5403 = vadd.f32 0.0, %v5402
    %v5404 = vpop.f32.mrf.mxu0
    %v5405 = vpop.f32.mrf.mxu0
    %v5406 = vadd.f32 0.0, %v5405
    %v5407 = vpop.f32.mrf.mxu0
    %5408 = vmatprep.mubr.bf16.mxu0 0
    %5409 = vmatmul.mubr.bf16.gmra.mxu0 %v5264
    %v5410 = vpop.f32.mrf.mxu0
    %v5411 = vadd.f32 0.0, %v5410
    %v5412 = vpop.f32.mrf.mxu0
    %v5413 = vpop.f32.mrf.mxu0
    %v5414 = vadd.f32 0.0, %v5413
    %v5415 = vpop.f32.mrf.mxu0
    %5416 = vmatprep.mubr.bf16.mxu0 0
    %5417 = vmatmul.mubr.bf16.gmra.mxu0 %v5267
    %v5418 = vpop.f32.mrf.mxu0
    %v5419 = vadd.f32 0.0, %v5418
    %v5420 = vpop.f32.mrf.mxu0
    %v5421 = vpop.f32.mrf.mxu0
    %v5422 = vadd.f32 0.0, %v5421
    %v5423 = vpop.f32.mrf.mxu0
    %5424 = vmatprep.mubr.bf16.mxu0 0
    %5425 = vmatmul.mubr.bf16.gmra.mxu0 %v5270
    %v5426 = vpop.f32.mrf.mxu0
    %v5427 = vadd.f32 0.0, %v5426
    %v5428 = vpop.f32.mrf.mxu0
    %v5429 = vpop.f32.mrf.mxu0
    %v5430 = vadd.f32 0.0, %v5429
    %v5431 = vpop.f32.mrf.mxu0
    %5432 = vdwg.mxu0
    %v5433 = vlaneseq
    %v5434 = vshrl.u32 %v5433, 7
    %v5435 = vsub.s32 0, %v5434
    %v5436 = vrot.slane %v5102, %v5435
    %v5437 = vadd.f32 %v5436, %v5307
    %v5438 = vadd.f32 %v5436, %v5310
    %v5439 = vadd.f32 %v5436, %v5315
    %v5440 = vadd.f32 %v5436, %v5318
    %v5441 = vadd.f32 %v5436, %v5323
    %v5442 = vadd.f32 %v5436, %v5326
    %v5443 = vadd.f32 %v5436, %v5331
    %v5444 = vadd.f32 %v5436, %v5334
    %v5445 = vadd.f32 %v5436, %v5339
    %v5446 = vadd.f32 %v5436, %v5342
    %v5447 = vadd.f32 %v5436, %v5347
    %v5448 = vadd.f32 %v5436, %v5350
    %v5449 = vadd.f32 %v5436, %v5355
    %v5450 = vadd.f32 %v5436, %v5358
    %v5451 = vadd.f32 %v5436, %v5363
    %v5452 = vadd.f32 %v5436, %v5366
    %v5453 = vadd.f32 %v5436, %v5371
    %v5454 = vadd.f32 %v5436, %v5374
    %v5455 = vadd.f32 %v5436, %v5379
    %v5456 = vadd.f32 %v5436, %v5382
    %v5457 = vadd.f32 %v5436, %v5387
    %v5458 = vadd.f32 %v5436, %v5390
    %v5459 = vadd.f32 %v5436, %v5395
    %v5460 = vadd.f32 %v5436, %v5398
    %v5461 = vadd.f32 %v5436, %v5403
    %v5462 = vadd.f32 %v5436, %v5406
    %v5463 = vadd.f32 %v5436, %v5411
    %v5464 = vadd.f32 %v5436, %v5414
    %v5465 = vadd.f32 %v5436, %v5419
    %v5466 = vadd.f32 %v5436, %v5422
    %v5467 = vadd.f32 %v5436, %v5427
    %v5468 = vadd.f32 %v5436, %v5430
    %v5469 = vld [vmem:[#allocation2 + $0x12] sm:$0xff]
    %v5470 = vld [vmem:[#allocation2 + $0x1a] sm:$0xff]
    %v5471 = vld [vmem:[#allocation2 + $0x42] sm:$0xff]
    %v5472 = vld [vmem:[#allocation2 + $0x4a] sm:$0xff]
    %v5473 = vld [vmem:[#allocation2 + $0x72] sm:$0xff]
    %v5474 = vld [vmem:[#allocation2 + $0x7a] sm:$0xff]
    %v5475 = vld [vmem:[#allocation2 + $0xa2] sm:$0xff]
    %v5476 = vld [vmem:[#allocation2 + $0xaa] sm:$0xff]
    %v5477 = vld [vmem:[#allocation2 + $0xd2] sm:$0xff]
    %v5478 = vld [vmem:[#allocation2 + $0xda] sm:$0xff]
    %v5479 = vld [vmem:[#allocation2 + $0x102] sm:$0xff]
    %v5480 = vld [vmem:[#allocation2 + $0x10a] sm:$0xff]
    %v5481 = vld [vmem:[#allocation2 + $0x132] sm:$0xff]
    %v5482 = vld [vmem:[#allocation2 + $0x13a] sm:$0xff]
    %v5483 = vld [vmem:[#allocation2 + $0x162] sm:$0xff]
    %v5484 = vld [vmem:[#allocation2 + $0x16a] sm:$0xff]
    %v5485 = vld [vmem:[#allocation2 + $0x192] sm:$0xff]
    %v5486 = vld [vmem:[#allocation2 + $0x19a] sm:$0xff]
    %v5487 = vld [vmem:[#allocation2 + $0x1c2] sm:$0xff]
    %v5488 = vld [vmem:[#allocation2 + $0x1ca] sm:$0xff]
    %v5489 = vld [vmem:[#allocation2 + $0x1f2] sm:$0xff]
    %v5490 = vld [vmem:[#allocation2 + $0x1fa] sm:$0xff]
    %v5491 = vld [vmem:[#allocation2 + $0x222] sm:$0xff]
    %v5492 = vld [vmem:[#allocation2 + $0x22a] sm:$0xff]
    %v5493 = vld [vmem:[#allocation2 + $0x252] sm:$0xff]
    %v5494 = vld [vmem:[#allocation2 + $0x25a] sm:$0xff]
    %v5495 = vld [vmem:[#allocation2 + $0x282] sm:$0xff]
    %v5496 = vld [vmem:[#allocation2 + $0x28a] sm:$0xff]
    %v5497 = vld [vmem:[#allocation2 + $0x2b2] sm:$0xff]
    %v5498 = vld [vmem:[#allocation2 + $0x2ba] sm:$0xff]
    %v5499 = vld [vmem:[#allocation2 + $0x2e2] sm:$0xff]
    %v5500 = vld [vmem:[#allocation2 + $0x2ea] sm:$0xff]
    %s5501 = scalar_lea.vmem [#allocation7], 440
    %v5502 = vld [vmem:[%s5501] sm:$0xf]
    %v5503 = vld [vmem:[%s5501 + $0x4] sm:$0xf]
    %v5504 = vld [vmem:[%s5501 + $0x8] sm:$0xf]
    %v5505 = vld [vmem:[%s5501 + $0xc] sm:$0xf]
    %v5506 = vld [vmem:[%s5501 + $0x10] sm:$0xf]
    %v5507 = vld [vmem:[%s5501 + $0x14] sm:$0xf]
    %v5508 = vld [vmem:[%s5501 + $0x18] sm:$0xf]
    %v5509 = vld [vmem:[%s5501 + $0x1c] sm:$0xf]
    %v5510 = vld [vmem:[%s5501 + $0x20] sm:$0xf]
    %v5511 = vld [vmem:[%s5501 + $0x24] sm:$0xf]
    %v5512 = vpack.c.bf16 %v5470, %v5469
    %v5513 = vpack.c.bf16 %v5472, %v5471
    %v5514 = vpack.c.bf16 %v5474, %v5473
    %v5515 = vpack.c.bf16 %v5476, %v5475
    %v5516 = vpack.c.bf16 %v5478, %v5477
    %v5517 = vpack.c.bf16 %v5480, %v5479
    %v5518 = vpack.c.bf16 %v5482, %v5481
    %v5519 = vpack.c.bf16 %v5484, %v5483
    %v5520 = vpack.c.bf16 %v5486, %v5485
    %v5521 = vpack.c.bf16 %v5488, %v5487
    %v5522 = vpack.c.bf16 %v5490, %v5489
    %v5523 = vpack.c.bf16 %v5492, %v5491
    %v5524 = vpack.c.bf16 %v5494, %v5493
    %v5525 = vpack.c.bf16 %v5496, %v5495
    %v5526 = vpack.c.bf16 %v5498, %v5497
    %v5527 = vpack.c.bf16 %v5500, %v5499
    %v5538 = vunpack.c.l.b16 %v5502
    %v5539 = vunpack.c.l.b16 %v5503
    %v5540 = vunpack.c.l.b16 %v5504
    %v5541 = vunpack.c.l.b16 %v5505
    %v5542 = vunpack.c.l.b16 %v5506
    %v5543 = vunpack.c.l.b16 %v5507
    %v5544 = vunpack.c.l.b16 %v5508
    %v5545 = vunpack.c.l.b16 %v5509
    %v5546 = vunpack.c.l.b16 %v5510
    %v5547 = vunpack.c.l.b16 %v5511
    %v5548 = vpack.c.b16 %v5539, %v5538
    %v5549 = vpack.c.b16 %v5541, %v5540
    %v5550 = vpack.c.b16 %v5543, %v5542
    %v5551 = vpack.c.b16 %v5545, %v5544
    %v5552 = vpack.c.b16 %v5547, %v5546
    %v5559 = vsel %vm59, %v5512, 0
    %v5562 = vsel %vm59, %v5513, 0
    %v5565 = vsel %vm59, %v5514, 0
    %v5568 = vsel %vm59, %v5515, 0
    %v5571 = vsel %vm59, %v5516, 0
    %v5574 = vsel %vm59, %v5517, 0
    %v5577 = vsel %vm59, %v5518, 0
    %v5580 = vsel %vm59, %v5519, 0
    %v5583 = vsel %vm59, %v5520, 0
    %v5586 = vsel %vm59, %v5521, 0
    %v5589 = vsel %vm59, %v5522, 0
    %v5592 = vsel %vm59, %v5523, 0
    %v5595 = vsel %vm59, %v5524, 0
    %v5598 = vsel %vm59, %v5525, 0
    %v5601 = vsel %vm59, %v5526, 0
    %v5604 = vsel %vm59, %v5527, 0
    %5606 = vmatprep.subr.bf16.mxu0 0
    %5607 = vmatpush1.bf16.msra.mxu0 0
    %5608 = vmatprep.subr.bf16.mxu0 0
    %5609 = vmatpush1.bf16.msra.mxu0 0
    %5610 = vmatprep.subr.bf16.mxu0 0
    %5611 = vmatpush1.bf16.msra.mxu0 0
    %5612 = vmatprep.subr.bf16.mxu0 0
    %5613 = vmatpush1.bf16.msra.mxu0 %v5552
    %5614 = vmatprep.subr.bf16.mxu0 0
    %5615 = vmatpush1.bf16.msra.mxu0 %v5551
    %5616 = vmatprep.subr.bf16.mxu0 0
    %5617 = vmatpush1.bf16.msra.mxu0 %v5550
    %5618 = vmatprep.subr.bf16.mxu0 0
    %5619 = vmatpush1.bf16.msra.mxu0 %v5549
    %5620 = vmatprep.subr.bf16.mxu0 0
    %5621 = vmatpush1.bf16.msra.mxu0 %v5548
    %5622 = vmatprep.subr.bf16.mxu0 0
    %5623 = vmatpush2.bf16.msra.mxu0 0
    %5624 = vmatprep.subr.bf16.mxu0 0
    %5625 = vmatpush2.bf16.msra.mxu0 0
    %5626 = vmatprep.subr.bf16.mxu0 0
    %5627 = vmatpush2.bf16.msra.mxu0 0
    %5628 = vmatprep.subr.bf16.mxu0 0
    %5629 = vmatpush2.bf16.msra.mxu0 0
    %5630 = vmatprep.subr.bf16.mxu0 0
    %5631 = vmatpush2.bf16.msra.mxu0 0
    %5632 = vmatprep.subr.bf16.mxu0 0
    %5633 = vmatpush2.bf16.msra.mxu0 0
    %5634 = vmatprep.subr.bf16.mxu0 0
    %5635 = vmatpush2.bf16.msra.mxu0 0
    %5636 = vmatprep.subr.bf16.mxu0 0
    %5637 = vmatpush2.bf16.msra.mxu0 0
    %5638 = vmatprep.mubr.bf16.mxu0 0
    %5639 = vmatmul.mubr.bf16.gmra.mxu0 %v5559
    %v5640 = vpop.f32.mrf.mxu0
    %v5641 = vadd.f32 0.0, %v5640
    %v5642 = vpop.f32.mrf.mxu0
    %v5643 = vpop.f32.mrf.mxu0
    %v5644 = vadd.f32 0.0, %v5643
    %v5645 = vpop.f32.mrf.mxu0
    %5646 = vmatprep.mubr.bf16.mxu0 0
    %5647 = vmatmul.mubr.bf16.gmra.mxu0 %v5562
    %v5648 = vpop.f32.mrf.mxu0
    %v5649 = vadd.f32 0.0, %v5648
    %v5650 = vpop.f32.mrf.mxu0
    %v5651 = vpop.f32.mrf.mxu0
    %v5652 = vadd.f32 0.0, %v5651
    %v5653 = vpop.f32.mrf.mxu0
    %5654 = vmatprep.mubr.bf16.mxu0 0
    %5655 = vmatmul.mubr.bf16.gmra.mxu0 %v5565
    %v5656 = vpop.f32.mrf.mxu0
    %v5657 = vadd.f32 0.0, %v5656
    %v5658 = vpop.f32.mrf.mxu0
    %v5659 = vpop.f32.mrf.mxu0
    %v5660 = vadd.f32 0.0, %v5659
    %v5661 = vpop.f32.mrf.mxu0
    %5662 = vmatprep.mubr.bf16.mxu0 0
    %5663 = vmatmul.mubr.bf16.gmra.mxu0 %v5568
    %v5664 = vpop.f32.mrf.mxu0
    %v5665 = vadd.f32 0.0, %v5664
    %v5666 = vpop.f32.mrf.mxu0
    %v5667 = vpop.f32.mrf.mxu0
    %v5668 = vadd.f32 0.0, %v5667
    %v5669 = vpop.f32.mrf.mxu0
    %5670 = vmatprep.mubr.bf16.mxu0 0
    %5671 = vmatmul.mubr.bf16.gmra.mxu0 %v5571
    %v5672 = vpop.f32.mrf.mxu0
    %v5673 = vadd.f32 0.0, %v5672
    %v5674 = vpop.f32.mrf.mxu0
    %v5675 = vpop.f32.mrf.mxu0
    %v5676 = vadd.f32 0.0, %v5675
    %v5677 = vpop.f32.mrf.mxu0
    %5678 = vmatprep.mubr.bf16.mxu0 0
    %5679 = vmatmul.mubr.bf16.gmra.mxu0 %v5574
    %v5680 = vpop.f32.mrf.mxu0
    %v5681 = vadd.f32 0.0, %v5680
    %v5682 = vpop.f32.mrf.mxu0
    %v5683 = vpop.f32.mrf.mxu0
    %v5684 = vadd.f32 0.0, %v5683
    %v5685 = vpop.f32.mrf.mxu0
    %5686 = vmatprep.mubr.bf16.mxu0 0
    %5687 = vmatmul.mubr.bf16.gmra.mxu0 %v5577
    %v5688 = vpop.f32.mrf.mxu0
    %v5689 = vadd.f32 0.0, %v5688
    %v5690 = vpop.f32.mrf.mxu0
    %v5691 = vpop.f32.mrf.mxu0
    %v5692 = vadd.f32 0.0, %v5691
    %v5693 = vpop.f32.mrf.mxu0
    %5694 = vmatprep.mubr.bf16.mxu0 0
    %5695 = vmatmul.mubr.bf16.gmra.mxu0 %v5580
    %v5696 = vpop.f32.mrf.mxu0
    %v5697 = vadd.f32 0.0, %v5696
    %v5698 = vpop.f32.mrf.mxu0
    %v5699 = vpop.f32.mrf.mxu0
    %v5700 = vadd.f32 0.0, %v5699
    %v5701 = vpop.f32.mrf.mxu0
    %5702 = vmatprep.mubr.bf16.mxu0 0
    %5703 = vmatmul.mubr.bf16.gmra.mxu0 %v5583
    %v5704 = vpop.f32.mrf.mxu0
    %v5705 = vadd.f32 0.0, %v5704
    %v5706 = vpop.f32.mrf.mxu0
    %v5707 = vpop.f32.mrf.mxu0
    %v5708 = vadd.f32 0.0, %v5707
    %v5709 = vpop.f32.mrf.mxu0
    %5710 = vmatprep.mubr.bf16.mxu0 0
    %5711 = vmatmul.mubr.bf16.gmra.mxu0 %v5586
    %v5712 = vpop.f32.mrf.mxu0
    %v5713 = vadd.f32 0.0, %v5712
    %v5714 = vpop.f32.mrf.mxu0
    %v5715 = vpop.f32.mrf.mxu0
    %v5716 = vadd.f32 0.0, %v5715
    %v5717 = vpop.f32.mrf.mxu0
    %5718 = vmatprep.mubr.bf16.mxu0 0
    %5719 = vmatmul.mubr.bf16.gmra.mxu0 %v5589
    %v5720 = vpop.f32.mrf.mxu0
    %v5721 = vadd.f32 0.0, %v5720
    %v5722 = vpop.f32.mrf.mxu0
    %v5723 = vpop.f32.mrf.mxu0
    %v5724 = vadd.f32 0.0, %v5723
    %v5725 = vpop.f32.mrf.mxu0
    %5726 = vmatprep.mubr.bf16.mxu0 0
    %5727 = vmatmul.mubr.bf16.gmra.mxu0 %v5592
    %v5728 = vpop.f32.mrf.mxu0
    %v5729 = vadd.f32 0.0, %v5728
    %v5730 = vpop.f32.mrf.mxu0
    %v5731 = vpop.f32.mrf.mxu0
    %v5732 = vadd.f32 0.0, %v5731
    %v5733 = vpop.f32.mrf.mxu0
    %5734 = vmatprep.mubr.bf16.mxu0 0
    %5735 = vmatmul.mubr.bf16.gmra.mxu0 %v5595
    %v5736 = vpop.f32.mrf.mxu0
    %v5737 = vadd.f32 0.0, %v5736
    %v5738 = vpop.f32.mrf.mxu0
    %v5739 = vpop.f32.mrf.mxu0
    %v5740 = vadd.f32 0.0, %v5739
    %v5741 = vpop.f32.mrf.mxu0
    %5742 = vmatprep.mubr.bf16.mxu0 0
    %5743 = vmatmul.mubr.bf16.gmra.mxu0 %v5598
    %v5744 = vpop.f32.mrf.mxu0
    %v5745 = vadd.f32 0.0, %v5744
    %v5746 = vpop.f32.mrf.mxu0
    %v5747 = vpop.f32.mrf.mxu0
    %v5748 = vadd.f32 0.0, %v5747
    %v5749 = vpop.f32.mrf.mxu0
    %5750 = vmatprep.mubr.bf16.mxu0 0
    %5751 = vmatmul.mubr.bf16.gmra.mxu0 %v5601
    %v5752 = vpop.f32.mrf.mxu0
    %v5753 = vadd.f32 0.0, %v5752
    %v5754 = vpop.f32.mrf.mxu0
    %v5755 = vpop.f32.mrf.mxu0
    %v5756 = vadd.f32 0.0, %v5755
    %v5757 = vpop.f32.mrf.mxu0
    %5758 = vmatprep.mubr.bf16.mxu0 0
    %5759 = vmatmul.mubr.bf16.gmra.mxu0 %v5604
    %v5760 = vpop.f32.mrf.mxu0
    %v5761 = vadd.f32 0.0, %v5760
    %v5762 = vpop.f32.mrf.mxu0
    %v5763 = vpop.f32.mrf.mxu0
    %v5764 = vadd.f32 0.0, %v5763
    %v5765 = vpop.f32.mrf.mxu0
    %5766 = vdwg.mxu0
    %v5767 = vadd.f32 %v5437, %v5641
    %v5768 = vadd.f32 %v5438, %v5644
    %v5769 = vadd.f32 %v5439, %v5649
    %v5770 = vadd.f32 %v5440, %v5652
    %v5771 = vadd.f32 %v5441, %v5657
    %v5772 = vadd.f32 %v5442, %v5660
    %v5773 = vadd.f32 %v5443, %v5665
    %v5774 = vadd.f32 %v5444, %v5668
    %v5775 = vadd.f32 %v5445, %v5673
    %v5776 = vadd.f32 %v5446, %v5676
    %v5777 = vadd.f32 %v5447, %v5681
    %v5778 = vadd.f32 %v5448, %v5684
    %v5779 = vadd.f32 %v5449, %v5689
    %v5780 = vadd.f32 %v5450, %v5692
    %v5781 = vadd.f32 %v5451, %v5697
    %v5782 = vadd.f32 %v5452, %v5700
    %v5783 = vadd.f32 %v5453, %v5705
    %v5784 = vadd.f32 %v5454, %v5708
    %v5785 = vadd.f32 %v5455, %v5713
    %v5786 = vadd.f32 %v5456, %v5716
    %v5787 = vadd.f32 %v5457, %v5721
    %v5788 = vadd.f32 %v5458, %v5724
    %v5789 = vadd.f32 %v5459, %v5729
    %v5790 = vadd.f32 %v5460, %v5732
    %v5791 = vadd.f32 %v5461, %v5737
    %v5792 = vadd.f32 %v5462, %v5740
    %v5793 = vadd.f32 %v5463, %v5745
    %v5794 = vadd.f32 %v5464, %v5748
    %v5795 = vadd.f32 %v5465, %v5753
    %v5796 = vadd.f32 %v5466, %v5756
    %v5797 = vadd.f32 %v5467, %v5761
    %v5798 = vadd.f32 %v5468, %v5764
    %s5799 = sld [smem:[#allocation4 + $0x7]]
    %vm5800 = vcmp.ge.f32.partialorder %v5767, 0.0
    %vm5801 = vcmp.ge.f32.partialorder %v5768, 0.0
    %vm5802 = vcmp.ge.f32.partialorder %v5769, 0.0
    %vm5803 = vcmp.ge.f32.partialorder %v5770, 0.0
    %vm5804 = vcmp.ge.f32.partialorder %v5771, 0.0
    %vm5805 = vcmp.ge.f32.partialorder %v5772, 0.0
    %vm5806 = vcmp.ge.f32.partialorder %v5773, 0.0
    %vm5807 = vcmp.ge.f32.partialorder %v5774, 0.0
    %vm5808 = vcmp.ge.f32.partialorder %v5775, 0.0
    %vm5809 = vcmp.ge.f32.partialorder %v5776, 0.0
    %vm5810 = vcmp.ge.f32.partialorder %v5777, 0.0
    %vm5811 = vcmp.ge.f32.partialorder %v5778, 0.0
    %vm5812 = vcmp.ge.f32.partialorder %v5779, 0.0
    %vm5813 = vcmp.ge.f32.partialorder %v5780, 0.0
    %vm5814 = vcmp.ge.f32.partialorder %v5781, 0.0
    %vm5815 = vcmp.ge.f32.partialorder %v5782, 0.0
    %vm5816 = vcmp.ge.f32.partialorder %v5783, 0.0
    %vm5817 = vcmp.ge.f32.partialorder %v5784, 0.0
    %vm5818 = vcmp.ge.f32.partialorder %v5785, 0.0
    %vm5819 = vcmp.ge.f32.partialorder %v5786, 0.0
    %vm5820 = vcmp.ge.f32.partialorder %v5787, 0.0
    %vm5821 = vcmp.ge.f32.partialorder %v5788, 0.0
    %vm5822 = vcmp.ge.f32.partialorder %v5789, 0.0
    %vm5823 = vcmp.ge.f32.partialorder %v5790, 0.0
    %vm5824 = vcmp.ge.f32.partialorder %v5791, 0.0
    %vm5825 = vcmp.ge.f32.partialorder %v5792, 0.0
    %vm5826 = vcmp.ge.f32.partialorder %v5793, 0.0
    %vm5827 = vcmp.ge.f32.partialorder %v5794, 0.0
    %vm5828 = vcmp.ge.f32.partialorder %v5795, 0.0
    %vm5829 = vcmp.ge.f32.partialorder %v5796, 0.0
    %vm5830 = vcmp.ge.f32.partialorder %v5797, 0.0
    %vm5831 = vcmp.ge.f32.partialorder %v5798, 0.0
    %v5832 = vstv %s5799
    %v5833 = vmul.f32 %v5832, %v5767
    %v5834 = vmul.f32 %v5832, %v5768
    %v5835 = vmul.f32 %v5832, %v5769
    %v5836 = vmul.f32 %v5832, %v5770
    %v5837 = vmul.f32 %v5832, %v5771
    %v5838 = vmul.f32 %v5832, %v5772
    %v5839 = vmul.f32 %v5832, %v5773
    %v5840 = vmul.f32 %v5832, %v5774
    %v5841 = vmul.f32 %v5832, %v5775
    %v5842 = vmul.f32 %v5832, %v5776
    %v5843 = vmul.f32 %v5832, %v5777
    %v5844 = vmul.f32 %v5832, %v5778
    %v5845 = vmul.f32 %v5832, %v5779
    %v5846 = vmul.f32 %v5832, %v5780
    %v5847 = vmul.f32 %v5832, %v5781
    %v5848 = vmul.f32 %v5832, %v5782
    %v5849 = vmul.f32 %v5832, %v5783
    %v5850 = vmul.f32 %v5832, %v5784
    %v5851 = vmul.f32 %v5832, %v5785
    %v5852 = vmul.f32 %v5832, %v5786
    %v5853 = vmul.f32 %v5832, %v5787
    %v5854 = vmul.f32 %v5832, %v5788
    %v5855 = vmul.f32 %v5832, %v5789
    %v5856 = vmul.f32 %v5832, %v5790
    %v5857 = vmul.f32 %v5832, %v5791
    %v5858 = vmul.f32 %v5832, %v5792
    %v5859 = vmul.f32 %v5832, %v5793
    %v5860 = vmul.f32 %v5832, %v5794
    %v5861 = vmul.f32 %v5832, %v5795
    %v5862 = vmul.f32 %v5832, %v5796
    %v5863 = vmul.f32 %v5832, %v5797
    %v5864 = vmul.f32 %v5832, %v5798
    %v5865 = vsel %vm5800, %v5767, %v5833
    %v5866 = vsel %vm5801, %v5768, %v5834
    %v5867 = vsel %vm5802, %v5769, %v5835
    %v5868 = vsel %vm5803, %v5770, %v5836
    %v5869 = vsel %vm5804, %v5771, %v5837
    %v5870 = vsel %vm5805, %v5772, %v5838
    %v5871 = vsel %vm5806, %v5773, %v5839
    %v5872 = vsel %vm5807, %v5774, %v5840
    %v5873 = vsel %vm5808, %v5775, %v5841
    %v5874 = vsel %vm5809, %v5776, %v5842
    %v5875 = vsel %vm5810, %v5777, %v5843
    %v5876 = vsel %vm5811, %v5778, %v5844
    %v5877 = vsel %vm5812, %v5779, %v5845
    %v5878 = vsel %vm5813, %v5780, %v5846
    %v5879 = vsel %vm5814, %v5781, %v5847
    %v5880 = vsel %vm5815, %v5782, %v5848
    %v5881 = vsel %vm5816, %v5783, %v5849
    %v5882 = vsel %vm5817, %v5784, %v5850
    %v5883 = vsel %vm5818, %v5785, %v5851
    %v5884 = vsel %vm5819, %v5786, %v5852
    %v5885 = vsel %vm5820, %v5787, %v5853
    %v5886 = vsel %vm5821, %v5788, %v5854
    %v5887 = vsel %vm5822, %v5789, %v5855
    %v5888 = vsel %vm5823, %v5790, %v5856
    %v5889 = vsel %vm5824, %v5791, %v5857
    %v5890 = vsel %vm5825, %v5792, %v5858
    %v5891 = vsel %vm5826, %v5793, %v5859
    %v5892 = vsel %vm5827, %v5794, %v5860
    %v5893 = vsel %vm5828, %v5795, %v5861
    %v5894 = vsel %vm5829, %v5796, %v5862
    %v5895 = vsel %vm5830, %v5797, %v5863
    %v5896 = vsel %vm5831, %v5798, %v5864
    %v5897 = vadd.f32 %v5865, %v4275
    %v5898 = vadd.f32 %v5866, %v4276
    %v5899 = vadd.f32 %v5867, %v4277
    %v5900 = vadd.f32 %v5868, %v4278
    %v5901 = vadd.f32 %v5869, %v4279
    %v5902 = vadd.f32 %v5870, %v4280
    %v5903 = vadd.f32 %v5871, %v4281
    %v5904 = vadd.f32 %v5872, %v4282
    %v5905 = vadd.f32 %v5873, %v4283
    %v5906 = vadd.f32 %v5874, %v4284
    %v5907 = vadd.f32 %v5875, %v4285
    %v5908 = vadd.f32 %v5876, %v4286
    %v5909 = vadd.f32 %v5877, %v4287
    %v5910 = vadd.f32 %v5878, %v4288
    %v5911 = vadd.f32 %v5879, %v4289
    %v5912 = vadd.f32 %v5880, %v4290
    %v5913 = vadd.f32 %v5881, %v4291
    %v5914 = vadd.f32 %v5882, %v4292
    %v5915 = vadd.f32 %v5883, %v4293
    %v5916 = vadd.f32 %v5884, %v4294
    %v5917 = vadd.f32 %v5885, %v4295
    %v5918 = vadd.f32 %v5886, %v4296
    %v5919 = vadd.f32 %v5887, %v4297
    %v5920 = vadd.f32 %v5888, %v4298
    %v5921 = vadd.f32 %v5889, %v4299
    %v5922 = vadd.f32 %v5890, %v4300
    %v5923 = vadd.f32 %v5891, %v4301
    %v5924 = vadd.f32 %v5892, %v4302
    %v5925 = vadd.f32 %v5893, %v4303
    %v5926 = vadd.f32 %v5894, %v4304
    %v5927 = vadd.f32 %v5895, %v4305
    %v5928 = vadd.f32 %v5896, %v4306
    %v5929 = vld [vmem:[%s6 + $0x9] sm:$0x1]
    %5930 = vst.msk [vmem:[#allocation2 + $0x10] sm:$0xff] %vm59, %v5897
    %5931 = vst.msk [vmem:[#allocation2 + $0x18] sm:$0xff] %vm59, %v5898
    %5932 = vst.msk [vmem:[#allocation2 + $0x40] sm:$0xff] %vm59, %v5899
    %5933 = vst.msk [vmem:[#allocation2 + $0x48] sm:$0xff] %vm59, %v5900
    %5934 = vst.msk [vmem:[#allocation2 + $0x70] sm:$0xff] %vm59, %v5901
    %5935 = vst.msk [vmem:[#allocation2 + $0x78] sm:$0xff] %vm59, %v5902
    %5936 = vst.msk [vmem:[#allocation2 + $0xa0] sm:$0xff] %vm59, %v5903
    %5937 = vst.msk [vmem:[#allocation2 + $0xa8] sm:$0xff] %vm59, %v5904
    %5938 = vst.msk [vmem:[#allocation2 + $0xd0] sm:$0xff] %vm59, %v5905
    %5939 = vst.msk [vmem:[#allocation2 + $0xd8] sm:$0xff] %vm59, %v5906
    %5940 = vst.msk [vmem:[#allocation2 + $0x100] sm:$0xff] %vm59, %v5907
    %5941 = vst.msk [vmem:[#allocation2 + $0x108] sm:$0xff] %vm59, %v5908
    %5942 = vst.msk [vmem:[#allocation2 + $0x130] sm:$0xff] %vm59, %v5909
    %5943 = vst.msk [vmem:[#allocation2 + $0x138] sm:$0xff] %vm59, %v5910
    %5944 = vst.msk [vmem:[#allocation2 + $0x160] sm:$0xff] %vm59, %v5911
    %5945 = vst.msk [vmem:[#allocation2 + $0x168] sm:$0xff] %vm59, %v5912
    %5946 = vst.msk [vmem:[#allocation2 + $0x190] sm:$0xff] %vm59, %v5913
    %5947 = vst.msk [vmem:[#allocation2 + $0x198] sm:$0xff] %vm59, %v5914
    %5948 = vst.msk [vmem:[#allocation2 + $0x1c0] sm:$0xff] %vm59, %v5915
    %5949 = vst.msk [vmem:[#allocation2 + $0x1c8] sm:$0xff] %vm59, %v5916
    %5950 = vst.msk [vmem:[#allocation2 + $0x1f0] sm:$0xff] %vm59, %v5917
    %5951 = vst.msk [vmem:[#allocation2 + $0x1f8] sm:$0xff] %vm59, %v5918
    %5952 = vst.msk [vmem:[#allocation2 + $0x220] sm:$0xff] %vm59, %v5919
    %5953 = vst.msk [vmem:[#allocation2 + $0x228] sm:$0xff] %vm59, %v5920
    %5954 = vst.msk [vmem:[#allocation2 + $0x250] sm:$0xff] %vm59, %v5921
    %5955 = vst.msk [vmem:[#allocation2 + $0x258] sm:$0xff] %vm59, %v5922
    %5956 = vst.msk [vmem:[#allocation2 + $0x280] sm:$0xff] %vm59, %v5923
    %5957 = vst.msk [vmem:[#allocation2 + $0x288] sm:$0xff] %vm59, %v5924
    %5958 = vst.msk [vmem:[#allocation2 + $0x2b0] sm:$0xff] %vm59, %v5925
    %5959 = vst.msk [vmem:[#allocation2 + $0x2b8] sm:$0xff] %vm59, %v5926
    %5960 = vst.msk [vmem:[#allocation2 + $0x2e0] sm:$0xff] %vm59, %v5927
    %5961 = vst.msk [vmem:[#allocation2 + $0x2e8] sm:$0xff] %vm59, %v5928
    %v5962 = vld [vmem:[#allocation2 + $0xc] sm:$0xff]
    %v5963 = vld [vmem:[#allocation2 + $0x14] sm:$0xff]
    %v5964 = vld [vmem:[#allocation2 + $0x3c] sm:$0xff]
    %v5965 = vld [vmem:[#allocation2 + $0x44] sm:$0xff]
    %v5966 = vld [vmem:[#allocation2 + $0x6c] sm:$0xff]
    %v5967 = vld [vmem:[#allocation2 + $0x74] sm:$0xff]
    %v5968 = vld [vmem:[#allocation2 + $0x9c] sm:$0xff]
    %v5969 = vld [vmem:[#allocation2 + $0xa4] sm:$0xff]
    %v5970 = vld [vmem:[#allocation2 + $0xcc] sm:$0xff]
    %v5971 = vld [vmem:[#allocation2 + $0xd4] sm:$0xff]
    %v5972 = vld [vmem:[#allocation2 + $0xfc] sm:$0xff]
    %v5973 = vld [vmem:[#allocation2 + $0x104] sm:$0xff]
    %v5974 = vld [vmem:[#allocation2 + $0x12c] sm:$0xff]
    %v5975 = vld [vmem:[#allocation2 + $0x134] sm:$0xff]
    %v5976 = vld [vmem:[#allocation2 + $0x15c] sm:$0xff]
    %v5977 = vld [vmem:[#allocation2 + $0x164] sm:$0xff]
    %v5978 = vld [vmem:[#allocation2 + $0x18c] sm:$0xff]
    %v5979 = vld [vmem:[#allocation2 + $0x194] sm:$0xff]
    %v5980 = vld [vmem:[#allocation2 + $0x1bc] sm:$0xff]
    %v5981 = vld [vmem:[#allocation2 + $0x1c4] sm:$0xff]
    %v5982 = vld [vmem:[#allocation2 + $0x1ec] sm:$0xff]
    %v5983 = vld [vmem:[#allocation2 + $0x1f4] sm:$0xff]
    %v5984 = vld [vmem:[#allocation2 + $0x21c] sm:$0xff]
    %v5985 = vld [vmem:[#allocation2 + $0x224] sm:$0xff]
    %v5986 = vld [vmem:[#allocation2 + $0x24c] sm:$0xff]
    %v5987 = vld [vmem:[#allocation2 + $0x254] sm:$0xff]
    %v5988 = vld [vmem:[#allocation2 + $0x27c] sm:$0xff]
    %v5989 = vld [vmem:[#allocation2 + $0x284] sm:$0xff]
    %v5990 = vld [vmem:[#allocation2 + $0x2ac] sm:$0xff]
    %v5991 = vld [vmem:[#allocation2 + $0x2b4] sm:$0xff]
    %v5992 = vld [vmem:[#allocation2 + $0x2dc] sm:$0xff]
    %v5993 = vld [vmem:[#allocation2 + $0x2e4] sm:$0xff]
    %s5994 = scalar_lea.vmem [#allocation7], 480
    %v5995 = vld [vmem:[%s5994] sm:$0xf]
    %v5996 = vld [vmem:[%s5994 + $0x4] sm:$0xf]
    %v5997 = vld [vmem:[%s5994 + $0x8] sm:$0xf]
    %v5998 = vld [vmem:[%s5994 + $0xc] sm:$0xf]
    %v5999 = vld [vmem:[%s5994 + $0x10] sm:$0xf]
    %v6000 = vld [vmem:[%s5994 + $0x14] sm:$0xf]
    %v6001 = vld [vmem:[%s5994 + $0x18] sm:$0xf]
    %v6002 = vld [vmem:[%s5994 + $0x1c] sm:$0xf]
    %v6003 = vld [vmem:[%s5994 + $0x20] sm:$0xf]
    %v6004 = vld [vmem:[%s5994 + $0x24] sm:$0xf]
    %v6005 = vpack.c.bf16 %v5963, %v5962
    %v6006 = vpack.c.bf16 %v5965, %v5964
    %v6007 = vpack.c.bf16 %v5967, %v5966
    %v6008 = vpack.c.bf16 %v5969, %v5968
    %v6009 = vpack.c.bf16 %v5971, %v5970
    %v6010 = vpack.c.bf16 %v5973, %v5972
    %v6011 = vpack.c.bf16 %v5975, %v5974
    %v6012 = vpack.c.bf16 %v5977, %v5976
    %v6013 = vpack.c.bf16 %v5979, %v5978
    %v6014 = vpack.c.bf16 %v5981, %v5980
    %v6015 = vpack.c.bf16 %v5983, %v5982
    %v6016 = vpack.c.bf16 %v5985, %v5984
    %v6017 = vpack.c.bf16 %v5987, %v5986
    %v6018 = vpack.c.bf16 %v5989, %v5988
    %v6019 = vpack.c.bf16 %v5991, %v5990
    %v6020 = vpack.c.bf16 %v5993, %v5992
    %v6031 = vunpack.c.l.b16 %v5995
    %v6032 = vunpack.c.l.b16 %v5996
    %v6033 = vunpack.c.l.b16 %v5997
    %v6034 = vunpack.c.l.b16 %v5998
    %v6035 = vunpack.c.l.b16 %v5999
    %v6036 = vunpack.c.l.b16 %v6000
    %v6037 = vunpack.c.l.b16 %v6001
    %v6038 = vunpack.c.l.b16 %v6002
    %v6039 = vunpack.c.l.b16 %v6003
    %v6040 = vunpack.c.l.b16 %v6004
    %v6041 = vpack.c.b16 %v6032, %v6031
    %v6042 = vpack.c.b16 %v6034, %v6033
    %v6043 = vpack.c.b16 %v6036, %v6035
    %v6044 = vpack.c.b16 %v6038, %v6037
    %v6045 = vpack.c.b16 %v6040, %v6039
    %v6052 = vsel %vm59, %v6005, 0
    %v6055 = vsel %vm59, %v6006, 0
    %v6058 = vsel %vm59, %v6007, 0
    %v6061 = vsel %vm59, %v6008, 0
    %v6064 = vsel %vm59, %v6009, 0
    %v6067 = vsel %vm59, %v6010, 0
    %v6070 = vsel %vm59, %v6011, 0
    %v6073 = vsel %vm59, %v6012, 0
    %v6076 = vsel %vm59, %v6013, 0
    %v6079 = vsel %vm59, %v6014, 0
    %v6082 = vsel %vm59, %v6015, 0
    %v6085 = vsel %vm59, %v6016, 0
    %v6088 = vsel %vm59, %v6017, 0
    %v6091 = vsel %vm59, %v6018, 0
    %v6094 = vsel %vm59, %v6019, 0
    %v6097 = vsel %vm59, %v6020, 0
    %6099 = vmatprep.subr.bf16.mxu0 0
    %6100 = vmatpush1.bf16.msra.mxu0 0
    %6101 = vmatprep.subr.bf16.mxu0 0
    %6102 = vmatpush1.bf16.msra.mxu0 0
    %6103 = vmatprep.subr.bf16.mxu0 0
    %6104 = vmatpush1.bf16.msra.mxu0 0
    %6105 = vmatprep.subr.bf16.mxu0 0
    %6106 = vmatpush1.bf16.msra.mxu0 %v6045
    %6107 = vmatprep.subr.bf16.mxu0 0
    %6108 = vmatpush1.bf16.msra.mxu0 %v6044
    %6109 = vmatprep.subr.bf16.mxu0 0
    %6110 = vmatpush1.bf16.msra.mxu0 %v6043
    %6111 = vmatprep.subr.bf16.mxu0 0
    %6112 = vmatpush1.bf16.msra.mxu0 %v6042
    %6113 = vmatprep.subr.bf16.mxu0 0
    %6114 = vmatpush1.bf16.msra.mxu0 %v6041
    %6115 = vmatprep.subr.bf16.mxu0 0
    %6116 = vmatpush2.bf16.msra.mxu0 0
    %6117 = vmatprep.subr.bf16.mxu0 0
    %6118 = vmatpush2.bf16.msra.mxu0 0
    %6119 = vmatprep.subr.bf16.mxu0 0
    %6120 = vmatpush2.bf16.msra.mxu0 0
    %6121 = vmatprep.subr.bf16.mxu0 0
    %6122 = vmatpush2.bf16.msra.mxu0 0
    %6123 = vmatprep.subr.bf16.mxu0 0
    %6124 = vmatpush2.bf16.msra.mxu0 0
    %6125 = vmatprep.subr.bf16.mxu0 0
    %6126 = vmatpush2.bf16.msra.mxu0 0
    %6127 = vmatprep.subr.bf16.mxu0 0
    %6128 = vmatpush2.bf16.msra.mxu0 0
    %6129 = vmatprep.subr.bf16.mxu0 0
    %6130 = vmatpush2.bf16.msra.mxu0 0
    %6131 = vmatprep.mubr.bf16.mxu0 0
    %6132 = vmatmul.mubr.bf16.gmra.mxu0 %v6052
    %v6133 = vpop.f32.mrf.mxu0
    %v6134 = vadd.f32 0.0, %v6133
    %v6135 = vpop.f32.mrf.mxu0
    %v6136 = vpop.f32.mrf.mxu0
    %v6137 = vadd.f32 0.0, %v6136
    %v6138 = vpop.f32.mrf.mxu0
    %6139 = vmatprep.mubr.bf16.mxu0 0
    %6140 = vmatmul.mubr.bf16.gmra.mxu0 %v6055
    %v6141 = vpop.f32.mrf.mxu0
    %v6142 = vadd.f32 0.0, %v6141
    %v6143 = vpop.f32.mrf.mxu0
    %v6144 = vpop.f32.mrf.mxu0
    %v6145 = vadd.f32 0.0, %v6144
    %v6146 = vpop.f32.mrf.mxu0
    %6147 = vmatprep.mubr.bf16.mxu0 0
    %6148 = vmatmul.mubr.bf16.gmra.mxu0 %v6058
    %v6149 = vpop.f32.mrf.mxu0
    %v6150 = vadd.f32 0.0, %v6149
    %v6151 = vpop.f32.mrf.mxu0
    %v6152 = vpop.f32.mrf.mxu0
    %v6153 = vadd.f32 0.0, %v6152
    %v6154 = vpop.f32.mrf.mxu0
    %6155 = vmatprep.mubr.bf16.mxu0 0
    %6156 = vmatmul.mubr.bf16.gmra.mxu0 %v6061
    %v6157 = vpop.f32.mrf.mxu0
    %v6158 = vadd.f32 0.0, %v6157
    %v6159 = vpop.f32.mrf.mxu0
    %v6160 = vpop.f32.mrf.mxu0
    %v6161 = vadd.f32 0.0, %v6160
    %v6162 = vpop.f32.mrf.mxu0
    %6163 = vmatprep.mubr.bf16.mxu0 0
    %6164 = vmatmul.mubr.bf16.gmra.mxu0 %v6064
    %v6165 = vpop.f32.mrf.mxu0
    %v6166 = vadd.f32 0.0, %v6165
    %v6167 = vpop.f32.mrf.mxu0
    %v6168 = vpop.f32.mrf.mxu0
    %v6169 = vadd.f32 0.0, %v6168
    %v6170 = vpop.f32.mrf.mxu0
    %6171 = vmatprep.mubr.bf16.mxu0 0
    %6172 = vmatmul.mubr.bf16.gmra.mxu0 %v6067
    %v6173 = vpop.f32.mrf.mxu0
    %v6174 = vadd.f32 0.0, %v6173
    %v6175 = vpop.f32.mrf.mxu0
    %v6176 = vpop.f32.mrf.mxu0
    %v6177 = vadd.f32 0.0, %v6176
    %v6178 = vpop.f32.mrf.mxu0
    %6179 = vmatprep.mubr.bf16.mxu0 0
    %6180 = vmatmul.mubr.bf16.gmra.mxu0 %v6070
    %v6181 = vpop.f32.mrf.mxu0
    %v6182 = vadd.f32 0.0, %v6181
    %v6183 = vpop.f32.mrf.mxu0
    %v6184 = vpop.f32.mrf.mxu0
    %v6185 = vadd.f32 0.0, %v6184
    %v6186 = vpop.f32.mrf.mxu0
    %6187 = vmatprep.mubr.bf16.mxu0 0
    %6188 = vmatmul.mubr.bf16.gmra.mxu0 %v6073
    %v6189 = vpop.f32.mrf.mxu0
    %v6190 = vadd.f32 0.0, %v6189
    %v6191 = vpop.f32.mrf.mxu0
    %v6192 = vpop.f32.mrf.mxu0
    %v6193 = vadd.f32 0.0, %v6192
    %v6194 = vpop.f32.mrf.mxu0
    %6195 = vmatprep.mubr.bf16.mxu0 0
    %6196 = vmatmul.mubr.bf16.gmra.mxu0 %v6076
    %v6197 = vpop.f32.mrf.mxu0
    %v6198 = vadd.f32 0.0, %v6197
    %v6199 = vpop.f32.mrf.mxu0
    %v6200 = vpop.f32.mrf.mxu0
    %v6201 = vadd.f32 0.0, %v6200
    %v6202 = vpop.f32.mrf.mxu0
    %6203 = vmatprep.mubr.bf16.mxu0 0
    %6204 = vmatmul.mubr.bf16.gmra.mxu0 %v6079
    %v6205 = vpop.f32.mrf.mxu0
    %v6206 = vadd.f32 0.0, %v6205
    %v6207 = vpop.f32.mrf.mxu0
    %v6208 = vpop.f32.mrf.mxu0
    %v6209 = vadd.f32 0.0, %v6208
    %v6210 = vpop.f32.mrf.mxu0
    %6211 = vmatprep.mubr.bf16.mxu0 0
    %6212 = vmatmul.mubr.bf16.gmra.mxu0 %v6082
    %v6213 = vpop.f32.mrf.mxu0
    %v6214 = vadd.f32 0.0, %v6213
    %v6215 = vpop.f32.mrf.mxu0
    %v6216 = vpop.f32.mrf.mxu0
    %v6217 = vadd.f32 0.0, %v6216
    %v6218 = vpop.f32.mrf.mxu0
    %6219 = vmatprep.mubr.bf16.mxu0 0
    %6220 = vmatmul.mubr.bf16.gmra.mxu0 %v6085
    %v6221 = vpop.f32.mrf.mxu0
    %v6222 = vadd.f32 0.0, %v6221
    %v6223 = vpop.f32.mrf.mxu0
    %v6224 = vpop.f32.mrf.mxu0
    %v6225 = vadd.f32 0.0, %v6224
    %v6226 = vpop.f32.mrf.mxu0
    %6227 = vmatprep.mubr.bf16.mxu0 0
    %6228 = vmatmul.mubr.bf16.gmra.mxu0 %v6088
    %v6229 = vpop.f32.mrf.mxu0
    %v6230 = vadd.f32 0.0, %v6229
    %v6231 = vpop.f32.mrf.mxu0
    %v6232 = vpop.f32.mrf.mxu0
    %v6233 = vadd.f32 0.0, %v6232
    %v6234 = vpop.f32.mrf.mxu0
    %6235 = vmatprep.mubr.bf16.mxu0 0
    %6236 = vmatmul.mubr.bf16.gmra.mxu0 %v6091
    %v6237 = vpop.f32.mrf.mxu0
    %v6238 = vadd.f32 0.0, %v6237
    %v6239 = vpop.f32.mrf.mxu0
    %v6240 = vpop.f32.mrf.mxu0
    %v6241 = vadd.f32 0.0, %v6240
    %v6242 = vpop.f32.mrf.mxu0
    %6243 = vmatprep.mubr.bf16.mxu0 0
    %6244 = vmatmul.mubr.bf16.gmra.mxu0 %v6094
    %v6245 = vpop.f32.mrf.mxu0
    %v6246 = vadd.f32 0.0, %v6245
    %v6247 = vpop.f32.mrf.mxu0
    %v6248 = vpop.f32.mrf.mxu0
    %v6249 = vadd.f32 0.0, %v6248
    %v6250 = vpop.f32.mrf.mxu0
    %6251 = vmatprep.mubr.bf16.mxu0 0
    %6252 = vmatmul.mubr.bf16.gmra.mxu0 %v6097
    %v6253 = vpop.f32.mrf.mxu0
    %v6254 = vadd.f32 0.0, %v6253
    %v6255 = vpop.f32.mrf.mxu0
    %v6256 = vpop.f32.mrf.mxu0
    %v6257 = vadd.f32 0.0, %v6256
    %v6258 = vpop.f32.mrf.mxu0
    %6259 = vdwg.mxu0
    %v6260 = vlaneseq
    %v6261 = vshrl.u32 %v6260, 7
    %v6262 = vsub.s32 0, %v6261
    %v6263 = vrot.slane %v5929, %v6262
    %v6264 = vadd.f32 %v6263, %v6134
    %v6265 = vadd.f32 %v6263, %v6137
    %v6266 = vadd.f32 %v6263, %v6142
    %v6267 = vadd.f32 %v6263, %v6145
    %v6268 = vadd.f32 %v6263, %v6150
    %v6269 = vadd.f32 %v6263, %v6153
    %v6270 = vadd.f32 %v6263, %v6158
    %v6271 = vadd.f32 %v6263, %v6161
    %v6272 = vadd.f32 %v6263, %v6166
    %v6273 = vadd.f32 %v6263, %v6169
    %v6274 = vadd.f32 %v6263, %v6174
    %v6275 = vadd.f32 %v6263, %v6177
    %v6276 = vadd.f32 %v6263, %v6182
    %v6277 = vadd.f32 %v6263, %v6185
    %v6278 = vadd.f32 %v6263, %v6190
    %v6279 = vadd.f32 %v6263, %v6193
    %v6280 = vadd.f32 %v6263, %v6198
    %v6281 = vadd.f32 %v6263, %v6201
    %v6282 = vadd.f32 %v6263, %v6206
    %v6283 = vadd.f32 %v6263, %v6209
    %v6284 = vadd.f32 %v6263, %v6214
    %v6285 = vadd.f32 %v6263, %v6217
    %v6286 = vadd.f32 %v6263, %v6222
    %v6287 = vadd.f32 %v6263, %v6225
    %v6288 = vadd.f32 %v6263, %v6230
    %v6289 = vadd.f32 %v6263, %v6233
    %v6290 = vadd.f32 %v6263, %v6238
    %v6291 = vadd.f32 %v6263, %v6241
    %v6292 = vadd.f32 %v6263, %v6246
    %v6293 = vadd.f32 %v6263, %v6249
    %v6294 = vadd.f32 %v6263, %v6254
    %v6295 = vadd.f32 %v6263, %v6257
    %v6296 = vld [vmem:[#allocation2 + $0x14] sm:$0xff]
    %v6297 = vld [vmem:[#allocation2 + $0x1c] sm:$0xff]
    %v6298 = vld [vmem:[#allocation2 + $0x44] sm:$0xff]
    %v6299 = vld [vmem:[#allocation2 + $0x4c] sm:$0xff]
    %v6300 = vld [vmem:[#allocation2 + $0x74] sm:$0xff]
    %v6301 = vld [vmem:[#allocation2 + $0x7c] sm:$0xff]
    %v6302 = vld [vmem:[#allocation2 + $0xa4] sm:$0xff]
    %v6303 = vld [vmem:[#allocation2 + $0xac] sm:$0xff]
    %v6304 = vld [vmem:[#allocation2 + $0xd4] sm:$0xff]
    %v6305 = vld [vmem:[#allocation2 + $0xdc] sm:$0xff]
    %v6306 = vld [vmem:[#allocation2 + $0x104] sm:$0xff]
    %v6307 = vld [vmem:[#allocation2 + $0x10c] sm:$0xff]
    %v6308 = vld [vmem:[#allocation2 + $0x134] sm:$0xff]
    %v6309 = vld [vmem:[#allocation2 + $0x13c] sm:$0xff]
    %v6310 = vld [vmem:[#allocation2 + $0x164] sm:$0xff]
    %v6311 = vld [vmem:[#allocation2 + $0x16c] sm:$0xff]
    %v6312 = vld [vmem:[#allocation2 + $0x194] sm:$0xff]
    %v6313 = vld [vmem:[#allocation2 + $0x19c] sm:$0xff]
    %v6314 = vld [vmem:[#allocation2 + $0x1c4] sm:$0xff]
    %v6315 = vld [vmem:[#allocation2 + $0x1cc] sm:$0xff]
    %v6316 = vld [vmem:[#allocation2 + $0x1f4] sm:$0xff]
    %v6317 = vld [vmem:[#allocation2 + $0x1fc] sm:$0xff]
    %v6318 = vld [vmem:[#allocation2 + $0x224] sm:$0xff]
    %v6319 = vld [vmem:[#allocation2 + $0x22c] sm:$0xff]
    %v6320 = vld [vmem:[#allocation2 + $0x254] sm:$0xff]
    %v6321 = vld [vmem:[#allocation2 + $0x25c] sm:$0xff]
    %v6322 = vld [vmem:[#allocation2 + $0x284] sm:$0xff]
    %v6323 = vld [vmem:[#allocation2 + $0x28c] sm:$0xff]
    %v6324 = vld [vmem:[#allocation2 + $0x2b4] sm:$0xff]
    %v6325 = vld [vmem:[#allocation2 + $0x2bc] sm:$0xff]
    %v6326 = vld [vmem:[#allocation2 + $0x2e4] sm:$0xff]
    %v6327 = vld [vmem:[#allocation2 + $0x2ec] sm:$0xff]
    %s6328 = scalar_lea.vmem [#allocation7], 520
    %v6329 = vld [vmem:[%s6328] sm:$0xf]
    %v6330 = vld [vmem:[%s6328 + $0x4] sm:$0xf]
    %v6331 = vld [vmem:[%s6328 + $0x8] sm:$0xf]
    %v6332 = vld [vmem:[%s6328 + $0xc] sm:$0xf]
    %v6333 = vld [vmem:[%s6328 + $0x10] sm:$0xf]
    %v6334 = vld [vmem:[%s6328 + $0x14] sm:$0xf]
    %v6335 = vld [vmem:[%s6328 + $0x18] sm:$0xf]
    %v6336 = vld [vmem:[%s6328 + $0x1c] sm:$0xf]
    %v6337 = vld [vmem:[%s6328 + $0x20] sm:$0xf]
    %v6338 = vld [vmem:[%s6328 + $0x24] sm:$0xf]
    %v6339 = vpack.c.bf16 %v6297, %v6296
    %v6340 = vpack.c.bf16 %v6299, %v6298
    %v6341 = vpack.c.bf16 %v6301, %v6300
    %v6342 = vpack.c.bf16 %v6303, %v6302
    %v6343 = vpack.c.bf16 %v6305, %v6304
    %v6344 = vpack.c.bf16 %v6307, %v6306
    %v6345 = vpack.c.bf16 %v6309, %v6308
    %v6346 = vpack.c.bf16 %v6311, %v6310
    %v6347 = vpack.c.bf16 %v6313, %v6312
    %v6348 = vpack.c.bf16 %v6315, %v6314
    %v6349 = vpack.c.bf16 %v6317, %v6316
    %v6350 = vpack.c.bf16 %v6319, %v6318
    %v6351 = vpack.c.bf16 %v6321, %v6320
    %v6352 = vpack.c.bf16 %v6323, %v6322
    %v6353 = vpack.c.bf16 %v6325, %v6324
    %v6354 = vpack.c.bf16 %v6327, %v6326
    %v6365 = vunpack.c.l.b16 %v6329
    %v6366 = vunpack.c.l.b16 %v6330
    %v6367 = vunpack.c.l.b16 %v6331
    %v6368 = vunpack.c.l.b16 %v6332
    %v6369 = vunpack.c.l.b16 %v6333
    %v6370 = vunpack.c.l.b16 %v6334
    %v6371 = vunpack.c.l.b16 %v6335
    %v6372 = vunpack.c.l.b16 %v6336
    %v6373 = vunpack.c.l.b16 %v6337
    %v6374 = vunpack.c.l.b16 %v6338
    %v6375 = vpack.c.b16 %v6366, %v6365
    %v6376 = vpack.c.b16 %v6368, %v6367
    %v6377 = vpack.c.b16 %v6370, %v6369
    %v6378 = vpack.c.b16 %v6372, %v6371
    %v6379 = vpack.c.b16 %v6374, %v6373
    %v6386 = vsel %vm59, %v6339, 0
    %v6389 = vsel %vm59, %v6340, 0
    %v6392 = vsel %vm59, %v6341, 0
    %v6395 = vsel %vm59, %v6342, 0
    %v6398 = vsel %vm59, %v6343, 0
    %v6401 = vsel %vm59, %v6344, 0
    %v6404 = vsel %vm59, %v6345, 0
    %v6407 = vsel %vm59, %v6346, 0
    %v6410 = vsel %vm59, %v6347, 0
    %v6413 = vsel %vm59, %v6348, 0
    %v6416 = vsel %vm59, %v6349, 0
    %v6419 = vsel %vm59, %v6350, 0
    %v6422 = vsel %vm59, %v6351, 0
    %v6425 = vsel %vm59, %v6352, 0
    %v6428 = vsel %vm59, %v6353, 0
    %v6431 = vsel %vm59, %v6354, 0
    %6433 = vmatprep.subr.bf16.mxu0 0
    %6434 = vmatpush1.bf16.msra.mxu0 0
    %6435 = vmatprep.subr.bf16.mxu0 0
    %6436 = vmatpush1.bf16.msra.mxu0 0
    %6437 = vmatprep.subr.bf16.mxu0 0
    %6438 = vmatpush1.bf16.msra.mxu0 0
    %6439 = vmatprep.subr.bf16.mxu0 0
    %6440 = vmatpush1.bf16.msra.mxu0 %v6379
    %6441 = vmatprep.subr.bf16.mxu0 0
    %6442 = vmatpush1.bf16.msra.mxu0 %v6378
    %6443 = vmatprep.subr.bf16.mxu0 0
    %6444 = vmatpush1.bf16.msra.mxu0 %v6377
    %6445 = vmatprep.subr.bf16.mxu0 0
    %6446 = vmatpush1.bf16.msra.mxu0 %v6376
    %6447 = vmatprep.subr.bf16.mxu0 0
    %6448 = vmatpush1.bf16.msra.mxu0 %v6375
    %6449 = vmatprep.subr.bf16.mxu0 0
    %6450 = vmatpush2.bf16.msra.mxu0 0
    %6451 = vmatprep.subr.bf16.mxu0 0
    %6452 = vmatpush2.bf16.msra.mxu0 0
    %6453 = vmatprep.subr.bf16.mxu0 0
    %6454 = vmatpush2.bf16.msra.mxu0 0
    %6455 = vmatprep.subr.bf16.mxu0 0
    %6456 = vmatpush2.bf16.msra.mxu0 0
    %6457 = vmatprep.subr.bf16.mxu0 0
    %6458 = vmatpush2.bf16.msra.mxu0 0
    %6459 = vmatprep.subr.bf16.mxu0 0
    %6460 = vmatpush2.bf16.msra.mxu0 0
    %6461 = vmatprep.subr.bf16.mxu0 0
    %6462 = vmatpush2.bf16.msra.mxu0 0
    %6463 = vmatprep.subr.bf16.mxu0 0
    %6464 = vmatpush2.bf16.msra.mxu0 0
    %6465 = vmatprep.mubr.bf16.mxu0 0
    %6466 = vmatmul.mubr.bf16.gmra.mxu0 %v6386
    %v6467 = vpop.f32.mrf.mxu0
    %v6468 = vadd.f32 0.0, %v6467
    %v6469 = vpop.f32.mrf.mxu0
    %v6470 = vpop.f32.mrf.mxu0
    %v6471 = vadd.f32 0.0, %v6470
    %v6472 = vpop.f32.mrf.mxu0
    %6473 = vmatprep.mubr.bf16.mxu0 0
    %6474 = vmatmul.mubr.bf16.gmra.mxu0 %v6389
    %v6475 = vpop.f32.mrf.mxu0
    %v6476 = vadd.f32 0.0, %v6475
    %v6477 = vpop.f32.mrf.mxu0
    %v6478 = vpop.f32.mrf.mxu0
    %v6479 = vadd.f32 0.0, %v6478
    %v6480 = vpop.f32.mrf.mxu0
    %6481 = vmatprep.mubr.bf16.mxu0 0
    %6482 = vmatmul.mubr.bf16.gmra.mxu0 %v6392
    %v6483 = vpop.f32.mrf.mxu0
    %v6484 = vadd.f32 0.0, %v6483
    %v6485 = vpop.f32.mrf.mxu0
    %v6486 = vpop.f32.mrf.mxu0
    %v6487 = vadd.f32 0.0, %v6486
    %v6488 = vpop.f32.mrf.mxu0
    %6489 = vmatprep.mubr.bf16.mxu0 0
    %6490 = vmatmul.mubr.bf16.gmra.mxu0 %v6395
    %v6491 = vpop.f32.mrf.mxu0
    %v6492 = vadd.f32 0.0, %v6491
    %v6493 = vpop.f32.mrf.mxu0
    %v6494 = vpop.f32.mrf.mxu0
    %v6495 = vadd.f32 0.0, %v6494
    %v6496 = vpop.f32.mrf.mxu0
    %6497 = vmatprep.mubr.bf16.mxu0 0
    %6498 = vmatmul.mubr.bf16.gmra.mxu0 %v6398
    %v6499 = vpop.f32.mrf.mxu0
    %v6500 = vadd.f32 0.0, %v6499
    %v6501 = vpop.f32.mrf.mxu0
    %v6502 = vpop.f32.mrf.mxu0
    %v6503 = vadd.f32 0.0, %v6502
    %v6504 = vpop.f32.mrf.mxu0
    %6505 = vmatprep.mubr.bf16.mxu0 0
    %6506 = vmatmul.mubr.bf16.gmra.mxu0 %v6401
    %v6507 = vpop.f32.mrf.mxu0
    %v6508 = vadd.f32 0.0, %v6507
    %v6509 = vpop.f32.mrf.mxu0
    %v6510 = vpop.f32.mrf.mxu0
    %v6511 = vadd.f32 0.0, %v6510
    %v6512 = vpop.f32.mrf.mxu0
    %6513 = vmatprep.mubr.bf16.mxu0 0
    %6514 = vmatmul.mubr.bf16.gmra.mxu0 %v6404
    %v6515 = vpop.f32.mrf.mxu0
    %v6516 = vadd.f32 0.0, %v6515
    %v6517 = vpop.f32.mrf.mxu0
    %v6518 = vpop.f32.mrf.mxu0
    %v6519 = vadd.f32 0.0, %v6518
    %v6520 = vpop.f32.mrf.mxu0
    %6521 = vmatprep.mubr.bf16.mxu0 0
    %6522 = vmatmul.mubr.bf16.gmra.mxu0 %v6407
    %v6523 = vpop.f32.mrf.mxu0
    %v6524 = vadd.f32 0.0, %v6523
    %v6525 = vpop.f32.mrf.mxu0
    %v6526 = vpop.f32.mrf.mxu0
    %v6527 = vadd.f32 0.0, %v6526
    %v6528 = vpop.f32.mrf.mxu0
    %6529 = vmatprep.mubr.bf16.mxu0 0
    %6530 = vmatmul.mubr.bf16.gmra.mxu0 %v6410
    %v6531 = vpop.f32.mrf.mxu0
    %v6532 = vadd.f32 0.0, %v6531
    %v6533 = vpop.f32.mrf.mxu0
    %v6534 = vpop.f32.mrf.mxu0
    %v6535 = vadd.f32 0.0, %v6534
    %v6536 = vpop.f32.mrf.mxu0
    %6537 = vmatprep.mubr.bf16.mxu0 0
    %6538 = vmatmul.mubr.bf16.gmra.mxu0 %v6413
    %v6539 = vpop.f32.mrf.mxu0
    %v6540 = vadd.f32 0.0, %v6539
    %v6541 = vpop.f32.mrf.mxu0
    %v6542 = vpop.f32.mrf.mxu0
    %v6543 = vadd.f32 0.0, %v6542
    %v6544 = vpop.f32.mrf.mxu0
    %6545 = vmatprep.mubr.bf16.mxu0 0
    %6546 = vmatmul.mubr.bf16.gmra.mxu0 %v6416
    %v6547 = vpop.f32.mrf.mxu0
    %v6548 = vadd.f32 0.0, %v6547
    %v6549 = vpop.f32.mrf.mxu0
    %v6550 = vpop.f32.mrf.mxu0
    %v6551 = vadd.f32 0.0, %v6550
    %v6552 = vpop.f32.mrf.mxu0
    %6553 = vmatprep.mubr.bf16.mxu0 0
    %6554 = vmatmul.mubr.bf16.gmra.mxu0 %v6419
    %v6555 = vpop.f32.mrf.mxu0
    %v6556 = vadd.f32 0.0, %v6555
    %v6557 = vpop.f32.mrf.mxu0
    %v6558 = vpop.f32.mrf.mxu0
    %v6559 = vadd.f32 0.0, %v6558
    %v6560 = vpop.f32.mrf.mxu0
    %6561 = vmatprep.mubr.bf16.mxu0 0
    %6562 = vmatmul.mubr.bf16.gmra.mxu0 %v6422
    %v6563 = vpop.f32.mrf.mxu0
    %v6564 = vadd.f32 0.0, %v6563
    %v6565 = vpop.f32.mrf.mxu0
    %v6566 = vpop.f32.mrf.mxu0
    %v6567 = vadd.f32 0.0, %v6566
    %v6568 = vpop.f32.mrf.mxu0
    %6569 = vmatprep.mubr.bf16.mxu0 0
    %6570 = vmatmul.mubr.bf16.gmra.mxu0 %v6425
    %v6571 = vpop.f32.mrf.mxu0
    %v6572 = vadd.f32 0.0, %v6571
    %v6573 = vpop.f32.mrf.mxu0
    %v6574 = vpop.f32.mrf.mxu0
    %v6575 = vadd.f32 0.0, %v6574
    %v6576 = vpop.f32.mrf.mxu0
    %6577 = vmatprep.mubr.bf16.mxu0 0
    %6578 = vmatmul.mubr.bf16.gmra.mxu0 %v6428
    %v6579 = vpop.f32.mrf.mxu0
    %v6580 = vadd.f32 0.0, %v6579
    %v6581 = vpop.f32.mrf.mxu0
    %v6582 = vpop.f32.mrf.mxu0
    %v6583 = vadd.f32 0.0, %v6582
    %v6584 = vpop.f32.mrf.mxu0
    %6585 = vmatprep.mubr.bf16.mxu0 0
    %6586 = vmatmul.mubr.bf16.gmra.mxu0 %v6431
    %v6587 = vpop.f32.mrf.mxu0
    %v6588 = vadd.f32 0.0, %v6587
    %v6589 = vpop.f32.mrf.mxu0
    %v6590 = vpop.f32.mrf.mxu0
    %v6591 = vadd.f32 0.0, %v6590
    %v6592 = vpop.f32.mrf.mxu0
    %6593 = vdwg.mxu0
    %v6594 = vadd.f32 %v6264, %v6468
    %v6595 = vadd.f32 %v6265, %v6471
    %v6596 = vadd.f32 %v6266, %v6476
    %v6597 = vadd.f32 %v6267, %v6479
    %v6598 = vadd.f32 %v6268, %v6484
    %v6599 = vadd.f32 %v6269, %v6487
    %v6600 = vadd.f32 %v6270, %v6492
    %v6601 = vadd.f32 %v6271, %v6495
    %v6602 = vadd.f32 %v6272, %v6500
    %v6603 = vadd.f32 %v6273, %v6503
    %v6604 = vadd.f32 %v6274, %v6508
    %v6605 = vadd.f32 %v6275, %v6511
    %v6606 = vadd.f32 %v6276, %v6516
    %v6607 = vadd.f32 %v6277, %v6519
    %v6608 = vadd.f32 %v6278, %v6524
    %v6609 = vadd.f32 %v6279, %v6527
    %v6610 = vadd.f32 %v6280, %v6532
    %v6611 = vadd.f32 %v6281, %v6535
    %v6612 = vadd.f32 %v6282, %v6540
    %v6613 = vadd.f32 %v6283, %v6543
    %v6614 = vadd.f32 %v6284, %v6548
    %v6615 = vadd.f32 %v6285, %v6551
    %v6616 = vadd.f32 %v6286, %v6556
    %v6617 = vadd.f32 %v6287, %v6559
    %v6618 = vadd.f32 %v6288, %v6564
    %v6619 = vadd.f32 %v6289, %v6567
    %v6620 = vadd.f32 %v6290, %v6572
    %v6621 = vadd.f32 %v6291, %v6575
    %v6622 = vadd.f32 %v6292, %v6580
    %v6623 = vadd.f32 %v6293, %v6583
    %v6624 = vadd.f32 %v6294, %v6588
    %v6625 = vadd.f32 %v6295, %v6591
    %s6626 = sld [smem:[#allocation4 + $0x8]]
    %vm6627 = vcmp.ge.f32.partialorder %v6594, 0.0
    %vm6628 = vcmp.ge.f32.partialorder %v6595, 0.0
    %vm6629 = vcmp.ge.f32.partialorder %v6596, 0.0
    %vm6630 = vcmp.ge.f32.partialorder %v6597, 0.0
    %vm6631 = vcmp.ge.f32.partialorder %v6598, 0.0
    %vm6632 = vcmp.ge.f32.partialorder %v6599, 0.0
    %vm6633 = vcmp.ge.f32.partialorder %v6600, 0.0
    %vm6634 = vcmp.ge.f32.partialorder %v6601, 0.0
    %vm6635 = vcmp.ge.f32.partialorder %v6602, 0.0
    %vm6636 = vcmp.ge.f32.partialorder %v6603, 0.0
    %vm6637 = vcmp.ge.f32.partialorder %v6604, 0.0
    %vm6638 = vcmp.ge.f32.partialorder %v6605, 0.0
    %vm6639 = vcmp.ge.f32.partialorder %v6606, 0.0
    %vm6640 = vcmp.ge.f32.partialorder %v6607, 0.0
    %vm6641 = vcmp.ge.f32.partialorder %v6608, 0.0
    %vm6642 = vcmp.ge.f32.partialorder %v6609, 0.0
    %vm6643 = vcmp.ge.f32.partialorder %v6610, 0.0
    %vm6644 = vcmp.ge.f32.partialorder %v6611, 0.0
    %vm6645 = vcmp.ge.f32.partialorder %v6612, 0.0
    %vm6646 = vcmp.ge.f32.partialorder %v6613, 0.0
    %vm6647 = vcmp.ge.f32.partialorder %v6614, 0.0
    %vm6648 = vcmp.ge.f32.partialorder %v6615, 0.0
    %vm6649 = vcmp.ge.f32.partialorder %v6616, 0.0
    %vm6650 = vcmp.ge.f32.partialorder %v6617, 0.0
    %vm6651 = vcmp.ge.f32.partialorder %v6618, 0.0
    %vm6652 = vcmp.ge.f32.partialorder %v6619, 0.0
    %vm6653 = vcmp.ge.f32.partialorder %v6620, 0.0
    %vm6654 = vcmp.ge.f32.partialorder %v6621, 0.0
    %vm6655 = vcmp.ge.f32.partialorder %v6622, 0.0
    %vm6656 = vcmp.ge.f32.partialorder %v6623, 0.0
    %vm6657 = vcmp.ge.f32.partialorder %v6624, 0.0
    %vm6658 = vcmp.ge.f32.partialorder %v6625, 0.0
    %v6659 = vstv %s6626
    %v6660 = vmul.f32 %v6659, %v6594
    %v6661 = vmul.f32 %v6659, %v6595
    %v6662 = vmul.f32 %v6659, %v6596
    %v6663 = vmul.f32 %v6659, %v6597
    %v6664 = vmul.f32 %v6659, %v6598
    %v6665 = vmul.f32 %v6659, %v6599
    %v6666 = vmul.f32 %v6659, %v6600
    %v6667 = vmul.f32 %v6659, %v6601
    %v6668 = vmul.f32 %v6659, %v6602
    %v6669 = vmul.f32 %v6659, %v6603
    %v6670 = vmul.f32 %v6659, %v6604
    %v6671 = vmul.f32 %v6659, %v6605
    %v6672 = vmul.f32 %v6659, %v6606
    %v6673 = vmul.f32 %v6659, %v6607
    %v6674 = vmul.f32 %v6659, %v6608
    %v6675 = vmul.f32 %v6659, %v6609
    %v6676 = vmul.f32 %v6659, %v6610
    %v6677 = vmul.f32 %v6659, %v6611
    %v6678 = vmul.f32 %v6659, %v6612
    %v6679 = vmul.f32 %v6659, %v6613
    %v6680 = vmul.f32 %v6659, %v6614
    %v6681 = vmul.f32 %v6659, %v6615
    %v6682 = vmul.f32 %v6659, %v6616
    %v6683 = vmul.f32 %v6659, %v6617
    %v6684 = vmul.f32 %v6659, %v6618
    %v6685 = vmul.f32 %v6659, %v6619
    %v6686 = vmul.f32 %v6659, %v6620
    %v6687 = vmul.f32 %v6659, %v6621
    %v6688 = vmul.f32 %v6659, %v6622
    %v6689 = vmul.f32 %v6659, %v6623
    %v6690 = vmul.f32 %v6659, %v6624
    %v6691 = vmul.f32 %v6659, %v6625
    %v6692 = vsel %vm6627, %v6594, %v6660
    %v6693 = vsel %vm6628, %v6595, %v6661
    %v6694 = vsel %vm6629, %v6596, %v6662
    %v6695 = vsel %vm6630, %v6597, %v6663
    %v6696 = vsel %vm6631, %v6598, %v6664
    %v6697 = vsel %vm6632, %v6599, %v6665
    %v6698 = vsel %vm6633, %v6600, %v6666
    %v6699 = vsel %vm6634, %v6601, %v6667
    %v6700 = vsel %vm6635, %v6602, %v6668
    %v6701 = vsel %vm6636, %v6603, %v6669
    %v6702 = vsel %vm6637, %v6604, %v6670
    %v6703 = vsel %vm6638, %v6605, %v6671
    %v6704 = vsel %vm6639, %v6606, %v6672
    %v6705 = vsel %vm6640, %v6607, %v6673
    %v6706 = vsel %vm6641, %v6608, %v6674
    %v6707 = vsel %vm6642, %v6609, %v6675
    %v6708 = vsel %vm6643, %v6610, %v6676
    %v6709 = vsel %vm6644, %v6611, %v6677
    %v6710 = vsel %vm6645, %v6612, %v6678
    %v6711 = vsel %vm6646, %v6613, %v6679
    %v6712 = vsel %vm6647, %v6614, %v6680
    %v6713 = vsel %vm6648, %v6615, %v6681
    %v6714 = vsel %vm6649, %v6616, %v6682
    %v6715 = vsel %vm6650, %v6617, %v6683
    %v6716 = vsel %vm6651, %v6618, %v6684
    %v6717 = vsel %vm6652, %v6619, %v6685
    %v6718 = vsel %vm6653, %v6620, %v6686
    %v6719 = vsel %vm6654, %v6621, %v6687
    %v6720 = vsel %vm6655, %v6622, %v6688
    %v6721 = vsel %vm6656, %v6623, %v6689
    %v6722 = vsel %vm6657, %v6624, %v6690
    %v6723 = vsel %vm6658, %v6625, %v6691
    %v6724 = vld [vmem:[%s6 + $0xa] sm:$0x1]
    %6725 = vst.msk [vmem:[#allocation2 + $0x10] sm:$0xff] %vm59, %v6692
    %6726 = vst.msk [vmem:[#allocation2 + $0x18] sm:$0xff] %vm59, %v6693
    %6727 = vst.msk [vmem:[#allocation2 + $0x40] sm:$0xff] %vm59, %v6694
    %6728 = vst.msk [vmem:[#allocation2 + $0x48] sm:$0xff] %vm59, %v6695
    %6729 = vst.msk [vmem:[#allocation2 + $0x70] sm:$0xff] %vm59, %v6696
    %6730 = vst.msk [vmem:[#allocation2 + $0x78] sm:$0xff] %vm59, %v6697
    %6731 = vst.msk [vmem:[#allocation2 + $0xa0] sm:$0xff] %vm59, %v6698
    %6732 = vst.msk [vmem:[#allocation2 + $0xa8] sm:$0xff] %vm59, %v6699
    %6733 = vst.msk [vmem:[#allocation2 + $0xd0] sm:$0xff] %vm59, %v6700
    %6734 = vst.msk [vmem:[#allocation2 + $0xd8] sm:$0xff] %vm59, %v6701
    %6735 = vst.msk [vmem:[#allocation2 + $0x100] sm:$0xff] %vm59, %v6702
    %6736 = vst.msk [vmem:[#allocation2 + $0x108] sm:$0xff] %vm59, %v6703
    %6737 = vst.msk [vmem:[#allocation2 + $0x130] sm:$0xff] %vm59, %v6704
    %6738 = vst.msk [vmem:[#allocation2 + $0x138] sm:$0xff] %vm59, %v6705
    %6739 = vst.msk [vmem:[#allocation2 + $0x160] sm:$0xff] %vm59, %v6706
    %6740 = vst.msk [vmem:[#allocation2 + $0x168] sm:$0xff] %vm59, %v6707
    %6741 = vst.msk [vmem:[#allocation2 + $0x190] sm:$0xff] %vm59, %v6708
    %6742 = vst.msk [vmem:[#allocation2 + $0x198] sm:$0xff] %vm59, %v6709
    %6743 = vst.msk [vmem:[#allocation2 + $0x1c0] sm:$0xff] %vm59, %v6710
    %6744 = vst.msk [vmem:[#allocation2 + $0x1c8] sm:$0xff] %vm59, %v6711
    %6745 = vst.msk [vmem:[#allocation2 + $0x1f0] sm:$0xff] %vm59, %v6712
    %6746 = vst.msk [vmem:[#allocation2 + $0x1f8] sm:$0xff] %vm59, %v6713
    %6747 = vst.msk [vmem:[#allocation2 + $0x220] sm:$0xff] %vm59, %v6714
    %6748 = vst.msk [vmem:[#allocation2 + $0x228] sm:$0xff] %vm59, %v6715
    %6749 = vst.msk [vmem:[#allocation2 + $0x250] sm:$0xff] %vm59, %v6716
    %6750 = vst.msk [vmem:[#allocation2 + $0x258] sm:$0xff] %vm59, %v6717
    %6751 = vst.msk [vmem:[#allocation2 + $0x280] sm:$0xff] %vm59, %v6718
    %6752 = vst.msk [vmem:[#allocation2 + $0x288] sm:$0xff] %vm59, %v6719
    %6753 = vst.msk [vmem:[#allocation2 + $0x2b0] sm:$0xff] %vm59, %v6720
    %6754 = vst.msk [vmem:[#allocation2 + $0x2b8] sm:$0xff] %vm59, %v6721
    %6755 = vst.msk [vmem:[#allocation2 + $0x2e0] sm:$0xff] %vm59, %v6722
    %6756 = vst.msk [vmem:[#allocation2 + $0x2e8] sm:$0xff] %vm59, %v6723
    %v6757 = vld [vmem:[#allocation2 + $0xc] sm:$0xff]
    %v6758 = vld [vmem:[#allocation2 + $0x14] sm:$0xff]
    %v6759 = vld [vmem:[#allocation2 + $0x3c] sm:$0xff]
    %v6760 = vld [vmem:[#allocation2 + $0x44] sm:$0xff]
    %v6761 = vld [vmem:[#allocation2 + $0x6c] sm:$0xff]
    %v6762 = vld [vmem:[#allocation2 + $0x74] sm:$0xff]
    %v6763 = vld [vmem:[#allocation2 + $0x9c] sm:$0xff]
    %v6764 = vld [vmem:[#allocation2 + $0xa4] sm:$0xff]
    %v6765 = vld [vmem:[#allocation2 + $0xcc] sm:$0xff]
    %v6766 = vld [vmem:[#allocation2 + $0xd4] sm:$0xff]
    %v6767 = vld [vmem:[#allocation2 + $0xfc] sm:$0xff]
    %v6768 = vld [vmem:[#allocation2 + $0x104] sm:$0xff]
    %v6769 = vld [vmem:[#allocation2 + $0x12c] sm:$0xff]
    %v6770 = vld [vmem:[#allocation2 + $0x134] sm:$0xff]
    %v6771 = vld [vmem:[#allocation2 + $0x15c] sm:$0xff]
    %v6772 = vld [vmem:[#allocation2 + $0x164] sm:$0xff]
    %v6773 = vld [vmem:[#allocation2 + $0x18c] sm:$0xff]
    %v6774 = vld [vmem:[#allocation2 + $0x194] sm:$0xff]
    %v6775 = vld [vmem:[#allocation2 + $0x1bc] sm:$0xff]
    %v6776 = vld [vmem:[#allocation2 + $0x1c4] sm:$0xff]
    %v6777 = vld [vmem:[#allocation2 + $0x1ec] sm:$0xff]
    %v6778 = vld [vmem:[#allocation2 + $0x1f4] sm:$0xff]
    %v6779 = vld [vmem:[#allocation2 + $0x21c] sm:$0xff]
    %v6780 = vld [vmem:[#allocation2 + $0x224] sm:$0xff]
    %v6781 = vld [vmem:[#allocation2 + $0x24c] sm:$0xff]
    %v6782 = vld [vmem:[#allocation2 + $0x254] sm:$0xff]
    %v6783 = vld [vmem:[#allocation2 + $0x27c] sm:$0xff]
    %v6784 = vld [vmem:[#allocation2 + $0x284] sm:$0xff]
    %v6785 = vld [vmem:[#allocation2 + $0x2ac] sm:$0xff]
    %v6786 = vld [vmem:[#allocation2 + $0x2b4] sm:$0xff]
    %v6787 = vld [vmem:[#allocation2 + $0x2dc] sm:$0xff]
    %v6788 = vld [vmem:[#allocation2 + $0x2e4] sm:$0xff]
    %s6789 = scalar_lea.vmem [#allocation7], 560
    %v6790 = vld [vmem:[%s6789] sm:$0xf]
    %v6791 = vld [vmem:[%s6789 + $0x4] sm:$0xf]
    %v6792 = vld [vmem:[%s6789 + $0x8] sm:$0xf]
    %v6793 = vld [vmem:[%s6789 + $0xc] sm:$0xf]
    %v6794 = vld [vmem:[%s6789 + $0x10] sm:$0xf]
    %v6795 = vld [vmem:[%s6789 + $0x14] sm:$0xf]
    %v6796 = vld [vmem:[%s6789 + $0x18] sm:$0xf]
    %v6797 = vld [vmem:[%s6789 + $0x1c] sm:$0xf]
    %v6798 = vld [vmem:[%s6789 + $0x20] sm:$0xf]
    %v6799 = vld [vmem:[%s6789 + $0x24] sm:$0xf]
    %v6800 = vpack.c.bf16 %v6758, %v6757
    %v6801 = vpack.c.bf16 %v6760, %v6759
    %v6802 = vpack.c.bf16 %v6762, %v6761
    %v6803 = vpack.c.bf16 %v6764, %v6763
    %v6804 = vpack.c.bf16 %v6766, %v6765
    %v6805 = vpack.c.bf16 %v6768, %v6767
    %v6806 = vpack.c.bf16 %v6770, %v6769
    %v6807 = vpack.c.bf16 %v6772, %v6771
    %v6808 = vpack.c.bf16 %v6774, %v6773
    %v6809 = vpack.c.bf16 %v6776, %v6775
    %v6810 = vpack.c.bf16 %v6778, %v6777
    %v6811 = vpack.c.bf16 %v6780, %v6779
    %v6812 = vpack.c.bf16 %v6782, %v6781
    %v6813 = vpack.c.bf16 %v6784, %v6783
    %v6814 = vpack.c.bf16 %v6786, %v6785
    %v6815 = vpack.c.bf16 %v6788, %v6787
    %v6826 = vunpack.c.l.b16 %v6790
    %v6827 = vunpack.c.l.b16 %v6791
    %v6828 = vunpack.c.l.b16 %v6792
    %v6829 = vunpack.c.l.b16 %v6793
    %v6830 = vunpack.c.l.b16 %v6794
    %v6831 = vunpack.c.l.b16 %v6795
    %v6832 = vunpack.c.l.b16 %v6796
    %v6833 = vunpack.c.l.b16 %v6797
    %v6834 = vunpack.c.l.b16 %v6798
    %v6835 = vunpack.c.l.b16 %v6799
    %v6836 = vpack.c.b16 %v6827, %v6826
    %v6837 = vpack.c.b16 %v6829, %v6828
    %v6838 = vpack.c.b16 %v6831, %v6830
    %v6839 = vpack.c.b16 %v6833, %v6832
    %v6840 = vpack.c.b16 %v6835, %v6834
    %v6847 = vsel %vm59, %v6800, 0
    %v6850 = vsel %vm59, %v6801, 0
    %v6853 = vsel %vm59, %v6802, 0
    %v6856 = vsel %vm59, %v6803, 0
    %v6859 = vsel %vm59, %v6804, 0
    %v6862 = vsel %vm59, %v6805, 0
    %v6865 = vsel %vm59, %v6806, 0
    %v6868 = vsel %vm59, %v6807, 0
    %v6871 = vsel %vm59, %v6808, 0
    %v6874 = vsel %vm59, %v6809, 0
    %v6877 = vsel %vm59, %v6810, 0
    %v6880 = vsel %vm59, %v6811, 0
    %v6883 = vsel %vm59, %v6812, 0
    %v6886 = vsel %vm59, %v6813, 0
    %v6889 = vsel %vm59, %v6814, 0
    %v6892 = vsel %vm59, %v6815, 0
    %6894 = vmatprep.subr.bf16.mxu0 0
    %6895 = vmatpush1.bf16.msra.mxu0 0
    %6896 = vmatprep.subr.bf16.mxu0 0
    %6897 = vmatpush1.bf16.msra.mxu0 0
    %6898 = vmatprep.subr.bf16.mxu0 0
    %6899 = vmatpush1.bf16.msra.mxu0 0
    %6900 = vmatprep.subr.bf16.mxu0 0
    %6901 = vmatpush1.bf16.msra.mxu0 %v6840
    %6902 = vmatprep.subr.bf16.mxu0 0
    %6903 = vmatpush1.bf16.msra.mxu0 %v6839
    %6904 = vmatprep.subr.bf16.mxu0 0
    %6905 = vmatpush1.bf16.msra.mxu0 %v6838
    %6906 = vmatprep.subr.bf16.mxu0 0
    %6907 = vmatpush1.bf16.msra.mxu0 %v6837
    %6908 = vmatprep.subr.bf16.mxu0 0
    %6909 = vmatpush1.bf16.msra.mxu0 %v6836
    %6910 = vmatprep.subr.bf16.mxu0 0
    %6911 = vmatpush2.bf16.msra.mxu0 0
    %6912 = vmatprep.subr.bf16.mxu0 0
    %6913 = vmatpush2.bf16.msra.mxu0 0
    %6914 = vmatprep.subr.bf16.mxu0 0
    %6915 = vmatpush2.bf16.msra.mxu0 0
    %6916 = vmatprep.subr.bf16.mxu0 0
    %6917 = vmatpush2.bf16.msra.mxu0 0
    %6918 = vmatprep.subr.bf16.mxu0 0
    %6919 = vmatpush2.bf16.msra.mxu0 0
    %6920 = vmatprep.subr.bf16.mxu0 0
    %6921 = vmatpush2.bf16.msra.mxu0 0
    %6922 = vmatprep.subr.bf16.mxu0 0
    %6923 = vmatpush2.bf16.msra.mxu0 0
    %6924 = vmatprep.subr.bf16.mxu0 0
    %6925 = vmatpush2.bf16.msra.mxu0 0
    %6926 = vmatprep.mubr.bf16.mxu0 0
    %6927 = vmatmul.mubr.bf16.gmra.mxu0 %v6847
    %v6928 = vpop.f32.mrf.mxu0
    %v6929 = vadd.f32 0.0, %v6928
    %v6930 = vpop.f32.mrf.mxu0
    %v6931 = vpop.f32.mrf.mxu0
    %v6932 = vadd.f32 0.0, %v6931
    %v6933 = vpop.f32.mrf.mxu0
    %6934 = vmatprep.mubr.bf16.mxu0 0
    %6935 = vmatmul.mubr.bf16.gmra.mxu0 %v6850
    %v6936 = vpop.f32.mrf.mxu0
    %v6937 = vadd.f32 0.0, %v6936
    %v6938 = vpop.f32.mrf.mxu0
    %v6939 = vpop.f32.mrf.mxu0
    %v6940 = vadd.f32 0.0, %v6939
    %v6941 = vpop.f32.mrf.mxu0
    %6942 = vmatprep.mubr.bf16.mxu0 0
    %6943 = vmatmul.mubr.bf16.gmra.mxu0 %v6853
    %v6944 = vpop.f32.mrf.mxu0
    %v6945 = vadd.f32 0.0, %v6944
    %v6946 = vpop.f32.mrf.mxu0
    %v6947 = vpop.f32.mrf.mxu0
    %v6948 = vadd.f32 0.0, %v6947
    %v6949 = vpop.f32.mrf.mxu0
    %6950 = vmatprep.mubr.bf16.mxu0 0
    %6951 = vmatmul.mubr.bf16.gmra.mxu0 %v6856
    %v6952 = vpop.f32.mrf.mxu0
    %v6953 = vadd.f32 0.0, %v6952
    %v6954 = vpop.f32.mrf.mxu0
    %v6955 = vpop.f32.mrf.mxu0
    %v6956 = vadd.f32 0.0, %v6955
    %v6957 = vpop.f32.mrf.mxu0
    %6958 = vmatprep.mubr.bf16.mxu0 0
    %6959 = vmatmul.mubr.bf16.gmra.mxu0 %v6859
    %v6960 = vpop.f32.mrf.mxu0
    %v6961 = vadd.f32 0.0, %v6960
    %v6962 = vpop.f32.mrf.mxu0
    %v6963 = vpop.f32.mrf.mxu0
    %v6964 = vadd.f32 0.0, %v6963
    %v6965 = vpop.f32.mrf.mxu0
    %6966 = vmatprep.mubr.bf16.mxu0 0
    %6967 = vmatmul.mubr.bf16.gmra.mxu0 %v6862
    %v6968 = vpop.f32.mrf.mxu0
    %v6969 = vadd.f32 0.0, %v6968
    %v6970 = vpop.f32.mrf.mxu0
    %v6971 = vpop.f32.mrf.mxu0
    %v6972 = vadd.f32 0.0, %v6971
    %v6973 = vpop.f32.mrf.mxu0
    %6974 = vmatprep.mubr.bf16.mxu0 0
    %6975 = vmatmul.mubr.bf16.gmra.mxu0 %v6865
    %v6976 = vpop.f32.mrf.mxu0
    %v6977 = vadd.f32 0.0, %v6976
    %v6978 = vpop.f32.mrf.mxu0
    %v6979 = vpop.f32.mrf.mxu0
    %v6980 = vadd.f32 0.0, %v6979
    %v6981 = vpop.f32.mrf.mxu0
    %6982 = vmatprep.mubr.bf16.mxu0 0
    %6983 = vmatmul.mubr.bf16.gmra.mxu0 %v6868
    %v6984 = vpop.f32.mrf.mxu0
    %v6985 = vadd.f32 0.0, %v6984
    %v6986 = vpop.f32.mrf.mxu0
    %v6987 = vpop.f32.mrf.mxu0
    %v6988 = vadd.f32 0.0, %v6987
    %v6989 = vpop.f32.mrf.mxu0
    %6990 = vmatprep.mubr.bf16.mxu0 0
    %6991 = vmatmul.mubr.bf16.gmra.mxu0 %v6871
    %v6992 = vpop.f32.mrf.mxu0
    %v6993 = vadd.f32 0.0, %v6992
    %v6994 = vpop.f32.mrf.mxu0
    %v6995 = vpop.f32.mrf.mxu0
    %v6996 = vadd.f32 0.0, %v6995
    %v6997 = vpop.f32.mrf.mxu0
    %6998 = vmatprep.mubr.bf16.mxu0 0
    %6999 = vmatmul.mubr.bf16.gmra.mxu0 %v6874
    %v7000 = vpop.f32.mrf.mxu0
    %v7001 = vadd.f32 0.0, %v7000
    %v7002 = vpop.f32.mrf.mxu0
    %v7003 = vpop.f32.mrf.mxu0
    %v7004 = vadd.f32 0.0, %v7003
    %v7005 = vpop.f32.mrf.mxu0
    %7006 = vmatprep.mubr.bf16.mxu0 0
    %7007 = vmatmul.mubr.bf16.gmra.mxu0 %v6877
    %v7008 = vpop.f32.mrf.mxu0
    %v7009 = vadd.f32 0.0, %v7008
    %v7010 = vpop.f32.mrf.mxu0
    %v7011 = vpop.f32.mrf.mxu0
    %v7012 = vadd.f32 0.0, %v7011
    %v7013 = vpop.f32.mrf.mxu0
    %7014 = vmatprep.mubr.bf16.mxu0 0
    %7015 = vmatmul.mubr.bf16.gmra.mxu0 %v6880
    %v7016 = vpop.f32.mrf.mxu0
    %v7017 = vadd.f32 0.0, %v7016
    %v7018 = vpop.f32.mrf.mxu0
    %v7019 = vpop.f32.mrf.mxu0
    %v7020 = vadd.f32 0.0, %v7019
    %v7021 = vpop.f32.mrf.mxu0
    %7022 = vmatprep.mubr.bf16.mxu0 0
    %7023 = vmatmul.mubr.bf16.gmra.mxu0 %v6883
    %v7024 = vpop.f32.mrf.mxu0
    %v7025 = vadd.f32 0.0, %v7024
    %v7026 = vpop.f32.mrf.mxu0
    %v7027 = vpop.f32.mrf.mxu0
    %v7028 = vadd.f32 0.0, %v7027
    %v7029 = vpop.f32.mrf.mxu0
    %7030 = vmatprep.mubr.bf16.mxu0 0
    %7031 = vmatmul.mubr.bf16.gmra.mxu0 %v6886
    %v7032 = vpop.f32.mrf.mxu0
    %v7033 = vadd.f32 0.0, %v7032
    %v7034 = vpop.f32.mrf.mxu0
    %v7035 = vpop.f32.mrf.mxu0
    %v7036 = vadd.f32 0.0, %v7035
    %v7037 = vpop.f32.mrf.mxu0
    %7038 = vmatprep.mubr.bf16.mxu0 0
    %7039 = vmatmul.mubr.bf16.gmra.mxu0 %v6889
    %v7040 = vpop.f32.mrf.mxu0
    %v7041 = vadd.f32 0.0, %v7040
    %v7042 = vpop.f32.mrf.mxu0
    %v7043 = vpop.f32.mrf.mxu0
    %v7044 = vadd.f32 0.0, %v7043
    %v7045 = vpop.f32.mrf.mxu0
    %7046 = vmatprep.mubr.bf16.mxu0 0
    %7047 = vmatmul.mubr.bf16.gmra.mxu0 %v6892
    %v7048 = vpop.f32.mrf.mxu0
    %v7049 = vadd.f32 0.0, %v7048
    %v7050 = vpop.f32.mrf.mxu0
    %v7051 = vpop.f32.mrf.mxu0
    %v7052 = vadd.f32 0.0, %v7051
    %v7053 = vpop.f32.mrf.mxu0
    %7054 = vdwg.mxu0
    %v7055 = vlaneseq
    %v7056 = vshrl.u32 %v7055, 7
    %v7057 = vsub.s32 0, %v7056
    %v7058 = vrot.slane %v6724, %v7057
    %v7059 = vadd.f32 %v7058, %v6929
    %v7060 = vadd.f32 %v7058, %v6932
    %v7061 = vadd.f32 %v7058, %v6937
    %v7062 = vadd.f32 %v7058, %v6940
    %v7063 = vadd.f32 %v7058, %v6945
    %v7064 = vadd.f32 %v7058, %v6948
    %v7065 = vadd.f32 %v7058, %v6953
    %v7066 = vadd.f32 %v7058, %v6956
    %v7067 = vadd.f32 %v7058, %v6961
    %v7068 = vadd.f32 %v7058, %v6964
    %v7069 = vadd.f32 %v7058, %v6969
    %v7070 = vadd.f32 %v7058, %v6972
    %v7071 = vadd.f32 %v7058, %v6977
    %v7072 = vadd.f32 %v7058, %v6980
    %v7073 = vadd.f32 %v7058, %v6985
    %v7074 = vadd.f32 %v7058, %v6988
    %v7075 = vadd.f32 %v7058, %v6993
    %v7076 = vadd.f32 %v7058, %v6996
    %v7077 = vadd.f32 %v7058, %v7001
    %v7078 = vadd.f32 %v7058, %v7004
    %v7079 = vadd.f32 %v7058, %v7009
    %v7080 = vadd.f32 %v7058, %v7012
    %v7081 = vadd.f32 %v7058, %v7017
    %v7082 = vadd.f32 %v7058, %v7020
    %v7083 = vadd.f32 %v7058, %v7025
    %v7084 = vadd.f32 %v7058, %v7028
    %v7085 = vadd.f32 %v7058, %v7033
    %v7086 = vadd.f32 %v7058, %v7036
    %v7087 = vadd.f32 %v7058, %v7041
    %v7088 = vadd.f32 %v7058, %v7044
    %v7089 = vadd.f32 %v7058, %v7049
    %v7090 = vadd.f32 %v7058, %v7052
    %v7091 = vld [vmem:[#allocation2 + $0x14] sm:$0xff]
    %v7092 = vld [vmem:[#allocation2 + $0x1c] sm:$0xff]
    %v7093 = vld [vmem:[#allocation2 + $0x44] sm:$0xff]
    %v7094 = vld [vmem:[#allocation2 + $0x4c] sm:$0xff]
    %v7095 = vld [vmem:[#allocation2 + $0x74] sm:$0xff]
    %v7096 = vld [vmem:[#allocation2 + $0x7c] sm:$0xff]
    %v7097 = vld [vmem:[#allocation2 + $0xa4] sm:$0xff]
    %v7098 = vld [vmem:[#allocation2 + $0xac] sm:$0xff]
    %v7099 = vld [vmem:[#allocation2 + $0xd4] sm:$0xff]
    %v7100 = vld [vmem:[#allocation2 + $0xdc] sm:$0xff]
    %v7101 = vld [vmem:[#allocation2 + $0x104] sm:$0xff]
    %v7102 = vld [vmem:[#allocation2 + $0x10c] sm:$0xff]
    %v7103 = vld [vmem:[#allocation2 + $0x134] sm:$0xff]
    %v7104 = vld [vmem:[#allocation2 + $0x13c] sm:$0xff]
    %v7105 = vld [vmem:[#allocation2 + $0x164] sm:$0xff]
    %v7106 = vld [vmem:[#allocation2 + $0x16c] sm:$0xff]
    %v7107 = vld [vmem:[#allocation2 + $0x194] sm:$0xff]
    %v7108 = vld [vmem:[#allocation2 + $0x19c] sm:$0xff]
    %v7109 = vld [vmem:[#allocation2 + $0x1c4] sm:$0xff]
    %v7110 = vld [vmem:[#allocation2 + $0x1cc] sm:$0xff]
    %v7111 = vld [vmem:[#allocation2 + $0x1f4] sm:$0xff]
    %v7112 = vld [vmem:[#allocation2 + $0x1fc] sm:$0xff]
    %v7113 = vld [vmem:[#allocation2 + $0x224] sm:$0xff]
    %v7114 = vld [vmem:[#allocation2 + $0x22c] sm:$0xff]
    %v7115 = vld [vmem:[#allocation2 + $0x254] sm:$0xff]
    %v7116 = vld [vmem:[#allocation2 + $0x25c] sm:$0xff]
    %v7117 = vld [vmem:[#allocation2 + $0x284] sm:$0xff]
    %v7118 = vld [vmem:[#allocation2 + $0x28c] sm:$0xff]
    %v7119 = vld [vmem:[#allocation2 + $0x2b4] sm:$0xff]
    %v7120 = vld [vmem:[#allocation2 + $0x2bc] sm:$0xff]
    %v7121 = vld [vmem:[#allocation2 + $0x2e4] sm:$0xff]
    %v7122 = vld [vmem:[#allocation2 + $0x2ec] sm:$0xff]
    %s7123 = scalar_lea.vmem [#allocation7], 600
    %v7124 = vld [vmem:[%s7123] sm:$0xf]
    %v7125 = vld [vmem:[%s7123 + $0x4] sm:$0xf]
    %v7126 = vld [vmem:[%s7123 + $0x8] sm:$0xf]
    %v7127 = vld [vmem:[%s7123 + $0xc] sm:$0xf]
    %v7128 = vld [vmem:[%s7123 + $0x10] sm:$0xf]
    %v7129 = vld [vmem:[%s7123 + $0x14] sm:$0xf]
    %v7130 = vld [vmem:[%s7123 + $0x18] sm:$0xf]
    %v7131 = vld [vmem:[%s7123 + $0x1c] sm:$0xf]
    %v7132 = vld [vmem:[%s7123 + $0x20] sm:$0xf]
    %v7133 = vld [vmem:[%s7123 + $0x24] sm:$0xf]
    %v7134 = vpack.c.bf16 %v7092, %v7091
    %v7135 = vpack.c.bf16 %v7094, %v7093
    %v7136 = vpack.c.bf16 %v7096, %v7095
    %v7137 = vpack.c.bf16 %v7098, %v7097
    %v7138 = vpack.c.bf16 %v7100, %v7099
    %v7139 = vpack.c.bf16 %v7102, %v7101
    %v7140 = vpack.c.bf16 %v7104, %v7103
    %v7141 = vpack.c.bf16 %v7106, %v7105
    %v7142 = vpack.c.bf16 %v7108, %v7107
    %v7143 = vpack.c.bf16 %v7110, %v7109
    %v7144 = vpack.c.bf16 %v7112, %v7111
    %v7145 = vpack.c.bf16 %v7114, %v7113
    %v7146 = vpack.c.bf16 %v7116, %v7115
    %v7147 = vpack.c.bf16 %v7118, %v7117
    %v7148 = vpack.c.bf16 %v7120, %v7119
    %v7149 = vpack.c.bf16 %v7122, %v7121
    %v7160 = vunpack.c.l.b16 %v7124
    %v7161 = vunpack.c.l.b16 %v7125
    %v7162 = vunpack.c.l.b16 %v7126
    %v7163 = vunpack.c.l.b16 %v7127
    %v7164 = vunpack.c.l.b16 %v7128
    %v7165 = vunpack.c.l.b16 %v7129
    %v7166 = vunpack.c.l.b16 %v7130
    %v7167 = vunpack.c.l.b16 %v7131
    %v7168 = vunpack.c.l.b16 %v7132
    %v7169 = vunpack.c.l.b16 %v7133
    %v7170 = vpack.c.b16 %v7161, %v7160
    %v7171 = vpack.c.b16 %v7163, %v7162
    %v7172 = vpack.c.b16 %v7165, %v7164
    %v7173 = vpack.c.b16 %v7167, %v7166
    %v7174 = vpack.c.b16 %v7169, %v7168
    %v7181 = vsel %vm59, %v7134, 0
    %v7184 = vsel %vm59, %v7135, 0
    %v7187 = vsel %vm59, %v7136, 0
    %v7190 = vsel %vm59, %v7137, 0
    %v7193 = vsel %vm59, %v7138, 0
    %v7196 = vsel %vm59, %v7139, 0
    %v7199 = vsel %vm59, %v7140, 0
    %v7202 = vsel %vm59, %v7141, 0
    %v7205 = vsel %vm59, %v7142, 0
    %v7208 = vsel %vm59, %v7143, 0
    %v7211 = vsel %vm59, %v7144, 0
    %v7214 = vsel %vm59, %v7145, 0
    %v7217 = vsel %vm59, %v7146, 0
    %v7220 = vsel %vm59, %v7147, 0
    %v7223 = vsel %vm59, %v7148, 0
    %v7226 = vsel %vm59, %v7149, 0
    %7228 = vmatprep.subr.bf16.mxu0 0
    %7229 = vmatpush1.bf16.msra.mxu0 0
    %7230 = vmatprep.subr.bf16.mxu0 0
    %7231 = vmatpush1.bf16.msra.mxu0 0
    %7232 = vmatprep.subr.bf16.mxu0 0
    %7233 = vmatpush1.bf16.msra.mxu0 0
    %7234 = vmatprep.subr.bf16.mxu0 0
    %7235 = vmatpush1.bf16.msra.mxu0 %v7174
    %7236 = vmatprep.subr.bf16.mxu0 0
    %7237 = vmatpush1.bf16.msra.mxu0 %v7173
    %7238 = vmatprep.subr.bf16.mxu0 0
    %7239 = vmatpush1.bf16.msra.mxu0 %v7172
    %7240 = vmatprep.subr.bf16.mxu0 0
    %7241 = vmatpush1.bf16.msra.mxu0 %v7171
    %7242 = vmatprep.subr.bf16.mxu0 0
    %7243 = vmatpush1.bf16.msra.mxu0 %v7170
    %7244 = vmatprep.subr.bf16.mxu0 0
    %7245 = vmatpush2.bf16.msra.mxu0 0
    %7246 = vmatprep.subr.bf16.mxu0 0
    %7247 = vmatpush2.bf16.msra.mxu0 0
    %7248 = vmatprep.subr.bf16.mxu0 0
    %7249 = vmatpush2.bf16.msra.mxu0 0
    %7250 = vmatprep.subr.bf16.mxu0 0
    %7251 = vmatpush2.bf16.msra.mxu0 0
    %7252 = vmatprep.subr.bf16.mxu0 0
    %7253 = vmatpush2.bf16.msra.mxu0 0
    %7254 = vmatprep.subr.bf16.mxu0 0
    %7255 = vmatpush2.bf16.msra.mxu0 0
    %7256 = vmatprep.subr.bf16.mxu0 0
    %7257 = vmatpush2.bf16.msra.mxu0 0
    %7258 = vmatprep.subr.bf16.mxu0 0
    %7259 = vmatpush2.bf16.msra.mxu0 0
    %7260 = vmatprep.mubr.bf16.mxu0 0
    %7261 = vmatmul.mubr.bf16.gmra.mxu0 %v7181
    %v7262 = vpop.f32.mrf.mxu0
    %v7263 = vadd.f32 0.0, %v7262
    %v7264 = vpop.f32.mrf.mxu0
    %v7265 = vpop.f32.mrf.mxu0
    %v7266 = vadd.f32 0.0, %v7265
    %v7267 = vpop.f32.mrf.mxu0
    %7268 = vmatprep.mubr.bf16.mxu0 0
    %7269 = vmatmul.mubr.bf16.gmra.mxu0 %v7184
    %v7270 = vpop.f32.mrf.mxu0
    %v7271 = vadd.f32 0.0, %v7270
    %v7272 = vpop.f32.mrf.mxu0
    %v7273 = vpop.f32.mrf.mxu0
    %v7274 = vadd.f32 0.0, %v7273
    %v7275 = vpop.f32.mrf.mxu0
    %7276 = vmatprep.mubr.bf16.mxu0 0
    %7277 = vmatmul.mubr.bf16.gmra.mxu0 %v7187
    %v7278 = vpop.f32.mrf.mxu0
    %v7279 = vadd.f32 0.0, %v7278
    %v7280 = vpop.f32.mrf.mxu0
    %v7281 = vpop.f32.mrf.mxu0
    %v7282 = vadd.f32 0.0, %v7281
    %v7283 = vpop.f32.mrf.mxu0
    %7284 = vmatprep.mubr.bf16.mxu0 0
    %7285 = vmatmul.mubr.bf16.gmra.mxu0 %v7190
    %v7286 = vpop.f32.mrf.mxu0
    %v7287 = vadd.f32 0.0, %v7286
    %v7288 = vpop.f32.mrf.mxu0
    %v7289 = vpop.f32.mrf.mxu0
    %v7290 = vadd.f32 0.0, %v7289
    %v7291 = vpop.f32.mrf.mxu0
    %7292 = vmatprep.mubr.bf16.mxu0 0
    %7293 = vmatmul.mubr.bf16.gmra.mxu0 %v7193
    %v7294 = vpop.f32.mrf.mxu0
    %v7295 = vadd.f32 0.0, %v7294
    %v7296 = vpop.f32.mrf.mxu0
    %v7297 = vpop.f32.mrf.mxu0
    %v7298 = vadd.f32 0.0, %v7297
    %v7299 = vpop.f32.mrf.mxu0
    %7300 = vmatprep.mubr.bf16.mxu0 0
    %7301 = vmatmul.mubr.bf16.gmra.mxu0 %v7196
    %v7302 = vpop.f32.mrf.mxu0
    %v7303 = vadd.f32 0.0, %v7302
    %v7304 = vpop.f32.mrf.mxu0
    %v7305 = vpop.f32.mrf.mxu0
    %v7306 = vadd.f32 0.0, %v7305
    %v7307 = vpop.f32.mrf.mxu0
    %7308 = vmatprep.mubr.bf16.mxu0 0
    %7309 = vmatmul.mubr.bf16.gmra.mxu0 %v7199
    %v7310 = vpop.f32.mrf.mxu0
    %v7311 = vadd.f32 0.0, %v7310
    %v7312 = vpop.f32.mrf.mxu0
    %v7313 = vpop.f32.mrf.mxu0
    %v7314 = vadd.f32 0.0, %v7313
    %v7315 = vpop.f32.mrf.mxu0
    %7316 = vmatprep.mubr.bf16.mxu0 0
    %7317 = vmatmul.mubr.bf16.gmra.mxu0 %v7202
    %v7318 = vpop.f32.mrf.mxu0
    %v7319 = vadd.f32 0.0, %v7318
    %v7320 = vpop.f32.mrf.mxu0
    %v7321 = vpop.f32.mrf.mxu0
    %v7322 = vadd.f32 0.0, %v7321
    %v7323 = vpop.f32.mrf.mxu0
    %7324 = vmatprep.mubr.bf16.mxu0 0
    %7325 = vmatmul.mubr.bf16.gmra.mxu0 %v7205
    %v7326 = vpop.f32.mrf.mxu0
    %v7327 = vadd.f32 0.0, %v7326
    %v7328 = vpop.f32.mrf.mxu0
    %v7329 = vpop.f32.mrf.mxu0
    %v7330 = vadd.f32 0.0, %v7329
    %v7331 = vpop.f32.mrf.mxu0
    %7332 = vmatprep.mubr.bf16.mxu0 0
    %7333 = vmatmul.mubr.bf16.gmra.mxu0 %v7208
    %v7334 = vpop.f32.mrf.mxu0
    %v7335 = vadd.f32 0.0, %v7334
    %v7336 = vpop.f32.mrf.mxu0
    %v7337 = vpop.f32.mrf.mxu0
    %v7338 = vadd.f32 0.0, %v7337
    %v7339 = vpop.f32.mrf.mxu0
    %7340 = vmatprep.mubr.bf16.mxu0 0
    %7341 = vmatmul.mubr.bf16.gmra.mxu0 %v7211
    %v7342 = vpop.f32.mrf.mxu0
    %v7343 = vadd.f32 0.0, %v7342
    %v7344 = vpop.f32.mrf.mxu0
    %v7345 = vpop.f32.mrf.mxu0
    %v7346 = vadd.f32 0.0, %v7345
    %v7347 = vpop.f32.mrf.mxu0
    %7348 = vmatprep.mubr.bf16.mxu0 0
    %7349 = vmatmul.mubr.bf16.gmra.mxu0 %v7214
    %v7350 = vpop.f32.mrf.mxu0
    %v7351 = vadd.f32 0.0, %v7350
    %v7352 = vpop.f32.mrf.mxu0
    %v7353 = vpop.f32.mrf.mxu0
    %v7354 = vadd.f32 0.0, %v7353
    %v7355 = vpop.f32.mrf.mxu0
    %7356 = vmatprep.mubr.bf16.mxu0 0
    %7357 = vmatmul.mubr.bf16.gmra.mxu0 %v7217
    %v7358 = vpop.f32.mrf.mxu0
    %v7359 = vadd.f32 0.0, %v7358
    %v7360 = vpop.f32.mrf.mxu0
    %v7361 = vpop.f32.mrf.mxu0
    %v7362 = vadd.f32 0.0, %v7361
    %v7363 = vpop.f32.mrf.mxu0
    %7364 = vmatprep.mubr.bf16.mxu0 0
    %7365 = vmatmul.mubr.bf16.gmra.mxu0 %v7220
    %v7366 = vpop.f32.mrf.mxu0
    %v7367 = vadd.f32 0.0, %v7366
    %v7368 = vpop.f32.mrf.mxu0
    %v7369 = vpop.f32.mrf.mxu0
    %v7370 = vadd.f32 0.0, %v7369
    %v7371 = vpop.f32.mrf.mxu0
    %7372 = vmatprep.mubr.bf16.mxu0 0
    %7373 = vmatmul.mubr.bf16.gmra.mxu0 %v7223
    %v7374 = vpop.f32.mrf.mxu0
    %v7375 = vadd.f32 0.0, %v7374
    %v7376 = vpop.f32.mrf.mxu0
    %v7377 = vpop.f32.mrf.mxu0
    %v7378 = vadd.f32 0.0, %v7377
    %v7379 = vpop.f32.mrf.mxu0
    %7380 = vmatprep.mubr.bf16.mxu0 0
    %7381 = vmatmul.mubr.bf16.gmra.mxu0 %v7226
    %v7382 = vpop.f32.mrf.mxu0
    %v7383 = vadd.f32 0.0, %v7382
    %v7384 = vpop.f32.mrf.mxu0
    %v7385 = vpop.f32.mrf.mxu0
    %v7386 = vadd.f32 0.0, %v7385
    %v7387 = vpop.f32.mrf.mxu0
    %7388 = vdwg.mxu0
    %v7389 = vadd.f32 %v7059, %v7263
    %v7390 = vadd.f32 %v7060, %v7266
    %v7391 = vadd.f32 %v7061, %v7271
    %v7392 = vadd.f32 %v7062, %v7274
    %v7393 = vadd.f32 %v7063, %v7279
    %v7394 = vadd.f32 %v7064, %v7282
    %v7395 = vadd.f32 %v7065, %v7287
    %v7396 = vadd.f32 %v7066, %v7290
    %v7397 = vadd.f32 %v7067, %v7295
    %v7398 = vadd.f32 %v7068, %v7298
    %v7399 = vadd.f32 %v7069, %v7303
    %v7400 = vadd.f32 %v7070, %v7306
    %v7401 = vadd.f32 %v7071, %v7311
    %v7402 = vadd.f32 %v7072, %v7314
    %v7403 = vadd.f32 %v7073, %v7319
    %v7404 = vadd.f32 %v7074, %v7322
    %v7405 = vadd.f32 %v7075, %v7327
    %v7406 = vadd.f32 %v7076, %v7330
    %v7407 = vadd.f32 %v7077, %v7335
    %v7408 = vadd.f32 %v7078, %v7338
    %v7409 = vadd.f32 %v7079, %v7343
    %v7410 = vadd.f32 %v7080, %v7346
    %v7411 = vadd.f32 %v7081, %v7351
    %v7412 = vadd.f32 %v7082, %v7354
    %v7413 = vadd.f32 %v7083, %v7359
    %v7414 = vadd.f32 %v7084, %v7362
    %v7415 = vadd.f32 %v7085, %v7367
    %v7416 = vadd.f32 %v7086, %v7370
    %v7417 = vadd.f32 %v7087, %v7375
    %v7418 = vadd.f32 %v7088, %v7378
    %v7419 = vadd.f32 %v7089, %v7383
    %v7420 = vadd.f32 %v7090, %v7386
    %s7421 = sld [smem:[#allocation4 + $0x9]]
    %vm7422 = vcmp.ge.f32.partialorder %v7389, 0.0
    %vm7423 = vcmp.ge.f32.partialorder %v7390, 0.0
    %vm7424 = vcmp.ge.f32.partialorder %v7391, 0.0
    %vm7425 = vcmp.ge.f32.partialorder %v7392, 0.0
    %vm7426 = vcmp.ge.f32.partialorder %v7393, 0.0
    %vm7427 = vcmp.ge.f32.partialorder %v7394, 0.0
    %vm7428 = vcmp.ge.f32.partialorder %v7395, 0.0
    %vm7429 = vcmp.ge.f32.partialorder %v7396, 0.0
    %vm7430 = vcmp.ge.f32.partialorder %v7397, 0.0
    %vm7431 = vcmp.ge.f32.partialorder %v7398, 0.0
    %vm7432 = vcmp.ge.f32.partialorder %v7399, 0.0
    %vm7433 = vcmp.ge.f32.partialorder %v7400, 0.0
    %vm7434 = vcmp.ge.f32.partialorder %v7401, 0.0
    %vm7435 = vcmp.ge.f32.partialorder %v7402, 0.0
    %vm7436 = vcmp.ge.f32.partialorder %v7403, 0.0
    %vm7437 = vcmp.ge.f32.partialorder %v7404, 0.0
    %vm7438 = vcmp.ge.f32.partialorder %v7405, 0.0
    %vm7439 = vcmp.ge.f32.partialorder %v7406, 0.0
    %vm7440 = vcmp.ge.f32.partialorder %v7407, 0.0
    %vm7441 = vcmp.ge.f32.partialorder %v7408, 0.0
    %vm7442 = vcmp.ge.f32.partialorder %v7409, 0.0
    %vm7443 = vcmp.ge.f32.partialorder %v7410, 0.0
    %vm7444 = vcmp.ge.f32.partialorder %v7411, 0.0
    %vm7445 = vcmp.ge.f32.partialorder %v7412, 0.0
    %vm7446 = vcmp.ge.f32.partialorder %v7413, 0.0
    %vm7447 = vcmp.ge.f32.partialorder %v7414, 0.0
    %vm7448 = vcmp.ge.f32.partialorder %v7415, 0.0
    %vm7449 = vcmp.ge.f32.partialorder %v7416, 0.0
    %vm7450 = vcmp.ge.f32.partialorder %v7417, 0.0
    %vm7451 = vcmp.ge.f32.partialorder %v7418, 0.0
    %vm7452 = vcmp.ge.f32.partialorder %v7419, 0.0
    %vm7453 = vcmp.ge.f32.partialorder %v7420, 0.0
    %v7454 = vstv %s7421
    %v7455 = vmul.f32 %v7454, %v7389
    %v7456 = vmul.f32 %v7454, %v7390
    %v7457 = vmul.f32 %v7454, %v7391
    %v7458 = vmul.f32 %v7454, %v7392
    %v7459 = vmul.f32 %v7454, %v7393
    %v7460 = vmul.f32 %v7454, %v7394
    %v7461 = vmul.f32 %v7454, %v7395
    %v7462 = vmul.f32 %v7454, %v7396
    %v7463 = vmul.f32 %v7454, %v7397
    %v7464 = vmul.f32 %v7454, %v7398
    %v7465 = vmul.f32 %v7454, %v7399
    %v7466 = vmul.f32 %v7454, %v7400
    %v7467 = vmul.f32 %v7454, %v7401
    %v7468 = vmul.f32 %v7454, %v7402
    %v7469 = vmul.f32 %v7454, %v7403
    %v7470 = vmul.f32 %v7454, %v7404
    %v7471 = vmul.f32 %v7454, %v7405
    %v7472 = vmul.f32 %v7454, %v7406
    %v7473 = vmul.f32 %v7454, %v7407
    %v7474 = vmul.f32 %v7454, %v7408
    %v7475 = vmul.f32 %v7454, %v7409
    %v7476 = vmul.f32 %v7454, %v7410
    %v7477 = vmul.f32 %v7454, %v7411
    %v7478 = vmul.f32 %v7454, %v7412
    %v7479 = vmul.f32 %v7454, %v7413
    %v7480 = vmul.f32 %v7454, %v7414
    %v7481 = vmul.f32 %v7454, %v7415
    %v7482 = vmul.f32 %v7454, %v7416
    %v7483 = vmul.f32 %v7454, %v7417
    %v7484 = vmul.f32 %v7454, %v7418
    %v7485 = vmul.f32 %v7454, %v7419
    %v7486 = vmul.f32 %v7454, %v7420
    %v7487 = vsel %vm7422, %v7389, %v7455
    %v7488 = vsel %vm7423, %v7390, %v7456
    %v7489 = vsel %vm7424, %v7391, %v7457
    %v7490 = vsel %vm7425, %v7392, %v7458
    %v7491 = vsel %vm7426, %v7393, %v7459
    %v7492 = vsel %vm7427, %v7394, %v7460
    %v7493 = vsel %vm7428, %v7395, %v7461
    %v7494 = vsel %vm7429, %v7396, %v7462
    %v7495 = vsel %vm7430, %v7397, %v7463
    %v7496 = vsel %vm7431, %v7398, %v7464
    %v7497 = vsel %vm7432, %v7399, %v7465
    %v7498 = vsel %vm7433, %v7400, %v7466
    %v7499 = vsel %vm7434, %v7401, %v7467
    %v7500 = vsel %vm7435, %v7402, %v7468
    %v7501 = vsel %vm7436, %v7403, %v7469
    %v7502 = vsel %vm7437, %v7404, %v7470
    %v7503 = vsel %vm7438, %v7405, %v7471
    %v7504 = vsel %vm7439, %v7406, %v7472
    %v7505 = vsel %vm7440, %v7407, %v7473
    %v7506 = vsel %vm7441, %v7408, %v7474
    %v7507 = vsel %vm7442, %v7409, %v7475
    %v7508 = vsel %vm7443, %v7410, %v7476
    %v7509 = vsel %vm7444, %v7411, %v7477
    %v7510 = vsel %vm7445, %v7412, %v7478
    %v7511 = vsel %vm7446, %v7413, %v7479
    %v7512 = vsel %vm7447, %v7414, %v7480
    %v7513 = vsel %vm7448, %v7415, %v7481
    %v7514 = vsel %vm7449, %v7416, %v7482
    %v7515 = vsel %vm7450, %v7417, %v7483
    %v7516 = vsel %vm7451, %v7418, %v7484
    %v7517 = vsel %vm7452, %v7419, %v7485
    %v7518 = vsel %vm7453, %v7420, %v7486
    %v7519 = vadd.f32 %v7487, %v5897
    %v7520 = vadd.f32 %v7488, %v5898
    %v7521 = vadd.f32 %v7489, %v5899
    %v7522 = vadd.f32 %v7490, %v5900
    %v7523 = vadd.f32 %v7491, %v5901
    %v7524 = vadd.f32 %v7492, %v5902
    %v7525 = vadd.f32 %v7493, %v5903
    %v7526 = vadd.f32 %v7494, %v5904
    %v7527 = vadd.f32 %v7495, %v5905
    %v7528 = vadd.f32 %v7496, %v5906
    %v7529 = vadd.f32 %v7497, %v5907
    %v7530 = vadd.f32 %v7498, %v5908
    %v7531 = vadd.f32 %v7499, %v5909
    %v7532 = vadd.f32 %v7500, %v5910
    %v7533 = vadd.f32 %v7501, %v5911
    %v7534 = vadd.f32 %v7502, %v5912
    %v7535 = vadd.f32 %v7503, %v5913
    %v7536 = vadd.f32 %v7504, %v5914
    %v7537 = vadd.f32 %v7505, %v5915
    %v7538 = vadd.f32 %v7506, %v5916
    %v7539 = vadd.f32 %v7507, %v5917
    %v7540 = vadd.f32 %v7508, %v5918
    %v7541 = vadd.f32 %v7509, %v5919
    %v7542 = vadd.f32 %v7510, %v5920
    %v7543 = vadd.f32 %v7511, %v5921
    %v7544 = vadd.f32 %v7512, %v5922
    %v7545 = vadd.f32 %v7513, %v5923
    %v7546 = vadd.f32 %v7514, %v5924
    %v7547 = vadd.f32 %v7515, %v5925
    %v7548 = vadd.f32 %v7516, %v5926
    %v7549 = vadd.f32 %v7517, %v5927
    %v7550 = vadd.f32 %v7518, %v5928
    %v7551 = vld [vmem:[%s6 + $0xb] sm:$0x1]
    %7552 = vst.msk [vmem:[#allocation2 + $0x10] sm:$0xff] %vm59, %v7519
    %7553 = vst.msk [vmem:[#allocation2 + $0x18] sm:$0xff] %vm59, %v7520
    %7554 = vst.msk [vmem:[#allocation2 + $0x40] sm:$0xff] %vm59, %v7521
    %7555 = vst.msk [vmem:[#allocation2 + $0x48] sm:$0xff] %vm59, %v7522
    %7556 = vst.msk [vmem:[#allocation2 + $0x70] sm:$0xff] %vm59, %v7523
    %7557 = vst.msk [vmem:[#allocation2 + $0x78] sm:$0xff] %vm59, %v7524
    %7558 = vst.msk [vmem:[#allocation2 + $0xa0] sm:$0xff] %vm59, %v7525
    %7559 = vst.msk [vmem:[#allocation2 + $0xa8] sm:$0xff] %vm59, %v7526
    %7560 = vst.msk [vmem:[#allocation2 + $0xd0] sm:$0xff] %vm59, %v7527
    %7561 = vst.msk [vmem:[#allocation2 + $0xd8] sm:$0xff] %vm59, %v7528
    %7562 = vst.msk [vmem:[#allocation2 + $0x100] sm:$0xff] %vm59, %v7529
    %7563 = vst.msk [vmem:[#allocation2 + $0x108] sm:$0xff] %vm59, %v7530
    %7564 = vst.msk [vmem:[#allocation2 + $0x130] sm:$0xff] %vm59, %v7531
    %7565 = vst.msk [vmem:[#allocation2 + $0x138] sm:$0xff] %vm59, %v7532
    %7566 = vst.msk [vmem:[#allocation2 + $0x160] sm:$0xff] %vm59, %v7533
    %7567 = vst.msk [vmem:[#allocation2 + $0x168] sm:$0xff] %vm59, %v7534
    %7568 = vst.msk [vmem:[#allocation2 + $0x190] sm:$0xff] %vm59, %v7535
    %7569 = vst.msk [vmem:[#allocation2 + $0x198] sm:$0xff] %vm59, %v7536
    %7570 = vst.msk [vmem:[#allocation2 + $0x1c0] sm:$0xff] %vm59, %v7537
    %7571 = vst.msk [vmem:[#allocation2 + $0x1c8] sm:$0xff] %vm59, %v7538
    %7572 = vst.msk [vmem:[#allocation2 + $0x1f0] sm:$0xff] %vm59, %v7539
    %7573 = vst.msk [vmem:[#allocation2 + $0x1f8] sm:$0xff] %vm59, %v7540
    %7574 = vst.msk [vmem:[#allocation2 + $0x220] sm:$0xff] %vm59, %v7541
    %7575 = vst.msk [vmem:[#allocation2 + $0x228] sm:$0xff] %vm59, %v7542
    %7576 = vst.msk [vmem:[#allocation2 + $0x250] sm:$0xff] %vm59, %v7543
    %7577 = vst.msk [vmem:[#allocation2 + $0x258] sm:$0xff] %vm59, %v7544
    %7578 = vst.msk [vmem:[#allocation2 + $0x280] sm:$0xff] %vm59, %v7545
    %7579 = vst.msk [vmem:[#allocation2 + $0x288] sm:$0xff] %vm59, %v7546
    %7580 = vst.msk [vmem:[#allocation2 + $0x2b0] sm:$0xff] %vm59, %v7547
    %7581 = vst.msk [vmem:[#allocation2 + $0x2b8] sm:$0xff] %vm59, %v7548
    %7582 = vst.msk [vmem:[#allocation2 + $0x2e0] sm:$0xff] %vm59, %v7549
    %7583 = vst.msk [vmem:[#allocation2 + $0x2e8] sm:$0xff] %vm59, %v7550
    %v7584 = vld [vmem:[#allocation2 + $0x8] sm:$0xff]
    %v7585 = vld [vmem:[#allocation2 + $0x10] sm:$0xff]
    %v7586 = vld [vmem:[#allocation2 + $0x38] sm:$0xff]
    %v7587 = vld [vmem:[#allocation2 + $0x40] sm:$0xff]
    %v7588 = vld [vmem:[#allocation2 + $0x68] sm:$0xff]
    %v7589 = vld [vmem:[#allocation2 + $0x70] sm:$0xff]
    %v7590 = vld [vmem:[#allocation2 + $0x98] sm:$0xff]
    %v7591 = vld [vmem:[#allocation2 + $0xa0] sm:$0xff]
    %v7592 = vld [vmem:[#allocation2 + $0xc8] sm:$0xff]
    %v7593 = vld [vmem:[#allocation2 + $0xd0] sm:$0xff]
    %v7594 = vld [vmem:[#allocation2 + $0xf8] sm:$0xff]
    %v7595 = vld [vmem:[#allocation2 + $0x100] sm:$0xff]
    %v7596 = vld [vmem:[#allocation2 + $0x128] sm:$0xff]
    %v7597 = vld [vmem:[#allocation2 + $0x130] sm:$0xff]
    %v7598 = vld [vmem:[#allocation2 + $0x158] sm:$0xff]
    %v7599 = vld [vmem:[#allocation2 + $0x160] sm:$0xff]
    %v7600 = vld [vmem:[#allocation2 + $0x188] sm:$0xff]
    %v7601 = vld [vmem:[#allocation2 + $0x190] sm:$0xff]
    %v7602 = vld [vmem:[#allocation2 + $0x1b8] sm:$0xff]
    %v7603 = vld [vmem:[#allocation2 + $0x1c0] sm:$0xff]
    %v7604 = vld [vmem:[#allocation2 + $0x1e8] sm:$0xff]
    %v7605 = vld [vmem:[#allocation2 + $0x1f0] sm:$0xff]
    %v7606 = vld [vmem:[#allocation2 + $0x218] sm:$0xff]
    %v7607 = vld [vmem:[#allocation2 + $0x220] sm:$0xff]
    %v7608 = vld [vmem:[#allocation2 + $0x248] sm:$0xff]
    %v7609 = vld [vmem:[#allocation2 + $0x250] sm:$0xff]
    %v7610 = vld [vmem:[#allocation2 + $0x278] sm:$0xff]
    %v7611 = vld [vmem:[#allocation2 + $0x280] sm:$0xff]
    %v7612 = vld [vmem:[#allocation2 + $0x2a8] sm:$0xff]
    %v7613 = vld [vmem:[#allocation2 + $0x2b0] sm:$0xff]
    %v7614 = vld [vmem:[#allocation2 + $0x2d8] sm:$0xff]
    %v7615 = vld [vmem:[#allocation2 + $0x2e0] sm:$0xff]
    %s7616 = scalar_lea.vmem [#allocation7], 640
    %v7617 = vld [vmem:[%s7616] sm:$0xf]
    %v7618 = vld [vmem:[%s7616 + $0x4] sm:$0xf]
    %v7619 = vld [vmem:[%s7616 + $0x8] sm:$0xf]
    %v7620 = vld [vmem:[%s7616 + $0xc] sm:$0xf]
    %v7621 = vld [vmem:[%s7616 + $0x10] sm:$0xf]
    %v7622 = vld [vmem:[%s7616 + $0x14] sm:$0xf]
    %v7623 = vld [vmem:[%s7616 + $0x18] sm:$0xf]
    %v7624 = vld [vmem:[%s7616 + $0x1c] sm:$0xf]
    %v7625 = vld [vmem:[%s7616 + $0x20] sm:$0xf]
    %v7626 = vld [vmem:[%s7616 + $0x24] sm:$0xf]
    %v7627 = vpack.c.bf16 %v7585, %v7584
    %v7628 = vpack.c.bf16 %v7587, %v7586
    %v7629 = vpack.c.bf16 %v7589, %v7588
    %v7630 = vpack.c.bf16 %v7591, %v7590
    %v7631 = vpack.c.bf16 %v7593, %v7592
    %v7632 = vpack.c.bf16 %v7595, %v7594
    %v7633 = vpack.c.bf16 %v7597, %v7596
    %v7634 = vpack.c.bf16 %v7599, %v7598
    %v7635 = vpack.c.bf16 %v7601, %v7600
    %v7636 = vpack.c.bf16 %v7603, %v7602
    %v7637 = vpack.c.bf16 %v7605, %v7604
    %v7638 = vpack.c.bf16 %v7607, %v7606
    %v7639 = vpack.c.bf16 %v7609, %v7608
    %v7640 = vpack.c.bf16 %v7611, %v7610
    %v7641 = vpack.c.bf16 %v7613, %v7612
    %v7642 = vpack.c.bf16 %v7615, %v7614
    %v7653 = vunpack.c.l.b16 %v7617
    %v7654 = vunpack.c.l.b16 %v7618
    %v7655 = vunpack.c.l.b16 %v7619
    %v7656 = vunpack.c.l.b16 %v7620
    %v7657 = vunpack.c.l.b16 %v7621
    %v7658 = vunpack.c.l.b16 %v7622
    %v7659 = vunpack.c.l.b16 %v7623
    %v7660 = vunpack.c.l.b16 %v7624
    %v7661 = vunpack.c.l.b16 %v7625
    %v7662 = vunpack.c.l.b16 %v7626
    %v7663 = vpack.c.b16 %v7654, %v7653
    %v7664 = vpack.c.b16 %v7656, %v7655
    %v7665 = vpack.c.b16 %v7658, %v7657
    %v7666 = vpack.c.b16 %v7660, %v7659
    %v7667 = vpack.c.b16 %v7662, %v7661
    %v7674 = vsel %vm59, %v7627, 0
    %v7677 = vsel %vm59, %v7628, 0
    %v7680 = vsel %vm59, %v7629, 0
    %v7683 = vsel %vm59, %v7630, 0
    %v7686 = vsel %vm59, %v7631, 0
    %v7689 = vsel %vm59, %v7632, 0
    %v7692 = vsel %vm59, %v7633, 0
    %v7695 = vsel %vm59, %v7634, 0
    %v7698 = vsel %vm59, %v7635, 0
    %v7701 = vsel %vm59, %v7636, 0
    %v7704 = vsel %vm59, %v7637, 0
    %v7707 = vsel %vm59, %v7638, 0
    %v7710 = vsel %vm59, %v7639, 0
    %v7713 = vsel %vm59, %v7640, 0
    %v7716 = vsel %vm59, %v7641, 0
    %v7719 = vsel %vm59, %v7642, 0
    %7721 = vmatprep.subr.bf16.mxu0 0
    %7722 = vmatpush1.bf16.msra.mxu0 0
    %7723 = vmatprep.subr.bf16.mxu0 0
    %7724 = vmatpush1.bf16.msra.mxu0 0
    %7725 = vmatprep.subr.bf16.mxu0 0
    %7726 = vmatpush1.bf16.msra.mxu0 0
    %7727 = vmatprep.subr.bf16.mxu0 0
    %7728 = vmatpush1.bf16.msra.mxu0 %v7667
    %7729 = vmatprep.subr.bf16.mxu0 0
    %7730 = vmatpush1.bf16.msra.mxu0 %v7666
    %7731 = vmatprep.subr.bf16.mxu0 0
    %7732 = vmatpush1.bf16.msra.mxu0 %v7665
    %7733 = vmatprep.subr.bf16.mxu0 0
    %7734 = vmatpush1.bf16.msra.mxu0 %v7664
    %7735 = vmatprep.subr.bf16.mxu0 0
    %7736 = vmatpush1.bf16.msra.mxu0 %v7663
    %7737 = vmatprep.subr.bf16.mxu0 0
    %7738 = vmatpush2.bf16.msra.mxu0 0
    %7739 = vmatprep.subr.bf16.mxu0 0
    %7740 = vmatpush2.bf16.msra.mxu0 0
    %7741 = vmatprep.subr.bf16.mxu0 0
    %7742 = vmatpush2.bf16.msra.mxu0 0
    %7743 = vmatprep.subr.bf16.mxu0 0
    %7744 = vmatpush2.bf16.msra.mxu0 0
    %7745 = vmatprep.subr.bf16.mxu0 0
    %7746 = vmatpush2.bf16.msra.mxu0 0
    %7747 = vmatprep.subr.bf16.mxu0 0
    %7748 = vmatpush2.bf16.msra.mxu0 0
    %7749 = vmatprep.subr.bf16.mxu0 0
    %7750 = vmatpush2.bf16.msra.mxu0 0
    %7751 = vmatprep.subr.bf16.mxu0 0
    %7752 = vmatpush2.bf16.msra.mxu0 0
    %7753 = vmatprep.mubr.bf16.mxu0 0
    %7754 = vmatmul.mubr.bf16.gmra.mxu0 %v7674
    %v7755 = vpop.f32.mrf.mxu0
    %v7756 = vadd.f32 0.0, %v7755
    %v7757 = vpop.f32.mrf.mxu0
    %v7758 = vpop.f32.mrf.mxu0
    %v7759 = vadd.f32 0.0, %v7758
    %v7760 = vpop.f32.mrf.mxu0
    %7761 = vmatprep.mubr.bf16.mxu0 0
    %7762 = vmatmul.mubr.bf16.gmra.mxu0 %v7677
    %v7763 = vpop.f32.mrf.mxu0
    %v7764 = vadd.f32 0.0, %v7763
    %v7765 = vpop.f32.mrf.mxu0
    %v7766 = vpop.f32.mrf.mxu0
    %v7767 = vadd.f32 0.0, %v7766
    %v7768 = vpop.f32.mrf.mxu0
    %7769 = vmatprep.mubr.bf16.mxu0 0
    %7770 = vmatmul.mubr.bf16.gmra.mxu0 %v7680
    %v7771 = vpop.f32.mrf.mxu0
    %v7772 = vadd.f32 0.0, %v7771
    %v7773 = vpop.f32.mrf.mxu0
    %v7774 = vpop.f32.mrf.mxu0
    %v7775 = vadd.f32 0.0, %v7774
    %v7776 = vpop.f32.mrf.mxu0
    %7777 = vmatprep.mubr.bf16.mxu0 0
    %7778 = vmatmul.mubr.bf16.gmra.mxu0 %v7683
    %v7779 = vpop.f32.mrf.mxu0
    %v7780 = vadd.f32 0.0, %v7779
    %v7781 = vpop.f32.mrf.mxu0
    %v7782 = vpop.f32.mrf.mxu0
    %v7783 = vadd.f32 0.0, %v7782
    %v7784 = vpop.f32.mrf.mxu0
    %7785 = vmatprep.mubr.bf16.mxu0 0
    %7786 = vmatmul.mubr.bf16.gmra.mxu0 %v7686
    %v7787 = vpop.f32.mrf.mxu0
    %v7788 = vadd.f32 0.0, %v7787
    %v7789 = vpop.f32.mrf.mxu0
    %v7790 = vpop.f32.mrf.mxu0
    %v7791 = vadd.f32 0.0, %v7790
    %v7792 = vpop.f32.mrf.mxu0
    %7793 = vmatprep.mubr.bf16.mxu0 0
    %7794 = vmatmul.mubr.bf16.gmra.mxu0 %v7689
    %v7795 = vpop.f32.mrf.mxu0
    %v7796 = vadd.f32 0.0, %v7795
    %v7797 = vpop.f32.mrf.mxu0
    %v7798 = vpop.f32.mrf.mxu0
    %v7799 = vadd.f32 0.0, %v7798
    %v7800 = vpop.f32.mrf.mxu0
    %7801 = vmatprep.mubr.bf16.mxu0 0
    %7802 = vmatmul.mubr.bf16.gmra.mxu0 %v7692
    %v7803 = vpop.f32.mrf.mxu0
    %v7804 = vadd.f32 0.0, %v7803
    %v7805 = vpop.f32.mrf.mxu0
    %v7806 = vpop.f32.mrf.mxu0
    %v7807 = vadd.f32 0.0, %v7806
    %v7808 = vpop.f32.mrf.mxu0
    %7809 = vmatprep.mubr.bf16.mxu0 0
    %7810 = vmatmul.mubr.bf16.gmra.mxu0 %v7695
    %v7811 = vpop.f32.mrf.mxu0
    %v7812 = vadd.f32 0.0, %v7811
    %v7813 = vpop.f32.mrf.mxu0
    %v7814 = vpop.f32.mrf.mxu0
    %v7815 = vadd.f32 0.0, %v7814
    %v7816 = vpop.f32.mrf.mxu0
    %7817 = vmatprep.mubr.bf16.mxu0 0
    %7818 = vmatmul.mubr.bf16.gmra.mxu0 %v7698
    %v7819 = vpop.f32.mrf.mxu0
    %v7820 = vadd.f32 0.0, %v7819
    %v7821 = vpop.f32.mrf.mxu0
    %v7822 = vpop.f32.mrf.mxu0
    %v7823 = vadd.f32 0.0, %v7822
    %v7824 = vpop.f32.mrf.mxu0
    %7825 = vmatprep.mubr.bf16.mxu0 0
    %7826 = vmatmul.mubr.bf16.gmra.mxu0 %v7701
    %v7827 = vpop.f32.mrf.mxu0
    %v7828 = vadd.f32 0.0, %v7827
    %v7829 = vpop.f32.mrf.mxu0
    %v7830 = vpop.f32.mrf.mxu0
    %v7831 = vadd.f32 0.0, %v7830
    %v7832 = vpop.f32.mrf.mxu0
    %7833 = vmatprep.mubr.bf16.mxu0 0
    %7834 = vmatmul.mubr.bf16.gmra.mxu0 %v7704
    %v7835 = vpop.f32.mrf.mxu0
    %v7836 = vadd.f32 0.0, %v7835
    %v7837 = vpop.f32.mrf.mxu0
    %v7838 = vpop.f32.mrf.mxu0
    %v7839 = vadd.f32 0.0, %v7838
    %v7840 = vpop.f32.mrf.mxu0
    %7841 = vmatprep.mubr.bf16.mxu0 0
    %7842 = vmatmul.mubr.bf16.gmra.mxu0 %v7707
    %v7843 = vpop.f32.mrf.mxu0
    %v7844 = vadd.f32 0.0, %v7843
    %v7845 = vpop.f32.mrf.mxu0
    %v7846 = vpop.f32.mrf.mxu0
    %v7847 = vadd.f32 0.0, %v7846
    %v7848 = vpop.f32.mrf.mxu0
    %7849 = vmatprep.mubr.bf16.mxu0 0
    %7850 = vmatmul.mubr.bf16.gmra.mxu0 %v7710
    %v7851 = vpop.f32.mrf.mxu0
    %v7852 = vadd.f32 0.0, %v7851
    %v7853 = vpop.f32.mrf.mxu0
    %v7854 = vpop.f32.mrf.mxu0
    %v7855 = vadd.f32 0.0, %v7854
    %v7856 = vpop.f32.mrf.mxu0
    %7857 = vmatprep.mubr.bf16.mxu0 0
    %7858 = vmatmul.mubr.bf16.gmra.mxu0 %v7713
    %v7859 = vpop.f32.mrf.mxu0
    %v7860 = vadd.f32 0.0, %v7859
    %v7861 = vpop.f32.mrf.mxu0
    %v7862 = vpop.f32.mrf.mxu0
    %v7863 = vadd.f32 0.0, %v7862
    %v7864 = vpop.f32.mrf.mxu0
    %7865 = vmatprep.mubr.bf16.mxu0 0
    %7866 = vmatmul.mubr.bf16.gmra.mxu0 %v7716
    %v7867 = vpop.f32.mrf.mxu0
    %v7868 = vadd.f32 0.0, %v7867
    %v7869 = vpop.f32.mrf.mxu0
    %v7870 = vpop.f32.mrf.mxu0
    %v7871 = vadd.f32 0.0, %v7870
    %v7872 = vpop.f32.mrf.mxu0
    %7873 = vmatprep.mubr.bf16.mxu0 0
    %7874 = vmatmul.mubr.bf16.gmra.mxu0 %v7719
    %v7875 = vpop.f32.mrf.mxu0
    %v7876 = vadd.f32 0.0, %v7875
    %v7877 = vpop.f32.mrf.mxu0
    %v7878 = vpop.f32.mrf.mxu0
    %v7879 = vadd.f32 0.0, %v7878
    %v7880 = vpop.f32.mrf.mxu0
    %7881 = vdwg.mxu0
    %v7882 = vlaneseq
    %v7883 = vshrl.u32 %v7882, 7
    %v7884 = vsub.s32 0, %v7883
    %v7885 = vrot.slane %v7551, %v7884
    %v7886 = vadd.f32 %v7885, %v7756
    %v7887 = vadd.f32 %v7885, %v7759
    %v7888 = vadd.f32 %v7885, %v7764
    %v7889 = vadd.f32 %v7885, %v7767
    %v7890 = vadd.f32 %v7885, %v7772
    %v7891 = vadd.f32 %v7885, %v7775
    %v7892 = vadd.f32 %v7885, %v7780
    %v7893 = vadd.f32 %v7885, %v7783
    %v7894 = vadd.f32 %v7885, %v7788
    %v7895 = vadd.f32 %v7885, %v7791
    %v7896 = vadd.f32 %v7885, %v7796
    %v7897 = vadd.f32 %v7885, %v7799
    %v7898 = vadd.f32 %v7885, %v7804
    %v7899 = vadd.f32 %v7885, %v7807
    %v7900 = vadd.f32 %v7885, %v7812
    %v7901 = vadd.f32 %v7885, %v7815
    %v7902 = vadd.f32 %v7885, %v7820
    %v7903 = vadd.f32 %v7885, %v7823
    %v7904 = vadd.f32 %v7885, %v7828
    %v7905 = vadd.f32 %v7885, %v7831
    %v7906 = vadd.f32 %v7885, %v7836
    %v7907 = vadd.f32 %v7885, %v7839
    %v7908 = vadd.f32 %v7885, %v7844
    %v7909 = vadd.f32 %v7885, %v7847
    %v7910 = vadd.f32 %v7885, %v7852
    %v7911 = vadd.f32 %v7885, %v7855
    %v7912 = vadd.f32 %v7885, %v7860
    %v7913 = vadd.f32 %v7885, %v7863
    %v7914 = vadd.f32 %v7885, %v7868
    %v7915 = vadd.f32 %v7885, %v7871
    %v7916 = vadd.f32 %v7885, %v7876
    %v7917 = vadd.f32 %v7885, %v7879
    %v7918 = vld [vmem:[#allocation2 + $0x18] sm:$0xff]
    %v7919 = vld [vmem:[#allocation2 + $0x20] sm:$0xff]
    %v7920 = vld [vmem:[#allocation2 + $0x48] sm:$0xff]
    %v7921 = vld [vmem:[#allocation2 + $0x50] sm:$0xff]
    %v7922 = vld [vmem:[#allocation2 + $0x78] sm:$0xff]
    %v7923 = vld [vmem:[#allocation2 + $0x80] sm:$0xff]
    %v7924 = vld [vmem:[#allocation2 + $0xa8] sm:$0xff]
    %v7925 = vld [vmem:[#allocation2 + $0xb0] sm:$0xff]
    %v7926 = vld [vmem:[#allocation2 + $0xd8] sm:$0xff]
    %v7927 = vld [vmem:[#allocation2 + $0xe0] sm:$0xff]
    %v7928 = vld [vmem:[#allocation2 + $0x108] sm:$0xff]
    %v7929 = vld [vmem:[#allocation2 + $0x110] sm:$0xff]
    %v7930 = vld [vmem:[#allocation2 + $0x138] sm:$0xff]
    %v7931 = vld [vmem:[#allocation2 + $0x140] sm:$0xff]
    %v7932 = vld [vmem:[#allocation2 + $0x168] sm:$0xff]
    %v7933 = vld [vmem:[#allocation2 + $0x170] sm:$0xff]
    %v7934 = vld [vmem:[#allocation2 + $0x198] sm:$0xff]
    %v7935 = vld [vmem:[#allocation2 + $0x1a0] sm:$0xff]
    %v7936 = vld [vmem:[#allocation2 + $0x1c8] sm:$0xff]
    %v7937 = vld [vmem:[#allocation2 + $0x1d0] sm:$0xff]
    %v7938 = vld [vmem:[#allocation2 + $0x1f8] sm:$0xff]
    %v7939 = vld [vmem:[#allocation2 + $0x200] sm:$0xff]
    %v7940 = vld [vmem:[#allocation2 + $0x228] sm:$0xff]
    %v7941 = vld [vmem:[#allocation2 + $0x230] sm:$0xff]
    %v7942 = vld [vmem:[#allocation2 + $0x258] sm:$0xff]
    %v7943 = vld [vmem:[#allocation2 + $0x260] sm:$0xff]
    %v7944 = vld [vmem:[#allocation2 + $0x288] sm:$0xff]
    %v7945 = vld [vmem:[#allocation2 + $0x290] sm:$0xff]
    %v7946 = vld [vmem:[#allocation2 + $0x2b8] sm:$0xff]
    %v7947 = vld [vmem:[#allocation2 + $0x2c0] sm:$0xff]
    %v7948 = vld [vmem:[#allocation2 + $0x2e8] sm:$0xff]
    %v7949 = vld [vmem:[#allocation2 + $0x2f0] sm:$0xff]
    %s7950 = scalar_lea.vmem [#allocation7], 680
    %v7951 = vld [vmem:[%s7950] sm:$0xf]
    %v7952 = vld [vmem:[%s7950 + $0x4] sm:$0xf]
    %v7953 = vld [vmem:[%s7950 + $0x8] sm:$0xf]
    %v7954 = vld [vmem:[%s7950 + $0xc] sm:$0xf]
    %v7955 = vld [vmem:[%s7950 + $0x10] sm:$0xf]
    %v7956 = vld [vmem:[%s7950 + $0x14] sm:$0xf]
    %v7957 = vld [vmem:[%s7950 + $0x18] sm:$0xf]
    %v7958 = vld [vmem:[%s7950 + $0x1c] sm:$0xf]
    %v7959 = vld [vmem:[%s7950 + $0x20] sm:$0xf]
    %v7960 = vld [vmem:[%s7950 + $0x24] sm:$0xf]
    %v7961 = vpack.c.bf16 %v7919, %v7918
    %v7962 = vpack.c.bf16 %v7921, %v7920
    %v7963 = vpack.c.bf16 %v7923, %v7922
    %v7964 = vpack.c.bf16 %v7925, %v7924
    %v7965 = vpack.c.bf16 %v7927, %v7926
    %v7966 = vpack.c.bf16 %v7929, %v7928
    %v7967 = vpack.c.bf16 %v7931, %v7930
    %v7968 = vpack.c.bf16 %v7933, %v7932
    %v7969 = vpack.c.bf16 %v7935, %v7934
    %v7970 = vpack.c.bf16 %v7937, %v7936
    %v7971 = vpack.c.bf16 %v7939, %v7938
    %v7972 = vpack.c.bf16 %v7941, %v7940
    %v7973 = vpack.c.bf16 %v7943, %v7942
    %v7974 = vpack.c.bf16 %v7945, %v7944
    %v7975 = vpack.c.bf16 %v7947, %v7946
    %v7976 = vpack.c.bf16 %v7949, %v7948
    %v7987 = vunpack.c.l.b16 %v7951
    %v7988 = vunpack.c.l.b16 %v7952
    %v7989 = vunpack.c.l.b16 %v7953
    %v7990 = vunpack.c.l.b16 %v7954
    %v7991 = vunpack.c.l.b16 %v7955
    %v7992 = vunpack.c.l.b16 %v7956
    %v7993 = vunpack.c.l.b16 %v7957
    %v7994 = vunpack.c.l.b16 %v7958
    %v7995 = vunpack.c.l.b16 %v7959
    %v7996 = vunpack.c.l.b16 %v7960
    %v7997 = vpack.c.b16 %v7988, %v7987
    %v7998 = vpack.c.b16 %v7990, %v7989
    %v7999 = vpack.c.b16 %v7992, %v7991
    %v8000 = vpack.c.b16 %v7994, %v7993
    %v8001 = vpack.c.b16 %v7996, %v7995
    %v8008 = vsel %vm59, %v7961, 0
    %v8011 = vsel %vm59, %v7962, 0
    %v8014 = vsel %vm59, %v7963, 0
    %v8017 = vsel %vm59, %v7964, 0
    %v8020 = vsel %vm59, %v7965, 0
    %v8023 = vsel %vm59, %v7966, 0
    %v8026 = vsel %vm59, %v7967, 0
    %v8029 = vsel %vm59, %v7968, 0
    %v8032 = vsel %vm59, %v7969, 0
    %v8035 = vsel %vm59, %v7970, 0
    %v8038 = vsel %vm59, %v7971, 0
    %v8041 = vsel %vm59, %v7972, 0
    %v8044 = vsel %vm59, %v7973, 0
    %v8047 = vsel %vm59, %v7974, 0
    %v8050 = vsel %vm59, %v7975, 0
    %v8053 = vsel %vm59, %v7976, 0
    %8055 = vmatprep.subr.bf16.mxu0 0
    %8056 = vmatpush1.bf16.msra.mxu0 0
    %8057 = vmatprep.subr.bf16.mxu0 0
    %8058 = vmatpush1.bf16.msra.mxu0 0
    %8059 = vmatprep.subr.bf16.mxu0 0
    %8060 = vmatpush1.bf16.msra.mxu0 0
    %8061 = vmatprep.subr.bf16.mxu0 0
    %8062 = vmatpush1.bf16.msra.mxu0 %v8001
    %8063 = vmatprep.subr.bf16.mxu0 0
    %8064 = vmatpush1.bf16.msra.mxu0 %v8000
    %8065 = vmatprep.subr.bf16.mxu0 0
    %8066 = vmatpush1.bf16.msra.mxu0 %v7999
    %8067 = vmatprep.subr.bf16.mxu0 0
    %8068 = vmatpush1.bf16.msra.mxu0 %v7998
    %8069 = vmatprep.subr.bf16.mxu0 0
    %8070 = vmatpush1.bf16.msra.mxu0 %v7997
    %8071 = vmatprep.subr.bf16.mxu0 0
    %8072 = vmatpush2.bf16.msra.mxu0 0
    %8073 = vmatprep.subr.bf16.mxu0 0
    %8074 = vmatpush2.bf16.msra.mxu0 0
    %8075 = vmatprep.subr.bf16.mxu0 0
    %8076 = vmatpush2.bf16.msra.mxu0 0
    %8077 = vmatprep.subr.bf16.mxu0 0
    %8078 = vmatpush2.bf16.msra.mxu0 0
    %8079 = vmatprep.subr.bf16.mxu0 0
    %8080 = vmatpush2.bf16.msra.mxu0 0
    %8081 = vmatprep.subr.bf16.mxu0 0
    %8082 = vmatpush2.bf16.msra.mxu0 0
    %8083 = vmatprep.subr.bf16.mxu0 0
    %8084 = vmatpush2.bf16.msra.mxu0 0
    %8085 = vmatprep.subr.bf16.mxu0 0
    %8086 = vmatpush2.bf16.msra.mxu0 0
    %8087 = vmatprep.mubr.bf16.mxu0 0
    %8088 = vmatmul.mubr.bf16.gmra.mxu0 %v8008
    %v8089 = vpop.f32.mrf.mxu0
    %v8090 = vadd.f32 0.0, %v8089
    %v8091 = vpop.f32.mrf.mxu0
    %v8092 = vpop.f32.mrf.mxu0
    %v8093 = vadd.f32 0.0, %v8092
    %v8094 = vpop.f32.mrf.mxu0
    %8095 = vmatprep.mubr.bf16.mxu0 0
    %8096 = vmatmul.mubr.bf16.gmra.mxu0 %v8011
    %v8097 = vpop.f32.mrf.mxu0
    %v8098 = vadd.f32 0.0, %v8097
    %v8099 = vpop.f32.mrf.mxu0
    %v8100 = vpop.f32.mrf.mxu0
    %v8101 = vadd.f32 0.0, %v8100
    %v8102 = vpop.f32.mrf.mxu0
    %8103 = vmatprep.mubr.bf16.mxu0 0
    %8104 = vmatmul.mubr.bf16.gmra.mxu0 %v8014
    %v8105 = vpop.f32.mrf.mxu0
    %v8106 = vadd.f32 0.0, %v8105
    %v8107 = vpop.f32.mrf.mxu0
    %v8108 = vpop.f32.mrf.mxu0
    %v8109 = vadd.f32 0.0, %v8108
    %v8110 = vpop.f32.mrf.mxu0
    %8111 = vmatprep.mubr.bf16.mxu0 0
    %8112 = vmatmul.mubr.bf16.gmra.mxu0 %v8017
    %v8113 = vpop.f32.mrf.mxu0
    %v8114 = vadd.f32 0.0, %v8113
    %v8115 = vpop.f32.mrf.mxu0
    %v8116 = vpop.f32.mrf.mxu0
    %v8117 = vadd.f32 0.0, %v8116
    %v8118 = vpop.f32.mrf.mxu0
    %8119 = vmatprep.mubr.bf16.mxu0 0
    %8120 = vmatmul.mubr.bf16.gmra.mxu0 %v8020
    %v8121 = vpop.f32.mrf.mxu0
    %v8122 = vadd.f32 0.0, %v8121
    %v8123 = vpop.f32.mrf.mxu0
    %v8124 = vpop.f32.mrf.mxu0
    %v8125 = vadd.f32 0.0, %v8124
    %v8126 = vpop.f32.mrf.mxu0
    %8127 = vmatprep.mubr.bf16.mxu0 0
    %8128 = vmatmul.mubr.bf16.gmra.mxu0 %v8023
    %v8129 = vpop.f32.mrf.mxu0
    %v8130 = vadd.f32 0.0, %v8129
    %v8131 = vpop.f32.mrf.mxu0
    %v8132 = vpop.f32.mrf.mxu0
    %v8133 = vadd.f32 0.0, %v8132
    %v8134 = vpop.f32.mrf.mxu0
    %8135 = vmatprep.mubr.bf16.mxu0 0
    %8136 = vmatmul.mubr.bf16.gmra.mxu0 %v8026
    %v8137 = vpop.f32.mrf.mxu0
    %v8138 = vadd.f32 0.0, %v8137
    %v8139 = vpop.f32.mrf.mxu0
    %v8140 = vpop.f32.mrf.mxu0
    %v8141 = vadd.f32 0.0, %v8140
    %v8142 = vpop.f32.mrf.mxu0
    %8143 = vmatprep.mubr.bf16.mxu0 0
    %8144 = vmatmul.mubr.bf16.gmra.mxu0 %v8029
    %v8145 = vpop.f32.mrf.mxu0
    %v8146 = vadd.f32 0.0, %v8145
    %v8147 = vpop.f32.mrf.mxu0
    %v8148 = vpop.f32.mrf.mxu0
    %v8149 = vadd.f32 0.0, %v8148
    %v8150 = vpop.f32.mrf.mxu0
    %8151 = vmatprep.mubr.bf16.mxu0 0
    %8152 = vmatmul.mubr.bf16.gmra.mxu0 %v8032
    %v8153 = vpop.f32.mrf.mxu0
    %v8154 = vadd.f32 0.0, %v8153
    %v8155 = vpop.f32.mrf.mxu0
    %v8156 = vpop.f32.mrf.mxu0
    %v8157 = vadd.f32 0.0, %v8156
    %v8158 = vpop.f32.mrf.mxu0
    %8159 = vmatprep.mubr.bf16.mxu0 0
    %8160 = vmatmul.mubr.bf16.gmra.mxu0 %v8035
    %v8161 = vpop.f32.mrf.mxu0
    %v8162 = vadd.f32 0.0, %v8161
    %v8163 = vpop.f32.mrf.mxu0
    %v8164 = vpop.f32.mrf.mxu0
    %v8165 = vadd.f32 0.0, %v8164
    %v8166 = vpop.f32.mrf.mxu0
    %8167 = vmatprep.mubr.bf16.mxu0 0
    %8168 = vmatmul.mubr.bf16.gmra.mxu0 %v8038
    %v8169 = vpop.f32.mrf.mxu0
    %v8170 = vadd.f32 0.0, %v8169
    %v8171 = vpop.f32.mrf.mxu0
    %v8172 = vpop.f32.mrf.mxu0
    %v8173 = vadd.f32 0.0, %v8172
    %v8174 = vpop.f32.mrf.mxu0
    %8175 = vmatprep.mubr.bf16.mxu0 0
    %8176 = vmatmul.mubr.bf16.gmra.mxu0 %v8041
    %v8177 = vpop.f32.mrf.mxu0
    %v8178 = vadd.f32 0.0, %v8177
    %v8179 = vpop.f32.mrf.mxu0
    %v8180 = vpop.f32.mrf.mxu0
    %v8181 = vadd.f32 0.0, %v8180
    %v8182 = vpop.f32.mrf.mxu0
    %8183 = vmatprep.mubr.bf16.mxu0 0
    %8184 = vmatmul.mubr.bf16.gmra.mxu0 %v8044
    %v8185 = vpop.f32.mrf.mxu0
    %v8186 = vadd.f32 0.0, %v8185
    %v8187 = vpop.f32.mrf.mxu0
    %v8188 = vpop.f32.mrf.mxu0
    %v8189 = vadd.f32 0.0, %v8188
    %v8190 = vpop.f32.mrf.mxu0
    %8191 = vmatprep.mubr.bf16.mxu0 0
    %8192 = vmatmul.mubr.bf16.gmra.mxu0 %v8047
    %v8193 = vpop.f32.mrf.mxu0
    %v8194 = vadd.f32 0.0, %v8193
    %v8195 = vpop.f32.mrf.mxu0
    %v8196 = vpop.f32.mrf.mxu0
    %v8197 = vadd.f32 0.0, %v8196
    %v8198 = vpop.f32.mrf.mxu0
    %8199 = vmatprep.mubr.bf16.mxu0 0
    %8200 = vmatmul.mubr.bf16.gmra.mxu0 %v8050
    %v8201 = vpop.f32.mrf.mxu0
    %v8202 = vadd.f32 0.0, %v8201
    %v8203 = vpop.f32.mrf.mxu0
    %v8204 = vpop.f32.mrf.mxu0
    %v8205 = vadd.f32 0.0, %v8204
    %v8206 = vpop.f32.mrf.mxu0
    %8207 = vmatprep.mubr.bf16.mxu0 0
    %8208 = vmatmul.mubr.bf16.gmra.mxu0 %v8053
    %v8209 = vpop.f32.mrf.mxu0
    %v8210 = vadd.f32 0.0, %v8209
    %v8211 = vpop.f32.mrf.mxu0
    %v8212 = vpop.f32.mrf.mxu0
    %v8213 = vadd.f32 0.0, %v8212
    %v8214 = vpop.f32.mrf.mxu0
    %8215 = vdwg.mxu0
    %v8216 = vadd.f32 %v7886, %v8090
    %v8217 = vadd.f32 %v7887, %v8093
    %v8218 = vadd.f32 %v7888, %v8098
    %v8219 = vadd.f32 %v7889, %v8101
    %v8220 = vadd.f32 %v7890, %v8106
    %v8221 = vadd.f32 %v7891, %v8109
    %v8222 = vadd.f32 %v7892, %v8114
    %v8223 = vadd.f32 %v7893, %v8117
    %v8224 = vadd.f32 %v7894, %v8122
    %v8225 = vadd.f32 %v7895, %v8125
    %v8226 = vadd.f32 %v7896, %v8130
    %v8227 = vadd.f32 %v7897, %v8133
    %v8228 = vadd.f32 %v7898, %v8138
    %v8229 = vadd.f32 %v7899, %v8141
    %v8230 = vadd.f32 %v7900, %v8146
    %v8231 = vadd.f32 %v7901, %v8149
    %v8232 = vadd.f32 %v7902, %v8154
    %v8233 = vadd.f32 %v7903, %v8157
    %v8234 = vadd.f32 %v7904, %v8162
    %v8235 = vadd.f32 %v7905, %v8165
    %v8236 = vadd.f32 %v7906, %v8170
    %v8237 = vadd.f32 %v7907, %v8173
    %v8238 = vadd.f32 %v7908, %v8178
    %v8239 = vadd.f32 %v7909, %v8181
    %v8240 = vadd.f32 %v7910, %v8186
    %v8241 = vadd.f32 %v7911, %v8189
    %v8242 = vadd.f32 %v7912, %v8194
    %v8243 = vadd.f32 %v7913, %v8197
    %v8244 = vadd.f32 %v7914, %v8202
    %v8245 = vadd.f32 %v7915, %v8205
    %v8246 = vadd.f32 %v7916, %v8210
    %v8247 = vadd.f32 %v7917, %v8213
    %s8248 = sld [smem:[#allocation4 + $0xa]]
    %vm8249 = vcmp.ge.f32.partialorder %v8216, 0.0
    %vm8250 = vcmp.ge.f32.partialorder %v8217, 0.0
    %vm8251 = vcmp.ge.f32.partialorder %v8218, 0.0
    %vm8252 = vcmp.ge.f32.partialorder %v8219, 0.0
    %vm8253 = vcmp.ge.f32.partialorder %v8220, 0.0
    %vm8254 = vcmp.ge.f32.partialorder %v8221, 0.0
    %vm8255 = vcmp.ge.f32.partialorder %v8222, 0.0
    %vm8256 = vcmp.ge.f32.partialorder %v8223, 0.0
    %vm8257 = vcmp.ge.f32.partialorder %v8224, 0.0
    %vm8258 = vcmp.ge.f32.partialorder %v8225, 0.0
    %vm8259 = vcmp.ge.f32.partialorder %v8226, 0.0
    %vm8260 = vcmp.ge.f32.partialorder %v8227, 0.0
    %vm8261 = vcmp.ge.f32.partialorder %v8228, 0.0
    %vm8262 = vcmp.ge.f32.partialorder %v8229, 0.0
    %vm8263 = vcmp.ge.f32.partialorder %v8230, 0.0
    %vm8264 = vcmp.ge.f32.partialorder %v8231, 0.0
    %vm8265 = vcmp.ge.f32.partialorder %v8232, 0.0
    %vm8266 = vcmp.ge.f32.partialorder %v8233, 0.0
    %vm8267 = vcmp.ge.f32.partialorder %v8234, 0.0
    %vm8268 = vcmp.ge.f32.partialorder %v8235, 0.0
    %vm8269 = vcmp.ge.f32.partialorder %v8236, 0.0
    %vm8270 = vcmp.ge.f32.partialorder %v8237, 0.0
    %vm8271 = vcmp.ge.f32.partialorder %v8238, 0.0
    %vm8272 = vcmp.ge.f32.partialorder %v8239, 0.0
    %vm8273 = vcmp.ge.f32.partialorder %v8240, 0.0
    %vm8274 = vcmp.ge.f32.partialorder %v8241, 0.0
    %vm8275 = vcmp.ge.f32.partialorder %v8242, 0.0
    %vm8276 = vcmp.ge.f32.partialorder %v8243, 0.0
    %vm8277 = vcmp.ge.f32.partialorder %v8244, 0.0
    %vm8278 = vcmp.ge.f32.partialorder %v8245, 0.0
    %vm8279 = vcmp.ge.f32.partialorder %v8246, 0.0
    %vm8280 = vcmp.ge.f32.partialorder %v8247, 0.0
    %v8281 = vstv %s8248
    %v8282 = vmul.f32 %v8281, %v8216
    %v8283 = vmul.f32 %v8281, %v8217
    %v8284 = vmul.f32 %v8281, %v8218
    %v8285 = vmul.f32 %v8281, %v8219
    %v8286 = vmul.f32 %v8281, %v8220
    %v8287 = vmul.f32 %v8281, %v8221
    %v8288 = vmul.f32 %v8281, %v8222
    %v8289 = vmul.f32 %v8281, %v8223
    %v8290 = vmul.f32 %v8281, %v8224
    %v8291 = vmul.f32 %v8281, %v8225
    %v8292 = vmul.f32 %v8281, %v8226
    %v8293 = vmul.f32 %v8281, %v8227
    %v8294 = vmul.f32 %v8281, %v8228
    %v8295 = vmul.f32 %v8281, %v8229
    %v8296 = vmul.f32 %v8281, %v8230
    %v8297 = vmul.f32 %v8281, %v8231
    %v8298 = vmul.f32 %v8281, %v8232
    %v8299 = vmul.f32 %v8281, %v8233
    %v8300 = vmul.f32 %v8281, %v8234
    %v8301 = vmul.f32 %v8281, %v8235
    %v8302 = vmul.f32 %v8281, %v8236
    %v8303 = vmul.f32 %v8281, %v8237
    %v8304 = vmul.f32 %v8281, %v8238
    %v8305 = vmul.f32 %v8281, %v8239
    %v8306 = vmul.f32 %v8281, %v8240
    %v8307 = vmul.f32 %v8281, %v8241
    %v8308 = vmul.f32 %v8281, %v8242
    %v8309 = vmul.f32 %v8281, %v8243
    %v8310 = vmul.f32 %v8281, %v8244
    %v8311 = vmul.f32 %v8281, %v8245
    %v8312 = vmul.f32 %v8281, %v8246
    %v8313 = vmul.f32 %v8281, %v8247
    %v8314 = vsel %vm8249, %v8216, %v8282
    %v8315 = vsel %vm8250, %v8217, %v8283
    %v8316 = vsel %vm8251, %v8218, %v8284
    %v8317 = vsel %vm8252, %v8219, %v8285
    %v8318 = vsel %vm8253, %v8220, %v8286
    %v8319 = vsel %vm8254, %v8221, %v8287
    %v8320 = vsel %vm8255, %v8222, %v8288
    %v8321 = vsel %vm8256, %v8223, %v8289
    %v8322 = vsel %vm8257, %v8224, %v8290
    %v8323 = vsel %vm8258, %v8225, %v8291
    %v8324 = vsel %vm8259, %v8226, %v8292
    %v8325 = vsel %vm8260, %v8227, %v8293
    %v8326 = vsel %vm8261, %v8228, %v8294
    %v8327 = vsel %vm8262, %v8229, %v8295
    %v8328 = vsel %vm8263, %v8230, %v8296
    %v8329 = vsel %vm8264, %v8231, %v8297
    %v8330 = vsel %vm8265, %v8232, %v8298
    %v8331 = vsel %vm8266, %v8233, %v8299
    %v8332 = vsel %vm8267, %v8234, %v8300
    %v8333 = vsel %vm8268, %v8235, %v8301
    %v8334 = vsel %vm8269, %v8236, %v8302
    %v8335 = vsel %vm8270, %v8237, %v8303
    %v8336 = vsel %vm8271, %v8238, %v8304
    %v8337 = vsel %vm8272, %v8239, %v8305
    %v8338 = vsel %vm8273, %v8240, %v8306
    %v8339 = vsel %vm8274, %v8241, %v8307
    %v8340 = vsel %vm8275, %v8242, %v8308
    %v8341 = vsel %vm8276, %v8243, %v8309
    %v8342 = vsel %vm8277, %v8244, %v8310
    %v8343 = vsel %vm8278, %v8245, %v8311
    %v8344 = vsel %vm8279, %v8246, %v8312
    %v8345 = vsel %vm8280, %v8247, %v8313
    %v8346 = vld [vmem:[%s6 + $0xc] sm:$0x1]
    %8347 = vst.msk [vmem:[#allocation2 + $0x10] sm:$0xff] %vm59, %v8314
    %8348 = vst.msk [vmem:[#allocation2 + $0x18] sm:$0xff] %vm59, %v8315
    %8349 = vst.msk [vmem:[#allocation2 + $0x40] sm:$0xff] %vm59, %v8316
    %8350 = vst.msk [vmem:[#allocation2 + $0x48] sm:$0xff] %vm59, %v8317
    %8351 = vst.msk [vmem:[#allocation2 + $0x70] sm:$0xff] %vm59, %v8318
    %8352 = vst.msk [vmem:[#allocation2 + $0x78] sm:$0xff] %vm59, %v8319
    %8353 = vst.msk [vmem:[#allocation2 + $0xa0] sm:$0xff] %vm59, %v8320
    %8354 = vst.msk [vmem:[#allocation2 + $0xa8] sm:$0xff] %vm59, %v8321
    %8355 = vst.msk [vmem:[#allocation2 + $0xd0] sm:$0xff] %vm59, %v8322
    %8356 = vst.msk [vmem:[#allocation2 + $0xd8] sm:$0xff] %vm59, %v8323
    %8357 = vst.msk [vmem:[#allocation2 + $0x100] sm:$0xff] %vm59, %v8324
    %8358 = vst.msk [vmem:[#allocation2 + $0x108] sm:$0xff] %vm59, %v8325
    %8359 = vst.msk [vmem:[#allocation2 + $0x130] sm:$0xff] %vm59, %v8326
    %8360 = vst.msk [vmem:[#allocation2 + $0x138] sm:$0xff] %vm59, %v8327
    %8361 = vst.msk [vmem:[#allocation2 + $0x160] sm:$0xff] %vm59, %v8328
    %8362 = vst.msk [vmem:[#allocation2 + $0x168] sm:$0xff] %vm59, %v8329
    %8363 = vst.msk [vmem:[#allocation2 + $0x190] sm:$0xff] %vm59, %v8330
    %8364 = vst.msk [vmem:[#allocation2 + $0x198] sm:$0xff] %vm59, %v8331
    %8365 = vst.msk [vmem:[#allocation2 + $0x1c0] sm:$0xff] %vm59, %v8332
    %8366 = vst.msk [vmem:[#allocation2 + $0x1c8] sm:$0xff] %vm59, %v8333
    %8367 = vst.msk [vmem:[#allocation2 + $0x1f0] sm:$0xff] %vm59, %v8334
    %8368 = vst.msk [vmem:[#allocation2 + $0x1f8] sm:$0xff] %vm59, %v8335
    %8369 = vst.msk [vmem:[#allocation2 + $0x220] sm:$0xff] %vm59, %v8336
    %8370 = vst.msk [vmem:[#allocation2 + $0x228] sm:$0xff] %vm59, %v8337
    %8371 = vst.msk [vmem:[#allocation2 + $0x250] sm:$0xff] %vm59, %v8338
    %8372 = vst.msk [vmem:[#allocation2 + $0x258] sm:$0xff] %vm59, %v8339
    %8373 = vst.msk [vmem:[#allocation2 + $0x280] sm:$0xff] %vm59, %v8340
    %8374 = vst.msk [vmem:[#allocation2 + $0x288] sm:$0xff] %vm59, %v8341
    %8375 = vst.msk [vmem:[#allocation2 + $0x2b0] sm:$0xff] %vm59, %v8342
    %8376 = vst.msk [vmem:[#allocation2 + $0x2b8] sm:$0xff] %vm59, %v8343
    %8377 = vst.msk [vmem:[#allocation2 + $0x2e0] sm:$0xff] %vm59, %v8344
    %8378 = vst.msk [vmem:[#allocation2 + $0x2e8] sm:$0xff] %vm59, %v8345
    %v8379 = vld [vmem:[#allocation2 + $0x8] sm:$0xff]
    %v8380 = vld [vmem:[#allocation2 + $0x10] sm:$0xff]
    %v8381 = vld [vmem:[#allocation2 + $0x38] sm:$0xff]
    %v8382 = vld [vmem:[#allocation2 + $0x40] sm:$0xff]
    %v8383 = vld [vmem:[#allocation2 + $0x68] sm:$0xff]
    %v8384 = vld [vmem:[#allocation2 + $0x70] sm:$0xff]
    %v8385 = vld [vmem:[#allocation2 + $0x98] sm:$0xff]
    %v8386 = vld [vmem:[#allocation2 + $0xa0] sm:$0xff]
    %v8387 = vld [vmem:[#allocation2 + $0xc8] sm:$0xff]
    %v8388 = vld [vmem:[#allocation2 + $0xd0] sm:$0xff]
    %v8389 = vld [vmem:[#allocation2 + $0xf8] sm:$0xff]
    %v8390 = vld [vmem:[#allocation2 + $0x100] sm:$0xff]
    %v8391 = vld [vmem:[#allocation2 + $0x128] sm:$0xff]
    %v8392 = vld [vmem:[#allocation2 + $0x130] sm:$0xff]
    %v8393 = vld [vmem:[#allocation2 + $0x158] sm:$0xff]
    %v8394 = vld [vmem:[#allocation2 + $0x160] sm:$0xff]
    %v8395 = vld [vmem:[#allocation2 + $0x188] sm:$0xff]
    %v8396 = vld [vmem:[#allocation2 + $0x190] sm:$0xff]
    %v8397 = vld [vmem:[#allocation2 + $0x1b8] sm:$0xff]
    %v8398 = vld [vmem:[#allocation2 + $0x1c0] sm:$0xff]
    %v8399 = vld [vmem:[#allocation2 + $0x1e8] sm:$0xff]
    %v8400 = vld [vmem:[#allocation2 + $0x1f0] sm:$0xff]
    %v8401 = vld [vmem:[#allocation2 + $0x218] sm:$0xff]
    %v8402 = vld [vmem:[#allocation2 + $0x220] sm:$0xff]
    %v8403 = vld [vmem:[#allocation2 + $0x248] sm:$0xff]
    %v8404 = vld [vmem:[#allocation2 + $0x250] sm:$0xff]
    %v8405 = vld [vmem:[#allocation2 + $0x278] sm:$0xff]
    %v8406 = vld [vmem:[#allocation2 + $0x280] sm:$0xff]
    %v8407 = vld [vmem:[#allocation2 + $0x2a8] sm:$0xff]
    %v8408 = vld [vmem:[#allocation2 + $0x2b0] sm:$0xff]
    %v8409 = vld [vmem:[#allocation2 + $0x2d8] sm:$0xff]
    %v8410 = vld [vmem:[#allocation2 + $0x2e0] sm:$0xff]
    %s8411 = scalar_lea.vmem [#allocation7], 720
    %v8412 = vld [vmem:[%s8411] sm:$0xf]
    %v8413 = vld [vmem:[%s8411 + $0x4] sm:$0xf]
    %v8414 = vld [vmem:[%s8411 + $0x8] sm:$0xf]
    %v8415 = vld [vmem:[%s8411 + $0xc] sm:$0xf]
    %v8416 = vld [vmem:[%s8411 + $0x10] sm:$0xf]
    %v8417 = vld [vmem:[%s8411 + $0x14] sm:$0xf]
    %v8418 = vld [vmem:[%s8411 + $0x18] sm:$0xf]
    %v8419 = vld [vmem:[%s8411 + $0x1c] sm:$0xf]
    %v8420 = vld [vmem:[%s8411 + $0x20] sm:$0xf]
    %v8421 = vld [vmem:[%s8411 + $0x24] sm:$0xf]
    %v8422 = vpack.c.bf16 %v8380, %v8379
    %v8423 = vpack.c.bf16 %v8382, %v8381
    %v8424 = vpack.c.bf16 %v8384, %v8383
    %v8425 = vpack.c.bf16 %v8386, %v8385
    %v8426 = vpack.c.bf16 %v8388, %v8387
    %v8427 = vpack.c.bf16 %v8390, %v8389
    %v8428 = vpack.c.bf16 %v8392, %v8391
    %v8429 = vpack.c.bf16 %v8394, %v8393
    %v8430 = vpack.c.bf16 %v8396, %v8395
    %v8431 = vpack.c.bf16 %v8398, %v8397
    %v8432 = vpack.c.bf16 %v8400, %v8399
    %v8433 = vpack.c.bf16 %v8402, %v8401
    %v8434 = vpack.c.bf16 %v8404, %v8403
    %v8435 = vpack.c.bf16 %v8406, %v8405
    %v8436 = vpack.c.bf16 %v8408, %v8407
    %v8437 = vpack.c.bf16 %v8410, %v8409
    %v8448 = vunpack.c.l.b16 %v8412
    %v8449 = vunpack.c.l.b16 %v8413
    %v8450 = vunpack.c.l.b16 %v8414
    %v8451 = vunpack.c.l.b16 %v8415
    %v8452 = vunpack.c.l.b16 %v8416
    %v8453 = vunpack.c.l.b16 %v8417
    %v8454 = vunpack.c.l.b16 %v8418
    %v8455 = vunpack.c.l.b16 %v8419
    %v8456 = vunpack.c.l.b16 %v8420
    %v8457 = vunpack.c.l.b16 %v8421
    %v8458 = vpack.c.b16 %v8449, %v8448
    %v8459 = vpack.c.b16 %v8451, %v8450
    %v8460 = vpack.c.b16 %v8453, %v8452
    %v8461 = vpack.c.b16 %v8455, %v8454
    %v8462 = vpack.c.b16 %v8457, %v8456
    %v8469 = vsel %vm59, %v8422, 0
    %v8472 = vsel %vm59, %v8423, 0
    %v8475 = vsel %vm59, %v8424, 0
    %v8478 = vsel %vm59, %v8425, 0
    %v8481 = vsel %vm59, %v8426, 0
    %v8484 = vsel %vm59, %v8427, 0
    %v8487 = vsel %vm59, %v8428, 0
    %v8490 = vsel %vm59, %v8429, 0
    %v8493 = vsel %vm59, %v8430, 0
    %v8496 = vsel %vm59, %v8431, 0
    %v8499 = vsel %vm59, %v8432, 0
    %v8502 = vsel %vm59, %v8433, 0
    %v8505 = vsel %vm59, %v8434, 0
    %v8508 = vsel %vm59, %v8435, 0
    %v8511 = vsel %vm59, %v8436, 0
    %v8514 = vsel %vm59, %v8437, 0
    %8516 = vmatprep.subr.bf16.mxu0 0
    %8517 = vmatpush1.bf16.msra.mxu0 0
    %8518 = vmatprep.subr.bf16.mxu0 0
    %8519 = vmatpush1.bf16.msra.mxu0 0
    %8520 = vmatprep.subr.bf16.mxu0 0
    %8521 = vmatpush1.bf16.msra.mxu0 0
    %8522 = vmatprep.subr.bf16.mxu0 0
    %8523 = vmatpush1.bf16.msra.mxu0 %v8462
    %8524 = vmatprep.subr.bf16.mxu0 0
    %8525 = vmatpush1.bf16.msra.mxu0 %v8461
    %8526 = vmatprep.subr.bf16.mxu0 0
    %8527 = vmatpush1.bf16.msra.mxu0 %v8460
    %8528 = vmatprep.subr.bf16.mxu0 0
    %8529 = vmatpush1.bf16.msra.mxu0 %v8459
    %8530 = vmatprep.subr.bf16.mxu0 0
    %8531 = vmatpush1.bf16.msra.mxu0 %v8458
    %8532 = vmatprep.subr.bf16.mxu0 0
    %8533 = vmatpush2.bf16.msra.mxu0 0
    %8534 = vmatprep.subr.bf16.mxu0 0
    %8535 = vmatpush2.bf16.msra.mxu0 0
    %8536 = vmatprep.subr.bf16.mxu0 0
    %8537 = vmatpush2.bf16.msra.mxu0 0
    %8538 = vmatprep.subr.bf16.mxu0 0
    %8539 = vmatpush2.bf16.msra.mxu0 0
    %8540 = vmatprep.subr.bf16.mxu0 0
    %8541 = vmatpush2.bf16.msra.mxu0 0
    %8542 = vmatprep.subr.bf16.mxu0 0
    %8543 = vmatpush2.bf16.msra.mxu0 0
    %8544 = vmatprep.subr.bf16.mxu0 0
    %8545 = vmatpush2.bf16.msra.mxu0 0
    %8546 = vmatprep.subr.bf16.mxu0 0
    %8547 = vmatpush2.bf16.msra.mxu0 0
    %8548 = vmatprep.mubr.bf16.mxu0 0
    %8549 = vmatmul.mubr.bf16.gmra.mxu0 %v8469
    %v8550 = vpop.f32.mrf.mxu0
    %v8551 = vadd.f32 0.0, %v8550
    %v8552 = vpop.f32.mrf.mxu0
    %v8553 = vpop.f32.mrf.mxu0
    %v8554 = vadd.f32 0.0, %v8553
    %v8555 = vpop.f32.mrf.mxu0
    %8556 = vmatprep.mubr.bf16.mxu0 0
    %8557 = vmatmul.mubr.bf16.gmra.mxu0 %v8472
    %v8558 = vpop.f32.mrf.mxu0
    %v8559 = vadd.f32 0.0, %v8558
    %v8560 = vpop.f32.mrf.mxu0
    %v8561 = vpop.f32.mrf.mxu0
    %v8562 = vadd.f32 0.0, %v8561
    %v8563 = vpop.f32.mrf.mxu0
    %8564 = vmatprep.mubr.bf16.mxu0 0
    %8565 = vmatmul.mubr.bf16.gmra.mxu0 %v8475
    %v8566 = vpop.f32.mrf.mxu0
    %v8567 = vadd.f32 0.0, %v8566
    %v8568 = vpop.f32.mrf.mxu0
    %v8569 = vpop.f32.mrf.mxu0
    %v8570 = vadd.f32 0.0, %v8569
    %v8571 = vpop.f32.mrf.mxu0
    %8572 = vmatprep.mubr.bf16.mxu0 0
    %8573 = vmatmul.mubr.bf16.gmra.mxu0 %v8478
    %v8574 = vpop.f32.mrf.mxu0
    %v8575 = vadd.f32 0.0, %v8574
    %v8576 = vpop.f32.mrf.mxu0
    %v8577 = vpop.f32.mrf.mxu0
    %v8578 = vadd.f32 0.0, %v8577
    %v8579 = vpop.f32.mrf.mxu0
    %8580 = vmatprep.mubr.bf16.mxu0 0
    %8581 = vmatmul.mubr.bf16.gmra.mxu0 %v8481
    %v8582 = vpop.f32.mrf.mxu0
    %v8583 = vadd.f32 0.0, %v8582
    %v8584 = vpop.f32.mrf.mxu0
    %v8585 = vpop.f32.mrf.mxu0
    %v8586 = vadd.f32 0.0, %v8585
    %v8587 = vpop.f32.mrf.mxu0
    %8588 = vmatprep.mubr.bf16.mxu0 0
    %8589 = vmatmul.mubr.bf16.gmra.mxu0 %v8484
    %v8590 = vpop.f32.mrf.mxu0
    %v8591 = vadd.f32 0.0, %v8590
    %v8592 = vpop.f32.mrf.mxu0
    %v8593 = vpop.f32.mrf.mxu0
    %v8594 = vadd.f32 0.0, %v8593
    %v8595 = vpop.f32.mrf.mxu0
    %8596 = vmatprep.mubr.bf16.mxu0 0
    %8597 = vmatmul.mubr.bf16.gmra.mxu0 %v8487
    %v8598 = vpop.f32.mrf.mxu0
    %v8599 = vadd.f32 0.0, %v8598
    %v8600 = vpop.f32.mrf.mxu0
    %v8601 = vpop.f32.mrf.mxu0
    %v8602 = vadd.f32 0.0, %v8601
    %v8603 = vpop.f32.mrf.mxu0
    %8604 = vmatprep.mubr.bf16.mxu0 0
    %8605 = vmatmul.mubr.bf16.gmra.mxu0 %v8490
    %v8606 = vpop.f32.mrf.mxu0
    %v8607 = vadd.f32 0.0, %v8606
    %v8608 = vpop.f32.mrf.mxu0
    %v8609 = vpop.f32.mrf.mxu0
    %v8610 = vadd.f32 0.0, %v8609
    %v8611 = vpop.f32.mrf.mxu0
    %8612 = vmatprep.mubr.bf16.mxu0 0
    %8613 = vmatmul.mubr.bf16.gmra.mxu0 %v8493
    %v8614 = vpop.f32.mrf.mxu0
    %v8615 = vadd.f32 0.0, %v8614
    %v8616 = vpop.f32.mrf.mxu0
    %v8617 = vpop.f32.mrf.mxu0
    %v8618 = vadd.f32 0.0, %v8617
    %v8619 = vpop.f32.mrf.mxu0
    %8620 = vmatprep.mubr.bf16.mxu0 0
    %8621 = vmatmul.mubr.bf16.gmra.mxu0 %v8496
    %v8622 = vpop.f32.mrf.mxu0
    %v8623 = vadd.f32 0.0, %v8622
    %v8624 = vpop.f32.mrf.mxu0
    %v8625 = vpop.f32.mrf.mxu0
    %v8626 = vadd.f32 0.0, %v8625
    %v8627 = vpop.f32.mrf.mxu0
    %8628 = vmatprep.mubr.bf16.mxu0 0
    %8629 = vmatmul.mubr.bf16.gmra.mxu0 %v8499
    %v8630 = vpop.f32.mrf.mxu0
    %v8631 = vadd.f32 0.0, %v8630
    %v8632 = vpop.f32.mrf.mxu0
    %v8633 = vpop.f32.mrf.mxu0
    %v8634 = vadd.f32 0.0, %v8633
    %v8635 = vpop.f32.mrf.mxu0
    %8636 = vmatprep.mubr.bf16.mxu0 0
    %8637 = vmatmul.mubr.bf16.gmra.mxu0 %v8502
    %v8638 = vpop.f32.mrf.mxu0
    %v8639 = vadd.f32 0.0, %v8638
    %v8640 = vpop.f32.mrf.mxu0
    %v8641 = vpop.f32.mrf.mxu0
    %v8642 = vadd.f32 0.0, %v8641
    %v8643 = vpop.f32.mrf.mxu0
    %8644 = vmatprep.mubr.bf16.mxu0 0
    %8645 = vmatmul.mubr.bf16.gmra.mxu0 %v8505
    %v8646 = vpop.f32.mrf.mxu0
    %v8647 = vadd.f32 0.0, %v8646
    %v8648 = vpop.f32.mrf.mxu0
    %v8649 = vpop.f32.mrf.mxu0
    %v8650 = vadd.f32 0.0, %v8649
    %v8651 = vpop.f32.mrf.mxu0
    %8652 = vmatprep.mubr.bf16.mxu0 0
    %8653 = vmatmul.mubr.bf16.gmra.mxu0 %v8508
    %v8654 = vpop.f32.mrf.mxu0
    %v8655 = vadd.f32 0.0, %v8654
    %v8656 = vpop.f32.mrf.mxu0
    %v8657 = vpop.f32.mrf.mxu0
    %v8658 = vadd.f32 0.0, %v8657
    %v8659 = vpop.f32.mrf.mxu0
    %8660 = vmatprep.mubr.bf16.mxu0 0
    %8661 = vmatmul.mubr.bf16.gmra.mxu0 %v8511
    %v8662 = vpop.f32.mrf.mxu0
    %v8663 = vadd.f32 0.0, %v8662
    %v8664 = vpop.f32.mrf.mxu0
    %v8665 = vpop.f32.mrf.mxu0
    %v8666 = vadd.f32 0.0, %v8665
    %v8667 = vpop.f32.mrf.mxu0
    %8668 = vmatprep.mubr.bf16.mxu0 0
    %8669 = vmatmul.mubr.bf16.gmra.mxu0 %v8514
    %v8670 = vpop.f32.mrf.mxu0
    %v8671 = vadd.f32 0.0, %v8670
    %v8672 = vpop.f32.mrf.mxu0
    %v8673 = vpop.f32.mrf.mxu0
    %v8674 = vadd.f32 0.0, %v8673
    %v8675 = vpop.f32.mrf.mxu0
    %8676 = vdwg.mxu0
    %v8677 = vlaneseq
    %v8678 = vshrl.u32 %v8677, 7
    %v8679 = vsub.s32 0, %v8678
    %v8680 = vrot.slane %v8346, %v8679
    %v8681 = vadd.f32 %v8680, %v8551
    %v8682 = vadd.f32 %v8680, %v8554
    %v8683 = vadd.f32 %v8680, %v8559
    %v8684 = vadd.f32 %v8680, %v8562
    %v8685 = vadd.f32 %v8680, %v8567
    %v8686 = vadd.f32 %v8680, %v8570
    %v8687 = vadd.f32 %v8680, %v8575
    %v8688 = vadd.f32 %v8680, %v8578
    %v8689 = vadd.f32 %v8680, %v8583
    %v8690 = vadd.f32 %v8680, %v8586
    %v8691 = vadd.f32 %v8680, %v8591
    %v8692 = vadd.f32 %v8680, %v8594
    %v8693 = vadd.f32 %v8680, %v8599
    %v8694 = vadd.f32 %v8680, %v8602
    %v8695 = vadd.f32 %v8680, %v8607
    %v8696 = vadd.f32 %v8680, %v8610
    %v8697 = vadd.f32 %v8680, %v8615
    %v8698 = vadd.f32 %v8680, %v8618
    %v8699 = vadd.f32 %v8680, %v8623
    %v8700 = vadd.f32 %v8680, %v8626
    %v8701 = vadd.f32 %v8680, %v8631
    %v8702 = vadd.f32 %v8680, %v8634
    %v8703 = vadd.f32 %v8680, %v8639
    %v8704 = vadd.f32 %v8680, %v8642
    %v8705 = vadd.f32 %v8680, %v8647
    %v8706 = vadd.f32 %v8680, %v8650
    %v8707 = vadd.f32 %v8680, %v8655
    %v8708 = vadd.f32 %v8680, %v8658
    %v8709 = vadd.f32 %v8680, %v8663
    %v8710 = vadd.f32 %v8680, %v8666
    %v8711 = vadd.f32 %v8680, %v8671
    %v8712 = vadd.f32 %v8680, %v8674
    %v8713 = vld [vmem:[#allocation2 + $0x18] sm:$0xff]
    %v8714 = vld [vmem:[#allocation2 + $0x20] sm:$0xff]
    %v8715 = vld [vmem:[#allocation2 + $0x48] sm:$0xff]
    %v8716 = vld [vmem:[#allocation2 + $0x50] sm:$0xff]
    %v8717 = vld [vmem:[#allocation2 + $0x78] sm:$0xff]
    %v8718 = vld [vmem:[#allocation2 + $0x80] sm:$0xff]
    %v8719 = vld [vmem:[#allocation2 + $0xa8] sm:$0xff]
    %v8720 = vld [vmem:[#allocation2 + $0xb0] sm:$0xff]
    %v8721 = vld [vmem:[#allocation2 + $0xd8] sm:$0xff]
    %v8722 = vld [vmem:[#allocation2 + $0xe0] sm:$0xff]
    %v8723 = vld [vmem:[#allocation2 + $0x108] sm:$0xff]
    %v8724 = vld [vmem:[#allocation2 + $0x110] sm:$0xff]
    %v8725 = vld [vmem:[#allocation2 + $0x138] sm:$0xff]
    %v8726 = vld [vmem:[#allocation2 + $0x140] sm:$0xff]
    %v8727 = vld [vmem:[#allocation2 + $0x168] sm:$0xff]
    %v8728 = vld [vmem:[#allocation2 + $0x170] sm:$0xff]
    %v8729 = vld [vmem:[#allocation2 + $0x198] sm:$0xff]
    %v8730 = vld [vmem:[#allocation2 + $0x1a0] sm:$0xff]
    %v8731 = vld [vmem:[#allocation2 + $0x1c8] sm:$0xff]
    %v8732 = vld [vmem:[#allocation2 + $0x1d0] sm:$0xff]
    %v8733 = vld [vmem:[#allocation2 + $0x1f8] sm:$0xff]
    %v8734 = vld [vmem:[#allocation2 + $0x200] sm:$0xff]
    %v8735 = vld [vmem:[#allocation2 + $0x228] sm:$0xff]
    %v8736 = vld [vmem:[#allocation2 + $0x230] sm:$0xff]
    %v8737 = vld [vmem:[#allocation2 + $0x258] sm:$0xff]
    %v8738 = vld [vmem:[#allocation2 + $0x260] sm:$0xff]
    %v8739 = vld [vmem:[#allocation2 + $0x288] sm:$0xff]
    %v8740 = vld [vmem:[#allocation2 + $0x290] sm:$0xff]
    %v8741 = vld [vmem:[#allocation2 + $0x2b8] sm:$0xff]
    %v8742 = vld [vmem:[#allocation2 + $0x2c0] sm:$0xff]
    %v8743 = vld [vmem:[#allocation2 + $0x2e8] sm:$0xff]
    %v8744 = vld [vmem:[#allocation2 + $0x2f0] sm:$0xff]
    %s8745 = scalar_lea.vmem [#allocation7], 760
    %v8746 = vld [vmem:[%s8745] sm:$0xf]
    %v8747 = vld [vmem:[%s8745 + $0x4] sm:$0xf]
    %v8748 = vld [vmem:[%s8745 + $0x8] sm:$0xf]
    %v8749 = vld [vmem:[%s8745 + $0xc] sm:$0xf]
    %v8750 = vld [vmem:[%s8745 + $0x10] sm:$0xf]
    %v8751 = vld [vmem:[%s8745 + $0x14] sm:$0xf]
    %v8752 = vld [vmem:[%s8745 + $0x18] sm:$0xf]
    %v8753 = vld [vmem:[%s8745 + $0x1c] sm:$0xf]
    %v8754 = vld [vmem:[%s8745 + $0x20] sm:$0xf]
    %v8755 = vld [vmem:[%s8745 + $0x24] sm:$0xf]
    %v8756 = vpack.c.bf16 %v8714, %v8713
    %v8757 = vpack.c.bf16 %v8716, %v8715
    %v8758 = vpack.c.bf16 %v8718, %v8717
    %v8759 = vpack.c.bf16 %v8720, %v8719
    %v8760 = vpack.c.bf16 %v8722, %v8721
    %v8761 = vpack.c.bf16 %v8724, %v8723
    %v8762 = vpack.c.bf16 %v8726, %v8725
    %v8763 = vpack.c.bf16 %v8728, %v8727
    %v8764 = vpack.c.bf16 %v8730, %v8729
    %v8765 = vpack.c.bf16 %v8732, %v8731
    %v8766 = vpack.c.bf16 %v8734, %v8733
    %v8767 = vpack.c.bf16 %v8736, %v8735
    %v8768 = vpack.c.bf16 %v8738, %v8737
    %v8769 = vpack.c.bf16 %v8740, %v8739
    %v8770 = vpack.c.bf16 %v8742, %v8741
    %v8771 = vpack.c.bf16 %v8744, %v8743
    %v8782 = vunpack.c.l.b16 %v8746
    %v8783 = vunpack.c.l.b16 %v8747
    %v8784 = vunpack.c.l.b16 %v8748
    %v8785 = vunpack.c.l.b16 %v8749
    %v8786 = vunpack.c.l.b16 %v8750
    %v8787 = vunpack.c.l.b16 %v8751
    %v8788 = vunpack.c.l.b16 %v8752
    %v8789 = vunpack.c.l.b16 %v8753
    %v8790 = vunpack.c.l.b16 %v8754
    %v8791 = vunpack.c.l.b16 %v8755
    %v8792 = vpack.c.b16 %v8783, %v8782
    %v8793 = vpack.c.b16 %v8785, %v8784
    %v8794 = vpack.c.b16 %v8787, %v8786
    %v8795 = vpack.c.b16 %v8789, %v8788
    %v8796 = vpack.c.b16 %v8791, %v8790
    %v8803 = vsel %vm59, %v8756, 0
    %v8806 = vsel %vm59, %v8757, 0
    %v8809 = vsel %vm59, %v8758, 0
    %v8812 = vsel %vm59, %v8759, 0
    %v8815 = vsel %vm59, %v8760, 0
    %v8818 = vsel %vm59, %v8761, 0
    %v8821 = vsel %vm59, %v8762, 0
    %v8824 = vsel %vm59, %v8763, 0
    %v8827 = vsel %vm59, %v8764, 0
    %v8830 = vsel %vm59, %v8765, 0
    %v8833 = vsel %vm59, %v8766, 0
    %v8836 = vsel %vm59, %v8767, 0
    %v8839 = vsel %vm59, %v8768, 0
    %v8842 = vsel %vm59, %v8769, 0
    %v8845 = vsel %vm59, %v8770, 0
    %v8848 = vsel %vm59, %v8771, 0
    %8850 = vmatprep.subr.bf16.mxu0 0
    %8851 = vmatpush1.bf16.msra.mxu0 0
    %8852 = vmatprep.subr.bf16.mxu0 0
    %8853 = vmatpush1.bf16.msra.mxu0 0
    %8854 = vmatprep.subr.bf16.mxu0 0
    %8855 = vmatpush1.bf16.msra.mxu0 0
    %8856 = vmatprep.subr.bf16.mxu0 0
    %8857 = vmatpush1.bf16.msra.mxu0 %v8796
    %8858 = vmatprep.subr.bf16.mxu0 0
    %8859 = vmatpush1.bf16.msra.mxu0 %v8795
    %8860 = vmatprep.subr.bf16.mxu0 0
    %8861 = vmatpush1.bf16.msra.mxu0 %v8794
    %8862 = vmatprep.subr.bf16.mxu0 0
    %8863 = vmatpush1.bf16.msra.mxu0 %v8793
    %8864 = vmatprep.subr.bf16.mxu0 0
    %8865 = vmatpush1.bf16.msra.mxu0 %v8792
    %8866 = vmatprep.subr.bf16.mxu0 0
    %8867 = vmatpush2.bf16.msra.mxu0 0
    %8868 = vmatprep.subr.bf16.mxu0 0
    %8869 = vmatpush2.bf16.msra.mxu0 0
    %8870 = vmatprep.subr.bf16.mxu0 0
    %8871 = vmatpush2.bf16.msra.mxu0 0
    %8872 = vmatprep.subr.bf16.mxu0 0
    %8873 = vmatpush2.bf16.msra.mxu0 0
    %8874 = vmatprep.subr.bf16.mxu0 0
    %8875 = vmatpush2.bf16.msra.mxu0 0
    %8876 = vmatprep.subr.bf16.mxu0 0
    %8877 = vmatpush2.bf16.msra.mxu0 0
    %8878 = vmatprep.subr.bf16.mxu0 0
    %8879 = vmatpush2.bf16.msra.mxu0 0
    %8880 = vmatprep.subr.bf16.mxu0 0
    %8881 = vmatpush2.bf16.msra.mxu0 0
    %8882 = vmatprep.mubr.bf16.mxu0 0
    %8883 = vmatmul.mubr.bf16.gmra.mxu0 %v8803
    %v8884 = vpop.f32.mrf.mxu0
    %v8885 = vadd.f32 0.0, %v8884
    %v8886 = vpop.f32.mrf.mxu0
    %v8887 = vpop.f32.mrf.mxu0
    %v8888 = vadd.f32 0.0, %v8887
    %v8889 = vpop.f32.mrf.mxu0
    %8890 = vmatprep.mubr.bf16.mxu0 0
    %8891 = vmatmul.mubr.bf16.gmra.mxu0 %v8806
    %v8892 = vpop.f32.mrf.mxu0
    %v8893 = vadd.f32 0.0, %v8892
    %v8894 = vpop.f32.mrf.mxu0
    %v8895 = vpop.f32.mrf.mxu0
    %v8896 = vadd.f32 0.0, %v8895
    %v8897 = vpop.f32.mrf.mxu0
    %8898 = vmatprep.mubr.bf16.mxu0 0
    %8899 = vmatmul.mubr.bf16.gmra.mxu0 %v8809
    %v8900 = vpop.f32.mrf.mxu0
    %v8901 = vadd.f32 0.0, %v8900
    %v8902 = vpop.f32.mrf.mxu0
    %v8903 = vpop.f32.mrf.mxu0
    %v8904 = vadd.f32 0.0, %v8903
    %v8905 = vpop.f32.mrf.mxu0
    %8906 = vmatprep.mubr.bf16.mxu0 0
    %8907 = vmatmul.mubr.bf16.gmra.mxu0 %v8812
    %v8908 = vpop.f32.mrf.mxu0
    %v8909 = vadd.f32 0.0, %v8908
    %v8910 = vpop.f32.mrf.mxu0
    %v8911 = vpop.f32.mrf.mxu0
    %v8912 = vadd.f32 0.0, %v8911
    %v8913 = vpop.f32.mrf.mxu0
    %8914 = vmatprep.mubr.bf16.mxu0 0
    %8915 = vmatmul.mubr.bf16.gmra.mxu0 %v8815
    %v8916 = vpop.f32.mrf.mxu0
    %v8917 = vadd.f32 0.0, %v8916
    %v8918 = vpop.f32.mrf.mxu0
    %v8919 = vpop.f32.mrf.mxu0
    %v8920 = vadd.f32 0.0, %v8919
    %v8921 = vpop.f32.mrf.mxu0
    %8922 = vmatprep.mubr.bf16.mxu0 0
    %8923 = vmatmul.mubr.bf16.gmra.mxu0 %v8818
    %v8924 = vpop.f32.mrf.mxu0
    %v8925 = vadd.f32 0.0, %v8924
    %v8926 = vpop.f32.mrf.mxu0
    %v8927 = vpop.f32.mrf.mxu0
    %v8928 = vadd.f32 0.0, %v8927
    %v8929 = vpop.f32.mrf.mxu0
    %8930 = vmatprep.mubr.bf16.mxu0 0
    %8931 = vmatmul.mubr.bf16.gmra.mxu0 %v8821
    %v8932 = vpop.f32.mrf.mxu0
    %v8933 = vadd.f32 0.0, %v8932
    %v8934 = vpop.f32.mrf.mxu0
    %v8935 = vpop.f32.mrf.mxu0
    %v8936 = vadd.f32 0.0, %v8935
    %v8937 = vpop.f32.mrf.mxu0
    %8938 = vmatprep.mubr.bf16.mxu0 0
    %8939 = vmatmul.mubr.bf16.gmra.mxu0 %v8824
    %v8940 = vpop.f32.mrf.mxu0
    %v8941 = vadd.f32 0.0, %v8940
    %v8942 = vpop.f32.mrf.mxu0
    %v8943 = vpop.f32.mrf.mxu0
    %v8944 = vadd.f32 0.0, %v8943
    %v8945 = vpop.f32.mrf.mxu0
    %8946 = vmatprep.mubr.bf16.mxu0 0
    %8947 = vmatmul.mubr.bf16.gmra.mxu0 %v8827
    %v8948 = vpop.f32.mrf.mxu0
    %v8949 = vadd.f32 0.0, %v8948
    %v8950 = vpop.f32.mrf.mxu0
    %v8951 = vpop.f32.mrf.mxu0
    %v8952 = vadd.f32 0.0, %v8951
    %v8953 = vpop.f32.mrf.mxu0
    %8954 = vmatprep.mubr.bf16.mxu0 0
    %8955 = vmatmul.mubr.bf16.gmra.mxu0 %v8830
    %v8956 = vpop.f32.mrf.mxu0
    %v8957 = vadd.f32 0.0, %v8956
    %v8958 = vpop.f32.mrf.mxu0
    %v8959 = vpop.f32.mrf.mxu0
    %v8960 = vadd.f32 0.0, %v8959
    %v8961 = vpop.f32.mrf.mxu0
    %8962 = vmatprep.mubr.bf16.mxu0 0
    %8963 = vmatmul.mubr.bf16.gmra.mxu0 %v8833
    %v8964 = vpop.f32.mrf.mxu0
    %v8965 = vadd.f32 0.0, %v8964
    %v8966 = vpop.f32.mrf.mxu0
    %v8967 = vpop.f32.mrf.mxu0
    %v8968 = vadd.f32 0.0, %v8967
    %v8969 = vpop.f32.mrf.mxu0
    %8970 = vmatprep.mubr.bf16.mxu0 0
    %8971 = vmatmul.mubr.bf16.gmra.mxu0 %v8836
    %v8972 = vpop.f32.mrf.mxu0
    %v8973 = vadd.f32 0.0, %v8972
    %v8974 = vpop.f32.mrf.mxu0
    %v8975 = vpop.f32.mrf.mxu0
    %v8976 = vadd.f32 0.0, %v8975
    %v8977 = vpop.f32.mrf.mxu0
    %8978 = vmatprep.mubr.bf16.mxu0 0
    %8979 = vmatmul.mubr.bf16.gmra.mxu0 %v8839
    %v8980 = vpop.f32.mrf.mxu0
    %v8981 = vadd.f32 0.0, %v8980
    %v8982 = vpop.f32.mrf.mxu0
    %v8983 = vpop.f32.mrf.mxu0
    %v8984 = vadd.f32 0.0, %v8983
    %v8985 = vpop.f32.mrf.mxu0
    %8986 = vmatprep.mubr.bf16.mxu0 0
    %8987 = vmatmul.mubr.bf16.gmra.mxu0 %v8842
    %v8988 = vpop.f32.mrf.mxu0
    %v8989 = vadd.f32 0.0, %v8988
    %v8990 = vpop.f32.mrf.mxu0
    %v8991 = vpop.f32.mrf.mxu0
    %v8992 = vadd.f32 0.0, %v8991
    %v8993 = vpop.f32.mrf.mxu0
    %8994 = vmatprep.mubr.bf16.mxu0 0
    %8995 = vmatmul.mubr.bf16.gmra.mxu0 %v8845
    %v8996 = vpop.f32.mrf.mxu0
    %v8997 = vadd.f32 0.0, %v8996
    %v8998 = vpop.f32.mrf.mxu0
    %v8999 = vpop.f32.mrf.mxu0
    %v9000 = vadd.f32 0.0, %v8999
    %v9001 = vpop.f32.mrf.mxu0
    %9002 = vmatprep.mubr.bf16.mxu0 0
    %9003 = vmatmul.mubr.bf16.gmra.mxu0 %v8848
    %v9004 = vpop.f32.mrf.mxu0
    %v9005 = vadd.f32 0.0, %v9004
    %v9006 = vpop.f32.mrf.mxu0
    %v9007 = vpop.f32.mrf.mxu0
    %v9008 = vadd.f32 0.0, %v9007
    %v9009 = vpop.f32.mrf.mxu0
    %9010 = vdwg.mxu0
    %v9011 = vadd.f32 %v8681, %v8885
    %v9012 = vadd.f32 %v8682, %v8888
    %v9013 = vadd.f32 %v8683, %v8893
    %v9014 = vadd.f32 %v8684, %v8896
    %v9015 = vadd.f32 %v8685, %v8901
    %v9016 = vadd.f32 %v8686, %v8904
    %v9017 = vadd.f32 %v8687, %v8909
    %v9018 = vadd.f32 %v8688, %v8912
    %v9019 = vadd.f32 %v8689, %v8917
    %v9020 = vadd.f32 %v8690, %v8920
    %v9021 = vadd.f32 %v8691, %v8925
    %v9022 = vadd.f32 %v8692, %v8928
    %v9023 = vadd.f32 %v8693, %v8933
    %v9024 = vadd.f32 %v8694, %v8936
    %v9025 = vadd.f32 %v8695, %v8941
    %v9026 = vadd.f32 %v8696, %v8944
    %v9027 = vadd.f32 %v8697, %v8949
    %v9028 = vadd.f32 %v8698, %v8952
    %v9029 = vadd.f32 %v8699, %v8957
    %v9030 = vadd.f32 %v8700, %v8960
    %v9031 = vadd.f32 %v8701, %v8965
    %v9032 = vadd.f32 %v8702, %v8968
    %v9033 = vadd.f32 %v8703, %v8973
    %v9034 = vadd.f32 %v8704, %v8976
    %v9035 = vadd.f32 %v8705, %v8981
    %v9036 = vadd.f32 %v8706, %v8984
    %v9037 = vadd.f32 %v8707, %v8989
    %v9038 = vadd.f32 %v8708, %v8992
    %v9039 = vadd.f32 %v8709, %v8997
    %v9040 = vadd.f32 %v8710, %v9000
    %v9041 = vadd.f32 %v8711, %v9005
    %v9042 = vadd.f32 %v8712, %v9008
    %s9043 = sld [smem:[#allocation4 + $0xb]]
    %vm9044 = vcmp.ge.f32.partialorder %v9011, 0.0
    %vm9045 = vcmp.ge.f32.partialorder %v9012, 0.0
    %vm9046 = vcmp.ge.f32.partialorder %v9013, 0.0
    %vm9047 = vcmp.ge.f32.partialorder %v9014, 0.0
    %vm9048 = vcmp.ge.f32.partialorder %v9015, 0.0
    %vm9049 = vcmp.ge.f32.partialorder %v9016, 0.0
    %vm9050 = vcmp.ge.f32.partialorder %v9017, 0.0
    %vm9051 = vcmp.ge.f32.partialorder %v9018, 0.0
    %vm9052 = vcmp.ge.f32.partialorder %v9019, 0.0
    %vm9053 = vcmp.ge.f32.partialorder %v9020, 0.0
    %vm9054 = vcmp.ge.f32.partialorder %v9021, 0.0
    %vm9055 = vcmp.ge.f32.partialorder %v9022, 0.0
    %vm9056 = vcmp.ge.f32.partialorder %v9023, 0.0
    %vm9057 = vcmp.ge.f32.partialorder %v9024, 0.0
    %vm9058 = vcmp.ge.f32.partialorder %v9025, 0.0
    %vm9059 = vcmp.ge.f32.partialorder %v9026, 0.0
    %vm9060 = vcmp.ge.f32.partialorder %v9027, 0.0
    %vm9061 = vcmp.ge.f32.partialorder %v9028, 0.0
    %vm9062 = vcmp.ge.f32.partialorder %v9029, 0.0
    %vm9063 = vcmp.ge.f32.partialorder %v9030, 0.0
    %vm9064 = vcmp.ge.f32.partialorder %v9031, 0.0
    %vm9065 = vcmp.ge.f32.partialorder %v9032, 0.0
    %vm9066 = vcmp.ge.f32.partialorder %v9033, 0.0
    %vm9067 = vcmp.ge.f32.partialorder %v9034, 0.0
    %vm9068 = vcmp.ge.f32.partialorder %v9035, 0.0
    %vm9069 = vcmp.ge.f32.partialorder %v9036, 0.0
    %vm9070 = vcmp.ge.f32.partialorder %v9037, 0.0
    %vm9071 = vcmp.ge.f32.partialorder %v9038, 0.0
    %vm9072 = vcmp.ge.f32.partialorder %v9039, 0.0
    %vm9073 = vcmp.ge.f32.partialorder %v9040, 0.0
    %vm9074 = vcmp.ge.f32.partialorder %v9041, 0.0
    %vm9075 = vcmp.ge.f32.partialorder %v9042, 0.0
    %v9076 = vstv %s9043
    %v9077 = vmul.f32 %v9076, %v9011
    %v9078 = vmul.f32 %v9076, %v9012
    %v9079 = vmul.f32 %v9076, %v9013
    %v9080 = vmul.f32 %v9076, %v9014
    %v9081 = vmul.f32 %v9076, %v9015
    %v9082 = vmul.f32 %v9076, %v9016
    %v9083 = vmul.f32 %v9076, %v9017
    %v9084 = vmul.f32 %v9076, %v9018
    %v9085 = vmul.f32 %v9076, %v9019
    %v9086 = vmul.f32 %v9076, %v9020
    %v9087 = vmul.f32 %v9076, %v9021
    %v9088 = vmul.f32 %v9076, %v9022
    %v9089 = vmul.f32 %v9076, %v9023
    %v9090 = vmul.f32 %v9076, %v9024
    %v9091 = vmul.f32 %v9076, %v9025
    %v9092 = vmul.f32 %v9076, %v9026
    %v9093 = vmul.f32 %v9076, %v9027
    %v9094 = vmul.f32 %v9076, %v9028
    %v9095 = vmul.f32 %v9076, %v9029
    %v9096 = vmul.f32 %v9076, %v9030
    %v9097 = vmul.f32 %v9076, %v9031
    %v9098 = vmul.f32 %v9076, %v9032
    %v9099 = vmul.f32 %v9076, %v9033
    %v9100 = vmul.f32 %v9076, %v9034
    %v9101 = vmul.f32 %v9076, %v9035
    %v9102 = vmul.f32 %v9076, %v9036
    %v9103 = vmul.f32 %v9076, %v9037
    %v9104 = vmul.f32 %v9076, %v9038
    %v9105 = vmul.f32 %v9076, %v9039
    %v9106 = vmul.f32 %v9076, %v9040
    %v9107 = vmul.f32 %v9076, %v9041
    %v9108 = vmul.f32 %v9076, %v9042
    %v9109 = vsel %vm9044, %v9011, %v9077
    %v9110 = vsel %vm9045, %v9012, %v9078
    %v9111 = vsel %vm9046, %v9013, %v9079
    %v9112 = vsel %vm9047, %v9014, %v9080
    %v9113 = vsel %vm9048, %v9015, %v9081
    %v9114 = vsel %vm9049, %v9016, %v9082
    %v9115 = vsel %vm9050, %v9017, %v9083
    %v9116 = vsel %vm9051, %v9018, %v9084
    %v9117 = vsel %vm9052, %v9019, %v9085
    %v9118 = vsel %vm9053, %v9020, %v9086
    %v9119 = vsel %vm9054, %v9021, %v9087
    %v9120 = vsel %vm9055, %v9022, %v9088
    %v9121 = vsel %vm9056, %v9023, %v9089
    %v9122 = vsel %vm9057, %v9024, %v9090
    %v9123 = vsel %vm9058, %v9025, %v9091
    %v9124 = vsel %vm9059, %v9026, %v9092
    %v9125 = vsel %vm9060, %v9027, %v9093
    %v9126 = vsel %vm9061, %v9028, %v9094
    %v9127 = vsel %vm9062, %v9029, %v9095
    %v9128 = vsel %vm9063, %v9030, %v9096
    %v9129 = vsel %vm9064, %v9031, %v9097
    %v9130 = vsel %vm9065, %v9032, %v9098
    %v9131 = vsel %vm9066, %v9033, %v9099
    %v9132 = vsel %vm9067, %v9034, %v9100
    %v9133 = vsel %vm9068, %v9035, %v9101
    %v9134 = vsel %vm9069, %v9036, %v9102
    %v9135 = vsel %vm9070, %v9037, %v9103
    %v9136 = vsel %vm9071, %v9038, %v9104
    %v9137 = vsel %vm9072, %v9039, %v9105
    %v9138 = vsel %vm9073, %v9040, %v9106
    %v9139 = vsel %vm9074, %v9041, %v9107
    %v9140 = vsel %vm9075, %v9042, %v9108
    %v9141 = vadd.f32 %v9109, %v7519
    %v9142 = vadd.f32 %v9110, %v7520
    %v9143 = vadd.f32 %v9111, %v7521
    %v9144 = vadd.f32 %v9112, %v7522
    %v9145 = vadd.f32 %v9113, %v7523
    %v9146 = vadd.f32 %v9114, %v7524
    %v9147 = vadd.f32 %v9115, %v7525
    %v9148 = vadd.f32 %v9116, %v7526
    %v9149 = vadd.f32 %v9117, %v7527
    %v9150 = vadd.f32 %v9118, %v7528
    %v9151 = vadd.f32 %v9119, %v7529
    %v9152 = vadd.f32 %v9120, %v7530
    %v9153 = vadd.f32 %v9121, %v7531
    %v9154 = vadd.f32 %v9122, %v7532
    %v9155 = vadd.f32 %v9123, %v7533
    %v9156 = vadd.f32 %v9124, %v7534
    %v9157 = vadd.f32 %v9125, %v7535
    %v9158 = vadd.f32 %v9126, %v7536
    %v9159 = vadd.f32 %v9127, %v7537
    %v9160 = vadd.f32 %v9128, %v7538
    %v9161 = vadd.f32 %v9129, %v7539
    %v9162 = vadd.f32 %v9130, %v7540
    %v9163 = vadd.f32 %v9131, %v7541
    %v9164 = vadd.f32 %v9132, %v7542
    %v9165 = vadd.f32 %v9133, %v7543
    %v9166 = vadd.f32 %v9134, %v7544
    %v9167 = vadd.f32 %v9135, %v7545
    %v9168 = vadd.f32 %v9136, %v7546
    %v9169 = vadd.f32 %v9137, %v7547
    %v9170 = vadd.f32 %v9138, %v7548
    %v9171 = vadd.f32 %v9139, %v7549
    %v9172 = vadd.f32 %v9140, %v7550
    %v9173 = vld [vmem:[%s6 + $0xd] sm:$0x1]
    %9174 = vst.msk [vmem:[#allocation2 + $0x10] sm:$0xff] %vm59, %v9141
    %9175 = vst.msk [vmem:[#allocation2 + $0x18] sm:$0xff] %vm59, %v9142
    %9176 = vst.msk [vmem:[#allocation2 + $0x40] sm:$0xff] %vm59, %v9143
    %9177 = vst.msk [vmem:[#allocation2 + $0x48] sm:$0xff] %vm59, %v9144
    %9178 = vst.msk [vmem:[#allocation2 + $0x70] sm:$0xff] %vm59, %v9145
    %9179 = vst.msk [vmem:[#allocation2 + $0x78] sm:$0xff] %vm59, %v9146
    %9180 = vst.msk [vmem:[#allocation2 + $0xa0] sm:$0xff] %vm59, %v9147
    %9181 = vst.msk [vmem:[#allocation2 + $0xa8] sm:$0xff] %vm59, %v9148
    %9182 = vst.msk [vmem:[#allocation2 + $0xd0] sm:$0xff] %vm59, %v9149
    %9183 = vst.msk [vmem:[#allocation2 + $0xd8] sm:$0xff] %vm59, %v9150
    %9184 = vst.msk [vmem:[#allocation2 + $0x100] sm:$0xff] %vm59, %v9151
    %9185 = vst.msk [vmem:[#allocation2 + $0x108] sm:$0xff] %vm59, %v9152
    %9186 = vst.msk [vmem:[#allocation2 + $0x130] sm:$0xff] %vm59, %v9153
    %9187 = vst.msk [vmem:[#allocation2 + $0x138] sm:$0xff] %vm59, %v9154
    %9188 = vst.msk [vmem:[#allocation2 + $0x160] sm:$0xff] %vm59, %v9155
    %9189 = vst.msk [vmem:[#allocation2 + $0x168] sm:$0xff] %vm59, %v9156
    %9190 = vst.msk [vmem:[#allocation2 + $0x190] sm:$0xff] %vm59, %v9157
    %9191 = vst.msk [vmem:[#allocation2 + $0x198] sm:$0xff] %vm59, %v9158
    %9192 = vst.msk [vmem:[#allocation2 + $0x1c0] sm:$0xff] %vm59, %v9159
    %9193 = vst.msk [vmem:[#allocation2 + $0x1c8] sm:$0xff] %vm59, %v9160
    %9194 = vst.msk [vmem:[#allocation2 + $0x1f0] sm:$0xff] %vm59, %v9161
    %9195 = vst.msk [vmem:[#allocation2 + $0x1f8] sm:$0xff] %vm59, %v9162
    %9196 = vst.msk [vmem:[#allocation2 + $0x220] sm:$0xff] %vm59, %v9163
    %9197 = vst.msk [vmem:[#allocation2 + $0x228] sm:$0xff] %vm59, %v9164
    %9198 = vst.msk [vmem:[#allocation2 + $0x250] sm:$0xff] %vm59, %v9165
    %9199 = vst.msk [vmem:[#allocation2 + $0x258] sm:$0xff] %vm59, %v9166
    %9200 = vst.msk [vmem:[#allocation2 + $0x280] sm:$0xff] %vm59, %v9167
    %9201 = vst.msk [vmem:[#allocation2 + $0x288] sm:$0xff] %vm59, %v9168
    %9202 = vst.msk [vmem:[#allocation2 + $0x2b0] sm:$0xff] %vm59, %v9169
    %9203 = vst.msk [vmem:[#allocation2 + $0x2b8] sm:$0xff] %vm59, %v9170
    %9204 = vst.msk [vmem:[#allocation2 + $0x2e0] sm:$0xff] %vm59, %v9171
    %9205 = vst.msk [vmem:[#allocation2 + $0x2e8] sm:$0xff] %vm59, %v9172
    %v9206 = vld [vmem:[#allocation2] sm:$0xff]
    %v9207 = vld [vmem:[#allocation2 + $0x8] sm:$0xff]
    %v9208 = vld [vmem:[#allocation2 + $0x30] sm:$0xff]
    %v9209 = vld [vmem:[#allocation2 + $0x38] sm:$0xff]
    %v9210 = vld [vmem:[#allocation2 + $0x60] sm:$0xff]
    %v9211 = vld [vmem:[#allocation2 + $0x68] sm:$0xff]
    %v9212 = vld [vmem:[#allocation2 + $0x90] sm:$0xff]
    %v9213 = vld [vmem:[#allocation2 + $0x98] sm:$0xff]
    %v9214 = vld [vmem:[#allocation2 + $0xc0] sm:$0xff]
    %v9215 = vld [vmem:[#allocation2 + $0xc8] sm:$0xff]
    %v9216 = vld [vmem:[#allocation2 + $0xf0] sm:$0xff]
    %v9217 = vld [vmem:[#allocation2 + $0xf8] sm:$0xff]
    %v9218 = vld [vmem:[#allocation2 + $0x120] sm:$0xff]
    %v9219 = vld [vmem:[#allocation2 + $0x128] sm:$0xff]
    %v9220 = vld [vmem:[#allocation2 + $0x150] sm:$0xff]
    %v9221 = vld [vmem:[#allocation2 + $0x158] sm:$0xff]
    %v9222 = vld [vmem:[#allocation2 + $0x180] sm:$0xff]
    %v9223 = vld [vmem:[#allocation2 + $0x188] sm:$0xff]
    %v9224 = vld [vmem:[#allocation2 + $0x1b0] sm:$0xff]
    %v9225 = vld [vmem:[#allocation2 + $0x1b8] sm:$0xff]
    %v9226 = vld [vmem:[#allocation2 + $0x1e0] sm:$0xff]
    %v9227 = vld [vmem:[#allocation2 + $0x1e8] sm:$0xff]
    %v9228 = vld [vmem:[#allocation2 + $0x210] sm:$0xff]
    %v9229 = vld [vmem:[#allocation2 + $0x218] sm:$0xff]
    %v9230 = vld [vmem:[#allocation2 + $0x240] sm:$0xff]
    %v9231 = vld [vmem:[#allocation2 + $0x248] sm:$0xff]
    %v9232 = vld [vmem:[#allocation2 + $0x270] sm:$0xff]
    %v9233 = vld [vmem:[#allocation2 + $0x278] sm:$0xff]
    %v9234 = vld [vmem:[#allocation2 + $0x2a0] sm:$0xff]
    %v9235 = vld [vmem:[#allocation2 + $0x2a8] sm:$0xff]
    %v9236 = vld [vmem:[#allocation2 + $0x2d0] sm:$0xff]
    %v9237 = vld [vmem:[#allocation2 + $0x2d8] sm:$0xff]
    %s9238 = scalar_lea.vmem [#allocation7], 800
    %v9239 = vld [vmem:[%s9238] sm:$0xf]
    %v9240 = vld [vmem:[%s9238 + $0x4] sm:$0xf]
    %v9241 = vld [vmem:[%s9238 + $0x8] sm:$0xf]
    %v9242 = vld [vmem:[%s9238 + $0xc] sm:$0xf]
    %v9243 = vld [vmem:[%s9238 + $0x10] sm:$0xf]
    %v9244 = vld [vmem:[%s9238 + $0x14] sm:$0xf]
    %v9245 = vld [vmem:[%s9238 + $0x18] sm:$0xf]
    %v9246 = vld [vmem:[%s9238 + $0x1c] sm:$0xf]
    %v9247 = vld [vmem:[%s9238 + $0x20] sm:$0xf]
    %v9248 = vld [vmem:[%s9238 + $0x24] sm:$0xf]
    %v9249 = vpack.c.bf16 %v9207, %v9206
    %v9250 = vpack.c.bf16 %v9209, %v9208
    %v9251 = vpack.c.bf16 %v9211, %v9210
    %v9252 = vpack.c.bf16 %v9213, %v9212
    %v9253 = vpack.c.bf16 %v9215, %v9214
    %v9254 = vpack.c.bf16 %v9217, %v9216
    %v9255 = vpack.c.bf16 %v9219, %v9218
    %v9256 = vpack.c.bf16 %v9221, %v9220
    %v9257 = vpack.c.bf16 %v9223, %v9222
    %v9258 = vpack.c.bf16 %v9225, %v9224
    %v9259 = vpack.c.bf16 %v9227, %v9226
    %v9260 = vpack.c.bf16 %v9229, %v9228
    %v9261 = vpack.c.bf16 %v9231, %v9230
    %v9262 = vpack.c.bf16 %v9233, %v9232
    %v9263 = vpack.c.bf16 %v9235, %v9234
    %v9264 = vpack.c.bf16 %v9237, %v9236
    %v9275 = vunpack.c.l.b16 %v9239
    %v9276 = vunpack.c.l.b16 %v9240
    %v9277 = vunpack.c.l.b16 %v9241
    %v9278 = vunpack.c.l.b16 %v9242
    %v9279 = vunpack.c.l.b16 %v9243
    %v9280 = vunpack.c.l.b16 %v9244
    %v9281 = vunpack.c.l.b16 %v9245
    %v9282 = vunpack.c.l.b16 %v9246
    %v9283 = vunpack.c.l.b16 %v9247
    %v9284 = vunpack.c.l.b16 %v9248
    %v9285 = vpack.c.b16 %v9276, %v9275
    %v9286 = vpack.c.b16 %v9278, %v9277
    %v9287 = vpack.c.b16 %v9280, %v9279
    %v9288 = vpack.c.b16 %v9282, %v9281
    %v9289 = vpack.c.b16 %v9284, %v9283
    %v9296 = vsel %vm59, %v9249, 0
    %v9299 = vsel %vm59, %v9250, 0
    %v9302 = vsel %vm59, %v9251, 0
    %v9305 = vsel %vm59, %v9252, 0
    %v9308 = vsel %vm59, %v9253, 0
    %v9311 = vsel %vm59, %v9254, 0
    %v9314 = vsel %vm59, %v9255, 0
    %v9317 = vsel %vm59, %v9256, 0
    %v9320 = vsel %vm59, %v9257, 0
    %v9323 = vsel %vm59, %v9258, 0
    %v9326 = vsel %vm59, %v9259, 0
    %v9329 = vsel %vm59, %v9260, 0
    %v9332 = vsel %vm59, %v9261, 0
    %v9335 = vsel %vm59, %v9262, 0
    %v9338 = vsel %vm59, %v9263, 0
    %v9341 = vsel %vm59, %v9264, 0
    %9343 = vmatprep.subr.bf16.mxu0 0
    %9344 = vmatpush1.bf16.msra.mxu0 0
    %9345 = vmatprep.subr.bf16.mxu0 0
    %9346 = vmatpush1.bf16.msra.mxu0 0
    %9347 = vmatprep.subr.bf16.mxu0 0
    %9348 = vmatpush1.bf16.msra.mxu0 0
    %9349 = vmatprep.subr.bf16.mxu0 0
    %9350 = vmatpush1.bf16.msra.mxu0 %v9289
    %9351 = vmatprep.subr.bf16.mxu0 0
    %9352 = vmatpush1.bf16.msra.mxu0 %v9288
    %9353 = vmatprep.subr.bf16.mxu0 0
    %9354 = vmatpush1.bf16.msra.mxu0 %v9287
    %9355 = vmatprep.subr.bf16.mxu0 0
    %9356 = vmatpush1.bf16.msra.mxu0 %v9286
    %9357 = vmatprep.subr.bf16.mxu0 0
    %9358 = vmatpush1.bf16.msra.mxu0 %v9285
    %9359 = vmatprep.subr.bf16.mxu0 0
    %9360 = vmatpush2.bf16.msra.mxu0 0
    %9361 = vmatprep.subr.bf16.mxu0 0
    %9362 = vmatpush2.bf16.msra.mxu0 0
    %9363 = vmatprep.subr.bf16.mxu0 0
    %9364 = vmatpush2.bf16.msra.mxu0 0
    %9365 = vmatprep.subr.bf16.mxu0 0
    %9366 = vmatpush2.bf16.msra.mxu0 0
    %9367 = vmatprep.subr.bf16.mxu0 0
    %9368 = vmatpush2.bf16.msra.mxu0 0
    %9369 = vmatprep.subr.bf16.mxu0 0
    %9370 = vmatpush2.bf16.msra.mxu0 0
    %9371 = vmatprep.subr.bf16.mxu0 0
    %9372 = vmatpush2.bf16.msra.mxu0 0
    %9373 = vmatprep.subr.bf16.mxu0 0
    %9374 = vmatpush2.bf16.msra.mxu0 0
    %9375 = vmatprep.mubr.bf16.mxu0 0
    %9376 = vmatmul.mubr.bf16.gmra.mxu0 %v9296
    %v9377 = vpop.f32.mrf.mxu0
    %v9378 = vadd.f32 0.0, %v9377
    %v9379 = vpop.f32.mrf.mxu0
    %v9380 = vpop.f32.mrf.mxu0
    %v9381 = vadd.f32 0.0, %v9380
    %v9382 = vpop.f32.mrf.mxu0
    %9383 = vmatprep.mubr.bf16.mxu0 0
    %9384 = vmatmul.mubr.bf16.gmra.mxu0 %v9299
    %v9385 = vpop.f32.mrf.mxu0
    %v9386 = vadd.f32 0.0, %v9385
    %v9387 = vpop.f32.mrf.mxu0
    %v9388 = vpop.f32.mrf.mxu0
    %v9389 = vadd.f32 0.0, %v9388
    %v9390 = vpop.f32.mrf.mxu0
    %9391 = vmatprep.mubr.bf16.mxu0 0
    %9392 = vmatmul.mubr.bf16.gmra.mxu0 %v9302
    %v9393 = vpop.f32.mrf.mxu0
    %v9394 = vadd.f32 0.0, %v9393
    %v9395 = vpop.f32.mrf.mxu0
    %v9396 = vpop.f32.mrf.mxu0
    %v9397 = vadd.f32 0.0, %v9396
    %v9398 = vpop.f32.mrf.mxu0
    %9399 = vmatprep.mubr.bf16.mxu0 0
    %9400 = vmatmul.mubr.bf16.gmra.mxu0 %v9305
    %v9401 = vpop.f32.mrf.mxu0
    %v9402 = vadd.f32 0.0, %v9401
    %v9403 = vpop.f32.mrf.mxu0
    %v9404 = vpop.f32.mrf.mxu0
    %v9405 = vadd.f32 0.0, %v9404
    %v9406 = vpop.f32.mrf.mxu0
    %9407 = vmatprep.mubr.bf16.mxu0 0
    %9408 = vmatmul.mubr.bf16.gmra.mxu0 %v9308
    %v9409 = vpop.f32.mrf.mxu0
    %v9410 = vadd.f32 0.0, %v9409
    %v9411 = vpop.f32.mrf.mxu0
    %v9412 = vpop.f32.mrf.mxu0
    %v9413 = vadd.f32 0.0, %v9412
    %v9414 = vpop.f32.mrf.mxu0
    %9415 = vmatprep.mubr.bf16.mxu0 0
    %9416 = vmatmul.mubr.bf16.gmra.mxu0 %v9311
    %v9417 = vpop.f32.mrf.mxu0
    %v9418 = vadd.f32 0.0, %v9417
    %v9419 = vpop.f32.mrf.mxu0
    %v9420 = vpop.f32.mrf.mxu0
    %v9421 = vadd.f32 0.0, %v9420
    %v9422 = vpop.f32.mrf.mxu0
    %9423 = vmatprep.mubr.bf16.mxu0 0
    %9424 = vmatmul.mubr.bf16.gmra.mxu0 %v9314
    %v9425 = vpop.f32.mrf.mxu0
    %v9426 = vadd.f32 0.0, %v9425
    %v9427 = vpop.f32.mrf.mxu0
    %v9428 = vpop.f32.mrf.mxu0
    %v9429 = vadd.f32 0.0, %v9428
    %v9430 = vpop.f32.mrf.mxu0
    %9431 = vmatprep.mubr.bf16.mxu0 0
    %9432 = vmatmul.mubr.bf16.gmra.mxu0 %v9317
    %v9433 = vpop.f32.mrf.mxu0
    %v9434 = vadd.f32 0.0, %v9433
    %v9435 = vpop.f32.mrf.mxu0
    %v9436 = vpop.f32.mrf.mxu0
    %v9437 = vadd.f32 0.0, %v9436
    %v9438 = vpop.f32.mrf.mxu0
    %9439 = vmatprep.mubr.bf16.mxu0 0
    %9440 = vmatmul.mubr.bf16.gmra.mxu0 %v9320
    %v9441 = vpop.f32.mrf.mxu0
    %v9442 = vadd.f32 0.0, %v9441
    %v9443 = vpop.f32.mrf.mxu0
    %v9444 = vpop.f32.mrf.mxu0
    %v9445 = vadd.f32 0.0, %v9444
    %v9446 = vpop.f32.mrf.mxu0
    %9447 = vmatprep.mubr.bf16.mxu0 0
    %9448 = vmatmul.mubr.bf16.gmra.mxu0 %v9323
    %v9449 = vpop.f32.mrf.mxu0
    %v9450 = vadd.f32 0.0, %v9449
    %v9451 = vpop.f32.mrf.mxu0
    %v9452 = vpop.f32.mrf.mxu0
    %v9453 = vadd.f32 0.0, %v9452
    %v9454 = vpop.f32.mrf.mxu0
    %9455 = vmatprep.mubr.bf16.mxu0 0
    %9456 = vmatmul.mubr.bf16.gmra.mxu0 %v9326
    %v9457 = vpop.f32.mrf.mxu0
    %v9458 = vadd.f32 0.0, %v9457
    %v9459 = vpop.f32.mrf.mxu0
    %v9460 = vpop.f32.mrf.mxu0
    %v9461 = vadd.f32 0.0, %v9460
    %v9462 = vpop.f32.mrf.mxu0
    %9463 = vmatprep.mubr.bf16.mxu0 0
    %9464 = vmatmul.mubr.bf16.gmra.mxu0 %v9329
    %v9465 = vpop.f32.mrf.mxu0
    %v9466 = vadd.f32 0.0, %v9465
    %v9467 = vpop.f32.mrf.mxu0
    %v9468 = vpop.f32.mrf.mxu0
    %v9469 = vadd.f32 0.0, %v9468
    %v9470 = vpop.f32.mrf.mxu0
    %9471 = vmatprep.mubr.bf16.mxu0 0
    %9472 = vmatmul.mubr.bf16.gmra.mxu0 %v9332
    %v9473 = vpop.f32.mrf.mxu0
    %v9474 = vadd.f32 0.0, %v9473
    %v9475 = vpop.f32.mrf.mxu0
    %v9476 = vpop.f32.mrf.mxu0
    %v9477 = vadd.f32 0.0, %v9476
    %v9478 = vpop.f32.mrf.mxu0
    %9479 = vmatprep.mubr.bf16.mxu0 0
    %9480 = vmatmul.mubr.bf16.gmra.mxu0 %v9335
    %v9481 = vpop.f32.mrf.mxu0
    %v9482 = vadd.f32 0.0, %v9481
    %v9483 = vpop.f32.mrf.mxu0
    %v9484 = vpop.f32.mrf.mxu0
    %v9485 = vadd.f32 0.0, %v9484
    %v9486 = vpop.f32.mrf.mxu0
    %9487 = vmatprep.mubr.bf16.mxu0 0
    %9488 = vmatmul.mubr.bf16.gmra.mxu0 %v9338
    %v9489 = vpop.f32.mrf.mxu0
    %v9490 = vadd.f32 0.0, %v9489
    %v9491 = vpop.f32.mrf.mxu0
    %v9492 = vpop.f32.mrf.mxu0
    %v9493 = vadd.f32 0.0, %v9492
    %v9494 = vpop.f32.mrf.mxu0
    %9495 = vmatprep.mubr.bf16.mxu0 0
    %9496 = vmatmul.mubr.bf16.gmra.mxu0 %v9341
    %v9497 = vpop.f32.mrf.mxu0
    %v9498 = vadd.f32 0.0, %v9497
    %v9499 = vpop.f32.mrf.mxu0
    %v9500 = vpop.f32.mrf.mxu0
    %v9501 = vadd.f32 0.0, %v9500
    %v9502 = vpop.f32.mrf.mxu0
    %9503 = vdwg.mxu0
    %v9504 = vlaneseq
    %v9505 = vshrl.u32 %v9504, 7
    %v9506 = vsub.s32 0, %v9505
    %v9507 = vrot.slane %v9173, %v9506
    %v9508 = vadd.f32 %v9507, %v9378
    %v9509 = vadd.f32 %v9507, %v9381
    %v9510 = vadd.f32 %v9507, %v9386
    %v9511 = vadd.f32 %v9507, %v9389
    %v9512 = vadd.f32 %v9507, %v9394
    %v9513 = vadd.f32 %v9507, %v9397
    %v9514 = vadd.f32 %v9507, %v9402
    %v9515 = vadd.f32 %v9507, %v9405
    %v9516 = vadd.f32 %v9507, %v9410
    %v9517 = vadd.f32 %v9507, %v9413
    %v9518 = vadd.f32 %v9507, %v9418
    %v9519 = vadd.f32 %v9507, %v9421
    %v9520 = vadd.f32 %v9507, %v9426
    %v9521 = vadd.f32 %v9507, %v9429
    %v9522 = vadd.f32 %v9507, %v9434
    %v9523 = vadd.f32 %v9507, %v9437
    %v9524 = vadd.f32 %v9507, %v9442
    %v9525 = vadd.f32 %v9507, %v9445
    %v9526 = vadd.f32 %v9507, %v9450
    %v9527 = vadd.f32 %v9507, %v9453
    %v9528 = vadd.f32 %v9507, %v9458
    %v9529 = vadd.f32 %v9507, %v9461
    %v9530 = vadd.f32 %v9507, %v9466
    %v9531 = vadd.f32 %v9507, %v9469
    %v9532 = vadd.f32 %v9507, %v9474
    %v9533 = vadd.f32 %v9507, %v9477
    %v9534 = vadd.f32 %v9507, %v9482
    %v9535 = vadd.f32 %v9507, %v9485
    %v9536 = vadd.f32 %v9507, %v9490
    %v9537 = vadd.f32 %v9507, %v9493
    %v9538 = vadd.f32 %v9507, %v9498
    %v9539 = vadd.f32 %v9507, %v9501
    %v9540 = vld [vmem:[#allocation2 + $0x20] sm:$0xff]
    %v9541 = vld [vmem:[#allocation2 + $0x28] sm:$0xff]
    %v9542 = vld [vmem:[#allocation2 + $0x50] sm:$0xff]
    %v9543 = vld [vmem:[#allocation2 + $0x58] sm:$0xff]
    %v9544 = vld [vmem:[#allocation2 + $0x80] sm:$0xff]
    %v9545 = vld [vmem:[#allocation2 + $0x88] sm:$0xff]
    %v9546 = vld [vmem:[#allocation2 + $0xb0] sm:$0xff]
    %v9547 = vld [vmem:[#allocation2 + $0xb8] sm:$0xff]
    %v9548 = vld [vmem:[#allocation2 + $0xe0] sm:$0xff]
    %v9549 = vld [vmem:[#allocation2 + $0xe8] sm:$0xff]
    %v9550 = vld [vmem:[#allocation2 + $0x110] sm:$0xff]
    %v9551 = vld [vmem:[#allocation2 + $0x118] sm:$0xff]
    %v9552 = vld [vmem:[#allocation2 + $0x140] sm:$0xff]
    %v9553 = vld [vmem:[#allocation2 + $0x148] sm:$0xff]
    %v9554 = vld [vmem:[#allocation2 + $0x170] sm:$0xff]
    %v9555 = vld [vmem:[#allocation2 + $0x178] sm:$0xff]
    %v9556 = vld [vmem:[#allocation2 + $0x1a0] sm:$0xff]
    %v9557 = vld [vmem:[#allocation2 + $0x1a8] sm:$0xff]
    %v9558 = vld [vmem:[#allocation2 + $0x1d0] sm:$0xff]
    %v9559 = vld [vmem:[#allocation2 + $0x1d8] sm:$0xff]
    %v9560 = vld [vmem:[#allocation2 + $0x200] sm:$0xff]
    %v9561 = vld [vmem:[#allocation2 + $0x208] sm:$0xff]
    %v9562 = vld [vmem:[#allocation2 + $0x230] sm:$0xff]
    %v9563 = vld [vmem:[#allocation2 + $0x238] sm:$0xff]
    %v9564 = vld [vmem:[#allocation2 + $0x260] sm:$0xff]
    %v9565 = vld [vmem:[#allocation2 + $0x268] sm:$0xff]
    %v9566 = vld [vmem:[#allocation2 + $0x290] sm:$0xff]
    %v9567 = vld [vmem:[#allocation2 + $0x298] sm:$0xff]
    %v9568 = vld [vmem:[#allocation2 + $0x2c0] sm:$0xff]
    %v9569 = vld [vmem:[#allocation2 + $0x2c8] sm:$0xff]
    %v9570 = vld [vmem:[#allocation2 + $0x2f0] sm:$0xff]
    %v9571 = vld [vmem:[#allocation2 + $0x2f8] sm:$0xff]
    %s9572 = scalar_lea.vmem [#allocation7], 840
    %v9573 = vld [vmem:[%s9572] sm:$0xf]
    %v9574 = vld [vmem:[%s9572 + $0x4] sm:$0xf]
    %v9575 = vld [vmem:[%s9572 + $0x8] sm:$0xf]
    %v9576 = vld [vmem:[%s9572 + $0xc] sm:$0xf]
    %v9577 = vld [vmem:[%s9572 + $0x10] sm:$0xf]
    %v9578 = vld [vmem:[%s9572 + $0x14] sm:$0xf]
    %v9579 = vld [vmem:[%s9572 + $0x18] sm:$0xf]
    %v9580 = vld [vmem:[%s9572 + $0x1c] sm:$0xf]
    %v9581 = vld [vmem:[%s9572 + $0x20] sm:$0xf]
    %v9582 = vld [vmem:[%s9572 + $0x24] sm:$0xf]
    %v9583 = vpack.c.bf16 %v9541, %v9540
    %v9584 = vpack.c.bf16 %v9543, %v9542
    %v9585 = vpack.c.bf16 %v9545, %v9544
    %v9586 = vpack.c.bf16 %v9547, %v9546
    %v9587 = vpack.c.bf16 %v9549, %v9548
    %v9588 = vpack.c.bf16 %v9551, %v9550
    %v9589 = vpack.c.bf16 %v9553, %v9552
    %v9590 = vpack.c.bf16 %v9555, %v9554
    %v9591 = vpack.c.bf16 %v9557, %v9556
    %v9592 = vpack.c.bf16 %v9559, %v9558
    %v9593 = vpack.c.bf16 %v9561, %v9560
    %v9594 = vpack.c.bf16 %v9563, %v9562
    %v9595 = vpack.c.bf16 %v9565, %v9564
    %v9596 = vpack.c.bf16 %v9567, %v9566
    %v9597 = vpack.c.bf16 %v9569, %v9568
    %v9598 = vpack.c.bf16 %v9571, %v9570
    %v9609 = vunpack.c.l.b16 %v9573
    %v9610 = vunpack.c.l.b16 %v9574
    %v9611 = vunpack.c.l.b16 %v9575
    %v9612 = vunpack.c.l.b16 %v9576
    %v9613 = vunpack.c.l.b16 %v9577
    %v9614 = vunpack.c.l.b16 %v9578
    %v9615 = vunpack.c.l.b16 %v9579
    %v9616 = vunpack.c.l.b16 %v9580
    %v9617 = vunpack.c.l.b16 %v9581
    %v9618 = vunpack.c.l.b16 %v9582
    %v9619 = vpack.c.b16 %v9610, %v9609
    %v9620 = vpack.c.b16 %v9612, %v9611
    %v9621 = vpack.c.b16 %v9614, %v9613
    %v9622 = vpack.c.b16 %v9616, %v9615
    %v9623 = vpack.c.b16 %v9618, %v9617
    %v9630 = vsel %vm59, %v9583, 0
    %v9633 = vsel %vm59, %v9584, 0
    %v9636 = vsel %vm59, %v9585, 0
    %v9639 = vsel %vm59, %v9586, 0
    %v9642 = vsel %vm59, %v9587, 0
    %v9645 = vsel %vm59, %v9588, 0
    %v9648 = vsel %vm59, %v9589, 0
    %v9651 = vsel %vm59, %v9590, 0
    %v9654 = vsel %vm59, %v9591, 0
    %v9657 = vsel %vm59, %v9592, 0
    %v9660 = vsel %vm59, %v9593, 0
    %v9663 = vsel %vm59, %v9594, 0
    %v9666 = vsel %vm59, %v9595, 0
    %v9669 = vsel %vm59, %v9596, 0
    %v9672 = vsel %vm59, %v9597, 0
    %v9675 = vsel %vm59, %v9598, 0
    %9677 = vmatprep.subr.bf16.mxu0 0
    %9678 = vmatpush1.bf16.msra.mxu0 0
    %9679 = vmatprep.subr.bf16.mxu0 0
    %9680 = vmatpush1.bf16.msra.mxu0 0
    %9681 = vmatprep.subr.bf16.mxu0 0
    %9682 = vmatpush1.bf16.msra.mxu0 0
    %9683 = vmatprep.subr.bf16.mxu0 0
    %9684 = vmatpush1.bf16.msra.mxu0 %v9623
    %9685 = vmatprep.subr.bf16.mxu0 0
    %9686 = vmatpush1.bf16.msra.mxu0 %v9622
    %9687 = vmatprep.subr.bf16.mxu0 0
    %9688 = vmatpush1.bf16.msra.mxu0 %v9621
    %9689 = vmatprep.subr.bf16.mxu0 0
    %9690 = vmatpush1.bf16.msra.mxu0 %v9620
    %9691 = vmatprep.subr.bf16.mxu0 0
    %9692 = vmatpush1.bf16.msra.mxu0 %v9619
    %9693 = vmatprep.subr.bf16.mxu0 0
    %9694 = vmatpush2.bf16.msra.mxu0 0
    %9695 = vmatprep.subr.bf16.mxu0 0
    %9696 = vmatpush2.bf16.msra.mxu0 0
    %9697 = vmatprep.subr.bf16.mxu0 0
    %9698 = vmatpush2.bf16.msra.mxu0 0
    %9699 = vmatprep.subr.bf16.mxu0 0
    %9700 = vmatpush2.bf16.msra.mxu0 0
    %9701 = vmatprep.subr.bf16.mxu0 0
    %9702 = vmatpush2.bf16.msra.mxu0 0
    %9703 = vmatprep.subr.bf16.mxu0 0
    %9704 = vmatpush2.bf16.msra.mxu0 0
    %9705 = vmatprep.subr.bf16.mxu0 0
    %9706 = vmatpush2.bf16.msra.mxu0 0
    %9707 = vmatprep.subr.bf16.mxu0 0
    %9708 = vmatpush2.bf16.msra.mxu0 0
    %9709 = vmatprep.mubr.bf16.mxu0 0
    %9710 = vmatmul.mubr.bf16.gmra.mxu0 %v9630
    %v9711 = vpop.f32.mrf.mxu0
    %v9712 = vadd.f32 0.0, %v9711
    %v9713 = vpop.f32.mrf.mxu0
    %v9714 = vpop.f32.mrf.mxu0
    %v9715 = vadd.f32 0.0, %v9714
    %v9716 = vpop.f32.mrf.mxu0
    %9717 = vmatprep.mubr.bf16.mxu0 0
    %9718 = vmatmul.mubr.bf16.gmra.mxu0 %v9633
    %v9719 = vpop.f32.mrf.mxu0
    %v9720 = vadd.f32 0.0, %v9719
    %v9721 = vpop.f32.mrf.mxu0
    %v9722 = vpop.f32.mrf.mxu0
    %v9723 = vadd.f32 0.0, %v9722
    %v9724 = vpop.f32.mrf.mxu0
    %9725 = vmatprep.mubr.bf16.mxu0 0
    %9726 = vmatmul.mubr.bf16.gmra.mxu0 %v9636
    %v9727 = vpop.f32.mrf.mxu0
    %v9728 = vadd.f32 0.0, %v9727
    %v9729 = vpop.f32.mrf.mxu0
    %v9730 = vpop.f32.mrf.mxu0
    %v9731 = vadd.f32 0.0, %v9730
    %v9732 = vpop.f32.mrf.mxu0
    %9733 = vmatprep.mubr.bf16.mxu0 0
    %9734 = vmatmul.mubr.bf16.gmra.mxu0 %v9639
    %v9735 = vpop.f32.mrf.mxu0
    %v9736 = vadd.f32 0.0, %v9735
    %v9737 = vpop.f32.mrf.mxu0
    %v9738 = vpop.f32.mrf.mxu0
    %v9739 = vadd.f32 0.0, %v9738
    %v9740 = vpop.f32.mrf.mxu0
    %9741 = vmatprep.mubr.bf16.mxu0 0
    %9742 = vmatmul.mubr.bf16.gmra.mxu0 %v9642
    %v9743 = vpop.f32.mrf.mxu0
    %v9744 = vadd.f32 0.0, %v9743
    %v9745 = vpop.f32.mrf.mxu0
    %v9746 = vpop.f32.mrf.mxu0
    %v9747 = vadd.f32 0.0, %v9746
    %v9748 = vpop.f32.mrf.mxu0
    %9749 = vmatprep.mubr.bf16.mxu0 0
    %9750 = vmatmul.mubr.bf16.gmra.mxu0 %v9645
    %v9751 = vpop.f32.mrf.mxu0
    %v9752 = vadd.f32 0.0, %v9751
    %v9753 = vpop.f32.mrf.mxu0
    %v9754 = vpop.f32.mrf.mxu0
    %v9755 = vadd.f32 0.0, %v9754
    %v9756 = vpop.f32.mrf.mxu0
    %9757 = vmatprep.mubr.bf16.mxu0 0
    %9758 = vmatmul.mubr.bf16.gmra.mxu0 %v9648
    %v9759 = vpop.f32.mrf.mxu0
    %v9760 = vadd.f32 0.0, %v9759
    %v9761 = vpop.f32.mrf.mxu0
    %v9762 = vpop.f32.mrf.mxu0
    %v9763 = vadd.f32 0.0, %v9762
    %v9764 = vpop.f32.mrf.mxu0
    %9765 = vmatprep.mubr.bf16.mxu0 0
    %9766 = vmatmul.mubr.bf16.gmra.mxu0 %v9651
    %v9767 = vpop.f32.mrf.mxu0
    %v9768 = vadd.f32 0.0, %v9767
    %v9769 = vpop.f32.mrf.mxu0
    %v9770 = vpop.f32.mrf.mxu0
    %v9771 = vadd.f32 0.0, %v9770
    %v9772 = vpop.f32.mrf.mxu0
    %9773 = vmatprep.mubr.bf16.mxu0 0
    %9774 = vmatmul.mubr.bf16.gmra.mxu0 %v9654
    %v9775 = vpop.f32.mrf.mxu0
    %v9776 = vadd.f32 0.0, %v9775
    %v9777 = vpop.f32.mrf.mxu0
    %v9778 = vpop.f32.mrf.mxu0
    %v9779 = vadd.f32 0.0, %v9778
    %v9780 = vpop.f32.mrf.mxu0
    %9781 = vmatprep.mubr.bf16.mxu0 0
    %9782 = vmatmul.mubr.bf16.gmra.mxu0 %v9657
    %v9783 = vpop.f32.mrf.mxu0
    %v9784 = vadd.f32 0.0, %v9783
    %v9785 = vpop.f32.mrf.mxu0
    %v9786 = vpop.f32.mrf.mxu0
    %v9787 = vadd.f32 0.0, %v9786
    %v9788 = vpop.f32.mrf.mxu0
    %9789 = vmatprep.mubr.bf16.mxu0 0
    %9790 = vmatmul.mubr.bf16.gmra.mxu0 %v9660
    %v9791 = vpop.f32.mrf.mxu0
    %v9792 = vadd.f32 0.0, %v9791
    %v9793 = vpop.f32.mrf.mxu0
    %v9794 = vpop.f32.mrf.mxu0
    %v9795 = vadd.f32 0.0, %v9794
    %v9796 = vpop.f32.mrf.mxu0
    %9797 = vmatprep.mubr.bf16.mxu0 0
    %9798 = vmatmul.mubr.bf16.gmra.mxu0 %v9663
    %v9799 = vpop.f32.mrf.mxu0
    %v9800 = vadd.f32 0.0, %v9799
    %v9801 = vpop.f32.mrf.mxu0
    %v9802 = vpop.f32.mrf.mxu0
    %v9803 = vadd.f32 0.0, %v9802
    %v9804 = vpop.f32.mrf.mxu0
    %9805 = vmatprep.mubr.bf16.mxu0 0
    %9806 = vmatmul.mubr.bf16.gmra.mxu0 %v9666
    %v9807 = vpop.f32.mrf.mxu0
    %v9808 = vadd.f32 0.0, %v9807
    %v9809 = vpop.f32.mrf.mxu0
    %v9810 = vpop.f32.mrf.mxu0
    %v9811 = vadd.f32 0.0, %v9810
    %v9812 = vpop.f32.mrf.mxu0
    %9813 = vmatprep.mubr.bf16.mxu0 0
    %9814 = vmatmul.mubr.bf16.gmra.mxu0 %v9669
    %v9815 = vpop.f32.mrf.mxu0
    %v9816 = vadd.f32 0.0, %v9815
    %v9817 = vpop.f32.mrf.mxu0
    %v9818 = vpop.f32.mrf.mxu0
    %v9819 = vadd.f32 0.0, %v9818
    %v9820 = vpop.f32.mrf.mxu0
    %9821 = vmatprep.mubr.bf16.mxu0 0
    %9822 = vmatmul.mubr.bf16.gmra.mxu0 %v9672
    %v9823 = vpop.f32.mrf.mxu0
    %v9824 = vadd.f32 0.0, %v9823
    %v9825 = vpop.f32.mrf.mxu0
    %v9826 = vpop.f32.mrf.mxu0
    %v9827 = vadd.f32 0.0, %v9826
    %v9828 = vpop.f32.mrf.mxu0
    %9829 = vmatprep.mubr.bf16.mxu0 0
    %9830 = vmatmul.mubr.bf16.gmra.mxu0 %v9675
    %v9831 = vpop.f32.mrf.mxu0
    %v9832 = vadd.f32 0.0, %v9831
    %v9833 = vpop.f32.mrf.mxu0
    %v9834 = vpop.f32.mrf.mxu0
    %v9835 = vadd.f32 0.0, %v9834
    %v9836 = vpop.f32.mrf.mxu0
    %9837 = vdwg.mxu0
    %v9838 = vadd.f32 %v9508, %v9712
    %v9839 = vadd.f32 %v9509, %v9715
    %v9840 = vadd.f32 %v9510, %v9720
    %v9841 = vadd.f32 %v9511, %v9723
    %v9842 = vadd.f32 %v9512, %v9728
    %v9843 = vadd.f32 %v9513, %v9731
    %v9844 = vadd.f32 %v9514, %v9736
    %v9845 = vadd.f32 %v9515, %v9739
    %v9846 = vadd.f32 %v9516, %v9744
    %v9847 = vadd.f32 %v9517, %v9747
    %v9848 = vadd.f32 %v9518, %v9752
    %v9849 = vadd.f32 %v9519, %v9755
    %v9850 = vadd.f32 %v9520, %v9760
    %v9851 = vadd.f32 %v9521, %v9763
    %v9852 = vadd.f32 %v9522, %v9768
    %v9853 = vadd.f32 %v9523, %v9771
    %v9854 = vadd.f32 %v9524, %v9776
    %v9855 = vadd.f32 %v9525, %v9779
    %v9856 = vadd.f32 %v9526, %v9784
    %v9857 = vadd.f32 %v9527, %v9787
    %v9858 = vadd.f32 %v9528, %v9792
    %v9859 = vadd.f32 %v9529, %v9795
    %v9860 = vadd.f32 %v9530, %v9800
    %v9861 = vadd.f32 %v9531, %v9803
    %v9862 = vadd.f32 %v9532, %v9808
    %v9863 = vadd.f32 %v9533, %v9811
    %v9864 = vadd.f32 %v9534, %v9816
    %v9865 = vadd.f32 %v9535, %v9819
    %v9866 = vadd.f32 %v9536, %v9824
    %v9867 = vadd.f32 %v9537, %v9827
    %v9868 = vadd.f32 %v9538, %v9832
    %v9869 = vadd.f32 %v9539, %v9835
    %s9870 = sld [smem:[#allocation4 + $0xc]]
    %vm9871 = vcmp.ge.f32.partialorder %v9838, 0.0
    %vm9872 = vcmp.ge.f32.partialorder %v9839, 0.0
    %vm9873 = vcmp.ge.f32.partialorder %v9840, 0.0
    %vm9874 = vcmp.ge.f32.partialorder %v9841, 0.0
    %vm9875 = vcmp.ge.f32.partialorder %v9842, 0.0
    %vm9876 = vcmp.ge.f32.partialorder %v9843, 0.0
    %vm9877 = vcmp.ge.f32.partialorder %v9844, 0.0
    %vm9878 = vcmp.ge.f32.partialorder %v9845, 0.0
    %vm9879 = vcmp.ge.f32.partialorder %v9846, 0.0
    %vm9880 = vcmp.ge.f32.partialorder %v9847, 0.0
    %vm9881 = vcmp.ge.f32.partialorder %v9848, 0.0
    %vm9882 = vcmp.ge.f32.partialorder %v9849, 0.0
    %vm9883 = vcmp.ge.f32.partialorder %v9850, 0.0
    %vm9884 = vcmp.ge.f32.partialorder %v9851, 0.0
    %vm9885 = vcmp.ge.f32.partialorder %v9852, 0.0
    %vm9886 = vcmp.ge.f32.partialorder %v9853, 0.0
    %vm9887 = vcmp.ge.f32.partialorder %v9854, 0.0
    %vm9888 = vcmp.ge.f32.partialorder %v9855, 0.0
    %vm9889 = vcmp.ge.f32.partialorder %v9856, 0.0
    %vm9890 = vcmp.ge.f32.partialorder %v9857, 0.0
    %vm9891 = vcmp.ge.f32.partialorder %v9858, 0.0
    %vm9892 = vcmp.ge.f32.partialorder %v9859, 0.0
    %vm9893 = vcmp.ge.f32.partialorder %v9860, 0.0
    %vm9894 = vcmp.ge.f32.partialorder %v9861, 0.0
    %vm9895 = vcmp.ge.f32.partialorder %v9862, 0.0
    %vm9896 = vcmp.ge.f32.partialorder %v9863, 0.0
    %vm9897 = vcmp.ge.f32.partialorder %v9864, 0.0
    %vm9898 = vcmp.ge.f32.partialorder %v9865, 0.0
    %vm9899 = vcmp.ge.f32.partialorder %v9866, 0.0
    %vm9900 = vcmp.ge.f32.partialorder %v9867, 0.0
    %vm9901 = vcmp.ge.f32.partialorder %v9868, 0.0
    %vm9902 = vcmp.ge.f32.partialorder %v9869, 0.0
    %v9903 = vstv %s9870
    %v9904 = vmul.f32 %v9903, %v9838
    %v9905 = vmul.f32 %v9903, %v9839
    %v9906 = vmul.f32 %v9903, %v9840
    %v9907 = vmul.f32 %v9903, %v9841
    %v9908 = vmul.f32 %v9903, %v9842
    %v9909 = vmul.f32 %v9903, %v9843
    %v9910 = vmul.f32 %v9903, %v9844
    %v9911 = vmul.f32 %v9903, %v9845
    %v9912 = vmul.f32 %v9903, %v9846
    %v9913 = vmul.f32 %v9903, %v9847
    %v9914 = vmul.f32 %v9903, %v9848
    %v9915 = vmul.f32 %v9903, %v9849
    %v9916 = vmul.f32 %v9903, %v9850
    %v9917 = vmul.f32 %v9903, %v9851
    %v9918 = vmul.f32 %v9903, %v9852
    %v9919 = vmul.f32 %v9903, %v9853
    %v9920 = vmul.f32 %v9903, %v9854
    %v9921 = vmul.f32 %v9903, %v9855
    %v9922 = vmul.f32 %v9903, %v9856
    %v9923 = vmul.f32 %v9903, %v9857
    %v9924 = vmul.f32 %v9903, %v9858
    %v9925 = vmul.f32 %v9903, %v9859
    %v9926 = vmul.f32 %v9903, %v9860
    %v9927 = vmul.f32 %v9903, %v9861
    %v9928 = vmul.f32 %v9903, %v9862
    %v9929 = vmul.f32 %v9903, %v9863
    %v9930 = vmul.f32 %v9903, %v9864
    %v9931 = vmul.f32 %v9903, %v9865
    %v9932 = vmul.f32 %v9903, %v9866
    %v9933 = vmul.f32 %v9903, %v9867
    %v9934 = vmul.f32 %v9903, %v9868
    %v9935 = vmul.f32 %v9903, %v9869
    %v9936 = vsel %vm9871, %v9838, %v9904
    %v9937 = vsel %vm9872, %v9839, %v9905
    %v9938 = vsel %vm9873, %v9840, %v9906
    %v9939 = vsel %vm9874, %v9841, %v9907
    %v9940 = vsel %vm9875, %v9842, %v9908
    %v9941 = vsel %vm9876, %v9843, %v9909
    %v9942 = vsel %vm9877, %v9844, %v9910
    %v9943 = vsel %vm9878, %v9845, %v9911
    %v9944 = vsel %vm9879, %v9846, %v9912
    %v9945 = vsel %vm9880, %v9847, %v9913
    %v9946 = vsel %vm9881, %v9848, %v9914
    %v9947 = vsel %vm9882, %v9849, %v9915
    %v9948 = vsel %vm9883, %v9850, %v9916
    %v9949 = vsel %vm9884, %v9851, %v9917
    %v9950 = vsel %vm9885, %v9852, %v9918
    %v9951 = vsel %vm9886, %v9853, %v9919
    %v9952 = vsel %vm9887, %v9854, %v9920
    %v9953 = vsel %vm9888, %v9855, %v9921
    %v9954 = vsel %vm9889, %v9856, %v9922
    %v9955 = vsel %vm9890, %v9857, %v9923
    %v9956 = vsel %vm9891, %v9858, %v9924
    %v9957 = vsel %vm9892, %v9859, %v9925
    %v9958 = vsel %vm9893, %v9860, %v9926
    %v9959 = vsel %vm9894, %v9861, %v9927
    %v9960 = vsel %vm9895, %v9862, %v9928
    %v9961 = vsel %vm9896, %v9863, %v9929
    %v9962 = vsel %vm9897, %v9864, %v9930
    %v9963 = vsel %vm9898, %v9865, %v9931
    %v9964 = vsel %vm9899, %v9866, %v9932
    %v9965 = vsel %vm9900, %v9867, %v9933
    %v9966 = vsel %vm9901, %v9868, %v9934
    %v9967 = vsel %vm9902, %v9869, %v9935
    %v9968 = vld [vmem:[%s6 + $0xe] sm:$0x1]
    %9969 = vst.msk [vmem:[#allocation2 + $0x10] sm:$0xff] %vm59, %v9936
    %9970 = vst.msk [vmem:[#allocation2 + $0x18] sm:$0xff] %vm59, %v9937
    %9971 = vst.msk [vmem:[#allocation2 + $0x40] sm:$0xff] %vm59, %v9938
    %9972 = vst.msk [vmem:[#allocation2 + $0x48] sm:$0xff] %vm59, %v9939
    %9973 = vst.msk [vmem:[#allocation2 + $0x70] sm:$0xff] %vm59, %v9940
    %9974 = vst.msk [vmem:[#allocation2 + $0x78] sm:$0xff] %vm59, %v9941
    %9975 = vst.msk [vmem:[#allocation2 + $0xa0] sm:$0xff] %vm59, %v9942
    %9976 = vst.msk [vmem:[#allocation2 + $0xa8] sm:$0xff] %vm59, %v9943
    %9977 = vst.msk [vmem:[#allocation2 + $0xd0] sm:$0xff] %vm59, %v9944
    %9978 = vst.msk [vmem:[#allocation2 + $0xd8] sm:$0xff] %vm59, %v9945
    %9979 = vst.msk [vmem:[#allocation2 + $0x100] sm:$0xff] %vm59, %v9946
    %9980 = vst.msk [vmem:[#allocation2 + $0x108] sm:$0xff] %vm59, %v9947
    %9981 = vst.msk [vmem:[#allocation2 + $0x130] sm:$0xff] %vm59, %v9948
    %9982 = vst.msk [vmem:[#allocation2 + $0x138] sm:$0xff] %vm59, %v9949
    %9983 = vst.msk [vmem:[#allocation2 + $0x160] sm:$0xff] %vm59, %v9950
    %9984 = vst.msk [vmem:[#allocation2 + $0x168] sm:$0xff] %vm59, %v9951
    %9985 = vst.msk [vmem:[#allocation2 + $0x190] sm:$0xff] %vm59, %v9952
    %9986 = vst.msk [vmem:[#allocation2 + $0x198] sm:$0xff] %vm59, %v9953
    %9987 = vst.msk [vmem:[#allocation2 + $0x1c0] sm:$0xff] %vm59, %v9954
    %9988 = vst.msk [vmem:[#allocation2 + $0x1c8] sm:$0xff] %vm59, %v9955
    %9989 = vst.msk [vmem:[#allocation2 + $0x1f0] sm:$0xff] %vm59, %v9956
    %9990 = vst.msk [vmem:[#allocation2 + $0x1f8] sm:$0xff] %vm59, %v9957
    %9991 = vst.msk [vmem:[#allocation2 + $0x220] sm:$0xff] %vm59, %v9958
    %9992 = vst.msk [vmem:[#allocation2 + $0x228] sm:$0xff] %vm59, %v9959
    %9993 = vst.msk [vmem:[#allocation2 + $0x250] sm:$0xff] %vm59, %v9960
    %9994 = vst.msk [vmem:[#allocation2 + $0x258] sm:$0xff] %vm59, %v9961
    %9995 = vst.msk [vmem:[#allocation2 + $0x280] sm:$0xff] %vm59, %v9962
    %9996 = vst.msk [vmem:[#allocation2 + $0x288] sm:$0xff] %vm59, %v9963
    %9997 = vst.msk [vmem:[#allocation2 + $0x2b0] sm:$0xff] %vm59, %v9964
    %9998 = vst.msk [vmem:[#allocation2 + $0x2b8] sm:$0xff] %vm59, %v9965
    %9999 = vst.msk [vmem:[#allocation2 + $0x2e0] sm:$0xff] %vm59, %v9966
    %10000 = vst.msk [vmem:[#allocation2 + $0x2e8] sm:$0xff] %vm59, %v9967
    %v10001 = vld [vmem:[#allocation2] sm:$0xff]
    %v10002 = vld [vmem:[#allocation2 + $0x8] sm:$0xff]
    %v10003 = vld [vmem:[#allocation2 + $0x30] sm:$0xff]
    %v10004 = vld [vmem:[#allocation2 + $0x38] sm:$0xff]
    %v10005 = vld [vmem:[#allocation2 + $0x60] sm:$0xff]
    %v10006 = vld [vmem:[#allocation2 + $0x68] sm:$0xff]
    %v10007 = vld [vmem:[#allocation2 + $0x90] sm:$0xff]
    %v10008 = vld [vmem:[#allocation2 + $0x98] sm:$0xff]
    %v10009 = vld [vmem:[#allocation2 + $0xc0] sm:$0xff]
    %v10010 = vld [vmem:[#allocation2 + $0xc8] sm:$0xff]
    %v10011 = vld [vmem:[#allocation2 + $0xf0] sm:$0xff]
    %v10012 = vld [vmem:[#allocation2 + $0xf8] sm:$0xff]
    %v10013 = vld [vmem:[#allocation2 + $0x120] sm:$0xff]
    %v10014 = vld [vmem:[#allocation2 + $0x128] sm:$0xff]
    %v10015 = vld [vmem:[#allocation2 + $0x150] sm:$0xff]
    %v10016 = vld [vmem:[#allocation2 + $0x158] sm:$0xff]
    %v10017 = vld [vmem:[#allocation2 + $0x180] sm:$0xff]
    %v10018 = vld [vmem:[#allocation2 + $0x188] sm:$0xff]
    %v10019 = vld [vmem:[#allocation2 + $0x1b0] sm:$0xff]
    %v10020 = vld [vmem:[#allocation2 + $0x1b8] sm:$0xff]
    %v10021 = vld [vmem:[#allocation2 + $0x1e0] sm:$0xff]
    %v10022 = vld [vmem:[#allocation2 + $0x1e8] sm:$0xff]
    %v10023 = vld [vmem:[#allocation2 + $0x210] sm:$0xff]
    %v10024 = vld [vmem:[#allocation2 + $0x218] sm:$0xff]
    %v10025 = vld [vmem:[#allocation2 + $0x240] sm:$0xff]
    %v10026 = vld [vmem:[#allocation2 + $0x248] sm:$0xff]
    %v10027 = vld [vmem:[#allocation2 + $0x270] sm:$0xff]
    %v10028 = vld [vmem:[#allocation2 + $0x278] sm:$0xff]
    %v10029 = vld [vmem:[#allocation2 + $0x2a0] sm:$0xff]
    %v10030 = vld [vmem:[#allocation2 + $0x2a8] sm:$0xff]
    %v10031 = vld [vmem:[#allocation2 + $0x2d0] sm:$0xff]
    %v10032 = vld [vmem:[#allocation2 + $0x2d8] sm:$0xff]
    %s10033 = scalar_lea.vmem [#allocation7], 880
    %v10034 = vld [vmem:[%s10033] sm:$0xf]
    %v10035 = vld [vmem:[%s10033 + $0x4] sm:$0xf]
    %v10036 = vld [vmem:[%s10033 + $0x8] sm:$0xf]
    %v10037 = vld [vmem:[%s10033 + $0xc] sm:$0xf]
    %v10038 = vld [vmem:[%s10033 + $0x10] sm:$0xf]
    %v10039 = vld [vmem:[%s10033 + $0x14] sm:$0xf]
    %v10040 = vld [vmem:[%s10033 + $0x18] sm:$0xf]
    %v10041 = vld [vmem:[%s10033 + $0x1c] sm:$0xf]
    %v10042 = vld [vmem:[%s10033 + $0x20] sm:$0xf]
    %v10043 = vld [vmem:[%s10033 + $0x24] sm:$0xf]
    %v10044 = vpack.c.bf16 %v10002, %v10001
    %v10045 = vpack.c.bf16 %v10004, %v10003
    %v10046 = vpack.c.bf16 %v10006, %v10005
    %v10047 = vpack.c.bf16 %v10008, %v10007
    %v10048 = vpack.c.bf16 %v10010, %v10009
    %v10049 = vpack.c.bf16 %v10012, %v10011
    %v10050 = vpack.c.bf16 %v10014, %v10013
    %v10051 = vpack.c.bf16 %v10016, %v10015
    %v10052 = vpack.c.bf16 %v10018, %v10017
    %v10053 = vpack.c.bf16 %v10020, %v10019
    %v10054 = vpack.c.bf16 %v10022, %v10021
    %v10055 = vpack.c.bf16 %v10024, %v10023
    %v10056 = vpack.c.bf16 %v10026, %v10025
    %v10057 = vpack.c.bf16 %v10028, %v10027
    %v10058 = vpack.c.bf16 %v10030, %v10029
    %v10059 = vpack.c.bf16 %v10032, %v10031
    %v10070 = vunpack.c.l.b16 %v10034
    %v10071 = vunpack.c.l.b16 %v10035
    %v10072 = vunpack.c.l.b16 %v10036
    %v10073 = vunpack.c.l.b16 %v10037
    %v10074 = vunpack.c.l.b16 %v10038
    %v10075 = vunpack.c.l.b16 %v10039
    %v10076 = vunpack.c.l.b16 %v10040
    %v10077 = vunpack.c.l.b16 %v10041
    %v10078 = vunpack.c.l.b16 %v10042
    %v10079 = vunpack.c.l.b16 %v10043
    %v10080 = vpack.c.b16 %v10071, %v10070
    %v10081 = vpack.c.b16 %v10073, %v10072
    %v10082 = vpack.c.b16 %v10075, %v10074
    %v10083 = vpack.c.b16 %v10077, %v10076
    %v10084 = vpack.c.b16 %v10079, %v10078
    %v10091 = vsel %vm59, %v10044, 0
    %v10094 = vsel %vm59, %v10045, 0
    %v10097 = vsel %vm59, %v10046, 0
    %v10100 = vsel %vm59, %v10047, 0
    %v10103 = vsel %vm59, %v10048, 0
    %v10106 = vsel %vm59, %v10049, 0
    %v10109 = vsel %vm59, %v10050, 0
    %v10112 = vsel %vm59, %v10051, 0
    %v10115 = vsel %vm59, %v10052, 0
    %v10118 = vsel %vm59, %v10053, 0
    %v10121 = vsel %vm59, %v10054, 0
    %v10124 = vsel %vm59, %v10055, 0
    %v10127 = vsel %vm59, %v10056, 0
    %v10130 = vsel %vm59, %v10057, 0
    %v10133 = vsel %vm59, %v10058, 0
    %v10136 = vsel %vm59, %v10059, 0
    %10138 = vmatprep.subr.bf16.mxu0 0
    %10139 = vmatpush1.bf16.msra.mxu0 0
    %10140 = vmatprep.subr.bf16.mxu0 0
    %10141 = vmatpush1.bf16.msra.mxu0 0
    %10142 = vmatprep.subr.bf16.mxu0 0
    %10143 = vmatpush1.bf16.msra.mxu0 0
    %10144 = vmatprep.subr.bf16.mxu0 0
    %10145 = vmatpush1.bf16.msra.mxu0 %v10084
    %10146 = vmatprep.subr.bf16.mxu0 0
    %10147 = vmatpush1.bf16.msra.mxu0 %v10083
    %10148 = vmatprep.subr.bf16.mxu0 0
    %10149 = vmatpush1.bf16.msra.mxu0 %v10082
    %10150 = vmatprep.subr.bf16.mxu0 0
    %10151 = vmatpush1.bf16.msra.mxu0 %v10081
    %10152 = vmatprep.subr.bf16.mxu0 0
    %10153 = vmatpush1.bf16.msra.mxu0 %v10080
    %10154 = vmatprep.subr.bf16.mxu0 0
    %10155 = vmatpush2.bf16.msra.mxu0 0
    %10156 = vmatprep.subr.bf16.mxu0 0
    %10157 = vmatpush2.bf16.msra.mxu0 0
    %10158 = vmatprep.subr.bf16.mxu0 0
    %10159 = vmatpush2.bf16.msra.mxu0 0
    %10160 = vmatprep.subr.bf16.mxu0 0
    %10161 = vmatpush2.bf16.msra.mxu0 0
    %10162 = vmatprep.subr.bf16.mxu0 0
    %10163 = vmatpush2.bf16.msra.mxu0 0
    %10164 = vmatprep.subr.bf16.mxu0 0
    %10165 = vmatpush2.bf16.msra.mxu0 0
    %10166 = vmatprep.subr.bf16.mxu0 0
    %10167 = vmatpush2.bf16.msra.mxu0 0
    %10168 = vmatprep.subr.bf16.mxu0 0
    %10169 = vmatpush2.bf16.msra.mxu0 0
    %10170 = vmatprep.mubr.bf16.mxu0 0
    %10171 = vmatmul.mubr.bf16.gmra.mxu0 %v10091
    %v10172 = vpop.f32.mrf.mxu0
    %v10173 = vadd.f32 0.0, %v10172
    %v10174 = vpop.f32.mrf.mxu0
    %v10175 = vpop.f32.mrf.mxu0
    %v10176 = vadd.f32 0.0, %v10175
    %v10177 = vpop.f32.mrf.mxu0
    %10178 = vmatprep.mubr.bf16.mxu0 0
    %10179 = vmatmul.mubr.bf16.gmra.mxu0 %v10094
    %v10180 = vpop.f32.mrf.mxu0
    %v10181 = vadd.f32 0.0, %v10180
    %v10182 = vpop.f32.mrf.mxu0
    %v10183 = vpop.f32.mrf.mxu0
    %v10184 = vadd.f32 0.0, %v10183
    %v10185 = vpop.f32.mrf.mxu0
    %10186 = vmatprep.mubr.bf16.mxu0 0
    %10187 = vmatmul.mubr.bf16.gmra.mxu0 %v10097
    %v10188 = vpop.f32.mrf.mxu0
    %v10189 = vadd.f32 0.0, %v10188
    %v10190 = vpop.f32.mrf.mxu0
    %v10191 = vpop.f32.mrf.mxu0
    %v10192 = vadd.f32 0.0, %v10191
    %v10193 = vpop.f32.mrf.mxu0
    %10194 = vmatprep.mubr.bf16.mxu0 0
    %10195 = vmatmul.mubr.bf16.gmra.mxu0 %v10100
    %v10196 = vpop.f32.mrf.mxu0
    %v10197 = vadd.f32 0.0, %v10196
    %v10198 = vpop.f32.mrf.mxu0
    %v10199 = vpop.f32.mrf.mxu0
    %v10200 = vadd.f32 0.0, %v10199
    %v10201 = vpop.f32.mrf.mxu0
    %10202 = vmatprep.mubr.bf16.mxu0 0
    %10203 = vmatmul.mubr.bf16.gmra.mxu0 %v10103
    %v10204 = vpop.f32.mrf.mxu0
    %v10205 = vadd.f32 0.0, %v10204
    %v10206 = vpop.f32.mrf.mxu0
    %v10207 = vpop.f32.mrf.mxu0
    %v10208 = vadd.f32 0.0, %v10207
    %v10209 = vpop.f32.mrf.mxu0
    %10210 = vmatprep.mubr.bf16.mxu0 0
    %10211 = vmatmul.mubr.bf16.gmra.mxu0 %v10106
    %v10212 = vpop.f32.mrf.mxu0
    %v10213 = vadd.f32 0.0, %v10212
    %v10214 = vpop.f32.mrf.mxu0
    %v10215 = vpop.f32.mrf.mxu0
    %v10216 = vadd.f32 0.0, %v10215
    %v10217 = vpop.f32.mrf.mxu0
    %10218 = vmatprep.mubr.bf16.mxu0 0
    %10219 = vmatmul.mubr.bf16.gmra.mxu0 %v10109
    %v10220 = vpop.f32.mrf.mxu0
    %v10221 = vadd.f32 0.0, %v10220
    %v10222 = vpop.f32.mrf.mxu0
    %v10223 = vpop.f32.mrf.mxu0
    %v10224 = vadd.f32 0.0, %v10223
    %v10225 = vpop.f32.mrf.mxu0
    %10226 = vmatprep.mubr.bf16.mxu0 0
    %10227 = vmatmul.mubr.bf16.gmra.mxu0 %v10112
    %v10228 = vpop.f32.mrf.mxu0
    %v10229 = vadd.f32 0.0, %v10228
    %v10230 = vpop.f32.mrf.mxu0
    %v10231 = vpop.f32.mrf.mxu0
    %v10232 = vadd.f32 0.0, %v10231
    %v10233 = vpop.f32.mrf.mxu0
    %10234 = vmatprep.mubr.bf16.mxu0 0
    %10235 = vmatmul.mubr.bf16.gmra.mxu0 %v10115
    %v10236 = vpop.f32.mrf.mxu0
    %v10237 = vadd.f32 0.0, %v10236
    %v10238 = vpop.f32.mrf.mxu0
    %v10239 = vpop.f32.mrf.mxu0
    %v10240 = vadd.f32 0.0, %v10239
    %v10241 = vpop.f32.mrf.mxu0
    %10242 = vmatprep.mubr.bf16.mxu0 0
    %10243 = vmatmul.mubr.bf16.gmra.mxu0 %v10118
    %v10244 = vpop.f32.mrf.mxu0
    %v10245 = vadd.f32 0.0, %v10244
    %v10246 = vpop.f32.mrf.mxu0
    %v10247 = vpop.f32.mrf.mxu0
    %v10248 = vadd.f32 0.0, %v10247
    %v10249 = vpop.f32.mrf.mxu0
    %10250 = vmatprep.mubr.bf16.mxu0 0
    %10251 = vmatmul.mubr.bf16.gmra.mxu0 %v10121
    %v10252 = vpop.f32.mrf.mxu0
    %v10253 = vadd.f32 0.0, %v10252
    %v10254 = vpop.f32.mrf.mxu0
    %v10255 = vpop.f32.mrf.mxu0
    %v10256 = vadd.f32 0.0, %v10255
    %v10257 = vpop.f32.mrf.mxu0
    %10258 = vmatprep.mubr.bf16.mxu0 0
    %10259 = vmatmul.mubr.bf16.gmra.mxu0 %v10124
    %v10260 = vpop.f32.mrf.mxu0
    %v10261 = vadd.f32 0.0, %v10260
    %v10262 = vpop.f32.mrf.mxu0
    %v10263 = vpop.f32.mrf.mxu0
    %v10264 = vadd.f32 0.0, %v10263
    %v10265 = vpop.f32.mrf.mxu0
    %10266 = vmatprep.mubr.bf16.mxu0 0
    %10267 = vmatmul.mubr.bf16.gmra.mxu0 %v10127
    %v10268 = vpop.f32.mrf.mxu0
    %v10269 = vadd.f32 0.0, %v10268
    %v10270 = vpop.f32.mrf.mxu0
    %v10271 = vpop.f32.mrf.mxu0
    %v10272 = vadd.f32 0.0, %v10271
    %v10273 = vpop.f32.mrf.mxu0
    %10274 = vmatprep.mubr.bf16.mxu0 0
    %10275 = vmatmul.mubr.bf16.gmra.mxu0 %v10130
    %v10276 = vpop.f32.mrf.mxu0
    %v10277 = vadd.f32 0.0, %v10276
    %v10278 = vpop.f32.mrf.mxu0
    %v10279 = vpop.f32.mrf.mxu0
    %v10280 = vadd.f32 0.0, %v10279
    %v10281 = vpop.f32.mrf.mxu0
    %10282 = vmatprep.mubr.bf16.mxu0 0
    %10283 = vmatmul.mubr.bf16.gmra.mxu0 %v10133
    %v10284 = vpop.f32.mrf.mxu0
    %v10285 = vadd.f32 0.0, %v10284
    %v10286 = vpop.f32.mrf.mxu0
    %v10287 = vpop.f32.mrf.mxu0
    %v10288 = vadd.f32 0.0, %v10287
    %v10289 = vpop.f32.mrf.mxu0
    %10290 = vmatprep.mubr.bf16.mxu0 0
    %10291 = vmatmul.mubr.bf16.gmra.mxu0 %v10136
    %v10292 = vpop.f32.mrf.mxu0
    %v10293 = vadd.f32 0.0, %v10292
    %v10294 = vpop.f32.mrf.mxu0
    %v10295 = vpop.f32.mrf.mxu0
    %v10296 = vadd.f32 0.0, %v10295
    %v10297 = vpop.f32.mrf.mxu0
    %10298 = vdwg.mxu0
    %v10299 = vlaneseq
    %v10300 = vshrl.u32 %v10299, 7
    %v10301 = vsub.s32 0, %v10300
    %v10302 = vrot.slane %v9968, %v10301
    %v10303 = vadd.f32 %v10302, %v10173
    %v10304 = vadd.f32 %v10302, %v10176
    %v10305 = vadd.f32 %v10302, %v10181
    %v10306 = vadd.f32 %v10302, %v10184
    %v10307 = vadd.f32 %v10302, %v10189
    %v10308 = vadd.f32 %v10302, %v10192
    %v10309 = vadd.f32 %v10302, %v10197
    %v10310 = vadd.f32 %v10302, %v10200
    %v10311 = vadd.f32 %v10302, %v10205
    %v10312 = vadd.f32 %v10302, %v10208
    %v10313 = vadd.f32 %v10302, %v10213
    %v10314 = vadd.f32 %v10302, %v10216
    %v10315 = vadd.f32 %v10302, %v10221
    %v10316 = vadd.f32 %v10302, %v10224
    %v10317 = vadd.f32 %v10302, %v10229
    %v10318 = vadd.f32 %v10302, %v10232
    %v10319 = vadd.f32 %v10302, %v10237
    %v10320 = vadd.f32 %v10302, %v10240
    %v10321 = vadd.f32 %v10302, %v10245
    %v10322 = vadd.f32 %v10302, %v10248
    %v10323 = vadd.f32 %v10302, %v10253
    %v10324 = vadd.f32 %v10302, %v10256
    %v10325 = vadd.f32 %v10302, %v10261
    %v10326 = vadd.f32 %v10302, %v10264
    %v10327 = vadd.f32 %v10302, %v10269
    %v10328 = vadd.f32 %v10302, %v10272
    %v10329 = vadd.f32 %v10302, %v10277
    %v10330 = vadd.f32 %v10302, %v10280
    %v10331 = vadd.f32 %v10302, %v10285
    %v10332 = vadd.f32 %v10302, %v10288
    %v10333 = vadd.f32 %v10302, %v10293
    %v10334 = vadd.f32 %v10302, %v10296
    %v10335 = vld [vmem:[#allocation2 + $0x20] sm:$0xff]
    %v10336 = vld [vmem:[#allocation2 + $0x28] sm:$0xff]
    %v10337 = vld [vmem:[#allocation2 + $0x50] sm:$0xff]
    %v10338 = vld [vmem:[#allocation2 + $0x58] sm:$0xff]
    %v10339 = vld [vmem:[#allocation2 + $0x80] sm:$0xff]
    %v10340 = vld [vmem:[#allocation2 + $0x88] sm:$0xff]
    %v10341 = vld [vmem:[#allocation2 + $0xb0] sm:$0xff]
    %v10342 = vld [vmem:[#allocation2 + $0xb8] sm:$0xff]
    %v10343 = vld [vmem:[#allocation2 + $0xe0] sm:$0xff]
    %v10344 = vld [vmem:[#allocation2 + $0xe8] sm:$0xff]
    %v10345 = vld [vmem:[#allocation2 + $0x110] sm:$0xff]
    %v10346 = vld [vmem:[#allocation2 + $0x118] sm:$0xff]
    %v10347 = vld [vmem:[#allocation2 + $0x140] sm:$0xff]
    %v10348 = vld [vmem:[#allocation2 + $0x148] sm:$0xff]
    %v10349 = vld [vmem:[#allocation2 + $0x170] sm:$0xff]
    %v10350 = vld [vmem:[#allocation2 + $0x178] sm:$0xff]
    %v10351 = vld [vmem:[#allocation2 + $0x1a0] sm:$0xff]
    %v10352 = vld [vmem:[#allocation2 + $0x1a8] sm:$0xff]
    %v10353 = vld [vmem:[#allocation2 + $0x1d0] sm:$0xff]
    %v10354 = vld [vmem:[#allocation2 + $0x1d8] sm:$0xff]
    %v10355 = vld [vmem:[#allocation2 + $0x200] sm:$0xff]
    %v10356 = vld [vmem:[#allocation2 + $0x208] sm:$0xff]
    %v10357 = vld [vmem:[#allocation2 + $0x230] sm:$0xff]
    %v10358 = vld [vmem:[#allocation2 + $0x238] sm:$0xff]
    %v10359 = vld [vmem:[#allocation2 + $0x260] sm:$0xff]
    %v10360 = vld [vmem:[#allocation2 + $0x268] sm:$0xff]
    %v10361 = vld [vmem:[#allocation2 + $0x290] sm:$0xff]
    %v10362 = vld [vmem:[#allocation2 + $0x298] sm:$0xff]
    %v10363 = vld [vmem:[#allocation2 + $0x2c0] sm:$0xff]
    %v10364 = vld [vmem:[#allocation2 + $0x2c8] sm:$0xff]
    %v10365 = vld [vmem:[#allocation2 + $0x2f0] sm:$0xff]
    %v10366 = vld [vmem:[#allocation2 + $0x2f8] sm:$0xff]
    %s10367 = scalar_lea.vmem [#allocation7], 920
    %v10368 = vld [vmem:[%s10367] sm:$0xf]
    %v10369 = vld [vmem:[%s10367 + $0x4] sm:$0xf]
    %v10370 = vld [vmem:[%s10367 + $0x8] sm:$0xf]
    %v10371 = vld [vmem:[%s10367 + $0xc] sm:$0xf]
    %v10372 = vld [vmem:[%s10367 + $0x10] sm:$0xf]
    %v10373 = vld [vmem:[%s10367 + $0x14] sm:$0xf]
    %v10374 = vld [vmem:[%s10367 + $0x18] sm:$0xf]
    %v10375 = vld [vmem:[%s10367 + $0x1c] sm:$0xf]
    %v10376 = vld [vmem:[%s10367 + $0x20] sm:$0xf]
    %v10377 = vld [vmem:[%s10367 + $0x24] sm:$0xf]
    %v10378 = vpack.c.bf16 %v10336, %v10335
    %v10379 = vpack.c.bf16 %v10338, %v10337
    %v10380 = vpack.c.bf16 %v10340, %v10339
    %v10381 = vpack.c.bf16 %v10342, %v10341
    %v10382 = vpack.c.bf16 %v10344, %v10343
    %v10383 = vpack.c.bf16 %v10346, %v10345
    %v10384 = vpack.c.bf16 %v10348, %v10347
    %v10385 = vpack.c.bf16 %v10350, %v10349
    %v10386 = vpack.c.bf16 %v10352, %v10351
    %v10387 = vpack.c.bf16 %v10354, %v10353
    %v10388 = vpack.c.bf16 %v10356, %v10355
    %v10389 = vpack.c.bf16 %v10358, %v10357
    %v10390 = vpack.c.bf16 %v10360, %v10359
    %v10391 = vpack.c.bf16 %v10362, %v10361
    %v10392 = vpack.c.bf16 %v10364, %v10363
    %v10393 = vpack.c.bf16 %v10366, %v10365
    %v10404 = vunpack.c.l.b16 %v10368
    %v10405 = vunpack.c.l.b16 %v10369
    %v10406 = vunpack.c.l.b16 %v10370
    %v10407 = vunpack.c.l.b16 %v10371
    %v10408 = vunpack.c.l.b16 %v10372
    %v10409 = vunpack.c.l.b16 %v10373
    %v10410 = vunpack.c.l.b16 %v10374
    %v10411 = vunpack.c.l.b16 %v10375
    %v10412 = vunpack.c.l.b16 %v10376
    %v10413 = vunpack.c.l.b16 %v10377
    %v10414 = vpack.c.b16 %v10405, %v10404
    %v10415 = vpack.c.b16 %v10407, %v10406
    %v10416 = vpack.c.b16 %v10409, %v10408
    %v10417 = vpack.c.b16 %v10411, %v10410
    %v10418 = vpack.c.b16 %v10413, %v10412
    %v10425 = vsel %vm59, %v10378, 0
    %v10428 = vsel %vm59, %v10379, 0
    %v10431 = vsel %vm59, %v10380, 0
    %v10434 = vsel %vm59, %v10381, 0
    %v10437 = vsel %vm59, %v10382, 0
    %v10440 = vsel %vm59, %v10383, 0
    %v10443 = vsel %vm59, %v10384, 0
    %v10446 = vsel %vm59, %v10385, 0
    %v10449 = vsel %vm59, %v10386, 0
    %v10452 = vsel %vm59, %v10387, 0
    %v10455 = vsel %vm59, %v10388, 0
    %v10458 = vsel %vm59, %v10389, 0
    %v10461 = vsel %vm59, %v10390, 0
    %v10464 = vsel %vm59, %v10391, 0
    %v10467 = vsel %vm59, %v10392, 0
    %v10470 = vsel %vm59, %v10393, 0
    %10472 = vmatprep.subr.bf16.mxu0 0
    %10473 = vmatpush1.bf16.msra.mxu0 0
    %10474 = vmatprep.subr.bf16.mxu0 0
    %10475 = vmatpush1.bf16.msra.mxu0 0
    %10476 = vmatprep.subr.bf16.mxu0 0
    %10477 = vmatpush1.bf16.msra.mxu0 0
    %10478 = vmatprep.subr.bf16.mxu0 0
    %10479 = vmatpush1.bf16.msra.mxu0 %v10418
    %10480 = vmatprep.subr.bf16.mxu0 0
    %10481 = vmatpush1.bf16.msra.mxu0 %v10417
    %10482 = vmatprep.subr.bf16.mxu0 0
    %10483 = vmatpush1.bf16.msra.mxu0 %v10416
    %10484 = vmatprep.subr.bf16.mxu0 0
    %10485 = vmatpush1.bf16.msra.mxu0 %v10415
    %10486 = vmatprep.subr.bf16.mxu0 0
    %10487 = vmatpush1.bf16.msra.mxu0 %v10414
    %10488 = vmatprep.subr.bf16.mxu0 0
    %10489 = vmatpush2.bf16.msra.mxu0 0
    %10490 = vmatprep.subr.bf16.mxu0 0
    %10491 = vmatpush2.bf16.msra.mxu0 0
    %10492 = vmatprep.subr.bf16.mxu0 0
    %10493 = vmatpush2.bf16.msra.mxu0 0
    %10494 = vmatprep.subr.bf16.mxu0 0
    %10495 = vmatpush2.bf16.msra.mxu0 0
    %10496 = vmatprep.subr.bf16.mxu0 0
    %10497 = vmatpush2.bf16.msra.mxu0 0
    %10498 = vmatprep.subr.bf16.mxu0 0
    %10499 = vmatpush2.bf16.msra.mxu0 0
    %10500 = vmatprep.subr.bf16.mxu0 0
    %10501 = vmatpush2.bf16.msra.mxu0 0
    %10502 = vmatprep.subr.bf16.mxu0 0
    %10503 = vmatpush2.bf16.msra.mxu0 0
    %10504 = vmatprep.mubr.bf16.mxu0 0
    %10505 = vmatmul.mubr.bf16.gmra.mxu0 %v10425
    %v10506 = vpop.f32.mrf.mxu0
    %v10507 = vadd.f32 0.0, %v10506
    %v10508 = vpop.f32.mrf.mxu0
    %v10509 = vpop.f32.mrf.mxu0
    %v10510 = vadd.f32 0.0, %v10509
    %v10511 = vpop.f32.mrf.mxu0
    %10512 = vmatprep.mubr.bf16.mxu0 0
    %10513 = vmatmul.mubr.bf16.gmra.mxu0 %v10428
    %v10514 = vpop.f32.mrf.mxu0
    %v10515 = vadd.f32 0.0, %v10514
    %v10516 = vpop.f32.mrf.mxu0
    %v10517 = vpop.f32.mrf.mxu0
    %v10518 = vadd.f32 0.0, %v10517
    %v10519 = vpop.f32.mrf.mxu0
    %10520 = vmatprep.mubr.bf16.mxu0 0
    %10521 = vmatmul.mubr.bf16.gmra.mxu0 %v10431
    %v10522 = vpop.f32.mrf.mxu0
    %v10523 = vadd.f32 0.0, %v10522
    %v10524 = vpop.f32.mrf.mxu0
    %v10525 = vpop.f32.mrf.mxu0
    %v10526 = vadd.f32 0.0, %v10525
    %v10527 = vpop.f32.mrf.mxu0
    %10528 = vmatprep.mubr.bf16.mxu0 0
    %10529 = vmatmul.mubr.bf16.gmra.mxu0 %v10434
    %v10530 = vpop.f32.mrf.mxu0
    %v10531 = vadd.f32 0.0, %v10530
    %v10532 = vpop.f32.mrf.mxu0
    %v10533 = vpop.f32.mrf.mxu0
    %v10534 = vadd.f32 0.0, %v10533
    %v10535 = vpop.f32.mrf.mxu0
    %10536 = vmatprep.mubr.bf16.mxu0 0
    %10537 = vmatmul.mubr.bf16.gmra.mxu0 %v10437
    %v10538 = vpop.f32.mrf.mxu0
    %v10539 = vadd.f32 0.0, %v10538
    %v10540 = vpop.f32.mrf.mxu0
    %v10541 = vpop.f32.mrf.mxu0
    %v10542 = vadd.f32 0.0, %v10541
    %v10543 = vpop.f32.mrf.mxu0
    %10544 = vmatprep.mubr.bf16.mxu0 0
    %10545 = vmatmul.mubr.bf16.gmra.mxu0 %v10440
    %v10546 = vpop.f32.mrf.mxu0
    %v10547 = vadd.f32 0.0, %v10546
    %v10548 = vpop.f32.mrf.mxu0
    %v10549 = vpop.f32.mrf.mxu0
    %v10550 = vadd.f32 0.0, %v10549
    %v10551 = vpop.f32.mrf.mxu0
    %10552 = vmatprep.mubr.bf16.mxu0 0
    %10553 = vmatmul.mubr.bf16.gmra.mxu0 %v10443
    %v10554 = vpop.f32.mrf.mxu0
    %v10555 = vadd.f32 0.0, %v10554
    %v10556 = vpop.f32.mrf.mxu0
    %v10557 = vpop.f32.mrf.mxu0
    %v10558 = vadd.f32 0.0, %v10557
    %v10559 = vpop.f32.mrf.mxu0
    %10560 = vmatprep.mubr.bf16.mxu0 0
    %10561 = vmatmul.mubr.bf16.gmra.mxu0 %v10446
    %v10562 = vpop.f32.mrf.mxu0
    %v10563 = vadd.f32 0.0, %v10562
    %v10564 = vpop.f32.mrf.mxu0
    %v10565 = vpop.f32.mrf.mxu0
    %v10566 = vadd.f32 0.0, %v10565
    %v10567 = vpop.f32.mrf.mxu0
    %10568 = vmatprep.mubr.bf16.mxu0 0
    %10569 = vmatmul.mubr.bf16.gmra.mxu0 %v10449
    %v10570 = vpop.f32.mrf.mxu0
    %v10571 = vadd.f32 0.0, %v10570
    %v10572 = vpop.f32.mrf.mxu0
    %v10573 = vpop.f32.mrf.mxu0
    %v10574 = vadd.f32 0.0, %v10573
    %v10575 = vpop.f32.mrf.mxu0
    %10576 = vmatprep.mubr.bf16.mxu0 0
    %10577 = vmatmul.mubr.bf16.gmra.mxu0 %v10452
    %v10578 = vpop.f32.mrf.mxu0
    %v10579 = vadd.f32 0.0, %v10578
    %v10580 = vpop.f32.mrf.mxu0
    %v10581 = vpop.f32.mrf.mxu0
    %v10582 = vadd.f32 0.0, %v10581
    %v10583 = vpop.f32.mrf.mxu0
    %10584 = vmatprep.mubr.bf16.mxu0 0
    %10585 = vmatmul.mubr.bf16.gmra.mxu0 %v10455
    %v10586 = vpop.f32.mrf.mxu0
    %v10587 = vadd.f32 0.0, %v10586
    %v10588 = vpop.f32.mrf.mxu0
    %v10589 = vpop.f32.mrf.mxu0
    %v10590 = vadd.f32 0.0, %v10589
    %v10591 = vpop.f32.mrf.mxu0
    %10592 = vmatprep.mubr.bf16.mxu0 0
    %10593 = vmatmul.mubr.bf16.gmra.mxu0 %v10458
    %v10594 = vpop.f32.mrf.mxu0
    %v10595 = vadd.f32 0.0, %v10594
    %v10596 = vpop.f32.mrf.mxu0
    %v10597 = vpop.f32.mrf.mxu0
    %v10598 = vadd.f32 0.0, %v10597
    %v10599 = vpop.f32.mrf.mxu0
    %10600 = vmatprep.mubr.bf16.mxu0 0
    %10601 = vmatmul.mubr.bf16.gmra.mxu0 %v10461
    %v10602 = vpop.f32.mrf.mxu0
    %v10603 = vadd.f32 0.0, %v10602
    %v10604 = vpop.f32.mrf.mxu0
    %v10605 = vpop.f32.mrf.mxu0
    %v10606 = vadd.f32 0.0, %v10605
    %v10607 = vpop.f32.mrf.mxu0
    %10608 = vmatprep.mubr.bf16.mxu0 0
    %10609 = vmatmul.mubr.bf16.gmra.mxu0 %v10464
    %v10610 = vpop.f32.mrf.mxu0
    %v10611 = vadd.f32 0.0, %v10610
    %v10612 = vpop.f32.mrf.mxu0
    %v10613 = vpop.f32.mrf.mxu0
    %v10614 = vadd.f32 0.0, %v10613
    %v10615 = vpop.f32.mrf.mxu0
    %10616 = vmatprep.mubr.bf16.mxu0 0
    %10617 = vmatmul.mubr.bf16.gmra.mxu0 %v10467
    %v10618 = vpop.f32.mrf.mxu0
    %v10619 = vadd.f32 0.0, %v10618
    %v10620 = vpop.f32.mrf.mxu0
    %v10621 = vpop.f32.mrf.mxu0
    %v10622 = vadd.f32 0.0, %v10621
    %v10623 = vpop.f32.mrf.mxu0
    %10624 = vmatprep.mubr.bf16.mxu0 0
    %10625 = vmatmul.mubr.bf16.gmra.mxu0 %v10470
    %v10626 = vpop.f32.mrf.mxu0
    %v10627 = vadd.f32 0.0, %v10626
    %v10628 = vpop.f32.mrf.mxu0
    %v10629 = vpop.f32.mrf.mxu0
    %v10630 = vadd.f32 0.0, %v10629
    %v10631 = vpop.f32.mrf.mxu0
    %10632 = vdwg.mxu0
    %v10633 = vadd.f32 %v10303, %v10507
    %v10634 = vadd.f32 %v10304, %v10510
    %v10635 = vadd.f32 %v10305, %v10515
    %v10636 = vadd.f32 %v10306, %v10518
    %v10637 = vadd.f32 %v10307, %v10523
    %v10638 = vadd.f32 %v10308, %v10526
    %v10639 = vadd.f32 %v10309, %v10531
    %v10640 = vadd.f32 %v10310, %v10534
    %v10641 = vadd.f32 %v10311, %v10539
    %v10642 = vadd.f32 %v10312, %v10542
    %v10643 = vadd.f32 %v10313, %v10547
    %v10644 = vadd.f32 %v10314, %v10550
    %v10645 = vadd.f32 %v10315, %v10555
    %v10646 = vadd.f32 %v10316, %v10558
    %v10647 = vadd.f32 %v10317, %v10563
    %v10648 = vadd.f32 %v10318, %v10566
    %v10649 = vadd.f32 %v10319, %v10571
    %v10650 = vadd.f32 %v10320, %v10574
    %v10651 = vadd.f32 %v10321, %v10579
    %v10652 = vadd.f32 %v10322, %v10582
    %v10653 = vadd.f32 %v10323, %v10587
    %v10654 = vadd.f32 %v10324, %v10590
    %v10655 = vadd.f32 %v10325, %v10595
    %v10656 = vadd.f32 %v10326, %v10598
    %v10657 = vadd.f32 %v10327, %v10603
    %v10658 = vadd.f32 %v10328, %v10606
    %v10659 = vadd.f32 %v10329, %v10611
    %v10660 = vadd.f32 %v10330, %v10614
    %v10661 = vadd.f32 %v10331, %v10619
    %v10662 = vadd.f32 %v10332, %v10622
    %v10663 = vadd.f32 %v10333, %v10627
    %v10664 = vadd.f32 %v10334, %v10630
    %s10665 = sld [smem:[#allocation4 + $0xd]]
    %vm10666 = vcmp.ge.f32.partialorder %v10633, 0.0
    %vm10667 = vcmp.ge.f32.partialorder %v10634, 0.0
    %vm10668 = vcmp.ge.f32.partialorder %v10635, 0.0
    %vm10669 = vcmp.ge.f32.partialorder %v10636, 0.0
    %vm10670 = vcmp.ge.f32.partialorder %v10637, 0.0
    %vm10671 = vcmp.ge.f32.partialorder %v10638, 0.0
    %vm10672 = vcmp.ge.f32.partialorder %v10639, 0.0
    %vm10673 = vcmp.ge.f32.partialorder %v10640, 0.0
    %vm10674 = vcmp.ge.f32.partialorder %v10641, 0.0
    %vm10675 = vcmp.ge.f32.partialorder %v10642, 0.0
    %vm10676 = vcmp.ge.f32.partialorder %v10643, 0.0
    %vm10677 = vcmp.ge.f32.partialorder %v10644, 0.0
    %vm10678 = vcmp.ge.f32.partialorder %v10645, 0.0
    %vm10679 = vcmp.ge.f32.partialorder %v10646, 0.0
    %vm10680 = vcmp.ge.f32.partialorder %v10647, 0.0
    %vm10681 = vcmp.ge.f32.partialorder %v10648, 0.0
    %vm10682 = vcmp.ge.f32.partialorder %v10649, 0.0
    %vm10683 = vcmp.ge.f32.partialorder %v10650, 0.0
    %vm10684 = vcmp.ge.f32.partialorder %v10651, 0.0
    %vm10685 = vcmp.ge.f32.partialorder %v10652, 0.0
    %vm10686 = vcmp.ge.f32.partialorder %v10653, 0.0
    %vm10687 = vcmp.ge.f32.partialorder %v10654, 0.0
    %vm10688 = vcmp.ge.f32.partialorder %v10655, 0.0
    %vm10689 = vcmp.ge.f32.partialorder %v10656, 0.0
    %vm10690 = vcmp.ge.f32.partialorder %v10657, 0.0
    %vm10691 = vcmp.ge.f32.partialorder %v10658, 0.0
    %vm10692 = vcmp.ge.f32.partialorder %v10659, 0.0
    %vm10693 = vcmp.ge.f32.partialorder %v10660, 0.0
    %vm10694 = vcmp.ge.f32.partialorder %v10661, 0.0
    %vm10695 = vcmp.ge.f32.partialorder %v10662, 0.0
    %vm10696 = vcmp.ge.f32.partialorder %v10663, 0.0
    %vm10697 = vcmp.ge.f32.partialorder %v10664, 0.0
    %v10698 = vstv %s10665
    %v10699 = vmul.f32 %v10698, %v10633
    %v10700 = vmul.f32 %v10698, %v10634
    %v10701 = vmul.f32 %v10698, %v10635
    %v10702 = vmul.f32 %v10698, %v10636
    %v10703 = vmul.f32 %v10698, %v10637
    %v10704 = vmul.f32 %v10698, %v10638
    %v10705 = vmul.f32 %v10698, %v10639
    %v10706 = vmul.f32 %v10698, %v10640
    %v10707 = vmul.f32 %v10698, %v10641
    %v10708 = vmul.f32 %v10698, %v10642
    %v10709 = vmul.f32 %v10698, %v10643
    %v10710 = vmul.f32 %v10698, %v10644
    %v10711 = vmul.f32 %v10698, %v10645
    %v10712 = vmul.f32 %v10698, %v10646
    %v10713 = vmul.f32 %v10698, %v10647
    %v10714 = vmul.f32 %v10698, %v10648
    %v10715 = vmul.f32 %v10698, %v10649
    %v10716 = vmul.f32 %v10698, %v10650
    %v10717 = vmul.f32 %v10698, %v10651
    %v10718 = vmul.f32 %v10698, %v10652
    %v10719 = vmul.f32 %v10698, %v10653
    %v10720 = vmul.f32 %v10698, %v10654
    %v10721 = vmul.f32 %v10698, %v10655
    %v10722 = vmul.f32 %v10698, %v10656
    %v10723 = vmul.f32 %v10698, %v10657
    %v10724 = vmul.f32 %v10698, %v10658
    %v10725 = vmul.f32 %v10698, %v10659
    %v10726 = vmul.f32 %v10698, %v10660
    %v10727 = vmul.f32 %v10698, %v10661
    %v10728 = vmul.f32 %v10698, %v10662
    %v10729 = vmul.f32 %v10698, %v10663
    %v10730 = vmul.f32 %v10698, %v10664
    %v10731 = vsel %vm10666, %v10633, %v10699
    %v10732 = vsel %vm10667, %v10634, %v10700
    %v10733 = vsel %vm10668, %v10635, %v10701
    %v10734 = vsel %vm10669, %v10636, %v10702
    %v10735 = vsel %vm10670, %v10637, %v10703
    %v10736 = vsel %vm10671, %v10638, %v10704
    %v10737 = vsel %vm10672, %v10639, %v10705
    %v10738 = vsel %vm10673, %v10640, %v10706
    %v10739 = vsel %vm10674, %v10641, %v10707
    %v10740 = vsel %vm10675, %v10642, %v10708
    %v10741 = vsel %vm10676, %v10643, %v10709
    %v10742 = vsel %vm10677, %v10644, %v10710
    %v10743 = vsel %vm10678, %v10645, %v10711
    %v10744 = vsel %vm10679, %v10646, %v10712
    %v10745 = vsel %vm10680, %v10647, %v10713
    %v10746 = vsel %vm10681, %v10648, %v10714
    %v10747 = vsel %vm10682, %v10649, %v10715
    %v10748 = vsel %vm10683, %v10650, %v10716
    %v10749 = vsel %vm10684, %v10651, %v10717
    %v10750 = vsel %vm10685, %v10652, %v10718
    %v10751 = vsel %vm10686, %v10653, %v10719
    %v10752 = vsel %vm10687, %v10654, %v10720
    %v10753 = vsel %vm10688, %v10655, %v10721
    %v10754 = vsel %vm10689, %v10656, %v10722
    %v10755 = vsel %vm10690, %v10657, %v10723
    %v10756 = vsel %vm10691, %v10658, %v10724
    %v10757 = vsel %vm10692, %v10659, %v10725
    %v10758 = vsel %vm10693, %v10660, %v10726
    %v10759 = vsel %vm10694, %v10661, %v10727
    %v10760 = vsel %vm10695, %v10662, %v10728
    %v10761 = vsel %vm10696, %v10663, %v10729
    %v10762 = vsel %vm10697, %v10664, %v10730
    %v10763 = vadd.f32 %v10731, %v9141
    %v10764 = vadd.f32 %v10732, %v9142
    %v10765 = vadd.f32 %v10733, %v9143
    %v10766 = vadd.f32 %v10734, %v9144
    %v10767 = vadd.f32 %v10735, %v9145
    %v10768 = vadd.f32 %v10736, %v9146
    %v10769 = vadd.f32 %v10737, %v9147
    %v10770 = vadd.f32 %v10738, %v9148
    %v10771 = vadd.f32 %v10739, %v9149
    %v10772 = vadd.f32 %v10740, %v9150
    %v10773 = vadd.f32 %v10741, %v9151
    %v10774 = vadd.f32 %v10742, %v9152
    %v10775 = vadd.f32 %v10743, %v9153
    %v10776 = vadd.f32 %v10744, %v9154
    %v10777 = vadd.f32 %v10745, %v9155
    %v10778 = vadd.f32 %v10746, %v9156
    %v10779 = vadd.f32 %v10747, %v9157
    %v10780 = vadd.f32 %v10748, %v9158
    %v10781 = vadd.f32 %v10749, %v9159
    %v10782 = vadd.f32 %v10750, %v9160
    %v10783 = vadd.f32 %v10751, %v9161
    %v10784 = vadd.f32 %v10752, %v9162
    %v10785 = vadd.f32 %v10753, %v9163
    %v10786 = vadd.f32 %v10754, %v9164
    %v10787 = vadd.f32 %v10755, %v9165
    %v10788 = vadd.f32 %v10756, %v9166
    %v10789 = vadd.f32 %v10757, %v9167
    %v10790 = vadd.f32 %v10758, %v9168
    %v10791 = vadd.f32 %v10759, %v9169
    %v10792 = vadd.f32 %v10760, %v9170
    %v10793 = vadd.f32 %v10761, %v9171
    %v10794 = vadd.f32 %v10762, %v9172
    %v10795 = vld [vmem:[%s5] sm:$0x1]
    %v10796 = vpack.c.bf16 %v10764, %v10763
    %v10797 = vpack.c.bf16 %v10766, %v10765
    %v10798 = vpack.c.bf16 %v10768, %v10767
    %v10799 = vpack.c.bf16 %v10770, %v10769
    %v10800 = vpack.c.bf16 %v10772, %v10771
    %v10801 = vpack.c.bf16 %v10774, %v10773
    %v10802 = vpack.c.bf16 %v10776, %v10775
    %v10803 = vpack.c.bf16 %v10778, %v10777
    %v10804 = vpack.c.bf16 %v10780, %v10779
    %v10805 = vpack.c.bf16 %v10782, %v10781
    %v10806 = vpack.c.bf16 %v10784, %v10783
    %v10807 = vpack.c.bf16 %v10786, %v10785
    %v10808 = vpack.c.bf16 %v10788, %v10787
    %v10809 = vpack.c.bf16 %v10790, %v10789
    %v10810 = vpack.c.bf16 %v10792, %v10791
    %v10811 = vpack.c.bf16 %v10794, %v10793
    %v10812 = vld [vmem:[#allocation3] sm:$0x1]
    %10814 = vset.pattern.permute.xlu0 0
    %10815 = vperm.xlu0 %10814, %v10812
    %v10816 = vpop.permute.xlu0 %10815
    %v10818 = vlaneseq
    %v10819 = vshrl.u32 %v10818, 7
    %v10820 = vsub.s32 0, %v10819
    %v10821 = vrot.slane %v10816, %v10820
    %v10823 = vsel %vm59, %v10795, 0
    %v10826 = vsel %vm59, %v10796, 0
    %v10829 = vsel %vm59, %v10797, 0
    %v10832 = vsel %vm59, %v10798, 0
    %v10835 = vsel %vm59, %v10799, 0
    %v10838 = vsel %vm59, %v10800, 0
    %v10841 = vsel %vm59, %v10801, 0
    %v10844 = vsel %vm59, %v10802, 0
    %v10847 = vsel %vm59, %v10803, 0
    %v10850 = vsel %vm59, %v10804, 0
    %v10853 = vsel %vm59, %v10805, 0
    %v10856 = vsel %vm59, %v10806, 0
    %v10859 = vsel %vm59, %v10807, 0
    %v10862 = vsel %vm59, %v10808, 0
    %v10865 = vsel %vm59, %v10809, 0
    %v10868 = vsel %vm59, %v10810, 0
    %v10871 = vsel %vm59, %v10811, 0
    %10873 = vmatprep.subr.bf16.mxu0 0
    %10874 = vmatpush1.bf16.xpose.msra.mxu0 %v10847
    %10875 = vmatprep.subr.bf16.mxu0 0
    %10876 = vmatpush1.bf16.xpose.msra.mxu0 %v10844
    %10877 = vmatprep.subr.bf16.mxu0 0
    %10878 = vmatpush1.bf16.xpose.msra.mxu0 %v10841
    %10879 = vmatprep.subr.bf16.mxu0 0
    %10880 = vmatpush1.bf16.xpose.msra.mxu0 %v10838
    %10881 = vmatprep.subr.bf16.mxu0 0
    %10882 = vmatpush1.bf16.xpose.msra.mxu0 %v10835
    %10883 = vmatprep.subr.bf16.mxu0 0
    %10884 = vmatpush1.bf16.xpose.msra.mxu0 %v10832
    %10885 = vmatprep.subr.bf16.mxu0 0
    %10886 = vmatpush1.bf16.xpose.msra.mxu0 %v10829
    %10887 = vmatprep.subr.bf16.mxu0 0
    %10888 = vmatpush1.bf16.xpose.msra.mxu0 %v10826
    %10889 = vmatprep.subr.bf16.mxu0 0
    %10890 = vmatpush2.bf16.xpose.msra.mxu0 %v10871
    %10891 = vmatprep.subr.bf16.mxu0 0
    %10892 = vmatpush2.bf16.xpose.msra.mxu0 %v10868
    %10893 = vmatprep.subr.bf16.mxu0 0
    %10894 = vmatpush2.bf16.xpose.msra.mxu0 %v10865
    %10895 = vmatprep.subr.bf16.mxu0 0
    %10896 = vmatpush2.bf16.xpose.msra.mxu0 %v10862
    %10897 = vmatprep.subr.bf16.mxu0 0
    %10898 = vmatpush2.bf16.xpose.msra.mxu0 %v10859
    %10899 = vmatprep.subr.bf16.mxu0 0
    %10900 = vmatpush2.bf16.xpose.msra.mxu0 %v10856
    %10901 = vmatprep.subr.bf16.mxu0 0
    %10902 = vmatpush2.bf16.xpose.msra.mxu0 %v10853
    %10903 = vmatprep.subr.bf16.mxu0 0
    %10904 = vmatpush2.bf16.xpose.msra.mxu0 %v10850
    %10905 = vmatprep.mubr.bf16.mxu0 0
    %10906 = vmatmul.mubr.bf16.gmra.mxu0 %v10823
    %v10907 = vpop.f32.mrf.mxu0
    %v10908 = vadd.f32 %v10821, %v10907
    %v10909 = vpop.f32.mrf.mxu0
    %v10910 = vadd.f32 %v10821, %v10909
    %v10911 = vpop.f32.mrf.mxu0
    %v10912 = vpop.f32.mrf.mxu0
    %10913 = vdwg.mxu0
    %v10914 = vtanh.pop %v10908
    %v10915 = vtanh.pop %v10910
    %v10918 = vcombine.low %v10914, %v10915
    %v10920 = vunpack.c.l.s4 1966171168
    %v10921 = vunpack.c.0.s8 %v10920
    %v10922 = vlaneseq
    %v10923 = vshrl.u32 %v10922, 7
    %v10924 = vsub.s32 %v10921, %v10923
    %v10925 = vrot.slane %v10918, %v10924
    %v10927 = vunpack.c.l.s4 1966171168
    %v10928 = vunpack.c.0.s8 %v10927
    %v10929 = vlaneseq
    %v10930 = vshrl.u32 %v10929, 7
    %v10931 = vsub.s32 %v10928, %v10930
    %v10932 = vrot.slane %v10925, %v10931
    %v10934 = vlaneseq
    %vm10935 = vcmp.ge.s32.totalorder %v10934, 0
    %vm10936 = vcmp.lt.s32.totalorder %v10934, 256
    %vm10937 = vmand %vm10935, %vm10936
    %10938 = vst.msk [vmem:[%s8] sm:$0x3] %vm10937, %v10932
    // Predicated region
    $region42: #{generator_forward.1} parent=1 // pred_check
      _
    $region43: #{generator_forward.1} parent=1 // pred_check_branch
      %10940 = sbr.rel (0) target = $region45
    $region44: #{generator_forward.1} parent=1 // pred_region
      _
    $region45: #{generator_forward.1} parent=1 // pred_fallthru
      _
    // Predicated region
    $region46: #{generator_forward.1} parent=1 // pred_check
      _
    $region47: #{generator_forward.1} parent=1 // pred_check_branch
      %10942 = sbr.rel (0) target = $region49
    $region48: #{generator_forward.1} parent=1 // pred_region
      _
    $region49: #{generator_forward.1} parent=1 // pred_fallthru
      _
    %10943 = vsyncpa [#allocation5], 1
    %10944 = vsyncpa [#allocation6], 1

</llo_original>
